<compile_context>
chip_gen: v7x
topology: tpu7x:2x2x1
jax: 0.10.0
libtpu: 0.0.40
codegen_flags: <defaults>
</compile_context>

<pallas_src>
import math

import jax
import jax.numpy as jnp
from jax.experimental import pallas as pl
from jax.experimental.pallas import tpu as pltpu


# ----------------------------------------------------------------------------
# LSTM cell on f32 gate pre-activations (PyTorch gate order i, f, g, o).
# ----------------------------------------------------------------------------
def _lstm_cell(gates, c_prev, H):
    """gates: (B, 4H) f32 pre-activation; returns (h_new, c_new) in f32."""
    sg = jax.nn.sigmoid(gates)          # one EUP pass over the full gate value
    th = jnp.tanh(gates)                # one EUP pass over the full gate value
    i_g = sg[:, 0 * H:1 * H]
    f_g = sg[:, 1 * H:2 * H]
    g_g = th[:, 2 * H:3 * H]
    o_g = sg[:, 3 * H:4 * H]
    c_new = f_g * c_prev + i_g * g_g
    h_new = o_g * jnp.tanh(c_new)
    return h_new, c_new


# ----------------------------------------------------------------------------
# Fused kernel
# ----------------------------------------------------------------------------
def _make_fused_kernel(T, B, E, H, C, n_layers):
    """Fused: n_layers bidirectional LSTM + Linear(2H->C) + LogSoftmax.

    Inputs : x (T*B, E) bf16,
             wih0 (E, 8H) bf16,
             wih_rest (max(1, L-1), 2H, 8H) bf16,
             whh_all (L, 2H, 8H) bf16  (block-diagonal: h_f->fwd gates,
                                        h_b->bwd gates),
             bias_all (L, 1, 8H) f32,
             gen_w (2H, C) bf16, gen_b (1, C) f32
    Output : out (B, C) f32
    Scratch: act (T*B, 2H) f32  [h_fwd(t) | h_bwd(t)] per time row,
             gxs (T*B, 8H) f32  staged gate pre-activations of current layer.
    """
    f32 = jnp.float32
    bf16 = jnp.bfloat16
    H4 = 4 * H
    H8 = 8 * H

    def kernel(x_ref, wih0_ref, wih_rest_ref, whh_ref, bias_ref,
               gen_w_ref, gen_b_ref, out_ref, act_ref, gxs_ref):
        head_f = None
        head_b = None

        for layer in range(n_layers):
            # ---- hoisted input projection: ONE bf16 MXU matmul covers the
            #      whole sequence and BOTH directions of this layer.
            if layer == 0:
                gx = jnp.dot(x_ref[...], wih0_ref[...],
                             preferred_element_type=f32)            # (T*B, 8H)
            else:
                a_in = act_ref[...].astype(bf16)                    # (T*B, 2H)
                gx = jnp.dot(a_in, wih_rest_ref[layer - 1],
                             preferred_element_type=f32)            # (T*B, 8H)
            # Stage pre-activations (+ folded bias) in VMEM to bound vreg
            # pressure across the fully-unrolled time loop.
            gxs_ref[...] = gx + bias_ref[layer]

            whh_l = whh_ref[layer]                                  # (2H, 8H) bf16

            c_f = jnp.zeros((B, H), f32)
            c_b = jnp.zeros((B, H), f32)
            h_f = None
            h_b = None
            last_layer = layer == n_layers - 1

            # ---- fully unrolled time loop; fwd processes time s, bwd T-1-s.
            for s in range(T):
                tf = s
                tb = T - 1 - s
                g_f = gxs_ref[tf * B:(tf + 1) * B, 0:H4]            # (B, 4H)
                g_b = gxs_ref[tb * B:(tb + 1) * B, H4:H8]           # (B, 4H)
                if s > 0:
                    # Merged recurrence: one (B,2H)@(2H,8H) MXU push serves
                    # both directions (W_hh is packed block-diagonally).
                    hp = jnp.concatenate([h_f, h_b], axis=-1).astype(bf16)
                    rec = jnp.dot(hp, whh_l, preferred_element_type=f32)
                    g_f = g_f + rec[:, 0:H4]
                    g_b = g_b + rec[:, H4:H8]
                # (s == 0: initial h is zero, so the recurrent term vanishes.)
                h_f, c_f = _lstm_cell(g_f, c_f, H)
                h_b, c_b = _lstm_cell(g_b, c_b, H)

                if last_layer:
                    if s == 0:
                        head_b = h_b        # bwd hidden at time T-1
                    if s == T - 1:
                        head_f = h_f        # fwd hidden at time T-1
                else:
                    act_ref[tf * B:(tf + 1) * B, 0:H] = h_f
                    act_ref[tb * B:(tb + 1) * B, H:2 * H] = h_b

        # ---- Linear(2H -> C) + LogSoftmax (split along fwd/bwd halves).
        gw = gen_w_ref[...]                                         # (2H, C)
        logits = (jnp.dot(head_f.astype(bf16), gw[0:H, :],
                          preferred_element_type=f32)
                  + jnp.dot(head_b.astype(bf16), gw[H:2 * H, :],
                            preferred_element_type=f32)
                  + gen_b_ref[...])                                  # (B, C)
        m = jnp.max(logits, axis=-1, keepdims=True)
        z = logits - m
        out_ref[...] = z - jnp.log(jnp.sum(jnp.exp(z), axis=-1, keepdims=True))

    return kernel


_VMEM_SPEC = pl.BlockSpec(memory_space=pltpu.MemorySpace.VMEM)


# ----------------------------------------------------------------------------
# Parameter init (deterministic, PyTorch-like shapes; values are synthetic)
# ----------------------------------------------------------------------------
def init_params(key, vocab, emb_dim, hidden, n_classes, n_layers):
    keys = iter(jax.random.split(key, 4 + 6 * n_layers * 2))
    params = {}
    params["emb"] = jax.random.normal(next(keys), (vocab, emb_dim), jnp.float32)

    s = 1.0 / math.sqrt(hidden)
    lstm = []
    for layer in range(n_layers):
        in_dim = emb_dim if layer == 0 else 2 * hidden
        dirs = []
        for _ in range(2):  # forward, backward
            # NOTE: pre-transposed vs. PyTorch's (4H, in) layout; gate column
            #       order (i, f, g, o).
            w_ih = jax.random.uniform(next(keys), (in_dim, 4 * hidden),
                                      jnp.float32, -s, s)
            w_hh = jax.random.uniform(next(keys), (hidden, 4 * hidden),
                                      jnp.float32, -s, s)
            b_ih = jax.random.uniform(next(keys), (4 * hidden,), jnp.float32, -s, s)
            b_hh = jax.random.uniform(next(keys), (4 * hidden,), jnp.float32, -s, s)
            dirs.append((w_ih, w_hh, (b_ih + b_hh)[None, :]))
        lstm.append(tuple(dirs))
    params["lstm"] = lstm

    sg = 1.0 / math.sqrt(2 * hidden)
    params["gen_w"] = jax.random.uniform(next(keys), (2 * hidden, n_classes),
                                         jnp.float32, -sg, sg)
    params["gen_b"] = jax.random.uniform(next(keys), (1, n_classes),
                                         jnp.float32, -sg, sg)
    return params


def pack_params(params):
    """Repack per-layer / per-direction weights into a few stacked bf16 slabs.

    8H gate-column layout: [ fwd (i,f,g,o) | bwd (i,f,g,o) ], each gate H wide.
    2H input-row layout (act slab, W_hh rows, generator rows): [ h_fwd | h_bwd ].
    """
    lstm = params["lstm"]
    n_layers = len(lstm)
    H = lstm[0][0][1].shape[0]
    bf16 = jnp.bfloat16

    # Layer-0 input projection, both directions side by side: (E, 8H).
    wih0 = jnp.concatenate([lstm[0][0][0], lstm[0][1][0]], axis=1).astype(bf16)

    # Layers > 0 input projections: (L-1, 2H, 8H).
    if n_layers > 1:
        wih_rest = jnp.stack(
            [jnp.concatenate([lstm[l][0][0], lstm[l][1][0]], axis=1)
             for l in range(1, n_layers)]).astype(bf16)
    else:
        wih_rest = jnp.zeros((1, 2 * H, 8 * H), bf16)   # dummy, never read

    # Block-diagonal recurrent weights: (L, 2H, 8H).
    zeros = jnp.zeros((H, 4 * H), jnp.float32)
    whh_all = jnp.stack(
        [jnp.concatenate(
            [jnp.concatenate([lstm[l][0][1], zeros], axis=1),   # h_f -> fwd gates
             jnp.concatenate([zeros, lstm[l][1][1]], axis=1)],  # h_b -> bwd gates
            axis=0)
         for l in range(n_layers)]).astype(bf16)

    # Folded biases: (L, 1, 8H) f32 (added after f32 accumulation).
    bias_all = jnp.stack(
        [jnp.concatenate([lstm[l][0][2], lstm[l][1][2]], axis=1)
         for l in range(n_layers)])

    gen_w = params["gen_w"].astype(bf16)   # (2H, C)
    gen_b = params["gen_b"]                # (1, C) f32
    return wih0, wih_rest, whh_all, bias_all, gen_w, gen_b


# ----------------------------------------------------------------------------
# Forward pass: embedding gather in XLA, everything else in ONE Pallas kernel.
# ----------------------------------------------------------------------------
def rnn_classifier_forward(tokens, params):
    B, T = tokens.shape
    E = params["emb"].shape[1]
    H = params["lstm"][0][0][1].shape[0]          # w_hh: (H, 4H)
    C = params["gen_w"].shape[1]
    n_layers = len(params["lstm"])

    # Pad batch to a full sublane tile so every per-timestep row slice inside
    # the kernel is tile-aligned.
    Bp = ((B + 7) // 8) * 8

    emb = params["emb"][tokens]                   # (B, T, E)  XLA gather
    x = jnp.transpose(emb, (1, 0, 2))             # (T, B, E)  time-major
    x = jnp.pad(x, ((0, 0), (0, Bp - B), (0, 0)))
    x2 = x.reshape(T * Bp, E).astype(jnp.bfloat16)   # row = t*Bp + b

    wih0, wih_rest, whh_all, bias_all, gen_w, gen_b = pack_params(params)

    kernel = _make_fused_kernel(T, Bp, E, H, C, n_layers)
    out = pl.pallas_call(
        kernel,
        out_shape=jax.ShapeDtypeStruct((Bp, C), jnp.float32),
        in_specs=[_VMEM_SPEC] * 7,
        out_specs=_VMEM_SPEC,
        scratch_shapes=[
            pltpu.VMEM((T * Bp, 2 * H), jnp.float32),   # inter-layer activations
            pltpu.VMEM((T * Bp, 8 * H), jnp.float32),   # staged gate pre-acts
        ],
    )(x2, wih0, wih_rest, whh_all, bias_all, gen_w, gen_b)

    return out[:B]                                # drop batch padding


# ----------------------------------------------------------------------------
if __name__ == "__main__":
    B, T = 2, 8
    VOCAB, EMB, HID, NCLS, NLAYERS = 100, 32, 32, 5, 4

    key = jax.random.PRNGKey(0)
    k_tok, k_par = jax.random.split(key)
    tokens = jax.random.randint(k_tok, (B, T), 0, VOCAB, dtype=jnp.int32)
    params = init_params(k_par, VOCAB, EMB, HID, NCLS, NLAYERS)

    fwd = jax.jit(rnn_classifier_forward)
    y = jax.block_until_ready(fwd(tokens, params))

    assert y.shape == (B, NCLS)
    # log-softmax rows must (approximately) exponentiate-sum to 1
    assert bool(jnp.all(jnp.abs(jnp.sum(jnp.exp(y), axis=-1) - 1.0) < 1e-3))
    print("KERNEL_OK")
</pallas_src>

<mosaic_0001>
module attributes {stable_mosaic.version = 11 : i64} {
  func.func @kernel(%arg0: memref<64x32xbf16, #tpu.memory_space<vmem>>, %arg1: memref<32x256xbf16, #tpu.memory_space<vmem>>, %arg2: memref<3x64x256xbf16, #tpu.memory_space<vmem>>, %arg3: memref<4x64x256xbf16, #tpu.memory_space<vmem>>, %arg4: memref<4x1x256xf32, #tpu.memory_space<vmem>>, %arg5: memref<64x5xbf16, #tpu.memory_space<vmem>>, %arg6: memref<1x5xf32, #tpu.memory_space<vmem>>, %arg7: memref<8x5xf32, #tpu.memory_space<vmem>>, %arg8: memref<64x64xf32, #tpu.memory_space<vmem>>, %arg9: memref<64x256xf32, #tpu.memory_space<vmem>>) attributes {dimension_semantics = [], scalar_prefetch = 0 : i64, scratch_operands = 2 : i64, tpu.core_type = #tpu.core_type<tc>} {
    %c0 = arith.constant 0 : index
    %c0_0 = arith.constant 0 : index
    %0 = vector.load %arg0[%c0, %c0_0] : memref<64x32xbf16, #tpu.memory_space<vmem>>, vector<64x32xbf16>
    %c0_1 = arith.constant 0 : index
    %c0_2 = arith.constant 0 : index
    %1 = vector.load %arg1[%c0_1, %c0_2] : memref<32x256xbf16, #tpu.memory_space<vmem>>, vector<32x256xbf16>
    %cst = arith.constant dense<0.000000e+00> : vector<64x256xf32>
    %2 = tpu.matmul %0, %1, %cst {dimension_numbers = #tpu.dot_dimension_numbers<[1], [0], [0], [1], [0, 0, 1, 1], [], []>} : vector<64x32xbf16>, vector<32x256xbf16>, vector<64x256xf32> -> vector<64x256xf32>
    %c0_3 = arith.constant 0 : index
    %c0_4 = arith.constant 0 : index
    %c0_5 = arith.constant 0 : index
    %3 = vector.load %arg4[%c0_3, %c0_4, %c0_5] : memref<4x1x256xf32, #tpu.memory_space<vmem>>, vector<1x1x256xf32>
    %4 = vector.shape_cast %3 : vector<1x1x256xf32> to vector<1x256xf32>
    %5 = vector.broadcast %4 : vector<1x256xf32> to vector<64x256xf32>
    %6 = arith.addf %2, %5 : vector<64x256xf32>
    %c0_6 = arith.constant 0 : index
    %c0_7 = arith.constant 0 : index
    %7 = vector.load %arg9[%c0_6, %c0_7] : memref<64x256xf32, #tpu.memory_space<vmem>>, vector<64x256xf32>
    tpu.vector_store %arg9[%c0_6, %c0_7], %6 {strides = array<i32>} : memref<64x256xf32, #tpu.memory_space<vmem>>, vector<64x256xf32>,
    %c0_8 = arith.constant 0 : index
    %c0_9 = arith.constant 0 : index
    %c0_10 = arith.constant 0 : index
    %8 = vector.load %arg3[%c0_8, %c0_9, %c0_10] : memref<4x64x256xbf16, #tpu.memory_space<vmem>>, vector<1x64x256xbf16>
    %9 = vector.shape_cast %8 : vector<1x64x256xbf16> to vector<64x256xbf16>
    %cst_11 = arith.constant 0.000000e+00 : f32
    %10 = vector.broadcast %cst_11 : f32 to vector<8x32xf32>
    %cst_12 = arith.constant 0.000000e+00 : f32
    %11 = vector.broadcast %cst_12 : f32 to vector<8x32xf32>
    %c0_13 = arith.constant 0 : index
    %c0_14 = arith.constant 0 : index
    %12 = vector.load %arg9[%c0_13, %c0_14] : memref<64x256xf32, #tpu.memory_space<vmem>>, vector<8x128xf32>
    %c56 = arith.constant 56 : index
    %c128 = arith.constant 128 : index
    %13 = vector.load %arg9[%c56, %c128] : memref<64x256xf32, #tpu.memory_space<vmem>>, vector<8x128xf32>
    %14 = arith.negf %12 : vector<8x128xf32>
    %15 = math.exp %14 : vector<8x128xf32>
    %cst_15 = arith.constant 1.000000e+00 : f32
    %16 = vector.broadcast %cst_15 : f32 to vector<8x128xf32>
    %17 = arith.addf %16, %15 : vector<8x128xf32>
    %18 = arith.divf %16, %17 : vector<8x128xf32>
    %19 = math.tanh %12 : vector<8x128xf32>
    %20 = vector.extract_strided_slice %18 {offsets = [0, 0], sizes = [8, 32], strides = [1, 1]} : vector<8x128xf32> to vector<8x32xf32>
    %21 = vector.extract_strided_slice %18 {offsets = [0, 32], sizes = [8, 32], strides = [1, 1]} : vector<8x128xf32> to vector<8x32xf32>
    %22 = vector.extract_strided_slice %19 {offsets = [0, 64], sizes = [8, 32], strides = [1, 1]} : vector<8x128xf32> to vector<8x32xf32>
    %23 = vector.extract_strided_slice %18 {offsets = [0, 96], sizes = [8, 32], strides = [1, 1]} : vector<8x128xf32> to vector<8x32xf32>
    %24 = arith.mulf %21, %10 : vector<8x32xf32>
    %25 = arith.mulf %20, %22 : vector<8x32xf32>
    %26 = arith.addf %24, %25 : vector<8x32xf32>
    %27 = math.tanh %26 : vector<8x32xf32>
    %28 = arith.mulf %23, %27 : vector<8x32xf32>
    %29 = arith.negf %13 : vector<8x128xf32>
    %30 = math.exp %29 : vector<8x128xf32>
    %cst_16 = arith.constant 1.000000e+00 : f32
    %31 = vector.broadcast %cst_16 : f32 to vector<8x128xf32>
    %32 = arith.addf %31, %30 : vector<8x128xf32>
    %33 = arith.divf %31, %32 : vector<8x128xf32>
    %34 = math.tanh %13 : vector<8x128xf32>
    %35 = vector.extract_strided_slice %33 {offsets = [0, 0], sizes = [8, 32], strides = [1, 1]} : vector<8x128xf32> to vector<8x32xf32>
    %36 = vector.extract_strided_slice %33 {offsets = [0, 32], sizes = [8, 32], strides = [1, 1]} : vector<8x128xf32> to vector<8x32xf32>
    %37 = vector.extract_strided_slice %34 {offsets = [0, 64], sizes = [8, 32], strides = [1, 1]} : vector<8x128xf32> to vector<8x32xf32>
    %38 = vector.extract_strided_slice %33 {offsets = [0, 96], sizes = [8, 32], strides = [1, 1]} : vector<8x128xf32> to vector<8x32xf32>
    %39 = arith.mulf %36, %11 : vector<8x32xf32>
    %40 = arith.mulf %35, %37 : vector<8x32xf32>
    %41 = arith.addf %39, %40 : vector<8x32xf32>
    %42 = math.tanh %41 : vector<8x32xf32>
    %43 = arith.mulf %38, %42 : vector<8x32xf32>
    %c0_17 = arith.constant 0 : index
    %c0_18 = arith.constant 0 : index
    %44 = vector.load %arg8[%c0_17, %c0_18] : memref<64x64xf32, #tpu.memory_space<vmem>>, vector<8x32xf32>
    tpu.vector_store %arg8[%c0_17, %c0_18], %28 {strides = array<i32>} : memref<64x64xf32, #tpu.memory_space<vmem>>, vector<8x32xf32>,
    %c56_19 = arith.constant 56 : index
    %c32 = arith.constant 32 : index
    %45 = vector.load %arg8[%c56_19, %c32] : memref<64x64xf32, #tpu.memory_space<vmem>>, vector<8x32xf32>
    tpu.vector_store %arg8[%c56_19, %c32], %43 {strides = array<i32>} : memref<64x64xf32, #tpu.memory_space<vmem>>, vector<8x32xf32>,
    %c8 = arith.constant 8 : index
    %c0_20 = arith.constant 0 : index
    %46 = vector.load %arg9[%c8, %c0_20] : memref<64x256xf32, #tpu.memory_space<vmem>>, vector<8x128xf32>
    %c48 = arith.constant 48 : index
    %c128_21 = arith.constant 128 : index
    %47 = vector.load %arg9[%c48, %c128_21] : memref<64x256xf32, #tpu.memory_space<vmem>>, vector<8x128xf32>
    %48 = tpu.concatenate %28, %43 in 1 : vector<8x32xf32>, vector<8x32xf32> -> vector<8x64xf32>
    %49 = arith.truncf %48 : vector<8x64xf32> to vector<8x64xbf16>
    %cst_22 = arith.constant dense<0.000000e+00> : vector<8x256xf32>
    %50 = tpu.matmul %49, %9, %cst_22 {dimension_numbers = #tpu.dot_dimension_numbers<[1], [0], [0], [1], [0, 0, 1, 1], [], []>} : vector<8x64xbf16>, vector<64x256xbf16>, vector<8x256xf32> -> vector<8x256xf32>
    %51 = vector.extract_strided_slice %50 {offsets = [0, 0], sizes = [8, 128], strides = [1, 1]} : vector<8x256xf32> to vector<8x128xf32>
    %52 = arith.addf %46, %51 : vector<8x128xf32>
    %53 = vector.extract_strided_slice %50 {offsets = [0, 128], sizes = [8, 128], strides = [1, 1]} : vector<8x256xf32> to vector<8x128xf32>
    %54 = arith.addf %47, %53 : vector<8x128xf32>
    %55 = arith.negf %52 : vector<8x128xf32>
    %56 = math.exp %55 : vector<8x128xf32>
    %cst_23 = arith.constant 1.000000e+00 : f32
    %57 = vector.broadcast %cst_23 : f32 to vector<8x128xf32>
    %58 = arith.addf %57, %56 : vector<8x128xf32>
    %59 = arith.divf %57, %58 : vector<8x128xf32>
    %60 = math.tanh %52 : vector<8x128xf32>
    %61 = vector.extract_strided_slice %59 {offsets = [0, 0], sizes = [8, 32], strides = [1, 1]} : vector<8x128xf32> to vector<8x32xf32>
    %62 = vector.extract_strided_slice %59 {offsets = [0, 32], sizes = [8, 32], strides = [1, 1]} : vector<8x128xf32> to vector<8x32xf32>
    %63 = vector.extract_strided_slice %60 {offsets = [0, 64], sizes = [8, 32], strides = [1, 1]} : vector<8x128xf32> to vector<8x32xf32>
    %64 = vector.extract_strided_slice %59 {offsets = [0, 96], sizes = [8, 32], strides = [1, 1]} : vector<8x128xf32> to vector<8x32xf32>
    %65 = arith.mulf %62, %26 : vector<8x32xf32>
    %66 = arith.mulf %61, %63 : vector<8x32xf32>
    %67 = arith.addf %65, %66 : vector<8x32xf32>
    %68 = math.tanh %67 : vector<8x32xf32>
    %69 = arith.mulf %64, %68 : vector<8x32xf32>
    %70 = arith.negf %54 : vector<8x128xf32>
    %71 = math.exp %70 : vector<8x128xf32>
    %cst_24 = arith.constant 1.000000e+00 : f32
    %72 = vector.broadcast %cst_24 : f32 to vector<8x128xf32>
    %73 = arith.addf %72, %71 : vector<8x128xf32>
    %74 = arith.divf %72, %73 : vector<8x128xf32>
    %75 = math.tanh %54 : vector<8x128xf32>
    %76 = vector.extract_strided_slice %74 {offsets = [0, 0], sizes = [8, 32], strides = [1, 1]} : vector<8x128xf32> to vector<8x32xf32>
    %77 = vector.extract_strided_slice %74 {offsets = [0, 32], sizes = [8, 32], strides = [1, 1]} : vector<8x128xf32> to vector<8x32xf32>
    %78 = vector.extract_strided_slice %75 {offsets = [0, 64], sizes = [8, 32], strides = [1, 1]} : vector<8x128xf32> to vector<8x32xf32>
    %79 = vector.extract_strided_slice %74 {offsets = [0, 96], sizes = [8, 32], strides = [1, 1]} : vector<8x128xf32> to vector<8x32xf32>
    %80 = arith.mulf %77, %41 : vector<8x32xf32>
    %81 = arith.mulf %76, %78 : vector<8x32xf32>
    %82 = arith.addf %80, %81 : vector<8x32xf32>
    %83 = math.tanh %82 : vector<8x32xf32>
    %84 = arith.mulf %79, %83 : vector<8x32xf32>
    %c8_25 = arith.constant 8 : index
    %c0_26 = arith.constant 0 : index
    %85 = vector.load %arg8[%c8_25, %c0_26] : memref<64x64xf32, #tpu.memory_space<vmem>>, vector<8x32xf32>
    tpu.vector_store %arg8[%c8_25, %c0_26], %69 {strides = array<i32>} : memref<64x64xf32, #tpu.memory_space<vmem>>, vector<8x32xf32>,
    %c48_27 = arith.constant 48 : index
    %c32_28 = arith.constant 32 : index
    %86 = vector.load %arg8[%c48_27, %c32_28] : memref<64x64xf32, #tpu.memory_space<vmem>>, vector<8x32xf32>
    tpu.vector_store %arg8[%c48_27, %c32_28], %84 {strides = array<i32>} : memref<64x64xf32, #tpu.memory_space<vmem>>, vector<8x32xf32>,
    %c16 = arith.constant 16 : index
    %c0_29 = arith.constant 0 : index
    %87 = vector.load %arg9[%c16, %c0_29] : memref<64x256xf32, #tpu.memory_space<vmem>>, vector<8x128xf32>
    %c40 = arith.constant 40 : index
    %c128_30 = arith.constant 128 : index
    %88 = vector.load %arg9[%c40, %c128_30] : memref<64x256xf32, #tpu.memory_space<vmem>>, vector<8x128xf32>
    %89 = tpu.concatenate %69, %84 in 1 : vector<8x32xf32>, vector<8x32xf32> -> vector<8x64xf32>
    %90 = arith.truncf %89 : vector<8x64xf32> to vector<8x64xbf16>
    %cst_31 = arith.constant dense<0.000000e+00> : vector<8x256xf32>
    %91 = tpu.matmul %90, %9, %cst_31 {dimension_numbers = #tpu.dot_dimension_numbers<[1], [0], [0], [1], [0, 0, 1, 1], [], []>} : vector<8x64xbf16>, vector<64x256xbf16>, vector<8x256xf32> -> vector<8x256xf32>
    %92 = vector.extract_strided_slice %91 {offsets = [0, 0], sizes = [8, 128], strides = [1, 1]} : vector<8x256xf32> to vector<8x128xf32>
    %93 = arith.addf %87, %92 : vector<8x128xf32>
    %94 = vector.extract_strided_slice %91 {offsets = [0, 128], sizes = [8, 128], strides = [1, 1]} : vector<8x256xf32> to vector<8x128xf32>
    %95 = arith.addf %88, %94 : vector<8x128xf32>
    %96 = arith.negf %93 : vector<8x128xf32>
    %97 = math.exp %96 : vector<8x128xf32>
    %cst_32 = arith.constant 1.000000e+00 : f32
    %98 = vector.broadcast %cst_32 : f32 to vector<8x128xf32>
    %99 = arith.addf %98, %97 : vector<8x128xf32>
    %100 = arith.divf %98, %99 : vector<8x128xf32>
    %101 = math.tanh %93 : vector<8x128xf32>
    %102 = vector.extract_strided_slice %100 {offsets = [0, 0], sizes = [8, 32], strides = [1, 1]} : vector<8x128xf32> to vector<8x32xf32>
    %103 = vector.extract_strided_slice %100 {offsets = [0, 32], sizes = [8, 32], strides = [1, 1]} : vector<8x128xf32> to vector<8x32xf32>
    %104 = vector.extract_strided_slice %101 {offsets = [0, 64], sizes = [8, 32], strides = [1, 1]} : vector<8x128xf32> to vector<8x32xf32>
    %105 = vector.extract_strided_slice %100 {offsets = [0, 96], sizes = [8, 32], strides = [1, 1]} : vector<8x128xf32> to vector<8x32xf32>
    %106 = arith.mulf %103, %67 : vector<8x32xf32>
    %107 = arith.mulf %102, %104 : vector<8x32xf32>
    %108 = arith.addf %106, %107 : vector<8x32xf32>
    %109 = math.tanh %108 : vector<8x32xf32>
    %110 = arith.mulf %105, %109 : vector<8x32xf32>
    %111 = arith.negf %95 : vector<8x128xf32>
    %112 = math.exp %111 : vector<8x128xf32>
    %cst_33 = arith.constant 1.000000e+00 : f32
    %113 = vector.broadcast %cst_33 : f32 to vector<8x128xf32>
    %114 = arith.addf %113, %112 : vector<8x128xf32>
    %115 = arith.divf %113, %114 : vector<8x128xf32>
    %116 = math.tanh %95 : vector<8x128xf32>
    %117 = vector.extract_strided_slice %115 {offsets = [0, 0], sizes = [8, 32], strides = [1, 1]} : vector<8x128xf32> to vector<8x32xf32>
    %118 = vector.extract_strided_slice %115 {offsets = [0, 32], sizes = [8, 32], strides = [1, 1]} : vector<8x128xf32> to vector<8x32xf32>
    %119 = vector.extract_strided_slice %116 {offsets = [0, 64], sizes = [8, 32], strides = [1, 1]} : vector<8x128xf32> to vector<8x32xf32>
    %120 = vector.extract_strided_slice %115 {offsets = [0, 96], sizes = [8, 32], strides = [1, 1]} : vector<8x128xf32> to vector<8x32xf32>
    %121 = arith.mulf %118, %82 : vector<8x32xf32>
    %122 = arith.mulf %117, %119 : vector<8x32xf32>
    %123 = arith.addf %121, %122 : vector<8x32xf32>
    %124 = math.tanh %123 : vector<8x32xf32>
    %125 = arith.mulf %120, %124 : vector<8x32xf32>
    %c16_34 = arith.constant 16 : index
    %c0_35 = arith.constant 0 : index
    %126 = vector.load %arg8[%c16_34, %c0_35] : memref<64x64xf32, #tpu.memory_space<vmem>>, vector<8x32xf32>
    tpu.vector_store %arg8[%c16_34, %c0_35], %110 {strides = array<i32>} : memref<64x64xf32, #tpu.memory_space<vmem>>, vector<8x32xf32>,
    %c40_36 = arith.constant 40 : index
    %c32_37 = arith.constant 32 : index
    %127 = vector.load %arg8[%c40_36, %c32_37] : memref<64x64xf32, #tpu.memory_space<vmem>>, vector<8x32xf32>
    tpu.vector_store %arg8[%c40_36, %c32_37], %125 {strides = array<i32>} : memref<64x64xf32, #tpu.memory_space<vmem>>, vector<8x32xf32>,
    %c24 = arith.constant 24 : index
    %c0_38 = arith.constant 0 : index
    %128 = vector.load %arg9[%c24, %c0_38] : memref<64x256xf32, #tpu.memory_space<vmem>>, vector<8x128xf32>
    %c32_39 = arith.constant 32 : index
    %c128_40 = arith.constant 128 : index
    %129 = vector.load %arg9[%c32_39, %c128_40] : memref<64x256xf32, #tpu.memory_space<vmem>>, vector<8x128xf32>
    %130 = tpu.concatenate %110, %125 in 1 : vector<8x32xf32>, vector<8x32xf32> -> vector<8x64xf32>
    %131 = arith.truncf %130 : vector<8x64xf32> to vector<8x64xbf16>
    %cst_41 = arith.constant dense<0.000000e+00> : vector<8x256xf32>
    %132 = tpu.matmul %131, %9, %cst_41 {dimension_numbers = #tpu.dot_dimension_numbers<[1], [0], [0], [1], [0, 0, 1, 1], [], []>} : vector<8x64xbf16>, vector<64x256xbf16>, vector<8x256xf32> -> vector<8x256xf32>
    %133 = vector.extract_strided_slice %132 {offsets = [0, 0], sizes = [8, 128], strides = [1, 1]} : vector<8x256xf32> to vector<8x128xf32>
    %134 = arith.addf %128, %133 : vector<8x128xf32>
    %135 = vector.extract_strided_slice %132 {offsets = [0, 128], sizes = [8, 128], strides = [1, 1]} : vector<8x256xf32> to vector<8x128xf32>
    %136 = arith.addf %129, %135 : vector<8x128xf32>
    %137 = arith.negf %134 : vector<8x128xf32>
    %138 = math.exp %137 : vector<8x128xf32>
    %cst_42 = arith.constant 1.000000e+00 : f32
    %139 = vector.broadcast %cst_42 : f32 to vector<8x128xf32>
    %140 = arith.addf %139, %138 : vector<8x128xf32>
    %141 = arith.divf %139, %140 : vector<8x128xf32>
    %142 = math.tanh %134 : vector<8x128xf32>
    %143 = vector.extract_strided_slice %141 {offsets = [0, 0], sizes = [8, 32], strides = [1, 1]} : vector<8x128xf32> to vector<8x32xf32>
    %144 = vector.extract_strided_slice %141 {offsets = [0, 32], sizes = [8, 32], strides = [1, 1]} : vector<8x128xf32> to vector<8x32xf32>
    %145 = vector.extract_strided_slice %142 {offsets = [0, 64], sizes = [8, 32], strides = [1, 1]} : vector<8x128xf32> to vector<8x32xf32>
    %146 = vector.extract_strided_slice %141 {offsets = [0, 96], sizes = [8, 32], strides = [1, 1]} : vector<8x128xf32> to vector<8x32xf32>
    %147 = arith.mulf %144, %108 : vector<8x32xf32>
    %148 = arith.mulf %143, %145 : vector<8x32xf32>
    %149 = arith.addf %147, %148 : vector<8x32xf32>
    %150 = math.tanh %149 : vector<8x32xf32>
    %151 = arith.mulf %146, %150 : vector<8x32xf32>
    %152 = arith.negf %136 : vector<8x128xf32>
    %153 = math.exp %152 : vector<8x128xf32>
    %cst_43 = arith.constant 1.000000e+00 : f32
    %154 = vector.broadcast %cst_43 : f32 to vector<8x128xf32>
    %155 = arith.addf %154, %153 : vector<8x128xf32>
    %156 = arith.divf %154, %155 : vector<8x128xf32>
    %157 = math.tanh %136 : vector<8x128xf32>
    %158 = vector.extract_strided_slice %156 {offsets = [0, 0], sizes = [8, 32], strides = [1, 1]} : vector<8x128xf32> to vector<8x32xf32>
    %159 = vector.extract_strided_slice %156 {offsets = [0, 32], sizes = [8, 32], strides = [1, 1]} : vector<8x128xf32> to vector<8x32xf32>
    %160 = vector.extract_strided_slice %157 {offsets = [0, 64], sizes = [8, 32], strides = [1, 1]} : vector<8x128xf32> to vector<8x32xf32>
    %161 = vector.extract_strided_slice %156 {offsets = [0, 96], sizes = [8, 32], strides = [1, 1]} : vector<8x128xf32> to vector<8x32xf32>
    %162 = arith.mulf %159, %123 : vector<8x32xf32>
    %163 = arith.mulf %158, %160 : vector<8x32xf32>
    %164 = arith.addf %162, %163 : vector<8x32xf32>
    %165 = math.tanh %164 : vector<8x32xf32>
    %166 = arith.mulf %161, %165 : vector<8x32xf32>
    %c24_44 = arith.constant 24 : index
    %c0_45 = arith.constant 0 : index
    %167 = vector.load %arg8[%c24_44, %c0_45] : memref<64x64xf32, #tpu.memory_space<vmem>>, vector<8x32xf32>
    tpu.vector_store %arg8[%c24_44, %c0_45], %151 {strides = array<i32>} : memref<64x64xf32, #tpu.memory_space<vmem>>, vector<8x32xf32>,
    %c32_46 = arith.constant 32 : index
    %c32_47 = arith.constant 32 : index
    %168 = vector.load %arg8[%c32_46, %c32_47] : memref<64x64xf32, #tpu.memory_space<vmem>>, vector<8x32xf32>
    tpu.vector_store %arg8[%c32_46, %c32_47], %166 {strides = array<i32>} : memref<64x64xf32, #tpu.memory_space<vmem>>, vector<8x32xf32>,
    %c32_48 = arith.constant 32 : index
    %c0_49 = arith.constant 0 : index
    %169 = vector.load %arg9[%c32_48, %c0_49] : memref<64x256xf32, #tpu.memory_space<vmem>>, vector<8x128xf32>
    %c24_50 = arith.constant 24 : index
    %c128_51 = arith.constant 128 : index
    %170 = vector.load %arg9[%c24_50, %c128_51] : memref<64x256xf32, #tpu.memory_space<vmem>>, vector<8x128xf32>
    %171 = tpu.concatenate %151, %166 in 1 : vector<8x32xf32>, vector<8x32xf32> -> vector<8x64xf32>
    %172 = arith.truncf %171 : vector<8x64xf32> to vector<8x64xbf16>
    %cst_52 = arith.constant dense<0.000000e+00> : vector<8x256xf32>
    %173 = tpu.matmul %172, %9, %cst_52 {dimension_numbers = #tpu.dot_dimension_numbers<[1], [0], [0], [1], [0, 0, 1, 1], [], []>} : vector<8x64xbf16>, vector<64x256xbf16>, vector<8x256xf32> -> vector<8x256xf32>
    %174 = vector.extract_strided_slice %173 {offsets = [0, 0], sizes = [8, 128], strides = [1, 1]} : vector<8x256xf32> to vector<8x128xf32>
    %175 = arith.addf %169, %174 : vector<8x128xf32>
    %176 = vector.extract_strided_slice %173 {offsets = [0, 128], sizes = [8, 128], strides = [1, 1]} : vector<8x256xf32> to vector<8x128xf32>
    %177 = arith.addf %170, %176 : vector<8x128xf32>
    %178 = arith.negf %175 : vector<8x128xf32>
    %179 = math.exp %178 : vector<8x128xf32>
    %cst_53 = arith.constant 1.000000e+00 : f32
    %180 = vector.broadcast %cst_53 : f32 to vector<8x128xf32>
    %181 = arith.addf %180, %179 : vector<8x128xf32>
    %182 = arith.divf %180, %181 : vector<8x128xf32>
    %183 = math.tanh %175 : vector<8x128xf32>
    %184 = vector.extract_strided_slice %182 {offsets = [0, 0], sizes = [8, 32], strides = [1, 1]} : vector<8x128xf32> to vector<8x32xf32>
    %185 = vector.extract_strided_slice %182 {offsets = [0, 32], sizes = [8, 32], strides = [1, 1]} : vector<8x128xf32> to vector<8x32xf32>
    %186 = vector.extract_strided_slice %183 {offsets = [0, 64], sizes = [8, 32], strides = [1, 1]} : vector<8x128xf32> to vector<8x32xf32>
    %187 = vector.extract_strided_slice %182 {offsets = [0, 96], sizes = [8, 32], strides = [1, 1]} : vector<8x128xf32> to vector<8x32xf32>
    %188 = arith.mulf %185, %149 : vector<8x32xf32>
    %189 = arith.mulf %184, %186 : vector<8x32xf32>
    %190 = arith.addf %188, %189 : vector<8x32xf32>
    %191 = math.tanh %190 : vector<8x32xf32>
    %192 = arith.mulf %187, %191 : vector<8x32xf32>
    %193 = arith.negf %177 : vector<8x128xf32>
    %194 = math.exp %193 : vector<8x128xf32>
    %cst_54 = arith.constant 1.000000e+00 : f32
    %195 = vector.broadcast %cst_54 : f32 to vector<8x128xf32>
    %196 = arith.addf %195, %194 : vector<8x128xf32>
    %197 = arith.divf %195, %196 : vector<8x128xf32>
    %198 = math.tanh %177 : vector<8x128xf32>
    %199 = vector.extract_strided_slice %197 {offsets = [0, 0], sizes = [8, 32], strides = [1, 1]} : vector<8x128xf32> to vector<8x32xf32>
    %200 = vector.extract_strided_slice %197 {offsets = [0, 32], sizes = [8, 32], strides = [1, 1]} : vector<8x128xf32> to vector<8x32xf32>
    %201 = vector.extract_strided_slice %198 {offsets = [0, 64], sizes = [8, 32], strides = [1, 1]} : vector<8x128xf32> to vector<8x32xf32>
    %202 = vector.extract_strided_slice %197 {offsets = [0, 96], sizes = [8, 32], strides = [1, 1]} : vector<8x128xf32> to vector<8x32xf32>
    %203 = arith.mulf %200, %164 : vector<8x32xf32>
    %204 = arith.mulf %199, %201 : vector<8x32xf32>
    %205 = arith.addf %203, %204 : vector<8x32xf32>
    %206 = math.tanh %205 : vector<8x32xf32>
    %207 = arith.mulf %202, %206 : vector<8x32xf32>
    %c32_55 = arith.constant 32 : index
    %c0_56 = arith.constant 0 : index
    %208 = vector.load %arg8[%c32_55, %c0_56] : memref<64x64xf32, #tpu.memory_space<vmem>>, vector<8x32xf32>
    tpu.vector_store %arg8[%c32_55, %c0_56], %192 {strides = array<i32>} : memref<64x64xf32, #tpu.memory_space<vmem>>, vector<8x32xf32>,
    %c24_57 = arith.constant 24 : index
    %c32_58 = arith.constant 32 : index
    %209 = vector.load %arg8[%c24_57, %c32_58] : memref<64x64xf32, #tpu.memory_space<vmem>>, vector<8x32xf32>
    tpu.vector_store %arg8[%c24_57, %c32_58], %207 {strides = array<i32>} : memref<64x64xf32, #tpu.memory_space<vmem>>, vector<8x32xf32>,
    %c40_59 = arith.constant 40 : index
    %c0_60 = arith.constant 0 : index
    %210 = vector.load %arg9[%c40_59, %c0_60] : memref<64x256xf32, #tpu.memory_space<vmem>>, vector<8x128xf32>
    %c16_61 = arith.constant 16 : index
    %c128_62 = arith.constant 128 : index
    %211 = vector.load %arg9[%c16_61, %c128_62] : memref<64x256xf32, #tpu.memory_space<vmem>>, vector<8x128xf32>
    %212 = tpu.concatenate %192, %207 in 1 : vector<8x32xf32>, vector<8x32xf32> -> vector<8x64xf32>
    %213 = arith.truncf %212 : vector<8x64xf32> to vector<8x64xbf16>
    %cst_63 = arith.constant dense<0.000000e+00> : vector<8x256xf32>
    %214 = tpu.matmul %213, %9, %cst_63 {dimension_numbers = #tpu.dot_dimension_numbers<[1], [0], [0], [1], [0, 0, 1, 1], [], []>} : vector<8x64xbf16>, vector<64x256xbf16>, vector<8x256xf32> -> vector<8x256xf32>
    %215 = vector.extract_strided_slice %214 {offsets = [0, 0], sizes = [8, 128], strides = [1, 1]} : vector<8x256xf32> to vector<8x128xf32>
    %216 = arith.addf %210, %215 : vector<8x128xf32>
    %217 = vector.extract_strided_slice %214 {offsets = [0, 128], sizes = [8, 128], strides = [1, 1]} : vector<8x256xf32> to vector<8x128xf32>
    %218 = arith.addf %211, %217 : vector<8x128xf32>
    %219 = arith.negf %216 : vector<8x128xf32>
    %220 = math.exp %219 : vector<8x128xf32>
    %cst_64 = arith.constant 1.000000e+00 : f32
    %221 = vector.broadcast %cst_64 : f32 to vector<8x128xf32>
    %222 = arith.addf %221, %220 : vector<8x128xf32>
    %223 = arith.divf %221, %222 : vector<8x128xf32>
    %224 = math.tanh %216 : vector<8x128xf32>
    %225 = vector.extract_strided_slice %223 {offsets = [0, 0], sizes = [8, 32], strides = [1, 1]} : vector<8x128xf32> to vector<8x32xf32>
    %226 = vector.extract_strided_slice %223 {offsets = [0, 32], sizes = [8, 32], strides = [1, 1]} : vector<8x128xf32> to vector<8x32xf32>
    %227 = vector.extract_strided_slice %224 {offsets = [0, 64], sizes = [8, 32], strides = [1, 1]} : vector<8x128xf32> to vector<8x32xf32>
    %228 = vector.extract_strided_slice %223 {offsets = [0, 96], sizes = [8, 32], strides = [1, 1]} : vector<8x128xf32> to vector<8x32xf32>
    %229 = arith.mulf %226, %190 : vector<8x32xf32>
    %230 = arith.mulf %225, %227 : vector<8x32xf32>
    %231 = arith.addf %229, %230 : vector<8x32xf32>
    %232 = math.tanh %231 : vector<8x32xf32>
    %233 = arith.mulf %228, %232 : vector<8x32xf32>
    %234 = arith.negf %218 : vector<8x128xf32>
    %235 = math.exp %234 : vector<8x128xf32>
    %cst_65 = arith.constant 1.000000e+00 : f32
    %236 = vector.broadcast %cst_65 : f32 to vector<8x128xf32>
    %237 = arith.addf %236, %235 : vector<8x128xf32>
    %238 = arith.divf %236, %237 : vector<8x128xf32>
    %239 = math.tanh %218 : vector<8x128xf32>
    %240 = vector.extract_strided_slice %238 {offsets = [0, 0], sizes = [8, 32], strides = [1, 1]} : vector<8x128xf32> to vector<8x32xf32>
    %241 = vector.extract_strided_slice %238 {offsets = [0, 32], sizes = [8, 32], strides = [1, 1]} : vector<8x128xf32> to vector<8x32xf32>
    %242 = vector.extract_strided_slice %239 {offsets = [0, 64], sizes = [8, 32], strides = [1, 1]} : vector<8x128xf32> to vector<8x32xf32>
    %243 = vector.extract_strided_slice %238 {offsets = [0, 96], sizes = [8, 32], strides = [1, 1]} : vector<8x128xf32> to vector<8x32xf32>
    %244 = arith.mulf %241, %205 : vector<8x32xf32>
    %245 = arith.mulf %240, %242 : vector<8x32xf32>
    %246 = arith.addf %244, %245 : vector<8x32xf32>
    %247 = math.tanh %246 : vector<8x32xf32>
    %248 = arith.mulf %243, %247 : vector<8x32xf32>
    %c40_66 = arith.constant 40 : index
    %c0_67 = arith.constant 0 : index
    %249 = vector.load %arg8[%c40_66, %c0_67] : memref<64x64xf32, #tpu.memory_space<vmem>>, vector<8x32xf32>
    tpu.vector_store %arg8[%c40_66, %c0_67], %233 {strides = array<i32>} : memref<64x64xf32, #tpu.memory_space<vmem>>, vector<8x32xf32>,
    %c16_68 = arith.constant 16 : index
    %c32_69 = arith.constant 32 : index
    %250 = vector.load %arg8[%c16_68, %c32_69] : memref<64x64xf32, #tpu.memory_space<vmem>>, vector<8x32xf32>
    tpu.vector_store %arg8[%c16_68, %c32_69], %248 {strides = array<i32>} : memref<64x64xf32, #tpu.memory_space<vmem>>, vector<8x32xf32>,
    %c48_70 = arith.constant 48 : index
    %c0_71 = arith.constant 0 : index
    %251 = vector.load %arg9[%c48_70, %c0_71] : memref<64x256xf32, #tpu.memory_space<vmem>>, vector<8x128xf32>
    %c8_72 = arith.constant 8 : index
    %c128_73 = arith.constant 128 : index
    %252 = vector.load %arg9[%c8_72, %c128_73] : memref<64x256xf32, #tpu.memory_space<vmem>>, vector<8x128xf32>
    %253 = tpu.concatenate %233, %248 in 1 : vector<8x32xf32>, vector<8x32xf32> -> vector<8x64xf32>
    %254 = arith.truncf %253 : vector<8x64xf32> to vector<8x64xbf16>
    %cst_74 = arith.constant dense<0.000000e+00> : vector<8x256xf32>
    %255 = tpu.matmul %254, %9, %cst_74 {dimension_numbers = #tpu.dot_dimension_numbers<[1], [0], [0], [1], [0, 0, 1, 1], [], []>} : vector<8x64xbf16>, vector<64x256xbf16>, vector<8x256xf32> -> vector<8x256xf32>
    %256 = vector.extract_strided_slice %255 {offsets = [0, 0], sizes = [8, 128], strides = [1, 1]} : vector<8x256xf32> to vector<8x128xf32>
    %257 = arith.addf %251, %256 : vector<8x128xf32>
    %258 = vector.extract_strided_slice %255 {offsets = [0, 128], sizes = [8, 128], strides = [1, 1]} : vector<8x256xf32> to vector<8x128xf32>
    %259 = arith.addf %252, %258 : vector<8x128xf32>
    %260 = arith.negf %257 : vector<8x128xf32>
    %261 = math.exp %260 : vector<8x128xf32>
    %cst_75 = arith.constant 1.000000e+00 : f32
    %262 = vector.broadcast %cst_75 : f32 to vector<8x128xf32>
    %263 = arith.addf %262, %261 : vector<8x128xf32>
    %264 = arith.divf %262, %263 : vector<8x128xf32>
    %265 = math.tanh %257 : vector<8x128xf32>
    %266 = vector.extract_strided_slice %264 {offsets = [0, 0], sizes = [8, 32], strides = [1, 1]} : vector<8x128xf32> to vector<8x32xf32>
    %267 = vector.extract_strided_slice %264 {offsets = [0, 32], sizes = [8, 32], strides = [1, 1]} : vector<8x128xf32> to vector<8x32xf32>
    %268 = vector.extract_strided_slice %265 {offsets = [0, 64], sizes = [8, 32], strides = [1, 1]} : vector<8x128xf32> to vector<8x32xf32>
    %269 = vector.extract_strided_slice %264 {offsets = [0, 96], sizes = [8, 32], strides = [1, 1]} : vector<8x128xf32> to vector<8x32xf32>
    %270 = arith.mulf %267, %231 : vector<8x32xf32>
    %271 = arith.mulf %266, %268 : vector<8x32xf32>
    %272 = arith.addf %270, %271 : vector<8x32xf32>
    %273 = math.tanh %272 : vector<8x32xf32>
    %274 = arith.mulf %269, %273 : vector<8x32xf32>
    %275 = arith.negf %259 : vector<8x128xf32>
    %276 = math.exp %275 : vector<8x128xf32>
    %cst_76 = arith.constant 1.000000e+00 : f32
    %277 = vector.broadcast %cst_76 : f32 to vector<8x128xf32>
    %278 = arith.addf %277, %276 : vector<8x128xf32>
    %279 = arith.divf %277, %278 : vector<8x128xf32>
    %280 = math.tanh %259 : vector<8x128xf32>
    %281 = vector.extract_strided_slice %279 {offsets = [0, 0], sizes = [8, 32], strides = [1, 1]} : vector<8x128xf32> to vector<8x32xf32>
    %282 = vector.extract_strided_slice %279 {offsets = [0, 32], sizes = [8, 32], strides = [1, 1]} : vector<8x128xf32> to vector<8x32xf32>
    %283 = vector.extract_strided_slice %280 {offsets = [0, 64], sizes = [8, 32], strides = [1, 1]} : vector<8x128xf32> to vector<8x32xf32>
    %284 = vector.extract_strided_slice %279 {offsets = [0, 96], sizes = [8, 32], strides = [1, 1]} : vector<8x128xf32> to vector<8x32xf32>
    %285 = arith.mulf %282, %246 : vector<8x32xf32>
    %286 = arith.mulf %281, %283 : vector<8x32xf32>
    %287 = arith.addf %285, %286 : vector<8x32xf32>
    %288 = math.tanh %287 : vector<8x32xf32>
    %289 = arith.mulf %284, %288 : vector<8x32xf32>
    %c48_77 = arith.constant 48 : index
    %c0_78 = arith.constant 0 : index
    %290 = vector.load %arg8[%c48_77, %c0_78] : memref<64x64xf32, #tpu.memory_space<vmem>>, vector<8x32xf32>
    tpu.vector_store %arg8[%c48_77, %c0_78], %274 {strides = array<i32>} : memref<64x64xf32, #tpu.memory_space<vmem>>, vector<8x32xf32>,
    %c8_79 = arith.constant 8 : index
    %c32_80 = arith.constant 32 : index
    %291 = vector.load %arg8[%c8_79, %c32_80] : memref<64x64xf32, #tpu.memory_space<vmem>>, vector<8x32xf32>
    tpu.vector_store %arg8[%c8_79, %c32_80], %289 {strides = array<i32>} : memref<64x64xf32, #tpu.memory_space<vmem>>, vector<8x32xf32>,
    %c56_81 = arith.constant 56 : index
    %c0_82 = arith.constant 0 : index
    %292 = vector.load %arg9[%c56_81, %c0_82] : memref<64x256xf32, #tpu.memory_space<vmem>>, vector<8x128xf32>
    %c0_83 = arith.constant 0 : index
    %c128_84 = arith.constant 128 : index
    %293 = vector.load %arg9[%c0_83, %c128_84] : memref<64x256xf32, #tpu.memory_space<vmem>>, vector<8x128xf32>
    %294 = tpu.concatenate %274, %289 in 1 : vector<8x32xf32>, vector<8x32xf32> -> vector<8x64xf32>
    %295 = arith.truncf %294 : vector<8x64xf32> to vector<8x64xbf16>
    %cst_85 = arith.constant dense<0.000000e+00> : vector<8x256xf32>
    %296 = tpu.matmul %295, %9, %cst_85 {dimension_numbers = #tpu.dot_dimension_numbers<[1], [0], [0], [1], [0, 0, 1, 1], [], []>} : vector<8x64xbf16>, vector<64x256xbf16>, vector<8x256xf32> -> vector<8x256xf32>
    %297 = vector.extract_strided_slice %296 {offsets = [0, 0], sizes = [8, 128], strides = [1, 1]} : vector<8x256xf32> to vector<8x128xf32>
    %298 = arith.addf %292, %297 : vector<8x128xf32>
    %299 = vector.extract_strided_slice %296 {offsets = [0, 128], sizes = [8, 128], strides = [1, 1]} : vector<8x256xf32> to vector<8x128xf32>
    %300 = arith.addf %293, %299 : vector<8x128xf32>
    %301 = arith.negf %298 : vector<8x128xf32>
    %302 = math.exp %301 : vector<8x128xf32>
    %cst_86 = arith.constant 1.000000e+00 : f32
    %303 = vector.broadcast %cst_86 : f32 to vector<8x128xf32>
    %304 = arith.addf %303, %302 : vector<8x128xf32>
    %305 = arith.divf %303, %304 : vector<8x128xf32>
    %306 = math.tanh %298 : vector<8x128xf32>
    %307 = vector.extract_strided_slice %305 {offsets = [0, 0], sizes = [8, 32], strides = [1, 1]} : vector<8x128xf32> to vector<8x32xf32>
    %308 = vector.extract_strided_slice %305 {offsets = [0, 32], sizes = [8, 32], strides = [1, 1]} : vector<8x128xf32> to vector<8x32xf32>
    %309 = vector.extract_strided_slice %306 {offsets = [0, 64], sizes = [8, 32], strides = [1, 1]} : vector<8x128xf32> to vector<8x32xf32>
    %310 = vector.extract_strided_slice %305 {offsets = [0, 96], sizes = [8, 32], strides = [1, 1]} : vector<8x128xf32> to vector<8x32xf32>
    %311 = arith.mulf %308, %272 : vector<8x32xf32>
    %312 = arith.mulf %307, %309 : vector<8x32xf32>
    %313 = arith.addf %311, %312 : vector<8x32xf32>
    %314 = math.tanh %313 : vector<8x32xf32>
    %315 = arith.mulf %310, %314 : vector<8x32xf32>
    %316 = arith.negf %300 : vector<8x128xf32>
    %317 = math.exp %316 : vector<8x128xf32>
    %cst_87 = arith.constant 1.000000e+00 : f32
    %318 = vector.broadcast %cst_87 : f32 to vector<8x128xf32>
    %319 = arith.addf %318, %317 : vector<8x128xf32>
    %320 = arith.divf %318, %319 : vector<8x128xf32>
    %321 = math.tanh %300 : vector<8x128xf32>
    %322 = vector.extract_strided_slice %320 {offsets = [0, 0], sizes = [8, 32], strides = [1, 1]} : vector<8x128xf32> to vector<8x32xf32>
    %323 = vector.extract_strided_slice %320 {offsets = [0, 32], sizes = [8, 32], strides = [1, 1]} : vector<8x128xf32> to vector<8x32xf32>
    %324 = vector.extract_strided_slice %321 {offsets = [0, 64], sizes = [8, 32], strides = [1, 1]} : vector<8x128xf32> to vector<8x32xf32>
    %325 = vector.extract_strided_slice %320 {offsets = [0, 96], sizes = [8, 32], strides = [1, 1]} : vector<8x128xf32> to vector<8x32xf32>
    %326 = arith.mulf %323, %287 : vector<8x32xf32>
    %327 = arith.mulf %322, %324 : vector<8x32xf32>
    %328 = arith.addf %326, %327 : vector<8x32xf32>
    %329 = math.tanh %328 : vector<8x32xf32>
    %330 = arith.mulf %325, %329 : vector<8x32xf32>
    %c56_88 = arith.constant 56 : index
    %c0_89 = arith.constant 0 : index
    %331 = vector.load %arg8[%c56_88, %c0_89] : memref<64x64xf32, #tpu.memory_space<vmem>>, vector<8x32xf32>
    tpu.vector_store %arg8[%c56_88, %c0_89], %315 {strides = array<i32>} : memref<64x64xf32, #tpu.memory_space<vmem>>, vector<8x32xf32>,
    %c0_90 = arith.constant 0 : index
    %c32_91 = arith.constant 32 : index
    %332 = vector.load %arg8[%c0_90, %c32_91] : memref<64x64xf32, #tpu.memory_space<vmem>>, vector<8x32xf32>
    tpu.vector_store %arg8[%c0_90, %c32_91], %330 {strides = array<i32>} : memref<64x64xf32, #tpu.memory_space<vmem>>, vector<8x32xf32>,
    %c0_92 = arith.constant 0 : index
    %c0_93 = arith.constant 0 : index
    %333 = vector.load %arg8[%c0_92, %c0_93] : memref<64x64xf32, #tpu.memory_space<vmem>>, vector<64x64xf32>
    %334 = arith.truncf %333 : vector<64x64xf32> to vector<64x64xbf16>
    %c0_94 = arith.constant 0 : index
    %c0_95 = arith.constant 0 : index
    %c0_96 = arith.constant 0 : index
    %335 = vector.load %arg2[%c0_94, %c0_95, %c0_96] : memref<3x64x256xbf16, #tpu.memory_space<vmem>>, vector<1x64x256xbf16>
    %336 = vector.shape_cast %335 : vector<1x64x256xbf16> to vector<64x256xbf16>
    %cst_97 = arith.constant dense<0.000000e+00> : vector<64x256xf32>
    %337 = tpu.matmul %334, %336, %cst_97 {dimension_numbers = #tpu.dot_dimension_numbers<[1], [0], [0], [1], [0, 0, 1, 1], [], []>} : vector<64x64xbf16>, vector<64x256xbf16>, vector<64x256xf32> -> vector<64x256xf32>
    %c1 = arith.constant 1 : index
    %c0_98 = arith.constant 0 : index
    %c0_99 = arith.constant 0 : index
    %338 = vector.load %arg4[%c1, %c0_98, %c0_99] : memref<4x1x256xf32, #tpu.memory_space<vmem>>, vector<1x1x256xf32>
    %339 = vector.shape_cast %338 : vector<1x1x256xf32> to vector<1x256xf32>
    %340 = vector.broadcast %339 : vector<1x256xf32> to vector<64x256xf32>
    %341 = arith.addf %337, %340 : vector<64x256xf32>
    %c0_100 = arith.constant 0 : index
    %c0_101 = arith.constant 0 : index
    %342 = vector.load %arg9[%c0_100, %c0_101] : memref<64x256xf32, #tpu.memory_space<vmem>>, vector<64x256xf32>
    tpu.vector_store %arg9[%c0_100, %c0_101], %341 {strides = array<i32>} : memref<64x256xf32, #tpu.memory_space<vmem>>, vector<64x256xf32>,
    %c1_102 = arith.constant 1 : index
    %c0_103 = arith.constant 0 : index
    %c0_104 = arith.constant 0 : index
    %343 = vector.load %arg3[%c1_102, %c0_103, %c0_104] : memref<4x64x256xbf16, #tpu.memory_space<vmem>>, vector<1x64x256xbf16>
    %344 = vector.shape_cast %343 : vector<1x64x256xbf16> to vector<64x256xbf16>
    %cst_105 = arith.constant 0.000000e+00 : f32
    %345 = vector.broadcast %cst_105 : f32 to vector<8x32xf32>
    %cst_106 = arith.constant 0.000000e+00 : f32
    %346 = vector.broadcast %cst_106 : f32 to vector<8x32xf32>
    %c0_107 = arith.constant 0 : index
    %c0_108 = arith.constant 0 : index
    %347 = vector.load %arg9[%c0_107, %c0_108] : memref<64x256xf32, #tpu.memory_space<vmem>>, vector<8x128xf32>
    %c56_109 = arith.constant 56 : index
    %c128_110 = arith.constant 128 : index
    %348 = vector.load %arg9[%c56_109, %c128_110] : memref<64x256xf32, #tpu.memory_space<vmem>>, vector<8x128xf32>
    %349 = arith.negf %347 : vector<8x128xf32>
    %350 = math.exp %349 : vector<8x128xf32>
    %cst_111 = arith.constant 1.000000e+00 : f32
    %351 = vector.broadcast %cst_111 : f32 to vector<8x128xf32>
    %352 = arith.addf %351, %350 : vector<8x128xf32>
    %353 = arith.divf %351, %352 : vector<8x128xf32>
    %354 = math.tanh %347 : vector<8x128xf32>
    %355 = vector.extract_strided_slice %353 {offsets = [0, 0], sizes = [8, 32], strides = [1, 1]} : vector<8x128xf32> to vector<8x32xf32>
    %356 = vector.extract_strided_slice %353 {offsets = [0, 32], sizes = [8, 32], strides = [1, 1]} : vector<8x128xf32> to vector<8x32xf32>
    %357 = vector.extract_strided_slice %354 {offsets = [0, 64], sizes = [8, 32], strides = [1, 1]} : vector<8x128xf32> to vector<8x32xf32>
    %358 = vector.extract_strided_slice %353 {offsets = [0, 96], sizes = [8, 32], strides = [1, 1]} : vector<8x128xf32> to vector<8x32xf32>
    %359 = arith.mulf %356, %345 : vector<8x32xf32>
    %360 = arith.mulf %355, %357 : vector<8x32xf32>
    %361 = arith.addf %359, %360 : vector<8x32xf32>
    %362 = math.tanh %361 : vector<8x32xf32>
    %363 = arith.mulf %358, %362 : vector<8x32xf32>
    %364 = arith.negf %348 : vector<8x128xf32>
    %365 = math.exp %364 : vector<8x128xf32>
    %cst_112 = arith.constant 1.000000e+00 : f32
    %366 = vector.broadcast %cst_112 : f32 to vector<8x128xf32>
    %367 = arith.addf %366, %365 : vector<8x128xf32>
    %368 = arith.divf %366, %367 : vector<8x128xf32>
    %369 = math.tanh %348 : vector<8x128xf32>
    %370 = vector.extract_strided_slice %368 {offsets = [0, 0], sizes = [8, 32], strides = [1, 1]} : vector<8x128xf32> to vector<8x32xf32>
    %371 = vector.extract_strided_slice %368 {offsets = [0, 32], sizes = [8, 32], strides = [1, 1]} : vector<8x128xf32> to vector<8x32xf32>
    %372 = vector.extract_strided_slice %369 {offsets = [0, 64], sizes = [8, 32], strides = [1, 1]} : vector<8x128xf32> to vector<8x32xf32>
    %373 = vector.extract_strided_slice %368 {offsets = [0, 96], sizes = [8, 32], strides = [1, 1]} : vector<8x128xf32> to vector<8x32xf32>
    %374 = arith.mulf %371, %346 : vector<8x32xf32>
    %375 = arith.mulf %370, %372 : vector<8x32xf32>
    %376 = arith.addf %374, %375 : vector<8x32xf32>
    %377 = math.tanh %376 : vector<8x32xf32>
    %378 = arith.mulf %373, %377 : vector<8x32xf32>
    %c0_113 = arith.constant 0 : index
    %c0_114 = arith.constant 0 : index
    %379 = vector.load %arg8[%c0_113, %c0_114] : memref<64x64xf32, #tpu.memory_space<vmem>>, vector<8x32xf32>
    tpu.vector_store %arg8[%c0_113, %c0_114], %363 {strides = array<i32>} : memref<64x64xf32, #tpu.memory_space<vmem>>, vector<8x32xf32>,
    %c56_115 = arith.constant 56 : index
    %c32_116 = arith.constant 32 : index
    %380 = vector.load %arg8[%c56_115, %c32_116] : memref<64x64xf32, #tpu.memory_space<vmem>>, vector<8x32xf32>
    tpu.vector_store %arg8[%c56_115, %c32_116], %378 {strides = array<i32>} : memref<64x64xf32, #tpu.memory_space<vmem>>, vector<8x32xf32>,
    %c8_117 = arith.constant 8 : index
    %c0_118 = arith.constant 0 : index
    %381 = vector.load %arg9[%c8_117, %c0_118] : memref<64x256xf32, #tpu.memory_space<vmem>>, vector<8x128xf32>
    %c48_119 = arith.constant 48 : index
    %c128_120 = arith.constant 128 : index
    %382 = vector.load %arg9[%c48_119, %c128_120] : memref<64x256xf32, #tpu.memory_space<vmem>>, vector<8x128xf32>
    %383 = tpu.concatenate %363, %378 in 1 : vector<8x32xf32>, vector<8x32xf32> -> vector<8x64xf32>
    %384 = arith.truncf %383 : vector<8x64xf32> to vector<8x64xbf16>
    %cst_121 = arith.constant dense<0.000000e+00> : vector<8x256xf32>
    %385 = tpu.matmul %384, %344, %cst_121 {dimension_numbers = #tpu.dot_dimension_numbers<[1], [0], [0], [1], [0, 0, 1, 1], [], []>} : vector<8x64xbf16>, vector<64x256xbf16>, vector<8x256xf32> -> vector<8x256xf32>
    %386 = vector.extract_strided_slice %385 {offsets = [0, 0], sizes = [8, 128], strides = [1, 1]} : vector<8x256xf32> to vector<8x128xf32>
    %387 = arith.addf %381, %386 : vector<8x128xf32>
    %388 = vector.extract_strided_slice %385 {offsets = [0, 128], sizes = [8, 128], strides = [1, 1]} : vector<8x256xf32> to vector<8x128xf32>
    %389 = arith.addf %382, %388 : vector<8x128xf32>
    %390 = arith.negf %387 : vector<8x128xf32>
    %391 = math.exp %390 : vector<8x128xf32>
    %cst_122 = arith.constant 1.000000e+00 : f32
    %392 = vector.broadcast %cst_122 : f32 to vector<8x128xf32>
    %393 = arith.addf %392, %391 : vector<8x128xf32>
    %394 = arith.divf %392, %393 : vector<8x128xf32>
    %395 = math.tanh %387 : vector<8x128xf32>
    %396 = vector.extract_strided_slice %394 {offsets = [0, 0], sizes = [8, 32], strides = [1, 1]} : vector<8x128xf32> to vector<8x32xf32>
    %397 = vector.extract_strided_slice %394 {offsets = [0, 32], sizes = [8, 32], strides = [1, 1]} : vector<8x128xf32> to vector<8x32xf32>
    %398 = vector.extract_strided_slice %395 {offsets = [0, 64], sizes = [8, 32], strides = [1, 1]} : vector<8x128xf32> to vector<8x32xf32>
    %399 = vector.extract_strided_slice %394 {offsets = [0, 96], sizes = [8, 32], strides = [1, 1]} : vector<8x128xf32> to vector<8x32xf32>
    %400 = arith.mulf %397, %361 : vector<8x32xf32>
    %401 = arith.mulf %396, %398 : vector<8x32xf32>
    %402 = arith.addf %400, %401 : vector<8x32xf32>
    %403 = math.tanh %402 : vector<8x32xf32>
    %404 = arith.mulf %399, %403 : vector<8x32xf32>
    %405 = arith.negf %389 : vector<8x128xf32>
    %406 = math.exp %405 : vector<8x128xf32>
    %cst_123 = arith.constant 1.000000e+00 : f32
    %407 = vector.broadcast %cst_123 : f32 to vector<8x128xf32>
    %408 = arith.addf %407, %406 : vector<8x128xf32>
    %409 = arith.divf %407, %408 : vector<8x128xf32>
    %410 = math.tanh %389 : vector<8x128xf32>
    %411 = vector.extract_strided_slice %409 {offsets = [0, 0], sizes = [8, 32], strides = [1, 1]} : vector<8x128xf32> to vector<8x32xf32>
    %412 = vector.extract_strided_slice %409 {offsets = [0, 32], sizes = [8, 32], strides = [1, 1]} : vector<8x128xf32> to vector<8x32xf32>
    %413 = vector.extract_strided_slice %410 {offsets = [0, 64], sizes = [8, 32], strides = [1, 1]} : vector<8x128xf32> to vector<8x32xf32>
    %414 = vector.extract_strided_slice %409 {offsets = [0, 96], sizes = [8, 32], strides = [1, 1]} : vector<8x128xf32> to vector<8x32xf32>
    %415 = arith.mulf %412, %376 : vector<8x32xf32>
    %416 = arith.mulf %411, %413 : vector<8x32xf32>
    %417 = arith.addf %415, %416 : vector<8x32xf32>
    %418 = math.tanh %417 : vector<8x32xf32>
    %419 = arith.mulf %414, %418 : vector<8x32xf32>
    %c8_124 = arith.constant 8 : index
    %c0_125 = arith.constant 0 : index
    %420 = vector.load %arg8[%c8_124, %c0_125] : memref<64x64xf32, #tpu.memory_space<vmem>>, vector<8x32xf32>
    tpu.vector_store %arg8[%c8_124, %c0_125], %404 {strides = array<i32>} : memref<64x64xf32, #tpu.memory_space<vmem>>, vector<8x32xf32>,
    %c48_126 = arith.constant 48 : index
    %c32_127 = arith.constant 32 : index
    %421 = vector.load %arg8[%c48_126, %c32_127] : memref<64x64xf32, #tpu.memory_space<vmem>>, vector<8x32xf32>
    tpu.vector_store %arg8[%c48_126, %c32_127], %419 {strides = array<i32>} : memref<64x64xf32, #tpu.memory_space<vmem>>, vector<8x32xf32>,
    %c16_128 = arith.constant 16 : index
    %c0_129 = arith.constant 0 : index
    %422 = vector.load %arg9[%c16_128, %c0_129] : memref<64x256xf32, #tpu.memory_space<vmem>>, vector<8x128xf32>
    %c40_130 = arith.constant 40 : index
    %c128_131 = arith.constant 128 : index
    %423 = vector.load %arg9[%c40_130, %c128_131] : memref<64x256xf32, #tpu.memory_space<vmem>>, vector<8x128xf32>
    %424 = tpu.concatenate %404, %419 in 1 : vector<8x32xf32>, vector<8x32xf32> -> vector<8x64xf32>
    %425 = arith.truncf %424 : vector<8x64xf32> to vector<8x64xbf16>
    %cst_132 = arith.constant dense<0.000000e+00> : vector<8x256xf32>
    %426 = tpu.matmul %425, %344, %cst_132 {dimension_numbers = #tpu.dot_dimension_numbers<[1], [0], [0], [1], [0, 0, 1, 1], [], []>} : vector<8x64xbf16>, vector<64x256xbf16>, vector<8x256xf32> -> vector<8x256xf32>
    %427 = vector.extract_strided_slice %426 {offsets = [0, 0], sizes = [8, 128], strides = [1, 1]} : vector<8x256xf32> to vector<8x128xf32>
    %428 = arith.addf %422, %427 : vector<8x128xf32>
    %429 = vector.extract_strided_slice %426 {offsets = [0, 128], sizes = [8, 128], strides = [1, 1]} : vector<8x256xf32> to vector<8x128xf32>
    %430 = arith.addf %423, %429 : vector<8x128xf32>
    %431 = arith.negf %428 : vector<8x128xf32>
    %432 = math.exp %431 : vector<8x128xf32>
    %cst_133 = arith.constant 1.000000e+00 : f32
    %433 = vector.broadcast %cst_133 : f32 to vector<8x128xf32>
    %434 = arith.addf %433, %432 : vector<8x128xf32>
    %435 = arith.divf %433, %434 : vector<8x128xf32>
    %436 = math.tanh %428 : vector<8x128xf32>
    %437 = vector.extract_strided_slice %435 {offsets = [0, 0], sizes = [8, 32], strides = [1, 1]} : vector<8x128xf32> to vector<8x32xf32>
    %438 = vector.extract_strided_slice %435 {offsets = [0, 32], sizes = [8, 32], strides = [1, 1]} : vector<8x128xf32> to vector<8x32xf32>
    %439 = vector.extract_strided_slice %436 {offsets = [0, 64], sizes = [8, 32], strides = [1, 1]} : vector<8x128xf32> to vector<8x32xf32>
    %440 = vector.extract_strided_slice %435 {offsets = [0, 96], sizes = [8, 32], strides = [1, 1]} : vector<8x128xf32> to vector<8x32xf32>
    %441 = arith.mulf %438, %402 : vector<8x32xf32>
    %442 = arith.mulf %437, %439 : vector<8x32xf32>
    %443 = arith.addf %441, %442 : vector<8x32xf32>
    %444 = math.tanh %443 : vector<8x32xf32>
    %445 = arith.mulf %440, %444 : vector<8x32xf32>
    %446 = arith.negf %430 : vector<8x128xf32>
    %447 = math.exp %446 : vector<8x128xf32>
    %cst_134 = arith.constant 1.000000e+00 : f32
    %448 = vector.broadcast %cst_134 : f32 to vector<8x128xf32>
    %449 = arith.addf %448, %447 : vector<8x128xf32>
    %450 = arith.divf %448, %449 : vector<8x128xf32>
    %451 = math.tanh %430 : vector<8x128xf32>
    %452 = vector.extract_strided_slice %450 {offsets = [0, 0], sizes = [8, 32], strides = [1, 1]} : vector<8x128xf32> to vector<8x32xf32>
    %453 = vector.extract_strided_slice %450 {offsets = [0, 32], sizes = [8, 32], strides = [1, 1]} : vector<8x128xf32> to vector<8x32xf32>
    %454 = vector.extract_strided_slice %451 {offsets = [0, 64], sizes = [8, 32], strides = [1, 1]} : vector<8x128xf32> to vector<8x32xf32>
    %455 = vector.extract_strided_slice %450 {offsets = [0, 96], sizes = [8, 32], strides = [1, 1]} : vector<8x128xf32> to vector<8x32xf32>
    %456 = arith.mulf %453, %417 : vector<8x32xf32>
    %457 = arith.mulf %452, %454 : vector<8x32xf32>
    %458 = arith.addf %456, %457 : vector<8x32xf32>
    %459 = math.tanh %458 : vector<8x32xf32>
    %460 = arith.mulf %455, %459 : vector<8x32xf32>
    %c16_135 = arith.constant 16 : index
    %c0_136 = arith.constant 0 : index
    %461 = vector.load %arg8[%c16_135, %c0_136] : memref<64x64xf32, #tpu.memory_space<vmem>>, vector<8x32xf32>
    tpu.vector_store %arg8[%c16_135, %c0_136], %445 {strides = array<i32>} : memref<64x64xf32, #tpu.memory_space<vmem>>, vector<8x32xf32>,
    %c40_137 = arith.constant 40 : index
    %c32_138 = arith.constant 32 : index
    %462 = vector.load %arg8[%c40_137, %c32_138] : memref<64x64xf32, #tpu.memory_space<vmem>>, vector<8x32xf32>
    tpu.vector_store %arg8[%c40_137, %c32_138], %460 {strides = array<i32>} : memref<64x64xf32, #tpu.memory_space<vmem>>, vector<8x32xf32>,
    %c24_139 = arith.constant 24 : index
    %c0_140 = arith.constant 0 : index
    %463 = vector.load %arg9[%c24_139, %c0_140] : memref<64x256xf32, #tpu.memory_space<vmem>>, vector<8x128xf32>
    %c32_141 = arith.constant 32 : index
    %c128_142 = arith.constant 128 : index
    %464 = vector.load %arg9[%c32_141, %c128_142] : memref<64x256xf32, #tpu.memory_space<vmem>>, vector<8x128xf32>
    %465 = tpu.concatenate %445, %460 in 1 : vector<8x32xf32>, vector<8x32xf32> -> vector<8x64xf32>
    %466 = arith.truncf %465 : vector<8x64xf32> to vector<8x64xbf16>
    %cst_143 = arith.constant dense<0.000000e+00> : vector<8x256xf32>
    %467 = tpu.matmul %466, %344, %cst_143 {dimension_numbers = #tpu.dot_dimension_numbers<[1], [0], [0], [1], [0, 0, 1, 1], [], []>} : vector<8x64xbf16>, vector<64x256xbf16>, vector<8x256xf32> -> vector<8x256xf32>
    %468 = vector.extract_strided_slice %467 {offsets = [0, 0], sizes = [8, 128], strides = [1, 1]} : vector<8x256xf32> to vector<8x128xf32>
    %469 = arith.addf %463, %468 : vector<8x128xf32>
    %470 = vector.extract_strided_slice %467 {offsets = [0, 128], sizes = [8, 128], strides = [1, 1]} : vector<8x256xf32> to vector<8x128xf32>
    %471 = arith.addf %464, %470 : vector<8x128xf32>
    %472 = arith.negf %469 : vector<8x128xf32>
    %473 = math.exp %472 : vector<8x128xf32>
    %cst_144 = arith.constant 1.000000e+00 : f32
    %474 = vector.broadcast %cst_144 : f32 to vector<8x128xf32>
    %475 = arith.addf %474, %473 : vector<8x128xf32>
    %476 = arith.divf %474, %475 : vector<8x128xf32>
    %477 = math.tanh %469 : vector<8x128xf32>
    %478 = vector.extract_strided_slice %476 {offsets = [0, 0], sizes = [8, 32], strides = [1, 1]} : vector<8x128xf32> to vector<8x32xf32>
    %479 = vector.extract_strided_slice %476 {offsets = [0, 32], sizes = [8, 32], strides = [1, 1]} : vector<8x128xf32> to vector<8x32xf32>
    %480 = vector.extract_strided_slice %477 {offsets = [0, 64], sizes = [8, 32], strides = [1, 1]} : vector<8x128xf32> to vector<8x32xf32>
    %481 = vector.extract_strided_slice %476 {offsets = [0, 96], sizes = [8, 32], strides = [1, 1]} : vector<8x128xf32> to vector<8x32xf32>
    %482 = arith.mulf %479, %443 : vector<8x32xf32>
    %483 = arith.mulf %478, %480 : vector<8x32xf32>
    %484 = arith.addf %482, %483 : vector<8x32xf32>
    %485 = math.tanh %484 : vector<8x32xf32>
    %486 = arith.mulf %481, %485 : vector<8x32xf32>
    %487 = arith.negf %471 : vector<8x128xf32>
    %488 = math.exp %487 : vector<8x128xf32>
    %cst_145 = arith.constant 1.000000e+00 : f32
    %489 = vector.broadcast %cst_145 : f32 to vector<8x128xf32>
    %490 = arith.addf %489, %488 : vector<8x128xf32>
    %491 = arith.divf %489, %490 : vector<8x128xf32>
    %492 = math.tanh %471 : vector<8x128xf32>
    %493 = vector.extract_strided_slice %491 {offsets = [0, 0], sizes = [8, 32], strides = [1, 1]} : vector<8x128xf32> to vector<8x32xf32>
    %494 = vector.extract_strided_slice %491 {offsets = [0, 32], sizes = [8, 32], strides = [1, 1]} : vector<8x128xf32> to vector<8x32xf32>
    %495 = vector.extract_strided_slice %492 {offsets = [0, 64], sizes = [8, 32], strides = [1, 1]} : vector<8x128xf32> to vector<8x32xf32>
    %496 = vector.extract_strided_slice %491 {offsets = [0, 96], sizes = [8, 32], strides = [1, 1]} : vector<8x128xf32> to vector<8x32xf32>
    %497 = arith.mulf %494, %458 : vector<8x32xf32>
    %498 = arith.mulf %493, %495 : vector<8x32xf32>
    %499 = arith.addf %497, %498 : vector<8x32xf32>
    %500 = math.tanh %499 : vector<8x32xf32>
    %501 = arith.mulf %496, %500 : vector<8x32xf32>
    %c24_146 = arith.constant 24 : index
    %c0_147 = arith.constant 0 : index
    %502 = vector.load %arg8[%c24_146, %c0_147] : memref<64x64xf32, #tpu.memory_space<vmem>>, vector<8x32xf32>
    tpu.vector_store %arg8[%c24_146, %c0_147], %486 {strides = array<i32>} : memref<64x64xf32, #tpu.memory_space<vmem>>, vector<8x32xf32>,
    %c32_148 = arith.constant 32 : index
    %c32_149 = arith.constant 32 : index
    %503 = vector.load %arg8[%c32_148, %c32_149] : memref<64x64xf32, #tpu.memory_space<vmem>>, vector<8x32xf32>
    tpu.vector_store %arg8[%c32_148, %c32_149], %501 {strides = array<i32>} : memref<64x64xf32, #tpu.memory_space<vmem>>, vector<8x32xf32>,
    %c32_150 = arith.constant 32 : index
    %c0_151 = arith.constant 0 : index
    %504 = vector.load %arg9[%c32_150, %c0_151] : memref<64x256xf32, #tpu.memory_space<vmem>>, vector<8x128xf32>
    %c24_152 = arith.constant 24 : index
    %c128_153 = arith.constant 128 : index
    %505 = vector.load %arg9[%c24_152, %c128_153] : memref<64x256xf32, #tpu.memory_space<vmem>>, vector<8x128xf32>
    %506 = tpu.concatenate %486, %501 in 1 : vector<8x32xf32>, vector<8x32xf32> -> vector<8x64xf32>
    %507 = arith.truncf %506 : vector<8x64xf32> to vector<8x64xbf16>
    %cst_154 = arith.constant dense<0.000000e+00> : vector<8x256xf32>
    %508 = tpu.matmul %507, %344, %cst_154 {dimension_numbers = #tpu.dot_dimension_numbers<[1], [0], [0], [1], [0, 0, 1, 1], [], []>} : vector<8x64xbf16>, vector<64x256xbf16>, vector<8x256xf32> -> vector<8x256xf32>
    %509 = vector.extract_strided_slice %508 {offsets = [0, 0], sizes = [8, 128], strides = [1, 1]} : vector<8x256xf32> to vector<8x128xf32>
    %510 = arith.addf %504, %509 : vector<8x128xf32>
    %511 = vector.extract_strided_slice %508 {offsets = [0, 128], sizes = [8, 128], strides = [1, 1]} : vector<8x256xf32> to vector<8x128xf32>
    %512 = arith.addf %505, %511 : vector<8x128xf32>
    %513 = arith.negf %510 : vector<8x128xf32>
    %514 = math.exp %513 : vector<8x128xf32>
    %cst_155 = arith.constant 1.000000e+00 : f32
    %515 = vector.broadcast %cst_155 : f32 to vector<8x128xf32>
    %516 = arith.addf %515, %514 : vector<8x128xf32>
    %517 = arith.divf %515, %516 : vector<8x128xf32>
    %518 = math.tanh %510 : vector<8x128xf32>
    %519 = vector.extract_strided_slice %517 {offsets = [0, 0], sizes = [8, 32], strides = [1, 1]} : vector<8x128xf32> to vector<8x32xf32>
    %520 = vector.extract_strided_slice %517 {offsets = [0, 32], sizes = [8, 32], strides = [1, 1]} : vector<8x128xf32> to vector<8x32xf32>
    %521 = vector.extract_strided_slice %518 {offsets = [0, 64], sizes = [8, 32], strides = [1, 1]} : vector<8x128xf32> to vector<8x32xf32>
    %522 = vector.extract_strided_slice %517 {offsets = [0, 96], sizes = [8, 32], strides = [1, 1]} : vector<8x128xf32> to vector<8x32xf32>
    %523 = arith.mulf %520, %484 : vector<8x32xf32>
    %524 = arith.mulf %519, %521 : vector<8x32xf32>
    %525 = arith.addf %523, %524 : vector<8x32xf32>
    %526 = math.tanh %525 : vector<8x32xf32>
    %527 = arith.mulf %522, %526 : vector<8x32xf32>
    %528 = arith.negf %512 : vector<8x128xf32>
    %529 = math.exp %528 : vector<8x128xf32>
    %cst_156 = arith.constant 1.000000e+00 : f32
    %530 = vector.broadcast %cst_156 : f32 to vector<8x128xf32>
    %531 = arith.addf %530, %529 : vector<8x128xf32>
    %532 = arith.divf %530, %531 : vector<8x128xf32>
    %533 = math.tanh %512 : vector<8x128xf32>
    %534 = vector.extract_strided_slice %532 {offsets = [0, 0], sizes = [8, 32], strides = [1, 1]} : vector<8x128xf32> to vector<8x32xf32>
    %535 = vector.extract_strided_slice %532 {offsets = [0, 32], sizes = [8, 32], strides = [1, 1]} : vector<8x128xf32> to vector<8x32xf32>
    %536 = vector.extract_strided_slice %533 {offsets = [0, 64], sizes = [8, 32], strides = [1, 1]} : vector<8x128xf32> to vector<8x32xf32>
    %537 = vector.extract_strided_slice %532 {offsets = [0, 96], sizes = [8, 32], strides = [1, 1]} : vector<8x128xf32> to vector<8x32xf32>
    %538 = arith.mulf %535, %499 : vector<8x32xf32>
    %539 = arith.mulf %534, %536 : vector<8x32xf32>
    %540 = arith.addf %538, %539 : vector<8x32xf32>
    %541 = math.tanh %540 : vector<8x32xf32>
    %542 = arith.mulf %537, %541 : vector<8x32xf32>
    %c32_157 = arith.constant 32 : index
    %c0_158 = arith.constant 0 : index
    %543 = vector.load %arg8[%c32_157, %c0_158] : memref<64x64xf32, #tpu.memory_space<vmem>>, vector<8x32xf32>
    tpu.vector_store %arg8[%c32_157, %c0_158], %527 {strides = array<i32>} : memref<64x64xf32, #tpu.memory_space<vmem>>, vector<8x32xf32>,
    %c24_159 = arith.constant 24 : index
    %c32_160 = arith.constant 32 : index
    %544 = vector.load %arg8[%c24_159, %c32_160] : memref<64x64xf32, #tpu.memory_space<vmem>>, vector<8x32xf32>
    tpu.vector_store %arg8[%c24_159, %c32_160], %542 {strides = array<i32>} : memref<64x64xf32, #tpu.memory_space<vmem>>, vector<8x32xf32>,
    %c40_161 = arith.constant 40 : index
    %c0_162 = arith.constant 0 : index
    %545 = vector.load %arg9[%c40_161, %c0_162] : memref<64x256xf32, #tpu.memory_space<vmem>>, vector<8x128xf32>
    %c16_163 = arith.constant 16 : index
    %c128_164 = arith.constant 128 : index
    %546 = vector.load %arg9[%c16_163, %c128_164] : memref<64x256xf32, #tpu.memory_space<vmem>>, vector<8x128xf32>
    %547 = tpu.concatenate %527, %542 in 1 : vector<8x32xf32>, vector<8x32xf32> -> vector<8x64xf32>
    %548 = arith.truncf %547 : vector<8x64xf32> to vector<8x64xbf16>
    %cst_165 = arith.constant dense<0.000000e+00> : vector<8x256xf32>
    %549 = tpu.matmul %548, %344, %cst_165 {dimension_numbers = #tpu.dot_dimension_numbers<[1], [0], [0], [1], [0, 0, 1, 1], [], []>} : vector<8x64xbf16>, vector<64x256xbf16>, vector<8x256xf32> -> vector<8x256xf32>
    %550 = vector.extract_strided_slice %549 {offsets = [0, 0], sizes = [8, 128], strides = [1, 1]} : vector<8x256xf32> to vector<8x128xf32>
    %551 = arith.addf %545, %550 : vector<8x128xf32>
    %552 = vector.extract_strided_slice %549 {offsets = [0, 128], sizes = [8, 128], strides = [1, 1]} : vector<8x256xf32> to vector<8x128xf32>
    %553 = arith.addf %546, %552 : vector<8x128xf32>
    %554 = arith.negf %551 : vector<8x128xf32>
    %555 = math.exp %554 : vector<8x128xf32>
    %cst_166 = arith.constant 1.000000e+00 : f32
    %556 = vector.broadcast %cst_166 : f32 to vector<8x128xf32>
    %557 = arith.addf %556, %555 : vector<8x128xf32>
    %558 = arith.divf %556, %557 : vector<8x128xf32>
    %559 = math.tanh %551 : vector<8x128xf32>
    %560 = vector.extract_strided_slice %558 {offsets = [0, 0], sizes = [8, 32], strides = [1, 1]} : vector<8x128xf32> to vector<8x32xf32>
    %561 = vector.extract_strided_slice %558 {offsets = [0, 32], sizes = [8, 32], strides = [1, 1]} : vector<8x128xf32> to vector<8x32xf32>
    %562 = vector.extract_strided_slice %559 {offsets = [0, 64], sizes = [8, 32], strides = [1, 1]} : vector<8x128xf32> to vector<8x32xf32>
    %563 = vector.extract_strided_slice %558 {offsets = [0, 96], sizes = [8, 32], strides = [1, 1]} : vector<8x128xf32> to vector<8x32xf32>
    %564 = arith.mulf %561, %525 : vector<8x32xf32>
    %565 = arith.mulf %560, %562 : vector<8x32xf32>
    %566 = arith.addf %564, %565 : vector<8x32xf32>
    %567 = math.tanh %566 : vector<8x32xf32>
    %568 = arith.mulf %563, %567 : vector<8x32xf32>
    %569 = arith.negf %553 : vector<8x128xf32>
    %570 = math.exp %569 : vector<8x128xf32>
    %cst_167 = arith.constant 1.000000e+00 : f32
    %571 = vector.broadcast %cst_167 : f32 to vector<8x128xf32>
    %572 = arith.addf %571, %570 : vector<8x128xf32>
    %573 = arith.divf %571, %572 : vector<8x128xf32>
    %574 = math.tanh %553 : vector<8x128xf32>
    %575 = vector.extract_strided_slice %573 {offsets = [0, 0], sizes = [8, 32], strides = [1, 1]} : vector<8x128xf32> to vector<8x32xf32>
    %576 = vector.extract_strided_slice %573 {offsets = [0, 32], sizes = [8, 32], strides = [1, 1]} : vector<8x128xf32> to vector<8x32xf32>
    %577 = vector.extract_strided_slice %574 {offsets = [0, 64], sizes = [8, 32], strides = [1, 1]} : vector<8x128xf32> to vector<8x32xf32>
    %578 = vector.extract_strided_slice %573 {offsets = [0, 96], sizes = [8, 32], strides = [1, 1]} : vector<8x128xf32> to vector<8x32xf32>
    %579 = arith.mulf %576, %540 : vector<8x32xf32>
    %580 = arith.mulf %575, %577 : vector<8x32xf32>
    %581 = arith.addf %579, %580 : vector<8x32xf32>
    %582 = math.tanh %581 : vector<8x32xf32>
    %583 = arith.mulf %578, %582 : vector<8x32xf32>
    %c40_168 = arith.constant 40 : index
    %c0_169 = arith.constant 0 : index
    %584 = vector.load %arg8[%c40_168, %c0_169] : memref<64x64xf32, #tpu.memory_space<vmem>>, vector<8x32xf32>
    tpu.vector_store %arg8[%c40_168, %c0_169], %568 {strides = array<i32>} : memref<64x64xf32, #tpu.memory_space<vmem>>, vector<8x32xf32>,
    %c16_170 = arith.constant 16 : index
    %c32_171 = arith.constant 32 : index
    %585 = vector.load %arg8[%c16_170, %c32_171] : memref<64x64xf32, #tpu.memory_space<vmem>>, vector<8x32xf32>
    tpu.vector_store %arg8[%c16_170, %c32_171], %583 {strides = array<i32>} : memref<64x64xf32, #tpu.memory_space<vmem>>, vector<8x32xf32>,
    %c48_172 = arith.constant 48 : index
    %c0_173 = arith.constant 0 : index
    %586 = vector.load %arg9[%c48_172, %c0_173] : memref<64x256xf32, #tpu.memory_space<vmem>>, vector<8x128xf32>
    %c8_174 = arith.constant 8 : index
    %c128_175 = arith.constant 128 : index
    %587 = vector.load %arg9[%c8_174, %c128_175] : memref<64x256xf32, #tpu.memory_space<vmem>>, vector<8x128xf32>
    %588 = tpu.concatenate %568, %583 in 1 : vector<8x32xf32>, vector<8x32xf32> -> vector<8x64xf32>
    %589 = arith.truncf %588 : vector<8x64xf32> to vector<8x64xbf16>
    %cst_176 = arith.constant dense<0.000000e+00> : vector<8x256xf32>
    %590 = tpu.matmul %589, %344, %cst_176 {dimension_numbers = #tpu.dot_dimension_numbers<[1], [0], [0], [1], [0, 0, 1, 1], [], []>} : vector<8x64xbf16>, vector<64x256xbf16>, vector<8x256xf32> -> vector<8x256xf32>
    %591 = vector.extract_strided_slice %590 {offsets = [0, 0], sizes = [8, 128], strides = [1, 1]} : vector<8x256xf32> to vector<8x128xf32>
    %592 = arith.addf %586, %591 : vector<8x128xf32>
    %593 = vector.extract_strided_slice %590 {offsets = [0, 128], sizes = [8, 128], strides = [1, 1]} : vector<8x256xf32> to vector<8x128xf32>
    %594 = arith.addf %587, %593 : vector<8x128xf32>
    %595 = arith.negf %592 : vector<8x128xf32>
    %596 = math.exp %595 : vector<8x128xf32>
    %cst_177 = arith.constant 1.000000e+00 : f32
    %597 = vector.broadcast %cst_177 : f32 to vector<8x128xf32>
    %598 = arith.addf %597, %596 : vector<8x128xf32>
    %599 = arith.divf %597, %598 : vector<8x128xf32>
    %600 = math.tanh %592 : vector<8x128xf32>
    %601 = vector.extract_strided_slice %599 {offsets = [0, 0], sizes = [8, 32], strides = [1, 1]} : vector<8x128xf32> to vector<8x32xf32>
    %602 = vector.extract_strided_slice %599 {offsets = [0, 32], sizes = [8, 32], strides = [1, 1]} : vector<8x128xf32> to vector<8x32xf32>
    %603 = vector.extract_strided_slice %600 {offsets = [0, 64], sizes = [8, 32], strides = [1, 1]} : vector<8x128xf32> to vector<8x32xf32>
    %604 = vector.extract_strided_slice %599 {offsets = [0, 96], sizes = [8, 32], strides = [1, 1]} : vector<8x128xf32> to vector<8x32xf32>
    %605 = arith.mulf %602, %566 : vector<8x32xf32>
    %606 = arith.mulf %601, %603 : vector<8x32xf32>
    %607 = arith.addf %605, %606 : vector<8x32xf32>
    %608 = math.tanh %607 : vector<8x32xf32>
    %609 = arith.mulf %604, %608 : vector<8x32xf32>
    %610 = arith.negf %594 : vector<8x128xf32>
    %611 = math.exp %610 : vector<8x128xf32>
    %cst_178 = arith.constant 1.000000e+00 : f32
    %612 = vector.broadcast %cst_178 : f32 to vector<8x128xf32>
    %613 = arith.addf %612, %611 : vector<8x128xf32>
    %614 = arith.divf %612, %613 : vector<8x128xf32>
    %615 = math.tanh %594 : vector<8x128xf32>
    %616 = vector.extract_strided_slice %614 {offsets = [0, 0], sizes = [8, 32], strides = [1, 1]} : vector<8x128xf32> to vector<8x32xf32>
    %617 = vector.extract_strided_slice %614 {offsets = [0, 32], sizes = [8, 32], strides = [1, 1]} : vector<8x128xf32> to vector<8x32xf32>
    %618 = vector.extract_strided_slice %615 {offsets = [0, 64], sizes = [8, 32], strides = [1, 1]} : vector<8x128xf32> to vector<8x32xf32>
    %619 = vector.extract_strided_slice %614 {offsets = [0, 96], sizes = [8, 32], strides = [1, 1]} : vector<8x128xf32> to vector<8x32xf32>
    %620 = arith.mulf %617, %581 : vector<8x32xf32>
    %621 = arith.mulf %616, %618 : vector<8x32xf32>
    %622 = arith.addf %620, %621 : vector<8x32xf32>
    %623 = math.tanh %622 : vector<8x32xf32>
    %624 = arith.mulf %619, %623 : vector<8x32xf32>
    %c48_179 = arith.constant 48 : index
    %c0_180 = arith.constant 0 : index
    %625 = vector.load %arg8[%c48_179, %c0_180] : memref<64x64xf32, #tpu.memory_space<vmem>>, vector<8x32xf32>
    tpu.vector_store %arg8[%c48_179, %c0_180], %609 {strides = array<i32>} : memref<64x64xf32, #tpu.memory_space<vmem>>, vector<8x32xf32>,
    %c8_181 = arith.constant 8 : index
    %c32_182 = arith.constant 32 : index
    %626 = vector.load %arg8[%c8_181, %c32_182] : memref<64x64xf32, #tpu.memory_space<vmem>>, vector<8x32xf32>
    tpu.vector_store %arg8[%c8_181, %c32_182], %624 {strides = array<i32>} : memref<64x64xf32, #tpu.memory_space<vmem>>, vector<8x32xf32>,
    %c56_183 = arith.constant 56 : index
    %c0_184 = arith.constant 0 : index
    %627 = vector.load %arg9[%c56_183, %c0_184] : memref<64x256xf32, #tpu.memory_space<vmem>>, vector<8x128xf32>
    %c0_185 = arith.constant 0 : index
    %c128_186 = arith.constant 128 : index
    %628 = vector.load %arg9[%c0_185, %c128_186] : memref<64x256xf32, #tpu.memory_space<vmem>>, vector<8x128xf32>
    %629 = tpu.concatenate %609, %624 in 1 : vector<8x32xf32>, vector<8x32xf32> -> vector<8x64xf32>
    %630 = arith.truncf %629 : vector<8x64xf32> to vector<8x64xbf16>
    %cst_187 = arith.constant dense<0.000000e+00> : vector<8x256xf32>
    %631 = tpu.matmul %630, %344, %cst_187 {dimension_numbers = #tpu.dot_dimension_numbers<[1], [0], [0], [1], [0, 0, 1, 1], [], []>} : vector<8x64xbf16>, vector<64x256xbf16>, vector<8x256xf32> -> vector<8x256xf32>
    %632 = vector.extract_strided_slice %631 {offsets = [0, 0], sizes = [8, 128], strides = [1, 1]} : vector<8x256xf32> to vector<8x128xf32>
    %633 = arith.addf %627, %632 : vector<8x128xf32>
    %634 = vector.extract_strided_slice %631 {offsets = [0, 128], sizes = [8, 128], strides = [1, 1]} : vector<8x256xf32> to vector<8x128xf32>
    %635 = arith.addf %628, %634 : vector<8x128xf32>
    %636 = arith.negf %633 : vector<8x128xf32>
    %637 = math.exp %636 : vector<8x128xf32>
    %cst_188 = arith.constant 1.000000e+00 : f32
    %638 = vector.broadcast %cst_188 : f32 to vector<8x128xf32>
    %639 = arith.addf %638, %637 : vector<8x128xf32>
    %640 = arith.divf %638, %639 : vector<8x128xf32>
    %641 = math.tanh %633 : vector<8x128xf32>
    %642 = vector.extract_strided_slice %640 {offsets = [0, 0], sizes = [8, 32], strides = [1, 1]} : vector<8x128xf32> to vector<8x32xf32>
    %643 = vector.extract_strided_slice %640 {offsets = [0, 32], sizes = [8, 32], strides = [1, 1]} : vector<8x128xf32> to vector<8x32xf32>
    %644 = vector.extract_strided_slice %641 {offsets = [0, 64], sizes = [8, 32], strides = [1, 1]} : vector<8x128xf32> to vector<8x32xf32>
    %645 = vector.extract_strided_slice %640 {offsets = [0, 96], sizes = [8, 32], strides = [1, 1]} : vector<8x128xf32> to vector<8x32xf32>
    %646 = arith.mulf %643, %607 : vector<8x32xf32>
    %647 = arith.mulf %642, %644 : vector<8x32xf32>
    %648 = arith.addf %646, %647 : vector<8x32xf32>
    %649 = math.tanh %648 : vector<8x32xf32>
    %650 = arith.mulf %645, %649 : vector<8x32xf32>
    %651 = arith.negf %635 : vector<8x128xf32>
    %652 = math.exp %651 : vector<8x128xf32>
    %cst_189 = arith.constant 1.000000e+00 : f32
    %653 = vector.broadcast %cst_189 : f32 to vector<8x128xf32>
    %654 = arith.addf %653, %652 : vector<8x128xf32>
    %655 = arith.divf %653, %654 : vector<8x128xf32>
    %656 = math.tanh %635 : vector<8x128xf32>
    %657 = vector.extract_strided_slice %655 {offsets = [0, 0], sizes = [8, 32], strides = [1, 1]} : vector<8x128xf32> to vector<8x32xf32>
    %658 = vector.extract_strided_slice %655 {offsets = [0, 32], sizes = [8, 32], strides = [1, 1]} : vector<8x128xf32> to vector<8x32xf32>
    %659 = vector.extract_strided_slice %656 {offsets = [0, 64], sizes = [8, 32], strides = [1, 1]} : vector<8x128xf32> to vector<8x32xf32>
    %660 = vector.extract_strided_slice %655 {offsets = [0, 96], sizes = [8, 32], strides = [1, 1]} : vector<8x128xf32> to vector<8x32xf32>
    %661 = arith.mulf %658, %622 : vector<8x32xf32>
    %662 = arith.mulf %657, %659 : vector<8x32xf32>
    %663 = arith.addf %661, %662 : vector<8x32xf32>
    %664 = math.tanh %663 : vector<8x32xf32>
    %665 = arith.mulf %660, %664 : vector<8x32xf32>
    %c56_190 = arith.constant 56 : index
    %c0_191 = arith.constant 0 : index
    %666 = vector.load %arg8[%c56_190, %c0_191] : memref<64x64xf32, #tpu.memory_space<vmem>>, vector<8x32xf32>
    tpu.vector_store %arg8[%c56_190, %c0_191], %650 {strides = array<i32>} : memref<64x64xf32, #tpu.memory_space<vmem>>, vector<8x32xf32>,
    %c0_192 = arith.constant 0 : index
    %c32_193 = arith.constant 32 : index
    %667 = vector.load %arg8[%c0_192, %c32_193] : memref<64x64xf32, #tpu.memory_space<vmem>>, vector<8x32xf32>
    tpu.vector_store %arg8[%c0_192, %c32_193], %665 {strides = array<i32>} : memref<64x64xf32, #tpu.memory_space<vmem>>, vector<8x32xf32>,
    %c0_194 = arith.constant 0 : index
    %c0_195 = arith.constant 0 : index
    %668 = vector.load %arg8[%c0_194, %c0_195] : memref<64x64xf32, #tpu.memory_space<vmem>>, vector<64x64xf32>
    %669 = arith.truncf %668 : vector<64x64xf32> to vector<64x64xbf16>
    %c1_196 = arith.constant 1 : index
    %c0_197 = arith.constant 0 : index
    %c0_198 = arith.constant 0 : index
    %670 = vector.load %arg2[%c1_196, %c0_197, %c0_198] : memref<3x64x256xbf16, #tpu.memory_space<vmem>>, vector<1x64x256xbf16>
    %671 = vector.shape_cast %670 : vector<1x64x256xbf16> to vector<64x256xbf16>
    %cst_199 = arith.constant dense<0.000000e+00> : vector<64x256xf32>
    %672 = tpu.matmul %669, %671, %cst_199 {dimension_numbers = #tpu.dot_dimension_numbers<[1], [0], [0], [1], [0, 0, 1, 1], [], []>} : vector<64x64xbf16>, vector<64x256xbf16>, vector<64x256xf32> -> vector<64x256xf32>
    %c2 = arith.constant 2 : index
    %c0_200 = arith.constant 0 : index
    %c0_201 = arith.constant 0 : index
    %673 = vector.load %arg4[%c2, %c0_200, %c0_201] : memref<4x1x256xf32, #tpu.memory_space<vmem>>, vector<1x1x256xf32>
    %674 = vector.shape_cast %673 : vector<1x1x256xf32> to vector<1x256xf32>
    %675 = vector.broadcast %674 : vector<1x256xf32> to vector<64x256xf32>
    %676 = arith.addf %672, %675 : vector<64x256xf32>
    %c0_202 = arith.constant 0 : index
    %c0_203 = arith.constant 0 : index
    %677 = vector.load %arg9[%c0_202, %c0_203] : memref<64x256xf32, #tpu.memory_space<vmem>>, vector<64x256xf32>
    tpu.vector_store %arg9[%c0_202, %c0_203], %676 {strides = array<i32>} : memref<64x256xf32, #tpu.memory_space<vmem>>, vector<64x256xf32>,
    %c2_204 = arith.constant 2 : index
    %c0_205 = arith.constant 0 : index
    %c0_206 = arith.constant 0 : index
    %678 = vector.load %arg3[%c2_204, %c0_205, %c0_206] : memref<4x64x256xbf16, #tpu.memory_space<vmem>>, vector<1x64x256xbf16>
    %679 = vector.shape_cast %678 : vector<1x64x256xbf16> to vector<64x256xbf16>
    %cst_207 = arith.constant 0.000000e+00 : f32
    %680 = vector.broadcast %cst_207 : f32 to vector<8x32xf32>
    %cst_208 = arith.constant 0.000000e+00 : f32
    %681 = vector.broadcast %cst_208 : f32 to vector<8x32xf32>
    %c0_209 = arith.constant 0 : index
    %c0_210 = arith.constant 0 : index
    %682 = vector.load %arg9[%c0_209, %c0_210] : memref<64x256xf32, #tpu.memory_space<vmem>>, vector<8x128xf32>
    %c56_211 = arith.constant 56 : index
    %c128_212 = arith.constant 128 : index
    %683 = vector.load %arg9[%c56_211, %c128_212] : memref<64x256xf32, #tpu.memory_space<vmem>>, vector<8x128xf32>
    %684 = arith.negf %682 : vector<8x128xf32>
    %685 = math.exp %684 : vector<8x128xf32>
    %cst_213 = arith.constant 1.000000e+00 : f32
    %686 = vector.broadcast %cst_213 : f32 to vector<8x128xf32>
    %687 = arith.addf %686, %685 : vector<8x128xf32>
    %688 = arith.divf %686, %687 : vector<8x128xf32>
    %689 = math.tanh %682 : vector<8x128xf32>
    %690 = vector.extract_strided_slice %688 {offsets = [0, 0], sizes = [8, 32], strides = [1, 1]} : vector<8x128xf32> to vector<8x32xf32>
    %691 = vector.extract_strided_slice %688 {offsets = [0, 32], sizes = [8, 32], strides = [1, 1]} : vector<8x128xf32> to vector<8x32xf32>
    %692 = vector.extract_strided_slice %689 {offsets = [0, 64], sizes = [8, 32], strides = [1, 1]} : vector<8x128xf32> to vector<8x32xf32>
    %693 = vector.extract_strided_slice %688 {offsets = [0, 96], sizes = [8, 32], strides = [1, 1]} : vector<8x128xf32> to vector<8x32xf32>
    %694 = arith.mulf %691, %680 : vector<8x32xf32>
    %695 = arith.mulf %690, %692 : vector<8x32xf32>
    %696 = arith.addf %694, %695 : vector<8x32xf32>
    %697 = math.tanh %696 : vector<8x32xf32>
    %698 = arith.mulf %693, %697 : vector<8x32xf32>
    %699 = arith.negf %683 : vector<8x128xf32>
    %700 = math.exp %699 : vector<8x128xf32>
    %cst_214 = arith.constant 1.000000e+00 : f32
    %701 = vector.broadcast %cst_214 : f32 to vector<8x128xf32>
    %702 = arith.addf %701, %700 : vector<8x128xf32>
    %703 = arith.divf %701, %702 : vector<8x128xf32>
    %704 = math.tanh %683 : vector<8x128xf32>
    %705 = vector.extract_strided_slice %703 {offsets = [0, 0], sizes = [8, 32], strides = [1, 1]} : vector<8x128xf32> to vector<8x32xf32>
    %706 = vector.extract_strided_slice %703 {offsets = [0, 32], sizes = [8, 32], strides = [1, 1]} : vector<8x128xf32> to vector<8x32xf32>
    %707 = vector.extract_strided_slice %704 {offsets = [0, 64], sizes = [8, 32], strides = [1, 1]} : vector<8x128xf32> to vector<8x32xf32>
    %708 = vector.extract_strided_slice %703 {offsets = [0, 96], sizes = [8, 32], strides = [1, 1]} : vector<8x128xf32> to vector<8x32xf32>
    %709 = arith.mulf %706, %681 : vector<8x32xf32>
    %710 = arith.mulf %705, %707 : vector<8x32xf32>
    %711 = arith.addf %709, %710 : vector<8x32xf32>
    %712 = math.tanh %711 : vector<8x32xf32>
    %713 = arith.mulf %708, %712 : vector<8x32xf32>
    %c0_215 = arith.constant 0 : index
    %c0_216 = arith.constant 0 : index
    %714 = vector.load %arg8[%c0_215, %c0_216] : memref<64x64xf32, #tpu.memory_space<vmem>>, vector<8x32xf32>
    tpu.vector_store %arg8[%c0_215, %c0_216], %698 {strides = array<i32>} : memref<64x64xf32, #tpu.memory_space<vmem>>, vector<8x32xf32>,
    %c56_217 = arith.constant 56 : index
    %c32_218 = arith.constant 32 : index
    %715 = vector.load %arg8[%c56_217, %c32_218] : memref<64x64xf32, #tpu.memory_space<vmem>>, vector<8x32xf32>
    tpu.vector_store %arg8[%c56_217, %c32_218], %713 {strides = array<i32>} : memref<64x64xf32, #tpu.memory_space<vmem>>, vector<8x32xf32>,
    %c8_219 = arith.constant 8 : index
    %c0_220 = arith.constant 0 : index
    %716 = vector.load %arg9[%c8_219, %c0_220] : memref<64x256xf32, #tpu.memory_space<vmem>>, vector<8x128xf32>
    %c48_221 = arith.constant 48 : index
    %c128_222 = arith.constant 128 : index
    %717 = vector.load %arg9[%c48_221, %c128_222] : memref<64x256xf32, #tpu.memory_space<vmem>>, vector<8x128xf32>
    %718 = tpu.concatenate %698, %713 in 1 : vector<8x32xf32>, vector<8x32xf32> -> vector<8x64xf32>
    %719 = arith.truncf %718 : vector<8x64xf32> to vector<8x64xbf16>
    %cst_223 = arith.constant dense<0.000000e+00> : vector<8x256xf32>
    %720 = tpu.matmul %719, %679, %cst_223 {dimension_numbers = #tpu.dot_dimension_numbers<[1], [0], [0], [1], [0, 0, 1, 1], [], []>} : vector<8x64xbf16>, vector<64x256xbf16>, vector<8x256xf32> -> vector<8x256xf32>
    %721 = vector.extract_strided_slice %720 {offsets = [0, 0], sizes = [8, 128], strides = [1, 1]} : vector<8x256xf32> to vector<8x128xf32>
    %722 = arith.addf %716, %721 : vector<8x128xf32>
    %723 = vector.extract_strided_slice %720 {offsets = [0, 128], sizes = [8, 128], strides = [1, 1]} : vector<8x256xf32> to vector<8x128xf32>
    %724 = arith.addf %717, %723 : vector<8x128xf32>
    %725 = arith.negf %722 : vector<8x128xf32>
    %726 = math.exp %725 : vector<8x128xf32>
    %cst_224 = arith.constant 1.000000e+00 : f32
    %727 = vector.broadcast %cst_224 : f32 to vector<8x128xf32>
    %728 = arith.addf %727, %726 : vector<8x128xf32>
    %729 = arith.divf %727, %728 : vector<8x128xf32>
    %730 = math.tanh %722 : vector<8x128xf32>
    %731 = vector.extract_strided_slice %729 {offsets = [0, 0], sizes = [8, 32], strides = [1, 1]} : vector<8x128xf32> to vector<8x32xf32>
    %732 = vector.extract_strided_slice %729 {offsets = [0, 32], sizes = [8, 32], strides = [1, 1]} : vector<8x128xf32> to vector<8x32xf32>
    %733 = vector.extract_strided_slice %730 {offsets = [0, 64], sizes = [8, 32], strides = [1, 1]} : vector<8x128xf32> to vector<8x32xf32>
    %734 = vector.extract_strided_slice %729 {offsets = [0, 96], sizes = [8, 32], strides = [1, 1]} : vector<8x128xf32> to vector<8x32xf32>
    %735 = arith.mulf %732, %696 : vector<8x32xf32>
    %736 = arith.mulf %731, %733 : vector<8x32xf32>
    %737 = arith.addf %735, %736 : vector<8x32xf32>
    %738 = math.tanh %737 : vector<8x32xf32>
    %739 = arith.mulf %734, %738 : vector<8x32xf32>
    %740 = arith.negf %724 : vector<8x128xf32>
    %741 = math.exp %740 : vector<8x128xf32>
    %cst_225 = arith.constant 1.000000e+00 : f32
    %742 = vector.broadcast %cst_225 : f32 to vector<8x128xf32>
    %743 = arith.addf %742, %741 : vector<8x128xf32>
    %744 = arith.divf %742, %743 : vector<8x128xf32>
    %745 = math.tanh %724 : vector<8x128xf32>
    %746 = vector.extract_strided_slice %744 {offsets = [0, 0], sizes = [8, 32], strides = [1, 1]} : vector<8x128xf32> to vector<8x32xf32>
    %747 = vector.extract_strided_slice %744 {offsets = [0, 32], sizes = [8, 32], strides = [1, 1]} : vector<8x128xf32> to vector<8x32xf32>
    %748 = vector.extract_strided_slice %745 {offsets = [0, 64], sizes = [8, 32], strides = [1, 1]} : vector<8x128xf32> to vector<8x32xf32>
    %749 = vector.extract_strided_slice %744 {offsets = [0, 96], sizes = [8, 32], strides = [1, 1]} : vector<8x128xf32> to vector<8x32xf32>
    %750 = arith.mulf %747, %711 : vector<8x32xf32>
    %751 = arith.mulf %746, %748 : vector<8x32xf32>
    %752 = arith.addf %750, %751 : vector<8x32xf32>
    %753 = math.tanh %752 : vector<8x32xf32>
    %754 = arith.mulf %749, %753 : vector<8x32xf32>
    %c8_226 = arith.constant 8 : index
    %c0_227 = arith.constant 0 : index
    %755 = vector.load %arg8[%c8_226, %c0_227] : memref<64x64xf32, #tpu.memory_space<vmem>>, vector<8x32xf32>
    tpu.vector_store %arg8[%c8_226, %c0_227], %739 {strides = array<i32>} : memref<64x64xf32, #tpu.memory_space<vmem>>, vector<8x32xf32>,
    %c48_228 = arith.constant 48 : index
    %c32_229 = arith.constant 32 : index
    %756 = vector.load %arg8[%c48_228, %c32_229] : memref<64x64xf32, #tpu.memory_space<vmem>>, vector<8x32xf32>
    tpu.vector_store %arg8[%c48_228, %c32_229], %754 {strides = array<i32>} : memref<64x64xf32, #tpu.memory_space<vmem>>, vector<8x32xf32>,
    %c16_230 = arith.constant 16 : index
    %c0_231 = arith.constant 0 : index
    %757 = vector.load %arg9[%c16_230, %c0_231] : memref<64x256xf32, #tpu.memory_space<vmem>>, vector<8x128xf32>
    %c40_232 = arith.constant 40 : index
    %c128_233 = arith.constant 128 : index
    %758 = vector.load %arg9[%c40_232, %c128_233] : memref<64x256xf32, #tpu.memory_space<vmem>>, vector<8x128xf32>
    %759 = tpu.concatenate %739, %754 in 1 : vector<8x32xf32>, vector<8x32xf32> -> vector<8x64xf32>
    %760 = arith.truncf %759 : vector<8x64xf32> to vector<8x64xbf16>
    %cst_234 = arith.constant dense<0.000000e+00> : vector<8x256xf32>
    %761 = tpu.matmul %760, %679, %cst_234 {dimension_numbers = #tpu.dot_dimension_numbers<[1], [0], [0], [1], [0, 0, 1, 1], [], []>} : vector<8x64xbf16>, vector<64x256xbf16>, vector<8x256xf32> -> vector<8x256xf32>
    %762 = vector.extract_strided_slice %761 {offsets = [0, 0], sizes = [8, 128], strides = [1, 1]} : vector<8x256xf32> to vector<8x128xf32>
    %763 = arith.addf %757, %762 : vector<8x128xf32>
    %764 = vector.extract_strided_slice %761 {offsets = [0, 128], sizes = [8, 128], strides = [1, 1]} : vector<8x256xf32> to vector<8x128xf32>
    %765 = arith.addf %758, %764 : vector<8x128xf32>
    %766 = arith.negf %763 : vector<8x128xf32>
    %767 = math.exp %766 : vector<8x128xf32>
    %cst_235 = arith.constant 1.000000e+00 : f32
    %768 = vector.broadcast %cst_235 : f32 to vector<8x128xf32>
    %769 = arith.addf %768, %767 : vector<8x128xf32>
    %770 = arith.divf %768, %769 : vector<8x128xf32>
    %771 = math.tanh %763 : vector<8x128xf32>
    %772 = vector.extract_strided_slice %770 {offsets = [0, 0], sizes = [8, 32], strides = [1, 1]} : vector<8x128xf32> to vector<8x32xf32>
    %773 = vector.extract_strided_slice %770 {offsets = [0, 32], sizes = [8, 32], strides = [1, 1]} : vector<8x128xf32> to vector<8x32xf32>
    %774 = vector.extract_strided_slice %771 {offsets = [0, 64], sizes = [8, 32], strides = [1, 1]} : vector<8x128xf32> to vector<8x32xf32>
    %775 = vector.extract_strided_slice %770 {offsets = [0, 96], sizes = [8, 32], strides = [1, 1]} : vector<8x128xf32> to vector<8x32xf32>
    %776 = arith.mulf %773, %737 : vector<8x32xf32>
    %777 = arith.mulf %772, %774 : vector<8x32xf32>
    %778 = arith.addf %776, %777 : vector<8x32xf32>
    %779 = math.tanh %778 : vector<8x32xf32>
    %780 = arith.mulf %775, %779 : vector<8x32xf32>
    %781 = arith.negf %765 : vector<8x128xf32>
    %782 = math.exp %781 : vector<8x128xf32>
    %cst_236 = arith.constant 1.000000e+00 : f32
    %783 = vector.broadcast %cst_236 : f32 to vector<8x128xf32>
    %784 = arith.addf %783, %782 : vector<8x128xf32>
    %785 = arith.divf %783, %784 : vector<8x128xf32>
    %786 = math.tanh %765 : vector<8x128xf32>
    %787 = vector.extract_strided_slice %785 {offsets = [0, 0], sizes = [8, 32], strides = [1, 1]} : vector<8x128xf32> to vector<8x32xf32>
    %788 = vector.extract_strided_slice %785 {offsets = [0, 32], sizes = [8, 32], strides = [1, 1]} : vector<8x128xf32> to vector<8x32xf32>
    %789 = vector.extract_strided_slice %786 {offsets = [0, 64], sizes = [8, 32], strides = [1, 1]} : vector<8x128xf32> to vector<8x32xf32>
    %790 = vector.extract_strided_slice %785 {offsets = [0, 96], sizes = [8, 32], strides = [1, 1]} : vector<8x128xf32> to vector<8x32xf32>
    %791 = arith.mulf %788, %752 : vector<8x32xf32>
    %792 = arith.mulf %787, %789 : vector<8x32xf32>
    %793 = arith.addf %791, %792 : vector<8x32xf32>
    %794 = math.tanh %793 : vector<8x32xf32>
    %795 = arith.mulf %790, %794 : vector<8x32xf32>
    %c16_237 = arith.constant 16 : index
    %c0_238 = arith.constant 0 : index
    %796 = vector.load %arg8[%c16_237, %c0_238] : memref<64x64xf32, #tpu.memory_space<vmem>>, vector<8x32xf32>
    tpu.vector_store %arg8[%c16_237, %c0_238], %780 {strides = array<i32>} : memref<64x64xf32, #tpu.memory_space<vmem>>, vector<8x32xf32>,
    %c40_239 = arith.constant 40 : index
    %c32_240 = arith.constant 32 : index
    %797 = vector.load %arg8[%c40_239, %c32_240] : memref<64x64xf32, #tpu.memory_space<vmem>>, vector<8x32xf32>
    tpu.vector_store %arg8[%c40_239, %c32_240], %795 {strides = array<i32>} : memref<64x64xf32, #tpu.memory_space<vmem>>, vector<8x32xf32>,
    %c24_241 = arith.constant 24 : index
    %c0_242 = arith.constant 0 : index
    %798 = vector.load %arg9[%c24_241, %c0_242] : memref<64x256xf32, #tpu.memory_space<vmem>>, vector<8x128xf32>
    %c32_243 = arith.constant 32 : index
    %c128_244 = arith.constant 128 : index
    %799 = vector.load %arg9[%c32_243, %c128_244] : memref<64x256xf32, #tpu.memory_space<vmem>>, vector<8x128xf32>
    %800 = tpu.concatenate %780, %795 in 1 : vector<8x32xf32>, vector<8x32xf32> -> vector<8x64xf32>
    %801 = arith.truncf %800 : vector<8x64xf32> to vector<8x64xbf16>
    %cst_245 = arith.constant dense<0.000000e+00> : vector<8x256xf32>
    %802 = tpu.matmul %801, %679, %cst_245 {dimension_numbers = #tpu.dot_dimension_numbers<[1], [0], [0], [1], [0, 0, 1, 1], [], []>} : vector<8x64xbf16>, vector<64x256xbf16>, vector<8x256xf32> -> vector<8x256xf32>
    %803 = vector.extract_strided_slice %802 {offsets = [0, 0], sizes = [8, 128], strides = [1, 1]} : vector<8x256xf32> to vector<8x128xf32>
    %804 = arith.addf %798, %803 : vector<8x128xf32>
    %805 = vector.extract_strided_slice %802 {offsets = [0, 128], sizes = [8, 128], strides = [1, 1]} : vector<8x256xf32> to vector<8x128xf32>
    %806 = arith.addf %799, %805 : vector<8x128xf32>
    %807 = arith.negf %804 : vector<8x128xf32>
    %808 = math.exp %807 : vector<8x128xf32>
    %cst_246 = arith.constant 1.000000e+00 : f32
    %809 = vector.broadcast %cst_246 : f32 to vector<8x128xf32>
    %810 = arith.addf %809, %808 : vector<8x128xf32>
    %811 = arith.divf %809, %810 : vector<8x128xf32>
    %812 = math.tanh %804 : vector<8x128xf32>
    %813 = vector.extract_strided_slice %811 {offsets = [0, 0], sizes = [8, 32], strides = [1, 1]} : vector<8x128xf32> to vector<8x32xf32>
    %814 = vector.extract_strided_slice %811 {offsets = [0, 32], sizes = [8, 32], strides = [1, 1]} : vector<8x128xf32> to vector<8x32xf32>
    %815 = vector.extract_strided_slice %812 {offsets = [0, 64], sizes = [8, 32], strides = [1, 1]} : vector<8x128xf32> to vector<8x32xf32>
    %816 = vector.extract_strided_slice %811 {offsets = [0, 96], sizes = [8, 32], strides = [1, 1]} : vector<8x128xf32> to vector<8x32xf32>
    %817 = arith.mulf %814, %778 : vector<8x32xf32>
    %818 = arith.mulf %813, %815 : vector<8x32xf32>
    %819 = arith.addf %817, %818 : vector<8x32xf32>
    %820 = math.tanh %819 : vector<8x32xf32>
    %821 = arith.mulf %816, %820 : vector<8x32xf32>
    %822 = arith.negf %806 : vector<8x128xf32>
    %823 = math.exp %822 : vector<8x128xf32>
    %cst_247 = arith.constant 1.000000e+00 : f32
    %824 = vector.broadcast %cst_247 : f32 to vector<8x128xf32>
    %825 = arith.addf %824, %823 : vector<8x128xf32>
    %826 = arith.divf %824, %825 : vector<8x128xf32>
    %827 = math.tanh %806 : vector<8x128xf32>
    %828 = vector.extract_strided_slice %826 {offsets = [0, 0], sizes = [8, 32], strides = [1, 1]} : vector<8x128xf32> to vector<8x32xf32>
    %829 = vector.extract_strided_slice %826 {offsets = [0, 32], sizes = [8, 32], strides = [1, 1]} : vector<8x128xf32> to vector<8x32xf32>
    %830 = vector.extract_strided_slice %827 {offsets = [0, 64], sizes = [8, 32], strides = [1, 1]} : vector<8x128xf32> to vector<8x32xf32>
    %831 = vector.extract_strided_slice %826 {offsets = [0, 96], sizes = [8, 32], strides = [1, 1]} : vector<8x128xf32> to vector<8x32xf32>
    %832 = arith.mulf %829, %793 : vector<8x32xf32>
    %833 = arith.mulf %828, %830 : vector<8x32xf32>
    %834 = arith.addf %832, %833 : vector<8x32xf32>
    %835 = math.tanh %834 : vector<8x32xf32>
    %836 = arith.mulf %831, %835 : vector<8x32xf32>
    %c24_248 = arith.constant 24 : index
    %c0_249 = arith.constant 0 : index
    %837 = vector.load %arg8[%c24_248, %c0_249] : memref<64x64xf32, #tpu.memory_space<vmem>>, vector<8x32xf32>
    tpu.vector_store %arg8[%c24_248, %c0_249], %821 {strides = array<i32>} : memref<64x64xf32, #tpu.memory_space<vmem>>, vector<8x32xf32>,
    %c32_250 = arith.constant 32 : index
    %c32_251 = arith.constant 32 : index
    %838 = vector.load %arg8[%c32_250, %c32_251] : memref<64x64xf32, #tpu.memory_space<vmem>>, vector<8x32xf32>
    tpu.vector_store %arg8[%c32_250, %c32_251], %836 {strides = array<i32>} : memref<64x64xf32, #tpu.memory_space<vmem>>, vector<8x32xf32>,
    %c32_252 = arith.constant 32 : index
    %c0_253 = arith.constant 0 : index
    %839 = vector.load %arg9[%c32_252, %c0_253] : memref<64x256xf32, #tpu.memory_space<vmem>>, vector<8x128xf32>
    %c24_254 = arith.constant 24 : index
    %c128_255 = arith.constant 128 : index
    %840 = vector.load %arg9[%c24_254, %c128_255] : memref<64x256xf32, #tpu.memory_space<vmem>>, vector<8x128xf32>
    %841 = tpu.concatenate %821, %836 in 1 : vector<8x32xf32>, vector<8x32xf32> -> vector<8x64xf32>
    %842 = arith.truncf %841 : vector<8x64xf32> to vector<8x64xbf16>
    %cst_256 = arith.constant dense<0.000000e+00> : vector<8x256xf32>
    %843 = tpu.matmul %842, %679, %cst_256 {dimension_numbers = #tpu.dot_dimension_numbers<[1], [0], [0], [1], [0, 0, 1, 1], [], []>} : vector<8x64xbf16>, vector<64x256xbf16>, vector<8x256xf32> -> vector<8x256xf32>
    %844 = vector.extract_strided_slice %843 {offsets = [0, 0], sizes = [8, 128], strides = [1, 1]} : vector<8x256xf32> to vector<8x128xf32>
    %845 = arith.addf %839, %844 : vector<8x128xf32>
    %846 = vector.extract_strided_slice %843 {offsets = [0, 128], sizes = [8, 128], strides = [1, 1]} : vector<8x256xf32> to vector<8x128xf32>
    %847 = arith.addf %840, %846 : vector<8x128xf32>
    %848 = arith.negf %845 : vector<8x128xf32>
    %849 = math.exp %848 : vector<8x128xf32>
    %cst_257 = arith.constant 1.000000e+00 : f32
    %850 = vector.broadcast %cst_257 : f32 to vector<8x128xf32>
    %851 = arith.addf %850, %849 : vector<8x128xf32>
    %852 = arith.divf %850, %851 : vector<8x128xf32>
    %853 = math.tanh %845 : vector<8x128xf32>
    %854 = vector.extract_strided_slice %852 {offsets = [0, 0], sizes = [8, 32], strides = [1, 1]} : vector<8x128xf32> to vector<8x32xf32>
    %855 = vector.extract_strided_slice %852 {offsets = [0, 32], sizes = [8, 32], strides = [1, 1]} : vector<8x128xf32> to vector<8x32xf32>
    %856 = vector.extract_strided_slice %853 {offsets = [0, 64], sizes = [8, 32], strides = [1, 1]} : vector<8x128xf32> to vector<8x32xf32>
    %857 = vector.extract_strided_slice %852 {offsets = [0, 96], sizes = [8, 32], strides = [1, 1]} : vector<8x128xf32> to vector<8x32xf32>
    %858 = arith.mulf %855, %819 : vector<8x32xf32>
    %859 = arith.mulf %854, %856 : vector<8x32xf32>
    %860 = arith.addf %858, %859 : vector<8x32xf32>
    %861 = math.tanh %860 : vector<8x32xf32>
    %862 = arith.mulf %857, %861 : vector<8x32xf32>
    %863 = arith.negf %847 : vector<8x128xf32>
    %864 = math.exp %863 : vector<8x128xf32>
    %cst_258 = arith.constant 1.000000e+00 : f32
    %865 = vector.broadcast %cst_258 : f32 to vector<8x128xf32>
    %866 = arith.addf %865, %864 : vector<8x128xf32>
    %867 = arith.divf %865, %866 : vector<8x128xf32>
    %868 = math.tanh %847 : vector<8x128xf32>
    %869 = vector.extract_strided_slice %867 {offsets = [0, 0], sizes = [8, 32], strides = [1, 1]} : vector<8x128xf32> to vector<8x32xf32>
    %870 = vector.extract_strided_slice %867 {offsets = [0, 32], sizes = [8, 32], strides = [1, 1]} : vector<8x128xf32> to vector<8x32xf32>
    %871 = vector.extract_strided_slice %868 {offsets = [0, 64], sizes = [8, 32], strides = [1, 1]} : vector<8x128xf32> to vector<8x32xf32>
    %872 = vector.extract_strided_slice %867 {offsets = [0, 96], sizes = [8, 32], strides = [1, 1]} : vector<8x128xf32> to vector<8x32xf32>
    %873 = arith.mulf %870, %834 : vector<8x32xf32>
    %874 = arith.mulf %869, %871 : vector<8x32xf32>
    %875 = arith.addf %873, %874 : vector<8x32xf32>
    %876 = math.tanh %875 : vector<8x32xf32>
    %877 = arith.mulf %872, %876 : vector<8x32xf32>
    %c32_259 = arith.constant 32 : index
    %c0_260 = arith.constant 0 : index
    %878 = vector.load %arg8[%c32_259, %c0_260] : memref<64x64xf32, #tpu.memory_space<vmem>>, vector<8x32xf32>
    tpu.vector_store %arg8[%c32_259, %c0_260], %862 {strides = array<i32>} : memref<64x64xf32, #tpu.memory_space<vmem>>, vector<8x32xf32>,
    %c24_261 = arith.constant 24 : index
    %c32_262 = arith.constant 32 : index
    %879 = vector.load %arg8[%c24_261, %c32_262] : memref<64x64xf32, #tpu.memory_space<vmem>>, vector<8x32xf32>
    tpu.vector_store %arg8[%c24_261, %c32_262], %877 {strides = array<i32>} : memref<64x64xf32, #tpu.memory_space<vmem>>, vector<8x32xf32>,
    %c40_263 = arith.constant 40 : index
    %c0_264 = arith.constant 0 : index
    %880 = vector.load %arg9[%c40_263, %c0_264] : memref<64x256xf32, #tpu.memory_space<vmem>>, vector<8x128xf32>
    %c16_265 = arith.constant 16 : index
    %c128_266 = arith.constant 128 : index
    %881 = vector.load %arg9[%c16_265, %c128_266] : memref<64x256xf32, #tpu.memory_space<vmem>>, vector<8x128xf32>
    %882 = tpu.concatenate %862, %877 in 1 : vector<8x32xf32>, vector<8x32xf32> -> vector<8x64xf32>
    %883 = arith.truncf %882 : vector<8x64xf32> to vector<8x64xbf16>
    %cst_267 = arith.constant dense<0.000000e+00> : vector<8x256xf32>
    %884 = tpu.matmul %883, %679, %cst_267 {dimension_numbers = #tpu.dot_dimension_numbers<[1], [0], [0], [1], [0, 0, 1, 1], [], []>} : vector<8x64xbf16>, vector<64x256xbf16>, vector<8x256xf32> -> vector<8x256xf32>
    %885 = vector.extract_strided_slice %884 {offsets = [0, 0], sizes = [8, 128], strides = [1, 1]} : vector<8x256xf32> to vector<8x128xf32>
    %886 = arith.addf %880, %885 : vector<8x128xf32>
    %887 = vector.extract_strided_slice %884 {offsets = [0, 128], sizes = [8, 128], strides = [1, 1]} : vector<8x256xf32> to vector<8x128xf32>
    %888 = arith.addf %881, %887 : vector<8x128xf32>
    %889 = arith.negf %886 : vector<8x128xf32>
    %890 = math.exp %889 : vector<8x128xf32>
    %cst_268 = arith.constant 1.000000e+00 : f32
    %891 = vector.broadcast %cst_268 : f32 to vector<8x128xf32>
    %892 = arith.addf %891, %890 : vector<8x128xf32>
    %893 = arith.divf %891, %892 : vector<8x128xf32>
    %894 = math.tanh %886 : vector<8x128xf32>
    %895 = vector.extract_strided_slice %893 {offsets = [0, 0], sizes = [8, 32], strides = [1, 1]} : vector<8x128xf32> to vector<8x32xf32>
    %896 = vector.extract_strided_slice %893 {offsets = [0, 32], sizes = [8, 32], strides = [1, 1]} : vector<8x128xf32> to vector<8x32xf32>
    %897 = vector.extract_strided_slice %894 {offsets = [0, 64], sizes = [8, 32], strides = [1, 1]} : vector<8x128xf32> to vector<8x32xf32>
    %898 = vector.extract_strided_slice %893 {offsets = [0, 96], sizes = [8, 32], strides = [1, 1]} : vector<8x128xf32> to vector<8x32xf32>
    %899 = arith.mulf %896, %860 : vector<8x32xf32>
    %900 = arith.mulf %895, %897 : vector<8x32xf32>
    %901 = arith.addf %899, %900 : vector<8x32xf32>
    %902 = math.tanh %901 : vector<8x32xf32>
    %903 = arith.mulf %898, %902 : vector<8x32xf32>
    %904 = arith.negf %888 : vector<8x128xf32>
    %905 = math.exp %904 : vector<8x128xf32>
    %cst_269 = arith.constant 1.000000e+00 : f32
    %906 = vector.broadcast %cst_269 : f32 to vector<8x128xf32>
    %907 = arith.addf %906, %905 : vector<8x128xf32>
    %908 = arith.divf %906, %907 : vector<8x128xf32>
    %909 = math.tanh %888 : vector<8x128xf32>
    %910 = vector.extract_strided_slice %908 {offsets = [0, 0], sizes = [8, 32], strides = [1, 1]} : vector<8x128xf32> to vector<8x32xf32>
    %911 = vector.extract_strided_slice %908 {offsets = [0, 32], sizes = [8, 32], strides = [1, 1]} : vector<8x128xf32> to vector<8x32xf32>
    %912 = vector.extract_strided_slice %909 {offsets = [0, 64], sizes = [8, 32], strides = [1, 1]} : vector<8x128xf32> to vector<8x32xf32>
    %913 = vector.extract_strided_slice %908 {offsets = [0, 96], sizes = [8, 32], strides = [1, 1]} : vector<8x128xf32> to vector<8x32xf32>
    %914 = arith.mulf %911, %875 : vector<8x32xf32>
    %915 = arith.mulf %910, %912 : vector<8x32xf32>
    %916 = arith.addf %914, %915 : vector<8x32xf32>
    %917 = math.tanh %916 : vector<8x32xf32>
    %918 = arith.mulf %913, %917 : vector<8x32xf32>
    %c40_270 = arith.constant 40 : index
    %c0_271 = arith.constant 0 : index
    %919 = vector.load %arg8[%c40_270, %c0_271] : memref<64x64xf32, #tpu.memory_space<vmem>>, vector<8x32xf32>
    tpu.vector_store %arg8[%c40_270, %c0_271], %903 {strides = array<i32>} : memref<64x64xf32, #tpu.memory_space<vmem>>, vector<8x32xf32>,
    %c16_272 = arith.constant 16 : index
    %c32_273 = arith.constant 32 : index
    %920 = vector.load %arg8[%c16_272, %c32_273] : memref<64x64xf32, #tpu.memory_space<vmem>>, vector<8x32xf32>
    tpu.vector_store %arg8[%c16_272, %c32_273], %918 {strides = array<i32>} : memref<64x64xf32, #tpu.memory_space<vmem>>, vector<8x32xf32>,
    %c48_274 = arith.constant 48 : index
    %c0_275 = arith.constant 0 : index
    %921 = vector.load %arg9[%c48_274, %c0_275] : memref<64x256xf32, #tpu.memory_space<vmem>>, vector<8x128xf32>
    %c8_276 = arith.constant 8 : index
    %c128_277 = arith.constant 128 : index
    %922 = vector.load %arg9[%c8_276, %c128_277] : memref<64x256xf32, #tpu.memory_space<vmem>>, vector<8x128xf32>
    %923 = tpu.concatenate %903, %918 in 1 : vector<8x32xf32>, vector<8x32xf32> -> vector<8x64xf32>
    %924 = arith.truncf %923 : vector<8x64xf32> to vector<8x64xbf16>
    %cst_278 = arith.constant dense<0.000000e+00> : vector<8x256xf32>
    %925 = tpu.matmul %924, %679, %cst_278 {dimension_numbers = #tpu.dot_dimension_numbers<[1], [0], [0], [1], [0, 0, 1, 1], [], []>} : vector<8x64xbf16>, vector<64x256xbf16>, vector<8x256xf32> -> vector<8x256xf32>
    %926 = vector.extract_strided_slice %925 {offsets = [0, 0], sizes = [8, 128], strides = [1, 1]} : vector<8x256xf32> to vector<8x128xf32>
    %927 = arith.addf %921, %926 : vector<8x128xf32>
    %928 = vector.extract_strided_slice %925 {offsets = [0, 128], sizes = [8, 128], strides = [1, 1]} : vector<8x256xf32> to vector<8x128xf32>
    %929 = arith.addf %922, %928 : vector<8x128xf32>
    %930 = arith.negf %927 : vector<8x128xf32>
    %931 = math.exp %930 : vector<8x128xf32>
    %cst_279 = arith.constant 1.000000e+00 : f32
    %932 = vector.broadcast %cst_279 : f32 to vector<8x128xf32>
    %933 = arith.addf %932, %931 : vector<8x128xf32>
    %934 = arith.divf %932, %933 : vector<8x128xf32>
    %935 = math.tanh %927 : vector<8x128xf32>
    %936 = vector.extract_strided_slice %934 {offsets = [0, 0], sizes = [8, 32], strides = [1, 1]} : vector<8x128xf32> to vector<8x32xf32>
    %937 = vector.extract_strided_slice %934 {offsets = [0, 32], sizes = [8, 32], strides = [1, 1]} : vector<8x128xf32> to vector<8x32xf32>
    %938 = vector.extract_strided_slice %935 {offsets = [0, 64], sizes = [8, 32], strides = [1, 1]} : vector<8x128xf32> to vector<8x32xf32>
    %939 = vector.extract_strided_slice %934 {offsets = [0, 96], sizes = [8, 32], strides = [1, 1]} : vector<8x128xf32> to vector<8x32xf32>
    %940 = arith.mulf %937, %901 : vector<8x32xf32>
    %941 = arith.mulf %936, %938 : vector<8x32xf32>
    %942 = arith.addf %940, %941 : vector<8x32xf32>
    %943 = math.tanh %942 : vector<8x32xf32>
    %944 = arith.mulf %939, %943 : vector<8x32xf32>
    %945 = arith.negf %929 : vector<8x128xf32>
    %946 = math.exp %945 : vector<8x128xf32>
    %cst_280 = arith.constant 1.000000e+00 : f32
    %947 = vector.broadcast %cst_280 : f32 to vector<8x128xf32>
    %948 = arith.addf %947, %946 : vector<8x128xf32>
    %949 = arith.divf %947, %948 : vector<8x128xf32>
    %950 = math.tanh %929 : vector<8x128xf32>
    %951 = vector.extract_strided_slice %949 {offsets = [0, 0], sizes = [8, 32], strides = [1, 1]} : vector<8x128xf32> to vector<8x32xf32>
    %952 = vector.extract_strided_slice %949 {offsets = [0, 32], sizes = [8, 32], strides = [1, 1]} : vector<8x128xf32> to vector<8x32xf32>
    %953 = vector.extract_strided_slice %950 {offsets = [0, 64], sizes = [8, 32], strides = [1, 1]} : vector<8x128xf32> to vector<8x32xf32>
    %954 = vector.extract_strided_slice %949 {offsets = [0, 96], sizes = [8, 32], strides = [1, 1]} : vector<8x128xf32> to vector<8x32xf32>
    %955 = arith.mulf %952, %916 : vector<8x32xf32>
    %956 = arith.mulf %951, %953 : vector<8x32xf32>
    %957 = arith.addf %955, %956 : vector<8x32xf32>
    %958 = math.tanh %957 : vector<8x32xf32>
    %959 = arith.mulf %954, %958 : vector<8x32xf32>
    %c48_281 = arith.constant 48 : index
    %c0_282 = arith.constant 0 : index
    %960 = vector.load %arg8[%c48_281, %c0_282] : memref<64x64xf32, #tpu.memory_space<vmem>>, vector<8x32xf32>
    tpu.vector_store %arg8[%c48_281, %c0_282], %944 {strides = array<i32>} : memref<64x64xf32, #tpu.memory_space<vmem>>, vector<8x32xf32>,
    %c8_283 = arith.constant 8 : index
    %c32_284 = arith.constant 32 : index
    %961 = vector.load %arg8[%c8_283, %c32_284] : memref<64x64xf32, #tpu.memory_space<vmem>>, vector<8x32xf32>
    tpu.vector_store %arg8[%c8_283, %c32_284], %959 {strides = array<i32>} : memref<64x64xf32, #tpu.memory_space<vmem>>, vector<8x32xf32>,
    %c56_285 = arith.constant 56 : index
    %c0_286 = arith.constant 0 : index
    %962 = vector.load %arg9[%c56_285, %c0_286] : memref<64x256xf32, #tpu.memory_space<vmem>>, vector<8x128xf32>
    %c0_287 = arith.constant 0 : index
    %c128_288 = arith.constant 128 : index
    %963 = vector.load %arg9[%c0_287, %c128_288] : memref<64x256xf32, #tpu.memory_space<vmem>>, vector<8x128xf32>
    %964 = tpu.concatenate %944, %959 in 1 : vector<8x32xf32>, vector<8x32xf32> -> vector<8x64xf32>
    %965 = arith.truncf %964 : vector<8x64xf32> to vector<8x64xbf16>
    %cst_289 = arith.constant dense<0.000000e+00> : vector<8x256xf32>
    %966 = tpu.matmul %965, %679, %cst_289 {dimension_numbers = #tpu.dot_dimension_numbers<[1], [0], [0], [1], [0, 0, 1, 1], [], []>} : vector<8x64xbf16>, vector<64x256xbf16>, vector<8x256xf32> -> vector<8x256xf32>
    %967 = vector.extract_strided_slice %966 {offsets = [0, 0], sizes = [8, 128], strides = [1, 1]} : vector<8x256xf32> to vector<8x128xf32>
    %968 = arith.addf %962, %967 : vector<8x128xf32>
    %969 = vector.extract_strided_slice %966 {offsets = [0, 128], sizes = [8, 128], strides = [1, 1]} : vector<8x256xf32> to vector<8x128xf32>
    %970 = arith.addf %963, %969 : vector<8x128xf32>
    %971 = arith.negf %968 : vector<8x128xf32>
    %972 = math.exp %971 : vector<8x128xf32>
    %cst_290 = arith.constant 1.000000e+00 : f32
    %973 = vector.broadcast %cst_290 : f32 to vector<8x128xf32>
    %974 = arith.addf %973, %972 : vector<8x128xf32>
    %975 = arith.divf %973, %974 : vector<8x128xf32>
    %976 = math.tanh %968 : vector<8x128xf32>
    %977 = vector.extract_strided_slice %975 {offsets = [0, 0], sizes = [8, 32], strides = [1, 1]} : vector<8x128xf32> to vector<8x32xf32>
    %978 = vector.extract_strided_slice %975 {offsets = [0, 32], sizes = [8, 32], strides = [1, 1]} : vector<8x128xf32> to vector<8x32xf32>
    %979 = vector.extract_strided_slice %976 {offsets = [0, 64], sizes = [8, 32], strides = [1, 1]} : vector<8x128xf32> to vector<8x32xf32>
    %980 = vector.extract_strided_slice %975 {offsets = [0, 96], sizes = [8, 32], strides = [1, 1]} : vector<8x128xf32> to vector<8x32xf32>
    %981 = arith.mulf %978, %942 : vector<8x32xf32>
    %982 = arith.mulf %977, %979 : vector<8x32xf32>
    %983 = arith.addf %981, %982 : vector<8x32xf32>
    %984 = math.tanh %983 : vector<8x32xf32>
    %985 = arith.mulf %980, %984 : vector<8x32xf32>
    %986 = arith.negf %970 : vector<8x128xf32>
    %987 = math.exp %986 : vector<8x128xf32>
    %cst_291 = arith.constant 1.000000e+00 : f32
    %988 = vector.broadcast %cst_291 : f32 to vector<8x128xf32>
    %989 = arith.addf %988, %987 : vector<8x128xf32>
    %990 = arith.divf %988, %989 : vector<8x128xf32>
    %991 = math.tanh %970 : vector<8x128xf32>
    %992 = vector.extract_strided_slice %990 {offsets = [0, 0], sizes = [8, 32], strides = [1, 1]} : vector<8x128xf32> to vector<8x32xf32>
    %993 = vector.extract_strided_slice %990 {offsets = [0, 32], sizes = [8, 32], strides = [1, 1]} : vector<8x128xf32> to vector<8x32xf32>
    %994 = vector.extract_strided_slice %991 {offsets = [0, 64], sizes = [8, 32], strides = [1, 1]} : vector<8x128xf32> to vector<8x32xf32>
    %995 = vector.extract_strided_slice %990 {offsets = [0, 96], sizes = [8, 32], strides = [1, 1]} : vector<8x128xf32> to vector<8x32xf32>
    %996 = arith.mulf %993, %957 : vector<8x32xf32>
    %997 = arith.mulf %992, %994 : vector<8x32xf32>
    %998 = arith.addf %996, %997 : vector<8x32xf32>
    %999 = math.tanh %998 : vector<8x32xf32>
    %1000 = arith.mulf %995, %999 : vector<8x32xf32>
    %c56_292 = arith.constant 56 : index
    %c0_293 = arith.constant 0 : index
    %1001 = vector.load %arg8[%c56_292, %c0_293] : memref<64x64xf32, #tpu.memory_space<vmem>>, vector<8x32xf32>
    tpu.vector_store %arg8[%c56_292, %c0_293], %985 {strides = array<i32>} : memref<64x64xf32, #tpu.memory_space<vmem>>, vector<8x32xf32>,
    %c0_294 = arith.constant 0 : index
    %c32_295 = arith.constant 32 : index
    %1002 = vector.load %arg8[%c0_294, %c32_295] : memref<64x64xf32, #tpu.memory_space<vmem>>, vector<8x32xf32>
    tpu.vector_store %arg8[%c0_294, %c32_295], %1000 {strides = array<i32>} : memref<64x64xf32, #tpu.memory_space<vmem>>, vector<8x32xf32>,
    %c0_296 = arith.constant 0 : index
    %c0_297 = arith.constant 0 : index
    %1003 = vector.load %arg8[%c0_296, %c0_297] : memref<64x64xf32, #tpu.memory_space<vmem>>, vector<64x64xf32>
    %1004 = arith.truncf %1003 : vector<64x64xf32> to vector<64x64xbf16>
    %c2_298 = arith.constant 2 : index
    %c0_299 = arith.constant 0 : index
    %c0_300 = arith.constant 0 : index
    %1005 = vector.load %arg2[%c2_298, %c0_299, %c0_300] : memref<3x64x256xbf16, #tpu.memory_space<vmem>>, vector<1x64x256xbf16>
    %1006 = vector.shape_cast %1005 : vector<1x64x256xbf16> to vector<64x256xbf16>
    %cst_301 = arith.constant dense<0.000000e+00> : vector<64x256xf32>
    %1007 = tpu.matmul %1004, %1006, %cst_301 {dimension_numbers = #tpu.dot_dimension_numbers<[1], [0], [0], [1], [0, 0, 1, 1], [], []>} : vector<64x64xbf16>, vector<64x256xbf16>, vector<64x256xf32> -> vector<64x256xf32>
    %c3 = arith.constant 3 : index
    %c0_302 = arith.constant 0 : index
    %c0_303 = arith.constant 0 : index
    %1008 = vector.load %arg4[%c3, %c0_302, %c0_303] : memref<4x1x256xf32, #tpu.memory_space<vmem>>, vector<1x1x256xf32>
    %1009 = vector.shape_cast %1008 : vector<1x1x256xf32> to vector<1x256xf32>
    %1010 = vector.broadcast %1009 : vector<1x256xf32> to vector<64x256xf32>
    %1011 = arith.addf %1007, %1010 : vector<64x256xf32>
    %c0_304 = arith.constant 0 : index
    %c0_305 = arith.constant 0 : index
    %1012 = vector.load %arg9[%c0_304, %c0_305] : memref<64x256xf32, #tpu.memory_space<vmem>>, vector<64x256xf32>
    tpu.vector_store %arg9[%c0_304, %c0_305], %1011 {strides = array<i32>} : memref<64x256xf32, #tpu.memory_space<vmem>>, vector<64x256xf32>,
    %c3_306 = arith.constant 3 : index
    %c0_307 = arith.constant 0 : index
    %c0_308 = arith.constant 0 : index
    %1013 = vector.load %arg3[%c3_306, %c0_307, %c0_308] : memref<4x64x256xbf16, #tpu.memory_space<vmem>>, vector<1x64x256xbf16>
    %1014 = vector.shape_cast %1013 : vector<1x64x256xbf16> to vector<64x256xbf16>
    %cst_309 = arith.constant 0.000000e+00 : f32
    %1015 = vector.broadcast %cst_309 : f32 to vector<8x32xf32>
    %cst_310 = arith.constant 0.000000e+00 : f32
    %1016 = vector.broadcast %cst_310 : f32 to vector<8x32xf32>
    %c0_311 = arith.constant 0 : index
    %c0_312 = arith.constant 0 : index
    %1017 = vector.load %arg9[%c0_311, %c0_312] : memref<64x256xf32, #tpu.memory_space<vmem>>, vector<8x128xf32>
    %c56_313 = arith.constant 56 : index
    %c128_314 = arith.constant 128 : index
    %1018 = vector.load %arg9[%c56_313, %c128_314] : memref<64x256xf32, #tpu.memory_space<vmem>>, vector<8x128xf32>
    %1019 = arith.negf %1017 : vector<8x128xf32>
    %1020 = math.exp %1019 : vector<8x128xf32>
    %cst_315 = arith.constant 1.000000e+00 : f32
    %1021 = vector.broadcast %cst_315 : f32 to vector<8x128xf32>
    %1022 = arith.addf %1021, %1020 : vector<8x128xf32>
    %1023 = arith.divf %1021, %1022 : vector<8x128xf32>
    %1024 = math.tanh %1017 : vector<8x128xf32>
    %1025 = vector.extract_strided_slice %1023 {offsets = [0, 0], sizes = [8, 32], strides = [1, 1]} : vector<8x128xf32> to vector<8x32xf32>
    %1026 = vector.extract_strided_slice %1023 {offsets = [0, 32], sizes = [8, 32], strides = [1, 1]} : vector<8x128xf32> to vector<8x32xf32>
    %1027 = vector.extract_strided_slice %1024 {offsets = [0, 64], sizes = [8, 32], strides = [1, 1]} : vector<8x128xf32> to vector<8x32xf32>
    %1028 = vector.extract_strided_slice %1023 {offsets = [0, 96], sizes = [8, 32], strides = [1, 1]} : vector<8x128xf32> to vector<8x32xf32>
    %1029 = arith.mulf %1026, %1015 : vector<8x32xf32>
    %1030 = arith.mulf %1025, %1027 : vector<8x32xf32>
    %1031 = arith.addf %1029, %1030 : vector<8x32xf32>
    %1032 = math.tanh %1031 : vector<8x32xf32>
    %1033 = arith.mulf %1028, %1032 : vector<8x32xf32>
    %1034 = arith.negf %1018 : vector<8x128xf32>
    %1035 = math.exp %1034 : vector<8x128xf32>
    %cst_316 = arith.constant 1.000000e+00 : f32
    %1036 = vector.broadcast %cst_316 : f32 to vector<8x128xf32>
    %1037 = arith.addf %1036, %1035 : vector<8x128xf32>
    %1038 = arith.divf %1036, %1037 : vector<8x128xf32>
    %1039 = math.tanh %1018 : vector<8x128xf32>
    %1040 = vector.extract_strided_slice %1038 {offsets = [0, 0], sizes = [8, 32], strides = [1, 1]} : vector<8x128xf32> to vector<8x32xf32>
    %1041 = vector.extract_strided_slice %1038 {offsets = [0, 32], sizes = [8, 32], strides = [1, 1]} : vector<8x128xf32> to vector<8x32xf32>
    %1042 = vector.extract_strided_slice %1039 {offsets = [0, 64], sizes = [8, 32], strides = [1, 1]} : vector<8x128xf32> to vector<8x32xf32>
    %1043 = vector.extract_strided_slice %1038 {offsets = [0, 96], sizes = [8, 32], strides = [1, 1]} : vector<8x128xf32> to vector<8x32xf32>
    %1044 = arith.mulf %1041, %1016 : vector<8x32xf32>
    %1045 = arith.mulf %1040, %1042 : vector<8x32xf32>
    %1046 = arith.addf %1044, %1045 : vector<8x32xf32>
    %1047 = math.tanh %1046 : vector<8x32xf32>
    %1048 = arith.mulf %1043, %1047 : vector<8x32xf32>
    %c8_317 = arith.constant 8 : index
    %c0_318 = arith.constant 0 : index
    %1049 = vector.load %arg9[%c8_317, %c0_318] : memref<64x256xf32, #tpu.memory_space<vmem>>, vector<8x128xf32>
    %c48_319 = arith.constant 48 : index
    %c128_320 = arith.constant 128 : index
    %1050 = vector.load %arg9[%c48_319, %c128_320] : memref<64x256xf32, #tpu.memory_space<vmem>>, vector<8x128xf32>
    %1051 = tpu.concatenate %1033, %1048 in 1 : vector<8x32xf32>, vector<8x32xf32> -> vector<8x64xf32>
    %1052 = arith.truncf %1051 : vector<8x64xf32> to vector<8x64xbf16>
    %cst_321 = arith.constant dense<0.000000e+00> : vector<8x256xf32>
    %1053 = tpu.matmul %1052, %1014, %cst_321 {dimension_numbers = #tpu.dot_dimension_numbers<[1], [0], [0], [1], [0, 0, 1, 1], [], []>} : vector<8x64xbf16>, vector<64x256xbf16>, vector<8x256xf32> -> vector<8x256xf32>
    %1054 = vector.extract_strided_slice %1053 {offsets = [0, 0], sizes = [8, 128], strides = [1, 1]} : vector<8x256xf32> to vector<8x128xf32>
    %1055 = arith.addf %1049, %1054 : vector<8x128xf32>
    %1056 = vector.extract_strided_slice %1053 {offsets = [0, 128], sizes = [8, 128], strides = [1, 1]} : vector<8x256xf32> to vector<8x128xf32>
    %1057 = arith.addf %1050, %1056 : vector<8x128xf32>
    %1058 = arith.negf %1055 : vector<8x128xf32>
    %1059 = math.exp %1058 : vector<8x128xf32>
    %cst_322 = arith.constant 1.000000e+00 : f32
    %1060 = vector.broadcast %cst_322 : f32 to vector<8x128xf32>
    %1061 = arith.addf %1060, %1059 : vector<8x128xf32>
    %1062 = arith.divf %1060, %1061 : vector<8x128xf32>
    %1063 = math.tanh %1055 : vector<8x128xf32>
    %1064 = vector.extract_strided_slice %1062 {offsets = [0, 0], sizes = [8, 32], strides = [1, 1]} : vector<8x128xf32> to vector<8x32xf32>
    %1065 = vector.extract_strided_slice %1062 {offsets = [0, 32], sizes = [8, 32], strides = [1, 1]} : vector<8x128xf32> to vector<8x32xf32>
    %1066 = vector.extract_strided_slice %1063 {offsets = [0, 64], sizes = [8, 32], strides = [1, 1]} : vector<8x128xf32> to vector<8x32xf32>
    %1067 = vector.extract_strided_slice %1062 {offsets = [0, 96], sizes = [8, 32], strides = [1, 1]} : vector<8x128xf32> to vector<8x32xf32>
    %1068 = arith.mulf %1065, %1031 : vector<8x32xf32>
    %1069 = arith.mulf %1064, %1066 : vector<8x32xf32>
    %1070 = arith.addf %1068, %1069 : vector<8x32xf32>
    %1071 = math.tanh %1070 : vector<8x32xf32>
    %1072 = arith.mulf %1067, %1071 : vector<8x32xf32>
    %1073 = arith.negf %1057 : vector<8x128xf32>
    %1074 = math.exp %1073 : vector<8x128xf32>
    %cst_323 = arith.constant 1.000000e+00 : f32
    %1075 = vector.broadcast %cst_323 : f32 to vector<8x128xf32>
    %1076 = arith.addf %1075, %1074 : vector<8x128xf32>
    %1077 = arith.divf %1075, %1076 : vector<8x128xf32>
    %1078 = math.tanh %1057 : vector<8x128xf32>
    %1079 = vector.extract_strided_slice %1077 {offsets = [0, 0], sizes = [8, 32], strides = [1, 1]} : vector<8x128xf32> to vector<8x32xf32>
    %1080 = vector.extract_strided_slice %1077 {offsets = [0, 32], sizes = [8, 32], strides = [1, 1]} : vector<8x128xf32> to vector<8x32xf32>
    %1081 = vector.extract_strided_slice %1078 {offsets = [0, 64], sizes = [8, 32], strides = [1, 1]} : vector<8x128xf32> to vector<8x32xf32>
    %1082 = vector.extract_strided_slice %1077 {offsets = [0, 96], sizes = [8, 32], strides = [1, 1]} : vector<8x128xf32> to vector<8x32xf32>
    %1083 = arith.mulf %1080, %1046 : vector<8x32xf32>
    %1084 = arith.mulf %1079, %1081 : vector<8x32xf32>
    %1085 = arith.addf %1083, %1084 : vector<8x32xf32>
    %1086 = math.tanh %1085 : vector<8x32xf32>
    %1087 = arith.mulf %1082, %1086 : vector<8x32xf32>
    %c16_324 = arith.constant 16 : index
    %c0_325 = arith.constant 0 : index
    %1088 = vector.load %arg9[%c16_324, %c0_325] : memref<64x256xf32, #tpu.memory_space<vmem>>, vector<8x128xf32>
    %c40_326 = arith.constant 40 : index
    %c128_327 = arith.constant 128 : index
    %1089 = vector.load %arg9[%c40_326, %c128_327] : memref<64x256xf32, #tpu.memory_space<vmem>>, vector<8x128xf32>
    %1090 = tpu.concatenate %1072, %1087 in 1 : vector<8x32xf32>, vector<8x32xf32> -> vector<8x64xf32>
    %1091 = arith.truncf %1090 : vector<8x64xf32> to vector<8x64xbf16>
    %cst_328 = arith.constant dense<0.000000e+00> : vector<8x256xf32>
    %1092 = tpu.matmul %1091, %1014, %cst_328 {dimension_numbers = #tpu.dot_dimension_numbers<[1], [0], [0], [1], [0, 0, 1, 1], [], []>} : vector<8x64xbf16>, vector<64x256xbf16>, vector<8x256xf32> -> vector<8x256xf32>
    %1093 = vector.extract_strided_slice %1092 {offsets = [0, 0], sizes = [8, 128], strides = [1, 1]} : vector<8x256xf32> to vector<8x128xf32>
    %1094 = arith.addf %1088, %1093 : vector<8x128xf32>
    %1095 = vector.extract_strided_slice %1092 {offsets = [0, 128], sizes = [8, 128], strides = [1, 1]} : vector<8x256xf32> to vector<8x128xf32>
    %1096 = arith.addf %1089, %1095 : vector<8x128xf32>
    %1097 = arith.negf %1094 : vector<8x128xf32>
    %1098 = math.exp %1097 : vector<8x128xf32>
    %cst_329 = arith.constant 1.000000e+00 : f32
    %1099 = vector.broadcast %cst_329 : f32 to vector<8x128xf32>
    %1100 = arith.addf %1099, %1098 : vector<8x128xf32>
    %1101 = arith.divf %1099, %1100 : vector<8x128xf32>
    %1102 = math.tanh %1094 : vector<8x128xf32>
    %1103 = vector.extract_strided_slice %1101 {offsets = [0, 0], sizes = [8, 32], strides = [1, 1]} : vector<8x128xf32> to vector<8x32xf32>
    %1104 = vector.extract_strided_slice %1101 {offsets = [0, 32], sizes = [8, 32], strides = [1, 1]} : vector<8x128xf32> to vector<8x32xf32>
    %1105 = vector.extract_strided_slice %1102 {offsets = [0, 64], sizes = [8, 32], strides = [1, 1]} : vector<8x128xf32> to vector<8x32xf32>
    %1106 = vector.extract_strided_slice %1101 {offsets = [0, 96], sizes = [8, 32], strides = [1, 1]} : vector<8x128xf32> to vector<8x32xf32>
    %1107 = arith.mulf %1104, %1070 : vector<8x32xf32>
    %1108 = arith.mulf %1103, %1105 : vector<8x32xf32>
    %1109 = arith.addf %1107, %1108 : vector<8x32xf32>
    %1110 = math.tanh %1109 : vector<8x32xf32>
    %1111 = arith.mulf %1106, %1110 : vector<8x32xf32>
    %1112 = arith.negf %1096 : vector<8x128xf32>
    %1113 = math.exp %1112 : vector<8x128xf32>
    %cst_330 = arith.constant 1.000000e+00 : f32
    %1114 = vector.broadcast %cst_330 : f32 to vector<8x128xf32>
    %1115 = arith.addf %1114, %1113 : vector<8x128xf32>
    %1116 = arith.divf %1114, %1115 : vector<8x128xf32>
    %1117 = math.tanh %1096 : vector<8x128xf32>
    %1118 = vector.extract_strided_slice %1116 {offsets = [0, 0], sizes = [8, 32], strides = [1, 1]} : vector<8x128xf32> to vector<8x32xf32>
    %1119 = vector.extract_strided_slice %1116 {offsets = [0, 32], sizes = [8, 32], strides = [1, 1]} : vector<8x128xf32> to vector<8x32xf32>
    %1120 = vector.extract_strided_slice %1117 {offsets = [0, 64], sizes = [8, 32], strides = [1, 1]} : vector<8x128xf32> to vector<8x32xf32>
    %1121 = vector.extract_strided_slice %1116 {offsets = [0, 96], sizes = [8, 32], strides = [1, 1]} : vector<8x128xf32> to vector<8x32xf32>
    %1122 = arith.mulf %1119, %1085 : vector<8x32xf32>
    %1123 = arith.mulf %1118, %1120 : vector<8x32xf32>
    %1124 = arith.addf %1122, %1123 : vector<8x32xf32>
    %1125 = math.tanh %1124 : vector<8x32xf32>
    %1126 = arith.mulf %1121, %1125 : vector<8x32xf32>
    %c24_331 = arith.constant 24 : index
    %c0_332 = arith.constant 0 : index
    %1127 = vector.load %arg9[%c24_331, %c0_332] : memref<64x256xf32, #tpu.memory_space<vmem>>, vector<8x128xf32>
    %c32_333 = arith.constant 32 : index
    %c128_334 = arith.constant 128 : index
    %1128 = vector.load %arg9[%c32_333, %c128_334] : memref<64x256xf32, #tpu.memory_space<vmem>>, vector<8x128xf32>
    %1129 = tpu.concatenate %1111, %1126 in 1 : vector<8x32xf32>, vector<8x32xf32> -> vector<8x64xf32>
    %1130 = arith.truncf %1129 : vector<8x64xf32> to vector<8x64xbf16>
    %cst_335 = arith.constant dense<0.000000e+00> : vector<8x256xf32>
    %1131 = tpu.matmul %1130, %1014, %cst_335 {dimension_numbers = #tpu.dot_dimension_numbers<[1], [0], [0], [1], [0, 0, 1, 1], [], []>} : vector<8x64xbf16>, vector<64x256xbf16>, vector<8x256xf32> -> vector<8x256xf32>
    %1132 = vector.extract_strided_slice %1131 {offsets = [0, 0], sizes = [8, 128], strides = [1, 1]} : vector<8x256xf32> to vector<8x128xf32>
    %1133 = arith.addf %1127, %1132 : vector<8x128xf32>
    %1134 = vector.extract_strided_slice %1131 {offsets = [0, 128], sizes = [8, 128], strides = [1, 1]} : vector<8x256xf32> to vector<8x128xf32>
    %1135 = arith.addf %1128, %1134 : vector<8x128xf32>
    %1136 = arith.negf %1133 : vector<8x128xf32>
    %1137 = math.exp %1136 : vector<8x128xf32>
    %cst_336 = arith.constant 1.000000e+00 : f32
    %1138 = vector.broadcast %cst_336 : f32 to vector<8x128xf32>
    %1139 = arith.addf %1138, %1137 : vector<8x128xf32>
    %1140 = arith.divf %1138, %1139 : vector<8x128xf32>
    %1141 = math.tanh %1133 : vector<8x128xf32>
    %1142 = vector.extract_strided_slice %1140 {offsets = [0, 0], sizes = [8, 32], strides = [1, 1]} : vector<8x128xf32> to vector<8x32xf32>
    %1143 = vector.extract_strided_slice %1140 {offsets = [0, 32], sizes = [8, 32], strides = [1, 1]} : vector<8x128xf32> to vector<8x32xf32>
    %1144 = vector.extract_strided_slice %1141 {offsets = [0, 64], sizes = [8, 32], strides = [1, 1]} : vector<8x128xf32> to vector<8x32xf32>
    %1145 = vector.extract_strided_slice %1140 {offsets = [0, 96], sizes = [8, 32], strides = [1, 1]} : vector<8x128xf32> to vector<8x32xf32>
    %1146 = arith.mulf %1143, %1109 : vector<8x32xf32>
    %1147 = arith.mulf %1142, %1144 : vector<8x32xf32>
    %1148 = arith.addf %1146, %1147 : vector<8x32xf32>
    %1149 = math.tanh %1148 : vector<8x32xf32>
    %1150 = arith.mulf %1145, %1149 : vector<8x32xf32>
    %1151 = arith.negf %1135 : vector<8x128xf32>
    %1152 = math.exp %1151 : vector<8x128xf32>
    %cst_337 = arith.constant 1.000000e+00 : f32
    %1153 = vector.broadcast %cst_337 : f32 to vector<8x128xf32>
    %1154 = arith.addf %1153, %1152 : vector<8x128xf32>
    %1155 = arith.divf %1153, %1154 : vector<8x128xf32>
    %1156 = math.tanh %1135 : vector<8x128xf32>
    %1157 = vector.extract_strided_slice %1155 {offsets = [0, 0], sizes = [8, 32], strides = [1, 1]} : vector<8x128xf32> to vector<8x32xf32>
    %1158 = vector.extract_strided_slice %1155 {offsets = [0, 32], sizes = [8, 32], strides = [1, 1]} : vector<8x128xf32> to vector<8x32xf32>
    %1159 = vector.extract_strided_slice %1156 {offsets = [0, 64], sizes = [8, 32], strides = [1, 1]} : vector<8x128xf32> to vector<8x32xf32>
    %1160 = vector.extract_strided_slice %1155 {offsets = [0, 96], sizes = [8, 32], strides = [1, 1]} : vector<8x128xf32> to vector<8x32xf32>
    %1161 = arith.mulf %1158, %1124 : vector<8x32xf32>
    %1162 = arith.mulf %1157, %1159 : vector<8x32xf32>
    %1163 = arith.addf %1161, %1162 : vector<8x32xf32>
    %1164 = math.tanh %1163 : vector<8x32xf32>
    %1165 = arith.mulf %1160, %1164 : vector<8x32xf32>
    %c32_338 = arith.constant 32 : index
    %c0_339 = arith.constant 0 : index
    %1166 = vector.load %arg9[%c32_338, %c0_339] : memref<64x256xf32, #tpu.memory_space<vmem>>, vector<8x128xf32>
    %c24_340 = arith.constant 24 : index
    %c128_341 = arith.constant 128 : index
    %1167 = vector.load %arg9[%c24_340, %c128_341] : memref<64x256xf32, #tpu.memory_space<vmem>>, vector<8x128xf32>
    %1168 = tpu.concatenate %1150, %1165 in 1 : vector<8x32xf32>, vector<8x32xf32> -> vector<8x64xf32>
    %1169 = arith.truncf %1168 : vector<8x64xf32> to vector<8x64xbf16>
    %cst_342 = arith.constant dense<0.000000e+00> : vector<8x256xf32>
    %1170 = tpu.matmul %1169, %1014, %cst_342 {dimension_numbers = #tpu.dot_dimension_numbers<[1], [0], [0], [1], [0, 0, 1, 1], [], []>} : vector<8x64xbf16>, vector<64x256xbf16>, vector<8x256xf32> -> vector<8x256xf32>
    %1171 = vector.extract_strided_slice %1170 {offsets = [0, 0], sizes = [8, 128], strides = [1, 1]} : vector<8x256xf32> to vector<8x128xf32>
    %1172 = arith.addf %1166, %1171 : vector<8x128xf32>
    %1173 = vector.extract_strided_slice %1170 {offsets = [0, 128], sizes = [8, 128], strides = [1, 1]} : vector<8x256xf32> to vector<8x128xf32>
    %1174 = arith.addf %1167, %1173 : vector<8x128xf32>
    %1175 = arith.negf %1172 : vector<8x128xf32>
    %1176 = math.exp %1175 : vector<8x128xf32>
    %cst_343 = arith.constant 1.000000e+00 : f32
    %1177 = vector.broadcast %cst_343 : f32 to vector<8x128xf32>
    %1178 = arith.addf %1177, %1176 : vector<8x128xf32>
    %1179 = arith.divf %1177, %1178 : vector<8x128xf32>
    %1180 = math.tanh %1172 : vector<8x128xf32>
    %1181 = vector.extract_strided_slice %1179 {offsets = [0, 0], sizes = [8, 32], strides = [1, 1]} : vector<8x128xf32> to vector<8x32xf32>
    %1182 = vector.extract_strided_slice %1179 {offsets = [0, 32], sizes = [8, 32], strides = [1, 1]} : vector<8x128xf32> to vector<8x32xf32>
    %1183 = vector.extract_strided_slice %1180 {offsets = [0, 64], sizes = [8, 32], strides = [1, 1]} : vector<8x128xf32> to vector<8x32xf32>
    %1184 = vector.extract_strided_slice %1179 {offsets = [0, 96], sizes = [8, 32], strides = [1, 1]} : vector<8x128xf32> to vector<8x32xf32>
    %1185 = arith.mulf %1182, %1148 : vector<8x32xf32>
    %1186 = arith.mulf %1181, %1183 : vector<8x32xf32>
    %1187 = arith.addf %1185, %1186 : vector<8x32xf32>
    %1188 = math.tanh %1187 : vector<8x32xf32>
    %1189 = arith.mulf %1184, %1188 : vector<8x32xf32>
    %1190 = arith.negf %1174 : vector<8x128xf32>
    %1191 = math.exp %1190 : vector<8x128xf32>
    %cst_344 = arith.constant 1.000000e+00 : f32
    %1192 = vector.broadcast %cst_344 : f32 to vector<8x128xf32>
    %1193 = arith.addf %1192, %1191 : vector<8x128xf32>
    %1194 = arith.divf %1192, %1193 : vector<8x128xf32>
    %1195 = math.tanh %1174 : vector<8x128xf32>
    %1196 = vector.extract_strided_slice %1194 {offsets = [0, 0], sizes = [8, 32], strides = [1, 1]} : vector<8x128xf32> to vector<8x32xf32>
    %1197 = vector.extract_strided_slice %1194 {offsets = [0, 32], sizes = [8, 32], strides = [1, 1]} : vector<8x128xf32> to vector<8x32xf32>
    %1198 = vector.extract_strided_slice %1195 {offsets = [0, 64], sizes = [8, 32], strides = [1, 1]} : vector<8x128xf32> to vector<8x32xf32>
    %1199 = vector.extract_strided_slice %1194 {offsets = [0, 96], sizes = [8, 32], strides = [1, 1]} : vector<8x128xf32> to vector<8x32xf32>
    %1200 = arith.mulf %1197, %1163 : vector<8x32xf32>
    %1201 = arith.mulf %1196, %1198 : vector<8x32xf32>
    %1202 = arith.addf %1200, %1201 : vector<8x32xf32>
    %1203 = math.tanh %1202 : vector<8x32xf32>
    %1204 = arith.mulf %1199, %1203 : vector<8x32xf32>
    %c40_345 = arith.constant 40 : index
    %c0_346 = arith.constant 0 : index
    %1205 = vector.load %arg9[%c40_345, %c0_346] : memref<64x256xf32, #tpu.memory_space<vmem>>, vector<8x128xf32>
    %c16_347 = arith.constant 16 : index
    %c128_348 = arith.constant 128 : index
    %1206 = vector.load %arg9[%c16_347, %c128_348] : memref<64x256xf32, #tpu.memory_space<vmem>>, vector<8x128xf32>
    %1207 = tpu.concatenate %1189, %1204 in 1 : vector<8x32xf32>, vector<8x32xf32> -> vector<8x64xf32>
    %1208 = arith.truncf %1207 : vector<8x64xf32> to vector<8x64xbf16>
    %cst_349 = arith.constant dense<0.000000e+00> : vector<8x256xf32>
    %1209 = tpu.matmul %1208, %1014, %cst_349 {dimension_numbers = #tpu.dot_dimension_numbers<[1], [0], [0], [1], [0, 0, 1, 1], [], []>} : vector<8x64xbf16>, vector<64x256xbf16>, vector<8x256xf32> -> vector<8x256xf32>
    %1210 = vector.extract_strided_slice %1209 {offsets = [0, 0], sizes = [8, 128], strides = [1, 1]} : vector<8x256xf32> to vector<8x128xf32>
    %1211 = arith.addf %1205, %1210 : vector<8x128xf32>
    %1212 = vector.extract_strided_slice %1209 {offsets = [0, 128], sizes = [8, 128], strides = [1, 1]} : vector<8x256xf32> to vector<8x128xf32>
    %1213 = arith.addf %1206, %1212 : vector<8x128xf32>
    %1214 = arith.negf %1211 : vector<8x128xf32>
    %1215 = math.exp %1214 : vector<8x128xf32>
    %cst_350 = arith.constant 1.000000e+00 : f32
    %1216 = vector.broadcast %cst_350 : f32 to vector<8x128xf32>
    %1217 = arith.addf %1216, %1215 : vector<8x128xf32>
    %1218 = arith.divf %1216, %1217 : vector<8x128xf32>
    %1219 = math.tanh %1211 : vector<8x128xf32>
    %1220 = vector.extract_strided_slice %1218 {offsets = [0, 0], sizes = [8, 32], strides = [1, 1]} : vector<8x128xf32> to vector<8x32xf32>
    %1221 = vector.extract_strided_slice %1218 {offsets = [0, 32], sizes = [8, 32], strides = [1, 1]} : vector<8x128xf32> to vector<8x32xf32>
    %1222 = vector.extract_strided_slice %1219 {offsets = [0, 64], sizes = [8, 32], strides = [1, 1]} : vector<8x128xf32> to vector<8x32xf32>
    %1223 = vector.extract_strided_slice %1218 {offsets = [0, 96], sizes = [8, 32], strides = [1, 1]} : vector<8x128xf32> to vector<8x32xf32>
    %1224 = arith.mulf %1221, %1187 : vector<8x32xf32>
    %1225 = arith.mulf %1220, %1222 : vector<8x32xf32>
    %1226 = arith.addf %1224, %1225 : vector<8x32xf32>
    %1227 = math.tanh %1226 : vector<8x32xf32>
    %1228 = arith.mulf %1223, %1227 : vector<8x32xf32>
    %1229 = arith.negf %1213 : vector<8x128xf32>
    %1230 = math.exp %1229 : vector<8x128xf32>
    %cst_351 = arith.constant 1.000000e+00 : f32
    %1231 = vector.broadcast %cst_351 : f32 to vector<8x128xf32>
    %1232 = arith.addf %1231, %1230 : vector<8x128xf32>
    %1233 = arith.divf %1231, %1232 : vector<8x128xf32>
    %1234 = math.tanh %1213 : vector<8x128xf32>
    %1235 = vector.extract_strided_slice %1233 {offsets = [0, 0], sizes = [8, 32], strides = [1, 1]} : vector<8x128xf32> to vector<8x32xf32>
    %1236 = vector.extract_strided_slice %1233 {offsets = [0, 32], sizes = [8, 32], strides = [1, 1]} : vector<8x128xf32> to vector<8x32xf32>
    %1237 = vector.extract_strided_slice %1234 {offsets = [0, 64], sizes = [8, 32], strides = [1, 1]} : vector<8x128xf32> to vector<8x32xf32>
    %1238 = vector.extract_strided_slice %1233 {offsets = [0, 96], sizes = [8, 32], strides = [1, 1]} : vector<8x128xf32> to vector<8x32xf32>
    %1239 = arith.mulf %1236, %1202 : vector<8x32xf32>
    %1240 = arith.mulf %1235, %1237 : vector<8x32xf32>
    %1241 = arith.addf %1239, %1240 : vector<8x32xf32>
    %1242 = math.tanh %1241 : vector<8x32xf32>
    %1243 = arith.mulf %1238, %1242 : vector<8x32xf32>
    %c48_352 = arith.constant 48 : index
    %c0_353 = arith.constant 0 : index
    %1244 = vector.load %arg9[%c48_352, %c0_353] : memref<64x256xf32, #tpu.memory_space<vmem>>, vector<8x128xf32>
    %c8_354 = arith.constant 8 : index
    %c128_355 = arith.constant 128 : index
    %1245 = vector.load %arg9[%c8_354, %c128_355] : memref<64x256xf32, #tpu.memory_space<vmem>>, vector<8x128xf32>
    %1246 = tpu.concatenate %1228, %1243 in 1 : vector<8x32xf32>, vector<8x32xf32> -> vector<8x64xf32>
    %1247 = arith.truncf %1246 : vector<8x64xf32> to vector<8x64xbf16>
    %cst_356 = arith.constant dense<0.000000e+00> : vector<8x256xf32>
    %1248 = tpu.matmul %1247, %1014, %cst_356 {dimension_numbers = #tpu.dot_dimension_numbers<[1], [0], [0], [1], [0, 0, 1, 1], [], []>} : vector<8x64xbf16>, vector<64x256xbf16>, vector<8x256xf32> -> vector<8x256xf32>
    %1249 = vector.extract_strided_slice %1248 {offsets = [0, 0], sizes = [8, 128], strides = [1, 1]} : vector<8x256xf32> to vector<8x128xf32>
    %1250 = arith.addf %1244, %1249 : vector<8x128xf32>
    %1251 = vector.extract_strided_slice %1248 {offsets = [0, 128], sizes = [8, 128], strides = [1, 1]} : vector<8x256xf32> to vector<8x128xf32>
    %1252 = arith.addf %1245, %1251 : vector<8x128xf32>
    %1253 = arith.negf %1250 : vector<8x128xf32>
    %1254 = math.exp %1253 : vector<8x128xf32>
    %cst_357 = arith.constant 1.000000e+00 : f32
    %1255 = vector.broadcast %cst_357 : f32 to vector<8x128xf32>
    %1256 = arith.addf %1255, %1254 : vector<8x128xf32>
    %1257 = arith.divf %1255, %1256 : vector<8x128xf32>
    %1258 = math.tanh %1250 : vector<8x128xf32>
    %1259 = vector.extract_strided_slice %1257 {offsets = [0, 0], sizes = [8, 32], strides = [1, 1]} : vector<8x128xf32> to vector<8x32xf32>
    %1260 = vector.extract_strided_slice %1257 {offsets = [0, 32], sizes = [8, 32], strides = [1, 1]} : vector<8x128xf32> to vector<8x32xf32>
    %1261 = vector.extract_strided_slice %1258 {offsets = [0, 64], sizes = [8, 32], strides = [1, 1]} : vector<8x128xf32> to vector<8x32xf32>
    %1262 = vector.extract_strided_slice %1257 {offsets = [0, 96], sizes = [8, 32], strides = [1, 1]} : vector<8x128xf32> to vector<8x32xf32>
    %1263 = arith.mulf %1260, %1226 : vector<8x32xf32>
    %1264 = arith.mulf %1259, %1261 : vector<8x32xf32>
    %1265 = arith.addf %1263, %1264 : vector<8x32xf32>
    %1266 = math.tanh %1265 : vector<8x32xf32>
    %1267 = arith.mulf %1262, %1266 : vector<8x32xf32>
    %1268 = arith.negf %1252 : vector<8x128xf32>
    %1269 = math.exp %1268 : vector<8x128xf32>
    %cst_358 = arith.constant 1.000000e+00 : f32
    %1270 = vector.broadcast %cst_358 : f32 to vector<8x128xf32>
    %1271 = arith.addf %1270, %1269 : vector<8x128xf32>
    %1272 = arith.divf %1270, %1271 : vector<8x128xf32>
    %1273 = math.tanh %1252 : vector<8x128xf32>
    %1274 = vector.extract_strided_slice %1272 {offsets = [0, 0], sizes = [8, 32], strides = [1, 1]} : vector<8x128xf32> to vector<8x32xf32>
    %1275 = vector.extract_strided_slice %1272 {offsets = [0, 32], sizes = [8, 32], strides = [1, 1]} : vector<8x128xf32> to vector<8x32xf32>
    %1276 = vector.extract_strided_slice %1273 {offsets = [0, 64], sizes = [8, 32], strides = [1, 1]} : vector<8x128xf32> to vector<8x32xf32>
    %1277 = vector.extract_strided_slice %1272 {offsets = [0, 96], sizes = [8, 32], strides = [1, 1]} : vector<8x128xf32> to vector<8x32xf32>
    %1278 = arith.mulf %1275, %1241 : vector<8x32xf32>
    %1279 = arith.mulf %1274, %1276 : vector<8x32xf32>
    %1280 = arith.addf %1278, %1279 : vector<8x32xf32>
    %1281 = math.tanh %1280 : vector<8x32xf32>
    %1282 = arith.mulf %1277, %1281 : vector<8x32xf32>
    %c56_359 = arith.constant 56 : index
    %c0_360 = arith.constant 0 : index
    %1283 = vector.load %arg9[%c56_359, %c0_360] : memref<64x256xf32, #tpu.memory_space<vmem>>, vector<8x128xf32>
    %1284 = tpu.concatenate %1267, %1282 in 1 : vector<8x32xf32>, vector<8x32xf32> -> vector<8x64xf32>
    %1285 = arith.truncf %1284 : vector<8x64xf32> to vector<8x64xbf16>
    %cst_361 = arith.constant dense<0.000000e+00> : vector<8x256xf32>
    %1286 = tpu.matmul %1285, %1014, %cst_361 {dimension_numbers = #tpu.dot_dimension_numbers<[1], [0], [0], [1], [0, 0, 1, 1], [], []>} : vector<8x64xbf16>, vector<64x256xbf16>, vector<8x256xf32> -> vector<8x256xf32>
    %1287 = vector.extract_strided_slice %1286 {offsets = [0, 0], sizes = [8, 128], strides = [1, 1]} : vector<8x256xf32> to vector<8x128xf32>
    %1288 = arith.addf %1283, %1287 : vector<8x128xf32>
    %1289 = arith.negf %1288 : vector<8x128xf32>
    %1290 = math.exp %1289 : vector<8x128xf32>
    %cst_362 = arith.constant 1.000000e+00 : f32
    %1291 = vector.broadcast %cst_362 : f32 to vector<8x128xf32>
    %1292 = arith.addf %1291, %1290 : vector<8x128xf32>
    %1293 = arith.divf %1291, %1292 : vector<8x128xf32>
    %1294 = math.tanh %1288 : vector<8x128xf32>
    %1295 = vector.extract_strided_slice %1293 {offsets = [0, 0], sizes = [8, 32], strides = [1, 1]} : vector<8x128xf32> to vector<8x32xf32>
    %1296 = vector.extract_strided_slice %1293 {offsets = [0, 32], sizes = [8, 32], strides = [1, 1]} : vector<8x128xf32> to vector<8x32xf32>
    %1297 = vector.extract_strided_slice %1294 {offsets = [0, 64], sizes = [8, 32], strides = [1, 1]} : vector<8x128xf32> to vector<8x32xf32>
    %1298 = vector.extract_strided_slice %1293 {offsets = [0, 96], sizes = [8, 32], strides = [1, 1]} : vector<8x128xf32> to vector<8x32xf32>
    %1299 = arith.mulf %1296, %1265 : vector<8x32xf32>
    %1300 = arith.mulf %1295, %1297 : vector<8x32xf32>
    %1301 = arith.addf %1299, %1300 : vector<8x32xf32>
    %1302 = math.tanh %1301 : vector<8x32xf32>
    %1303 = arith.mulf %1298, %1302 : vector<8x32xf32>
    %c0_363 = arith.constant 0 : index
    %c0_364 = arith.constant 0 : index
    %1304 = vector.load %arg5[%c0_363, %c0_364] : memref<64x5xbf16, #tpu.memory_space<vmem>>, vector<64x5xbf16>
    %1305 = arith.truncf %1303 : vector<8x32xf32> to vector<8x32xbf16>
    %1306 = vector.extract_strided_slice %1304 {offsets = [0, 0], sizes = [32, 5], strides = [1, 1]} : vector<64x5xbf16> to vector<32x5xbf16>
    %cst_365 = arith.constant dense<0.000000e+00> : vector<8x5xf32>
    %1307 = tpu.matmul %1305, %1306, %cst_365 {dimension_numbers = #tpu.dot_dimension_numbers<[1], [0], [0], [1], [0, 0, 1, 1], [], []>} : vector<8x32xbf16>, vector<32x5xbf16>, vector<8x5xf32> -> vector<8x5xf32>
    %1308 = arith.truncf %1048 : vector<8x32xf32> to vector<8x32xbf16>
    %1309 = vector.extract_strided_slice %1304 {offsets = [32, 0], sizes = [32, 5], strides = [1, 1]} : vector<64x5xbf16> to vector<32x5xbf16>
    %cst_366 = arith.constant dense<0.000000e+00> : vector<8x5xf32>
    %1310 = tpu.matmul %1308, %1309, %cst_366 {dimension_numbers = #tpu.dot_dimension_numbers<[1], [0], [0], [1], [0, 0, 1, 1], [], []>} : vector<8x32xbf16>, vector<32x5xbf16>, vector<8x5xf32> -> vector<8x5xf32>
    %1311 = arith.addf %1307, %1310 : vector<8x5xf32>
    %c0_367 = arith.constant 0 : index
    %c0_368 = arith.constant 0 : index
    %1312 = vector.load %arg6[%c0_367, %c0_368] : memref<1x5xf32, #tpu.memory_space<vmem>>, vector<1x5xf32>
    %1313 = vector.broadcast %1312 : vector<1x5xf32> to vector<8x5xf32>
    %1314 = arith.addf %1311, %1313 : vector<8x5xf32>
    %cst_369 = arith.constant dense<0xFF800000> : vector<8xf32>
    %1315 = vector.multi_reduction <maximumf>, %1314, %cst_369 [1] : vector<8x5xf32> to vector<8xf32>
    %1316 = vector.shape_cast %1315 : vector<8xf32> to vector<8x1xf32>
    %1317 = vector.broadcast %1316 : vector<8x1xf32> to vector<8x5xf32>
    %1318 = arith.subf %1314, %1317 : vector<8x5xf32>
    %1319 = math.exp %1318 : vector<8x5xf32>
    %cst_370 = arith.constant dense<0.000000e+00> : vector<8xf32>
    %1320 = vector.multi_reduction <add>, %1319, %cst_370 [1] : vector<8x5xf32> to vector<8xf32>
    %1321 = vector.shape_cast %1320 : vector<8xf32> to vector<8x1xf32>
    %1322 = math.log %1321 : vector<8x1xf32>
    %1323 = vector.broadcast %1322 : vector<8x1xf32> to vector<8x5xf32>
    %1324 = arith.subf %1318, %1323 : vector<8x5xf32>
    %c0_371 = arith.constant 0 : index
    %c0_372 = arith.constant 0 : index
    %1325 = vector.load %arg7[%c0_371, %c0_372] : memref<8x5xf32, #tpu.memory_space<vmem>>, vector<8x5xf32>
    tpu.vector_store %arg7[%c0_371, %c0_372], %1324 {strides = array<i32>} : memref<8x5xf32, #tpu.memory_space<vmem>>, vector<8x5xf32>,
    return
  }
}

</mosaic_0001>

<llo_original>
// kernel: rnn_classifier_forward.1
$region0: #{rnn_classifier_forward.1}
  #allocation0 [shape = 'u32[]', space=smem, size = 0x4, offset = 0x4, fixed_abs, tag = 'smem constant byte address 0x4 - core index']
  #allocation1 [shape = 'u32[144,128]{1,0:T(1,128)}', space=vmem, size = 0x12000, scoped, tag = 'internal scratch']
  #allocation2 [shape = 'f32[64,64]{1,0:T(8,128)}', space=vmem, size = 0x8000, scoped, tag = 'scratch operand']
  #allocation3 [shape = 'f32[64,256]{1,0:T(8,128)}', space=vmem, size = 0x10000, scoped, tag = 'scratch operand']
  %s0 = inlined_call_operand.vmem [shape: bf16[64,32], index: 0, kind: input, shape index: {}]
  %s1 = inlined_call_operand.vmem [shape: bf16[32,256], index: 1, kind: input, shape index: {}]
  %s2 = inlined_call_operand.vmem [shape: bf16[3,64,256], index: 2, kind: input, shape index: {}]
  %s3 = inlined_call_operand.vmem [shape: bf16[4,64,256], index: 3, kind: input, shape index: {}]
  %s4 = inlined_call_operand.vmem [shape: f32[4,1,256], index: 4, kind: input, shape index: {}]
  %s5 = inlined_call_operand.vmem [shape: bf16[64,5], index: 5, kind: input, shape index: {}]
  %s6 = inlined_call_operand.vmem [shape: f32[1,5], index: 6, kind: input, shape index: {}]
  %s7 = inlined_call_operand.vmem [shape: f32[8,5], index: 7, kind: output, shape index: {}]
  %s8 = sld [smem:[#allocation0]]
  $region38: #{rnn_classifier_forward.1} parent=0
    _
  %s10 = ssub.s32 1, %s8
  %s11 = scalar_select 0, %s10, %s8
  // Predicated region
  $region2: #{rnn_classifier_forward.1} parent=0 // pred_check
    _
  $region3: #{rnn_classifier_forward.1} parent=0 // pred_check_branch
    %13 = sbr.rel (0) target = $region5
  $region4: #{rnn_classifier_forward.1} parent=0 // pred_region
    _
  $region5: #{rnn_classifier_forward.1} parent=0 // pred_fallthru
    _
  // Predicated region
  $region6: #{rnn_classifier_forward.1} parent=0 // pred_check
    _
  $region7: #{rnn_classifier_forward.1} parent=0 // pred_check_branch
    %15 = sbr.rel (0) target = $region9
  $region8: #{rnn_classifier_forward.1} parent=0 // pred_region
    _
  $region9: #{rnn_classifier_forward.1} parent=0 // pred_fallthru
    _
  // Predicated region
  $region10: #{rnn_classifier_forward.1} parent=0 // pred_check
    _
  $region11: #{rnn_classifier_forward.1} parent=0 // pred_check_branch
    %17 = sbr.rel (0) target = $region13
  $region12: #{rnn_classifier_forward.1} parent=0 // pred_region
    _
  $region13: #{rnn_classifier_forward.1} parent=0 // pred_fallthru
    _
  // Predicated region
  $region14: #{rnn_classifier_forward.1} parent=0 // pred_check
    _
  $region15: #{rnn_classifier_forward.1} parent=0 // pred_check_branch
    %19 = sbr.rel (0) target = $region17
  $region16: #{rnn_classifier_forward.1} parent=0 // pred_region
    _
  $region17: #{rnn_classifier_forward.1} parent=0 // pred_fallthru
    _
  // Predicated region
  $region18: #{rnn_classifier_forward.1} parent=0 // pred_check
    _
  $region19: #{rnn_classifier_forward.1} parent=0 // pred_check_branch
    %21 = sbr.rel (0) target = $region21
  $region20: #{rnn_classifier_forward.1} parent=0 // pred_region
    _
  $region21: #{rnn_classifier_forward.1} parent=0 // pred_fallthru
    _
  // Predicated region
  $region22: #{rnn_classifier_forward.1} parent=0 // pred_check
    _
  $region23: #{rnn_classifier_forward.1} parent=0 // pred_check_branch
    %23 = sbr.rel (0) target = $region25
  $region24: #{rnn_classifier_forward.1} parent=0 // pred_region
    _
  $region25: #{rnn_classifier_forward.1} parent=0 // pred_fallthru
    _
  // Predicated region
  $region26: #{rnn_classifier_forward.1} parent=0 // pred_check
    _
  $region27: #{rnn_classifier_forward.1} parent=0 // pred_check_branch
    %25 = sbr.rel (0) target = $region29
  $region28: #{rnn_classifier_forward.1} parent=0 // pred_region
    _
  $region29: #{rnn_classifier_forward.1} parent=0 // pred_fallthru
    _
  %v27 = vld [vmem:[%s0] sm:$0xf]
  %v28 = vld [vmem:[%s0 + $0x4] sm:$0xf]
  %v29 = vld [vmem:[%s0 + $0x8] sm:$0xf]
  %v30 = vld [vmem:[%s0 + $0xc] sm:$0xf]
  %v31 = vld [vmem:[%s0 + $0x10] sm:$0xf]
  %v32 = vld [vmem:[%s0 + $0x14] sm:$0xf]
  %v33 = vld [vmem:[%s0 + $0x18] sm:$0xf]
  %v34 = vld [vmem:[%s0 + $0x1c] sm:$0xf]
  %v35 = vld [vmem:[%s1] sm:$0xff]
  %v36 = vld [vmem:[%s1 + $0x8] sm:$0xff]
  %v37 = vld [vmem:[%s1 + $0x10] sm:$0xff]
  %v38 = vld [vmem:[%s1 + $0x18] sm:$0xff]
  %v39 = vld [vmem:[%s4] sm:$0x3]
  %v41 = vlaneseq
  %v42 = vshrl.u32 %v41, 7
  %v43 = vsub.s32 0, %v42
  %v44 = vrot.slane %v39, %v43
  %v45 = vlaneseq
  %v46 = vshrl.u32 %v45, 7
  %v47 = vsub.s32 1, %v46
  %v48 = vrot.slane %v39, %v47
  %v59 = vunpack.c.l.b16 %v27
  %v60 = vunpack.c.l.b16 %v28
  %v61 = vunpack.c.l.b16 %v29
  %v62 = vunpack.c.l.b16 %v30
  %v63 = vunpack.c.l.b16 %v31
  %v64 = vunpack.c.l.b16 %v32
  %v65 = vunpack.c.l.b16 %v33
  %v66 = vunpack.c.l.b16 %v34
  %v67 = vpack.c.b16 %v60, %v59
  %v68 = vpack.c.b16 %v62, %v61
  %v69 = vpack.c.b16 %v64, %v63
  %v70 = vpack.c.b16 %v66, %v65
  %v75 = vunpack.c.l.b16 %v35
  %v76 = vunpack.c.h.b16 %v35
  %v77 = vunpack.c.l.b16 %v36
  %v78 = vunpack.c.h.b16 %v36
  %v79 = vunpack.c.l.b16 %v37
  %v80 = vunpack.c.h.b16 %v37
  %v81 = vunpack.c.l.b16 %v38
  %v82 = vunpack.c.h.b16 %v38
  %v83 = vpack.c.b16 %v77, %v75
  %v84 = vpack.c.b16 %v78, %v76
  %v85 = vpack.c.b16 %v81, %v79
  %v86 = vpack.c.b16 %v82, %v80
  %vm91 = vcmask 261120
  %v93 = vsel %vm91, %v67, 0
  %v96 = vsel %vm91, %v68, 0
  %v99 = vsel %vm91, %v69, 0
  %v102 = vsel %vm91, %v70, 0
  %104 = vmatprep.subr.bf16.mxu0 %v84
  %105 = vmatpush1.bf16.msra.mxu0 %v83
  %106 = vmatprep.subr.bf16.mxu0 %v86
  %107 = vmatpush1.bf16.msra.mxu0 %v85
  %108 = vmatprep.subr.bf16.mxu0 0
  %109 = vmatpush1.bf16.msra.mxu0 0
  %110 = vmatprep.subr.bf16.mxu0 0
  %111 = vmatpush1.bf16.msra.mxu0 0
  %112 = vmatprep.subr.bf16.mxu0 0
  %113 = vmatpush1.bf16.msra.mxu0 0
  %114 = vmatprep.subr.bf16.mxu0 0
  %115 = vmatpush1.bf16.msra.mxu0 0
  %116 = vmatprep.subr.bf16.mxu0 0
  %117 = vmatpush1.bf16.msra.mxu0 0
  %118 = vmatprep.subr.bf16.mxu0 0
  %119 = vmatpush1.bf16.msra.mxu0 0
  %120 = vmatprep.subr.bf16.mxu0 0
  %121 = vmatpush1.bf16.msra.mxu0 0
  %122 = vmatprep.subr.bf16.mxu0 0
  %123 = vmatpush1.bf16.msra.mxu0 0
  %124 = vmatprep.subr.bf16.mxu0 0
  %125 = vmatpush1.bf16.msra.mxu0 0
  %126 = vmatprep.subr.bf16.mxu0 0
  %127 = vmatpush1.bf16.msra.mxu0 0
  %128 = vmatprep.subr.bf16.mxu0 0
  %129 = vmatpush1.bf16.msra.mxu0 0
  %130 = vmatprep.subr.bf16.mxu0 0
  %131 = vmatpush1.bf16.msra.mxu0 0
  %132 = vmatprep.subr.bf16.mxu0 0
  %133 = vmatpush1.bf16.msra.mxu0 0
  %134 = vmatprep.subr.bf16.mxu0 0
  %135 = vmatpush1.bf16.msra.mxu0 0
  %136 = vmatprep.mubr.bf16.mxu0 0
  %137 = vmatmul.mubr.bf16.gmra.mrb[0].mxu0 %v93
  %v138 = vpop.f32.mrb[0].mxu0
  %v139 = vadd.f32 %v44, %v138
  %v140 = vpop.f32.mrb[0].mxu0
  %v141 = vadd.f32 %v48, %v140
  %v142 = vpop.f32.mrb[0].mxu0
  %v143 = vadd.f32 %v44, %v142
  %v144 = vpop.f32.mrb[0].mxu0
  %v145 = vadd.f32 %v48, %v144
  %146 = vmatprep.mubr.bf16.mxu0 0
  %147 = vmatmul.mubr.bf16.gmra.mrb[0].mxu0 %v96
  %v148 = vpop.f32.mrb[0].mxu0
  %v149 = vadd.f32 %v44, %v148
  %v150 = vpop.f32.mrb[0].mxu0
  %v151 = vadd.f32 %v48, %v150
  %v152 = vpop.f32.mrb[0].mxu0
  %v153 = vadd.f32 %v44, %v152
  %v154 = vpop.f32.mrb[0].mxu0
  %v155 = vadd.f32 %v48, %v154
  %156 = vmatprep.mubr.bf16.mxu0 0
  %157 = vmatmul.mubr.bf16.gmra.mrb[0].mxu0 %v99
  %v158 = vpop.f32.mrb[0].mxu0
  %v159 = vadd.f32 %v44, %v158
  %v160 = vpop.f32.mrb[0].mxu0
  %v161 = vadd.f32 %v48, %v160
  %v162 = vpop.f32.mrb[0].mxu0
  %v163 = vadd.f32 %v44, %v162
  %v164 = vpop.f32.mrb[0].mxu0
  %v165 = vadd.f32 %v48, %v164
  %166 = vmatprep.mubr.bf16.mxu0 0
  %167 = vmatmul.mubr.bf16.gmra.mrb[0].mxu0 %v102
  %v168 = vpop.f32.mrb[0].mxu0
  %v169 = vadd.f32 %v44, %v168
  %v170 = vpop.f32.mrb[0].mxu0
  %v171 = vadd.f32 %v48, %v170
  %v172 = vpop.f32.mrb[0].mxu0
  %v173 = vadd.f32 %v44, %v172
  %v174 = vpop.f32.mrb[0].mxu0
  %v175 = vadd.f32 %v48, %v174
  %176 = vdwg.mxu0
  %177 = vst [vmem:[#allocation3] sm:$0xff] %v139
  %178 = vst [vmem:[#allocation3 + $0x8] sm:$0xff] %v141
  %179 = vst [vmem:[#allocation3 + $0x10] sm:$0xff] %v143
  %180 = vst [vmem:[#allocation3 + $0x18] sm:$0xff] %v145
  %181 = vst [vmem:[#allocation3 + $0x20] sm:$0xff] %v149
  %182 = vst [vmem:[#allocation3 + $0x28] sm:$0xff] %v151
  %183 = vst [vmem:[#allocation3 + $0x30] sm:$0xff] %v153
  %184 = vst [vmem:[#allocation3 + $0x38] sm:$0xff] %v155
  %185 = vst [vmem:[#allocation3 + $0x40] sm:$0xff] %v159
  %186 = vst [vmem:[#allocation3 + $0x48] sm:$0xff] %v161
  %187 = vst [vmem:[#allocation3 + $0x50] sm:$0xff] %v163
  %188 = vst [vmem:[#allocation3 + $0x58] sm:$0xff] %v165
  %189 = vst [vmem:[#allocation3 + $0x60] sm:$0xff] %v169
  %190 = vst [vmem:[#allocation3 + $0x68] sm:$0xff] %v171
  %191 = vst [vmem:[#allocation3 + $0x70] sm:$0xff] %v173
  %192 = vst [vmem:[#allocation3 + $0x78] sm:$0xff] %v175
  %v193 = vld [vmem:[%s3] sm:$0xff]
  %v194 = vld [vmem:[%s3 + $0x8] sm:$0xff]
  %v195 = vld [vmem:[%s3 + $0x10] sm:$0xff]
  %v196 = vld [vmem:[%s3 + $0x18] sm:$0xff]
  %v197 = vld [vmem:[%s3 + $0x20] sm:$0xff]
  %v198 = vld [vmem:[%s3 + $0x28] sm:$0xff]
  %v199 = vld [vmem:[%s3 + $0x30] sm:$0xff]
  %v200 = vld [vmem:[%s3 + $0x38] sm:$0xff]
  %v201 = vld [vmem:[#allocation3] sm:$0xff]
  %v202 = vld [vmem:[#allocation3 + $0x78] sm:$0xff]
  %v203 = vxor.u32 %v201, 2147483648
  %v204 = vmul.f32 %v203, 1.442695
  %v205 = vpow.pop %v204
  %v206 = vadd.f32 %v205, 1.0
  %v207 = vrcp.pop %v206
  %v208 = vmul.f32 1.0, %v207
  %v209 = vtanh.pop %v201
  %v210 = vmul.f32 %v208, 0.0
  %212 = vrot.lane.b32.xlu0 %v209, 64
  %v213 = vpop.permute.xlu0 %212
  %v215 = vmul.f32 %v208, %v213
  %217 = vrot.lane.b32.xlu0 %v215, 32
  %v218 = vpop.permute.xlu0 %217
  %v220 = vadd.f32 %v210, %v218
  %v221 = vtanh.pop %v220
  %223 = vrot.lane.b32.xlu0 %v221, 64
  %v224 = vpop.permute.xlu0 %223
  %v226 = vmul.f32 %v208, %v224
  %v227 = vxor.u32 %v202, 2147483648
  %v228 = vmul.f32 %v227, 1.442695
  %v229 = vpow.pop %v228
  %v230 = vadd.f32 %v229, 1.0
  %v231 = vrcp.pop %v230
  %v232 = vmul.f32 1.0, %v231
  %v233 = vtanh.pop %v202
  %v234 = vmul.f32 %v232, 0.0
  %236 = vrot.lane.b32.xlu0 %v233, 64
  %v237 = vpop.permute.xlu0 %236
  %v239 = vmul.f32 %v232, %v237
  %241 = vrot.lane.b32.xlu0 %v239, 32
  %v242 = vpop.permute.xlu0 %241
  %v244 = vadd.f32 %v234, %v242
  %v245 = vtanh.pop %v244
  %247 = vrot.lane.b32.xlu0 %v245, 64
  %v248 = vpop.permute.xlu0 %247
  %v250 = vmul.f32 %v232, %v248
  %252 = vrot.lane.b32.xlu0 %v226, 32
  %v253 = vpop.permute.xlu0 %252
  %255 = vst.msk [vmem:[#allocation2] sm:$0xff] %vm91, %v253
  %257 = vrot.lane.b32.xlu0 %v250, 64
  %v258 = vpop.permute.xlu0 %257
  %vm260 = vcmask 523520
  %261 = vst.msk [vmem:[#allocation2 + $0x38] sm:$0xff] %vm260, %v258
  %v262 = vld [vmem:[#allocation3 + $0x10] sm:$0xff]
  %v263 = vld [vmem:[#allocation3 + $0x68] sm:$0xff]
  %v264 = vsel %vm91, %v253, %v258
  %v265 = vpack.c.bf16 %v264, %v264
  %v274 = vunpack.c.l.b16 %v193
  %v275 = vunpack.c.h.b16 %v193
  %v276 = vunpack.c.l.b16 %v194
  %v277 = vunpack.c.h.b16 %v194
  %v278 = vunpack.c.l.b16 %v195
  %v279 = vunpack.c.h.b16 %v195
  %v280 = vunpack.c.l.b16 %v196
  %v281 = vunpack.c.h.b16 %v196
  %v282 = vunpack.c.l.b16 %v197
  %v283 = vunpack.c.h.b16 %v197
  %v284 = vunpack.c.l.b16 %v198
  %v285 = vunpack.c.h.b16 %v198
  %v286 = vunpack.c.l.b16 %v199
  %v287 = vunpack.c.h.b16 %v199
  %v288 = vunpack.c.l.b16 %v200
  %v289 = vunpack.c.h.b16 %v200
  %v290 = vpack.c.b16 %v276, %v274
  %v291 = vpack.c.b16 %v277, %v275
  %v292 = vpack.c.b16 %v280, %v278
  %v293 = vpack.c.b16 %v281, %v279
  %v294 = vpack.c.b16 %v284, %v282
  %v295 = vpack.c.b16 %v285, %v283
  %v296 = vpack.c.b16 %v288, %v286
  %v297 = vpack.c.b16 %v289, %v287
  %vm306 = vcmask 523264
  %v308 = vsel %vm306, %v265, 0
  %310 = vmatprep.subr.bf16.mxu0 %v291
  %311 = vmatpush1.bf16.msra.mxu0 %v290
  %312 = vmatprep.subr.bf16.mxu0 %v293
  %313 = vmatpush1.bf16.msra.mxu0 %v292
  %314 = vmatprep.subr.bf16.mxu0 %v295
  %315 = vmatpush1.bf16.msra.mxu0 %v294
  %316 = vmatprep.subr.bf16.mxu0 %v297
  %317 = vmatpush1.bf16.msra.mxu0 %v296
  %318 = vmatprep.subr.bf16.mxu0 0
  %319 = vmatpush1.bf16.msra.mxu0 0
  %320 = vmatprep.subr.bf16.mxu0 0
  %321 = vmatpush1.bf16.msra.mxu0 0
  %322 = vmatprep.subr.bf16.mxu0 0
  %323 = vmatpush1.bf16.msra.mxu0 0
  %324 = vmatprep.subr.bf16.mxu0 0
  %325 = vmatpush1.bf16.msra.mxu0 0
  %326 = vmatprep.subr.bf16.mxu0 0
  %327 = vmatpush1.bf16.msra.mxu0 0
  %328 = vmatprep.subr.bf16.mxu0 0
  %329 = vmatpush1.bf16.msra.mxu0 0
  %330 = vmatprep.subr.bf16.mxu0 0
  %331 = vmatpush1.bf16.msra.mxu0 0
  %332 = vmatprep.subr.bf16.mxu0 0
  %333 = vmatpush1.bf16.msra.mxu0 0
  %334 = vmatprep.subr.bf16.mxu0 0
  %335 = vmatpush1.bf16.msra.mxu0 0
  %336 = vmatprep.subr.bf16.mxu0 0
  %337 = vmatpush1.bf16.msra.mxu0 0
  %338 = vmatprep.subr.bf16.mxu0 0
  %339 = vmatpush1.bf16.msra.mxu0 0
  %340 = vmatprep.subr.bf16.mxu0 0
  %341 = vmatpush1.bf16.msra.mxu0 0
  %342 = vmatprep.mubr.bf16.mxu0 0
  %343 = vmatmul.mubr.bf16.gmra.mrb[0].mxu0 %v308
  %v344 = vpop.f32.mrb[0].mxu0
  %v345 = vadd.f32 0.0, %v344
  %v346 = vpop.f32.mrb[0].mxu0
  %v347 = vadd.f32 0.0, %v346
  %v348 = vpop.f32.mrb[0].mxu0
  %v349 = vpop.f32.mrb[0].mxu0
  %350 = vdwg.mxu0
  %v351 = vadd.f32 %v262, %v345
  %v352 = vadd.f32 %v263, %v347
  %v353 = vxor.u32 %v351, 2147483648
  %v354 = vmul.f32 %v353, 1.442695
  %v355 = vpow.pop %v354
  %v356 = vadd.f32 %v355, 1.0
  %v357 = vrcp.pop %v356
  %v358 = vmul.f32 1.0, %v357
  %v359 = vtanh.pop %v351
  %v360 = vmul.f32 %v358, %v220
  %362 = vrot.lane.b32.xlu0 %v359, 64
  %v363 = vpop.permute.xlu0 %362
  %v365 = vmul.f32 %v358, %v363
  %367 = vrot.lane.b32.xlu0 %v365, 32
  %v368 = vpop.permute.xlu0 %367
  %v370 = vadd.f32 %v360, %v368
  %v371 = vtanh.pop %v370
  %373 = vrot.lane.b32.xlu0 %v371, 64
  %v374 = vpop.permute.xlu0 %373
  %v376 = vmul.f32 %v358, %v374
  %v377 = vxor.u32 %v352, 2147483648
  %v378 = vmul.f32 %v377, 1.442695
  %v379 = vpow.pop %v378
  %v380 = vadd.f32 %v379, 1.0
  %v381 = vrcp.pop %v380
  %v382 = vmul.f32 1.0, %v381
  %v383 = vtanh.pop %v352
  %v384 = vmul.f32 %v382, %v244
  %386 = vrot.lane.b32.xlu0 %v383, 64
  %v387 = vpop.permute.xlu0 %386
  %v389 = vmul.f32 %v382, %v387
  %391 = vrot.lane.b32.xlu0 %v389, 32
  %v392 = vpop.permute.xlu0 %391
  %v394 = vadd.f32 %v384, %v392
  %v395 = vtanh.pop %v394
  %397 = vrot.lane.b32.xlu0 %v395, 64
  %v398 = vpop.permute.xlu0 %397
  %v400 = vmul.f32 %v382, %v398
  %402 = vrot.lane.b32.xlu0 %v376, 32
  %v403 = vpop.permute.xlu0 %402
  %405 = vst.msk [vmem:[#allocation2 + $0x8] sm:$0xff] %vm91, %v403
  %407 = vrot.lane.b32.xlu0 %v400, 64
  %v408 = vpop.permute.xlu0 %407
  %410 = vst.msk [vmem:[#allocation2 + $0x30] sm:$0xff] %vm260, %v408
  %v411 = vld [vmem:[#allocation3 + $0x20] sm:$0xff]
  %v412 = vld [vmem:[#allocation3 + $0x58] sm:$0xff]
  %v413 = vsel %vm91, %v403, %v408
  %v414 = vpack.c.bf16 %v413, %v413
  %v416 = vsel %vm306, %v414, 0
  %418 = vmatprep.subr.bf16.mxu0 %v291
  %419 = vmatpush1.bf16.msra.mxu0 %v290
  %420 = vmatprep.subr.bf16.mxu0 %v293
  %421 = vmatpush1.bf16.msra.mxu0 %v292
  %422 = vmatprep.subr.bf16.mxu0 %v295
  %423 = vmatpush1.bf16.msra.mxu0 %v294
  %424 = vmatprep.subr.bf16.mxu0 %v297
  %425 = vmatpush1.bf16.msra.mxu0 %v296
  %426 = vmatprep.subr.bf16.mxu0 0
  %427 = vmatpush1.bf16.msra.mxu0 0
  %428 = vmatprep.subr.bf16.mxu0 0
  %429 = vmatpush1.bf16.msra.mxu0 0
  %430 = vmatprep.subr.bf16.mxu0 0
  %431 = vmatpush1.bf16.msra.mxu0 0
  %432 = vmatprep.subr.bf16.mxu0 0
  %433 = vmatpush1.bf16.msra.mxu0 0
  %434 = vmatprep.subr.bf16.mxu0 0
  %435 = vmatpush1.bf16.msra.mxu0 0
  %436 = vmatprep.subr.bf16.mxu0 0
  %437 = vmatpush1.bf16.msra.mxu0 0
  %438 = vmatprep.subr.bf16.mxu0 0
  %439 = vmatpush1.bf16.msra.mxu0 0
  %440 = vmatprep.subr.bf16.mxu0 0
  %441 = vmatpush1.bf16.msra.mxu0 0
  %442 = vmatprep.subr.bf16.mxu0 0
  %443 = vmatpush1.bf16.msra.mxu0 0
  %444 = vmatprep.subr.bf16.mxu0 0
  %445 = vmatpush1.bf16.msra.mxu0 0
  %446 = vmatprep.subr.bf16.mxu0 0
  %447 = vmatpush1.bf16.msra.mxu0 0
  %448 = vmatprep.subr.bf16.mxu0 0
  %449 = vmatpush1.bf16.msra.mxu0 0
  %450 = vmatprep.mubr.bf16.mxu0 0
  %451 = vmatmul.mubr.bf16.gmra.mrb[0].mxu0 %v416
  %v452 = vpop.f32.mrb[0].mxu0
  %v453 = vadd.f32 0.0, %v452
  %v454 = vpop.f32.mrb[0].mxu0
  %v455 = vadd.f32 0.0, %v454
  %v456 = vpop.f32.mrb[0].mxu0
  %v457 = vpop.f32.mrb[0].mxu0
  %458 = vdwg.mxu0
  %v459 = vadd.f32 %v411, %v453
  %v460 = vadd.f32 %v412, %v455
  %v461 = vxor.u32 %v459, 2147483648
  %v462 = vmul.f32 %v461, 1.442695
  %v463 = vpow.pop %v462
  %v464 = vadd.f32 %v463, 1.0
  %v465 = vrcp.pop %v464
  %v466 = vmul.f32 1.0, %v465
  %v467 = vtanh.pop %v459
  %v468 = vmul.f32 %v466, %v370
  %470 = vrot.lane.b32.xlu0 %v467, 64
  %v471 = vpop.permute.xlu0 %470
  %v473 = vmul.f32 %v466, %v471
  %475 = vrot.lane.b32.xlu0 %v473, 32
  %v476 = vpop.permute.xlu0 %475
  %v478 = vadd.f32 %v468, %v476
  %v479 = vtanh.pop %v478
  %481 = vrot.lane.b32.xlu0 %v479, 64
  %v482 = vpop.permute.xlu0 %481
  %v484 = vmul.f32 %v466, %v482
  %v485 = vxor.u32 %v460, 2147483648
  %v486 = vmul.f32 %v485, 1.442695
  %v487 = vpow.pop %v486
  %v488 = vadd.f32 %v487, 1.0
  %v489 = vrcp.pop %v488
  %v490 = vmul.f32 1.0, %v489
  %v491 = vtanh.pop %v460
  %v492 = vmul.f32 %v490, %v394
  %494 = vrot.lane.b32.xlu0 %v491, 64
  %v495 = vpop.permute.xlu0 %494
  %v497 = vmul.f32 %v490, %v495
  %499 = vrot.lane.b32.xlu0 %v497, 32
  %v500 = vpop.permute.xlu0 %499
  %v502 = vadd.f32 %v492, %v500
  %v503 = vtanh.pop %v502
  %505 = vrot.lane.b32.xlu0 %v503, 64
  %v506 = vpop.permute.xlu0 %505
  %v508 = vmul.f32 %v490, %v506
  %510 = vrot.lane.b32.xlu0 %v484, 32
  %v511 = vpop.permute.xlu0 %510
  %513 = vst.msk [vmem:[#allocation2 + $0x10] sm:$0xff] %vm91, %v511
  %515 = vrot.lane.b32.xlu0 %v508, 64
  %v516 = vpop.permute.xlu0 %515
  %518 = vst.msk [vmem:[#allocation2 + $0x28] sm:$0xff] %vm260, %v516
  %v519 = vld [vmem:[#allocation3 + $0x30] sm:$0xff]
  %v520 = vld [vmem:[#allocation3 + $0x48] sm:$0xff]
  %v521 = vsel %vm91, %v511, %v516
  %v522 = vpack.c.bf16 %v521, %v521
  %v524 = vsel %vm306, %v522, 0
  %526 = vmatprep.subr.bf16.mxu0 %v291
  %527 = vmatpush1.bf16.msra.mxu0 %v290
  %528 = vmatprep.subr.bf16.mxu0 %v293
  %529 = vmatpush1.bf16.msra.mxu0 %v292
  %530 = vmatprep.subr.bf16.mxu0 %v295
  %531 = vmatpush1.bf16.msra.mxu0 %v294
  %532 = vmatprep.subr.bf16.mxu0 %v297
  %533 = vmatpush1.bf16.msra.mxu0 %v296
  %534 = vmatprep.subr.bf16.mxu0 0
  %535 = vmatpush1.bf16.msra.mxu0 0
  %536 = vmatprep.subr.bf16.mxu0 0
  %537 = vmatpush1.bf16.msra.mxu0 0
  %538 = vmatprep.subr.bf16.mxu0 0
  %539 = vmatpush1.bf16.msra.mxu0 0
  %540 = vmatprep.subr.bf16.mxu0 0
  %541 = vmatpush1.bf16.msra.mxu0 0
  %542 = vmatprep.subr.bf16.mxu0 0
  %543 = vmatpush1.bf16.msra.mxu0 0
  %544 = vmatprep.subr.bf16.mxu0 0
  %545 = vmatpush1.bf16.msra.mxu0 0
  %546 = vmatprep.subr.bf16.mxu0 0
  %547 = vmatpush1.bf16.msra.mxu0 0
  %548 = vmatprep.subr.bf16.mxu0 0
  %549 = vmatpush1.bf16.msra.mxu0 0
  %550 = vmatprep.subr.bf16.mxu0 0
  %551 = vmatpush1.bf16.msra.mxu0 0
  %552 = vmatprep.subr.bf16.mxu0 0
  %553 = vmatpush1.bf16.msra.mxu0 0
  %554 = vmatprep.subr.bf16.mxu0 0
  %555 = vmatpush1.bf16.msra.mxu0 0
  %556 = vmatprep.subr.bf16.mxu0 0
  %557 = vmatpush1.bf16.msra.mxu0 0
  %558 = vmatprep.mubr.bf16.mxu0 0
  %559 = vmatmul.mubr.bf16.gmra.mrb[0].mxu0 %v524
  %v560 = vpop.f32.mrb[0].mxu0
  %v561 = vadd.f32 0.0, %v560
  %v562 = vpop.f32.mrb[0].mxu0
  %v563 = vadd.f32 0.0, %v562
  %v564 = vpop.f32.mrb[0].mxu0
  %v565 = vpop.f32.mrb[0].mxu0
  %566 = vdwg.mxu0
  %v567 = vadd.f32 %v519, %v561
  %v568 = vadd.f32 %v520, %v563
  %v569 = vxor.u32 %v567, 2147483648
  %v570 = vmul.f32 %v569, 1.442695
  %v571 = vpow.pop %v570
  %v572 = vadd.f32 %v571, 1.0
  %v573 = vrcp.pop %v572
  %v574 = vmul.f32 1.0, %v573
  %v575 = vtanh.pop %v567
  %v576 = vmul.f32 %v574, %v478
  %578 = vrot.lane.b32.xlu0 %v575, 64
  %v579 = vpop.permute.xlu0 %578
  %v581 = vmul.f32 %v574, %v579
  %583 = vrot.lane.b32.xlu0 %v581, 32
  %v584 = vpop.permute.xlu0 %583
  %v586 = vadd.f32 %v576, %v584
  %v587 = vtanh.pop %v586
  %589 = vrot.lane.b32.xlu0 %v587, 64
  %v590 = vpop.permute.xlu0 %589
  %v592 = vmul.f32 %v574, %v590
  %v593 = vxor.u32 %v568, 2147483648
  %v594 = vmul.f32 %v593, 1.442695
  %v595 = vpow.pop %v594
  %v596 = vadd.f32 %v595, 1.0
  %v597 = vrcp.pop %v596
  %v598 = vmul.f32 1.0, %v597
  %v599 = vtanh.pop %v568
  %v600 = vmul.f32 %v598, %v502
  %602 = vrot.lane.b32.xlu0 %v599, 64
  %v603 = vpop.permute.xlu0 %602
  %v605 = vmul.f32 %v598, %v603
  %607 = vrot.lane.b32.xlu0 %v605, 32
  %v608 = vpop.permute.xlu0 %607
  %v610 = vadd.f32 %v600, %v608
  %v611 = vtanh.pop %v610
  %613 = vrot.lane.b32.xlu0 %v611, 64
  %v614 = vpop.permute.xlu0 %613
  %v616 = vmul.f32 %v598, %v614
  %618 = vrot.lane.b32.xlu0 %v592, 32
  %v619 = vpop.permute.xlu0 %618
  %621 = vst.msk [vmem:[#allocation2 + $0x18] sm:$0xff] %vm91, %v619
  %623 = vrot.lane.b32.xlu0 %v616, 64
  %v624 = vpop.permute.xlu0 %623
  %626 = vst.msk [vmem:[#allocation2 + $0x20] sm:$0xff] %vm260, %v624
  %v627 = vld [vmem:[#allocation3 + $0x40] sm:$0xff]
  %v628 = vld [vmem:[#allocation3 + $0x38] sm:$0xff]
  %v629 = vsel %vm91, %v619, %v624
  %v630 = vpack.c.bf16 %v629, %v629
  %v632 = vsel %vm306, %v630, 0
  %634 = vmatprep.subr.bf16.mxu0 %v291
  %635 = vmatpush1.bf16.msra.mxu0 %v290
  %636 = vmatprep.subr.bf16.mxu0 %v293
  %637 = vmatpush1.bf16.msra.mxu0 %v292
  %638 = vmatprep.subr.bf16.mxu0 %v295
  %639 = vmatpush1.bf16.msra.mxu0 %v294
  %640 = vmatprep.subr.bf16.mxu0 %v297
  %641 = vmatpush1.bf16.msra.mxu0 %v296
  %642 = vmatprep.subr.bf16.mxu0 0
  %643 = vmatpush1.bf16.msra.mxu0 0
  %644 = vmatprep.subr.bf16.mxu0 0
  %645 = vmatpush1.bf16.msra.mxu0 0
  %646 = vmatprep.subr.bf16.mxu0 0
  %647 = vmatpush1.bf16.msra.mxu0 0
  %648 = vmatprep.subr.bf16.mxu0 0
  %649 = vmatpush1.bf16.msra.mxu0 0
  %650 = vmatprep.subr.bf16.mxu0 0
  %651 = vmatpush1.bf16.msra.mxu0 0
  %652 = vmatprep.subr.bf16.mxu0 0
  %653 = vmatpush1.bf16.msra.mxu0 0
  %654 = vmatprep.subr.bf16.mxu0 0
  %655 = vmatpush1.bf16.msra.mxu0 0
  %656 = vmatprep.subr.bf16.mxu0 0
  %657 = vmatpush1.bf16.msra.mxu0 0
  %658 = vmatprep.subr.bf16.mxu0 0
  %659 = vmatpush1.bf16.msra.mxu0 0
  %660 = vmatprep.subr.bf16.mxu0 0
  %661 = vmatpush1.bf16.msra.mxu0 0
  %662 = vmatprep.subr.bf16.mxu0 0
  %663 = vmatpush1.bf16.msra.mxu0 0
  %664 = vmatprep.subr.bf16.mxu0 0
  %665 = vmatpush1.bf16.msra.mxu0 0
  %666 = vmatprep.mubr.bf16.mxu0 0
  %667 = vmatmul.mubr.bf16.gmra.mrb[0].mxu0 %v632
  %v668 = vpop.f32.mrb[0].mxu0
  %v669 = vadd.f32 0.0, %v668
  %v670 = vpop.f32.mrb[0].mxu0
  %v671 = vadd.f32 0.0, %v670
  %v672 = vpop.f32.mrb[0].mxu0
  %v673 = vpop.f32.mrb[0].mxu0
  %674 = vdwg.mxu0
  %v675 = vadd.f32 %v627, %v669
  %v676 = vadd.f32 %v628, %v671
  %v677 = vxor.u32 %v675, 2147483648
  %v678 = vmul.f32 %v677, 1.442695
  %v679 = vpow.pop %v678
  %v680 = vadd.f32 %v679, 1.0
  %v681 = vrcp.pop %v680
  %v682 = vmul.f32 1.0, %v681
  %v683 = vtanh.pop %v675
  %v684 = vmul.f32 %v682, %v586
  %686 = vrot.lane.b32.xlu0 %v683, 64
  %v687 = vpop.permute.xlu0 %686
  %v689 = vmul.f32 %v682, %v687
  %691 = vrot.lane.b32.xlu0 %v689, 32
  %v692 = vpop.permute.xlu0 %691
  %v694 = vadd.f32 %v684, %v692
  %v695 = vtanh.pop %v694
  %697 = vrot.lane.b32.xlu0 %v695, 64
  %v698 = vpop.permute.xlu0 %697
  %v700 = vmul.f32 %v682, %v698
  %v701 = vxor.u32 %v676, 2147483648
  %v702 = vmul.f32 %v701, 1.442695
  %v703 = vpow.pop %v702
  %v704 = vadd.f32 %v703, 1.0
  %v705 = vrcp.pop %v704
  %v706 = vmul.f32 1.0, %v705
  %v707 = vtanh.pop %v676
  %v708 = vmul.f32 %v706, %v610
  %710 = vrot.lane.b32.xlu0 %v707, 64
  %v711 = vpop.permute.xlu0 %710
  %v713 = vmul.f32 %v706, %v711
  %715 = vrot.lane.b32.xlu0 %v713, 32
  %v716 = vpop.permute.xlu0 %715
  %v718 = vadd.f32 %v708, %v716
  %v719 = vtanh.pop %v718
  %721 = vrot.lane.b32.xlu0 %v719, 64
  %v722 = vpop.permute.xlu0 %721
  %v724 = vmul.f32 %v706, %v722
  %726 = vrot.lane.b32.xlu0 %v700, 32
  %v727 = vpop.permute.xlu0 %726
  %729 = vst.msk [vmem:[#allocation2 + $0x20] sm:$0xff] %vm91, %v727
  %731 = vrot.lane.b32.xlu0 %v724, 64
  %v732 = vpop.permute.xlu0 %731
  %734 = vst.msk [vmem:[#allocation2 + $0x18] sm:$0xff] %vm260, %v732
  %v735 = vld [vmem:[#allocation3 + $0x50] sm:$0xff]
  %v736 = vld [vmem:[#allocation3 + $0x28] sm:$0xff]
  %v737 = vsel %vm91, %v727, %v732
  %v738 = vpack.c.bf16 %v737, %v737
  %v740 = vsel %vm306, %v738, 0
  %742 = vmatprep.subr.bf16.mxu0 %v291
  %743 = vmatpush1.bf16.msra.mxu0 %v290
  %744 = vmatprep.subr.bf16.mxu0 %v293
  %745 = vmatpush1.bf16.msra.mxu0 %v292
  %746 = vmatprep.subr.bf16.mxu0 %v295
  %747 = vmatpush1.bf16.msra.mxu0 %v294
  %748 = vmatprep.subr.bf16.mxu0 %v297
  %749 = vmatpush1.bf16.msra.mxu0 %v296
  %750 = vmatprep.subr.bf16.mxu0 0
  %751 = vmatpush1.bf16.msra.mxu0 0
  %752 = vmatprep.subr.bf16.mxu0 0
  %753 = vmatpush1.bf16.msra.mxu0 0
  %754 = vmatprep.subr.bf16.mxu0 0
  %755 = vmatpush1.bf16.msra.mxu0 0
  %756 = vmatprep.subr.bf16.mxu0 0
  %757 = vmatpush1.bf16.msra.mxu0 0
  %758 = vmatprep.subr.bf16.mxu0 0
  %759 = vmatpush1.bf16.msra.mxu0 0
  %760 = vmatprep.subr.bf16.mxu0 0
  %761 = vmatpush1.bf16.msra.mxu0 0
  %762 = vmatprep.subr.bf16.mxu0 0
  %763 = vmatpush1.bf16.msra.mxu0 0
  %764 = vmatprep.subr.bf16.mxu0 0
  %765 = vmatpush1.bf16.msra.mxu0 0
  %766 = vmatprep.subr.bf16.mxu0 0
  %767 = vmatpush1.bf16.msra.mxu0 0
  %768 = vmatprep.subr.bf16.mxu0 0
  %769 = vmatpush1.bf16.msra.mxu0 0
  %770 = vmatprep.subr.bf16.mxu0 0
  %771 = vmatpush1.bf16.msra.mxu0 0
  %772 = vmatprep.subr.bf16.mxu0 0
  %773 = vmatpush1.bf16.msra.mxu0 0
  %774 = vmatprep.mubr.bf16.mxu0 0
  %775 = vmatmul.mubr.bf16.gmra.mrb[0].mxu0 %v740
  %v776 = vpop.f32.mrb[0].mxu0
  %v777 = vadd.f32 0.0, %v776
  %v778 = vpop.f32.mrb[0].mxu0
  %v779 = vadd.f32 0.0, %v778
  %v780 = vpop.f32.mrb[0].mxu0
  %v781 = vpop.f32.mrb[0].mxu0
  %782 = vdwg.mxu0
  %v783 = vadd.f32 %v735, %v777
  %v784 = vadd.f32 %v736, %v779
  %v785 = vxor.u32 %v783, 2147483648
  %v786 = vmul.f32 %v785, 1.442695
  %v787 = vpow.pop %v786
  %v788 = vadd.f32 %v787, 1.0
  %v789 = vrcp.pop %v788
  %v790 = vmul.f32 1.0, %v789
  %v791 = vtanh.pop %v783
  %v792 = vmul.f32 %v790, %v694
  %794 = vrot.lane.b32.xlu0 %v791, 64
  %v795 = vpop.permute.xlu0 %794
  %v797 = vmul.f32 %v790, %v795
  %799 = vrot.lane.b32.xlu0 %v797, 32
  %v800 = vpop.permute.xlu0 %799
  %v802 = vadd.f32 %v792, %v800
  %v803 = vtanh.pop %v802
  %805 = vrot.lane.b32.xlu0 %v803, 64
  %v806 = vpop.permute.xlu0 %805
  %v808 = vmul.f32 %v790, %v806
  %v809 = vxor.u32 %v784, 2147483648
  %v810 = vmul.f32 %v809, 1.442695
  %v811 = vpow.pop %v810
  %v812 = vadd.f32 %v811, 1.0
  %v813 = vrcp.pop %v812
  %v814 = vmul.f32 1.0, %v813
  %v815 = vtanh.pop %v784
  %v816 = vmul.f32 %v814, %v718
  %818 = vrot.lane.b32.xlu0 %v815, 64
  %v819 = vpop.permute.xlu0 %818
  %v821 = vmul.f32 %v814, %v819
  %823 = vrot.lane.b32.xlu0 %v821, 32
  %v824 = vpop.permute.xlu0 %823
  %v826 = vadd.f32 %v816, %v824
  %v827 = vtanh.pop %v826
  %829 = vrot.lane.b32.xlu0 %v827, 64
  %v830 = vpop.permute.xlu0 %829
  %v832 = vmul.f32 %v814, %v830
  %834 = vrot.lane.b32.xlu0 %v808, 32
  %v835 = vpop.permute.xlu0 %834
  %837 = vst.msk [vmem:[#allocation2 + $0x28] sm:$0xff] %vm91, %v835
  %839 = vrot.lane.b32.xlu0 %v832, 64
  %v840 = vpop.permute.xlu0 %839
  %842 = vst.msk [vmem:[#allocation2 + $0x10] sm:$0xff] %vm260, %v840
  %v843 = vld [vmem:[#allocation3 + $0x60] sm:$0xff]
  %v844 = vld [vmem:[#allocation3 + $0x18] sm:$0xff]
  %v845 = vsel %vm91, %v835, %v840
  %v846 = vpack.c.bf16 %v845, %v845
  %v848 = vsel %vm306, %v846, 0
  %850 = vmatprep.subr.bf16.mxu0 %v291
  %851 = vmatpush1.bf16.msra.mxu0 %v290
  %852 = vmatprep.subr.bf16.mxu0 %v293
  %853 = vmatpush1.bf16.msra.mxu0 %v292
  %854 = vmatprep.subr.bf16.mxu0 %v295
  %855 = vmatpush1.bf16.msra.mxu0 %v294
  %856 = vmatprep.subr.bf16.mxu0 %v297
  %857 = vmatpush1.bf16.msra.mxu0 %v296
  %858 = vmatprep.subr.bf16.mxu0 0
  %859 = vmatpush1.bf16.msra.mxu0 0
  %860 = vmatprep.subr.bf16.mxu0 0
  %861 = vmatpush1.bf16.msra.mxu0 0
  %862 = vmatprep.subr.bf16.mxu0 0
  %863 = vmatpush1.bf16.msra.mxu0 0
  %864 = vmatprep.subr.bf16.mxu0 0
  %865 = vmatpush1.bf16.msra.mxu0 0
  %866 = vmatprep.subr.bf16.mxu0 0
  %867 = vmatpush1.bf16.msra.mxu0 0
  %868 = vmatprep.subr.bf16.mxu0 0
  %869 = vmatpush1.bf16.msra.mxu0 0
  %870 = vmatprep.subr.bf16.mxu0 0
  %871 = vmatpush1.bf16.msra.mxu0 0
  %872 = vmatprep.subr.bf16.mxu0 0
  %873 = vmatpush1.bf16.msra.mxu0 0
  %874 = vmatprep.subr.bf16.mxu0 0
  %875 = vmatpush1.bf16.msra.mxu0 0
  %876 = vmatprep.subr.bf16.mxu0 0
  %877 = vmatpush1.bf16.msra.mxu0 0
  %878 = vmatprep.subr.bf16.mxu0 0
  %879 = vmatpush1.bf16.msra.mxu0 0
  %880 = vmatprep.subr.bf16.mxu0 0
  %881 = vmatpush1.bf16.msra.mxu0 0
  %882 = vmatprep.mubr.bf16.mxu0 0
  %883 = vmatmul.mubr.bf16.gmra.mrb[0].mxu0 %v848
  %v884 = vpop.f32.mrb[0].mxu0
  %v885 = vadd.f32 0.0, %v884
  %v886 = vpop.f32.mrb[0].mxu0
  %v887 = vadd.f32 0.0, %v886
  %v888 = vpop.f32.mrb[0].mxu0
  %v889 = vpop.f32.mrb[0].mxu0
  %890 = vdwg.mxu0
  %v891 = vadd.f32 %v843, %v885
  %v892 = vadd.f32 %v844, %v887
  %v893 = vxor.u32 %v891, 2147483648
  %v894 = vmul.f32 %v893, 1.442695
  %v895 = vpow.pop %v894
  %v896 = vadd.f32 %v895, 1.0
  %v897 = vrcp.pop %v896
  %v898 = vmul.f32 1.0, %v897
  %v899 = vtanh.pop %v891
  %v900 = vmul.f32 %v898, %v802
  %902 = vrot.lane.b32.xlu0 %v899, 64
  %v903 = vpop.permute.xlu0 %902
  %v905 = vmul.f32 %v898, %v903
  %907 = vrot.lane.b32.xlu0 %v905, 32
  %v908 = vpop.permute.xlu0 %907
  %v910 = vadd.f32 %v900, %v908
  %v911 = vtanh.pop %v910
  %913 = vrot.lane.b32.xlu0 %v911, 64
  %v914 = vpop.permute.xlu0 %913
  %v916 = vmul.f32 %v898, %v914
  %v917 = vxor.u32 %v892, 2147483648
  %v918 = vmul.f32 %v917, 1.442695
  %v919 = vpow.pop %v918
  %v920 = vadd.f32 %v919, 1.0
  %v921 = vrcp.pop %v920
  %v922 = vmul.f32 1.0, %v921
  %v923 = vtanh.pop %v892
  %v924 = vmul.f32 %v922, %v826
  %926 = vrot.lane.b32.xlu0 %v923, 64
  %v927 = vpop.permute.xlu0 %926
  %v929 = vmul.f32 %v922, %v927
  %931 = vrot.lane.b32.xlu0 %v929, 32
  %v932 = vpop.permute.xlu0 %931
  %v934 = vadd.f32 %v924, %v932
  %v935 = vtanh.pop %v934
  %937 = vrot.lane.b32.xlu0 %v935, 64
  %v938 = vpop.permute.xlu0 %937
  %v940 = vmul.f32 %v922, %v938
  %942 = vrot.lane.b32.xlu0 %v916, 32
  %v943 = vpop.permute.xlu0 %942
  %945 = vst.msk [vmem:[#allocation2 + $0x30] sm:$0xff] %vm91, %v943
  %947 = vrot.lane.b32.xlu0 %v940, 64
  %v948 = vpop.permute.xlu0 %947
  %950 = vst.msk [vmem:[#allocation2 + $0x8] sm:$0xff] %vm260, %v948
  %v951 = vld [vmem:[#allocation3 + $0x70] sm:$0xff]
  %v952 = vld [vmem:[#allocation3 + $0x8] sm:$0xff]
  %v953 = vsel %vm91, %v943, %v948
  %v954 = vpack.c.bf16 %v953, %v953
  %v956 = vsel %vm306, %v954, 0
  %958 = vmatprep.subr.bf16.mxu0 %v291
  %959 = vmatpush1.bf16.msra.mxu0 %v290
  %960 = vmatprep.subr.bf16.mxu0 %v293
  %961 = vmatpush1.bf16.msra.mxu0 %v292
  %962 = vmatprep.subr.bf16.mxu0 %v295
  %963 = vmatpush1.bf16.msra.mxu0 %v294
  %964 = vmatprep.subr.bf16.mxu0 %v297
  %965 = vmatpush1.bf16.msra.mxu0 %v296
  %966 = vmatprep.subr.bf16.mxu0 0
  %967 = vmatpush1.bf16.msra.mxu0 0
  %968 = vmatprep.subr.bf16.mxu0 0
  %969 = vmatpush1.bf16.msra.mxu0 0
  %970 = vmatprep.subr.bf16.mxu0 0
  %971 = vmatpush1.bf16.msra.mxu0 0
  %972 = vmatprep.subr.bf16.mxu0 0
  %973 = vmatpush1.bf16.msra.mxu0 0
  %974 = vmatprep.subr.bf16.mxu0 0
  %975 = vmatpush1.bf16.msra.mxu0 0
  %976 = vmatprep.subr.bf16.mxu0 0
  %977 = vmatpush1.bf16.msra.mxu0 0
  %978 = vmatprep.subr.bf16.mxu0 0
  %979 = vmatpush1.bf16.msra.mxu0 0
  %980 = vmatprep.subr.bf16.mxu0 0
  %981 = vmatpush1.bf16.msra.mxu0 0
  %982 = vmatprep.subr.bf16.mxu0 0
  %983 = vmatpush1.bf16.msra.mxu0 0
  %984 = vmatprep.subr.bf16.mxu0 0
  %985 = vmatpush1.bf16.msra.mxu0 0
  %986 = vmatprep.subr.bf16.mxu0 0
  %987 = vmatpush1.bf16.msra.mxu0 0
  %988 = vmatprep.subr.bf16.mxu0 0
  %989 = vmatpush1.bf16.msra.mxu0 0
  %990 = vmatprep.mubr.bf16.mxu0 0
  %991 = vmatmul.mubr.bf16.gmra.mrb[0].mxu0 %v956
  %v992 = vpop.f32.mrb[0].mxu0
  %v993 = vadd.f32 0.0, %v992
  %v994 = vpop.f32.mrb[0].mxu0
  %v995 = vadd.f32 0.0, %v994
  %v996 = vpop.f32.mrb[0].mxu0
  %v997 = vpop.f32.mrb[0].mxu0
  %998 = vdwg.mxu0
  %v999 = vadd.f32 %v951, %v993
  %v1000 = vadd.f32 %v952, %v995
  %v1001 = vxor.u32 %v999, 2147483648
  %v1002 = vmul.f32 %v1001, 1.442695
  %v1003 = vpow.pop %v1002
  %v1004 = vadd.f32 %v1003, 1.0
  %v1005 = vrcp.pop %v1004
  %v1006 = vmul.f32 1.0, %v1005
  %v1007 = vtanh.pop %v999
  %v1008 = vmul.f32 %v1006, %v910
  %1010 = vrot.lane.b32.xlu0 %v1007, 64
  %v1011 = vpop.permute.xlu0 %1010
  %v1013 = vmul.f32 %v1006, %v1011
  %1015 = vrot.lane.b32.xlu0 %v1013, 32
  %v1016 = vpop.permute.xlu0 %1015
  %v1018 = vadd.f32 %v1008, %v1016
  %v1019 = vtanh.pop %v1018
  %1021 = vrot.lane.b32.xlu0 %v1019, 64
  %v1022 = vpop.permute.xlu0 %1021
  %v1024 = vmul.f32 %v1006, %v1022
  %v1025 = vxor.u32 %v1000, 2147483648
  %v1026 = vmul.f32 %v1025, 1.442695
  %v1027 = vpow.pop %v1026
  %v1028 = vadd.f32 %v1027, 1.0
  %v1029 = vrcp.pop %v1028
  %v1030 = vmul.f32 1.0, %v1029
  %v1031 = vtanh.pop %v1000
  %v1032 = vmul.f32 %v1030, %v934
  %1034 = vrot.lane.b32.xlu0 %v1031, 64
  %v1035 = vpop.permute.xlu0 %1034
  %v1037 = vmul.f32 %v1030, %v1035
  %1039 = vrot.lane.b32.xlu0 %v1037, 32
  %v1040 = vpop.permute.xlu0 %1039
  %v1042 = vadd.f32 %v1032, %v1040
  %v1043 = vtanh.pop %v1042
  %1045 = vrot.lane.b32.xlu0 %v1043, 64
  %v1046 = vpop.permute.xlu0 %1045
  %v1048 = vmul.f32 %v1030, %v1046
  %1050 = vrot.lane.b32.xlu0 %v1024, 32
  %v1051 = vpop.permute.xlu0 %1050
  %1053 = vst.msk [vmem:[#allocation2 + $0x38] sm:$0xff] %vm91, %v1051
  %1055 = vrot.lane.b32.xlu0 %v1048, 64
  %v1056 = vpop.permute.xlu0 %1055
  %1058 = vst.msk [vmem:[#allocation2] sm:$0xff] %vm260, %v1056
  %v1059 = vld [vmem:[#allocation2] sm:$0xff]
  %v1060 = vld [vmem:[#allocation2 + $0x8] sm:$0xff]
  %v1061 = vld [vmem:[#allocation2 + $0x10] sm:$0xff]
  %v1062 = vld [vmem:[#allocation2 + $0x18] sm:$0xff]
  %v1063 = vld [vmem:[#allocation2 + $0x20] sm:$0xff]
  %v1064 = vld [vmem:[#allocation2 + $0x28] sm:$0xff]
  %v1065 = vld [vmem:[#allocation2 + $0x30] sm:$0xff]
  %v1066 = vld [vmem:[#allocation2 + $0x38] sm:$0xff]
  %v1067 = vpack.c.bf16 %v1060, %v1059
  %v1068 = vpack.c.bf16 %v1062, %v1061
  %v1069 = vpack.c.bf16 %v1064, %v1063
  %v1070 = vpack.c.bf16 %v1066, %v1065
  %v1071 = vld [vmem:[%s2] sm:$0xff]
  %v1072 = vld [vmem:[%s2 + $0x8] sm:$0xff]
  %v1073 = vld [vmem:[%s2 + $0x10] sm:$0xff]
  %v1074 = vld [vmem:[%s2 + $0x18] sm:$0xff]
  %v1075 = vld [vmem:[%s2 + $0x20] sm:$0xff]
  %v1076 = vld [vmem:[%s2 + $0x28] sm:$0xff]
  %v1077 = vld [vmem:[%s2 + $0x30] sm:$0xff]
  %v1078 = vld [vmem:[%s2 + $0x38] sm:$0xff]
  %s1079 = scalar_lea.vmem %s4, 2
  %v1080 = vld [vmem:[%s1079] sm:$0x3]
  %v1082 = vlaneseq
  %v1083 = vshrl.u32 %v1082, 7
  %v1084 = vsub.s32 0, %v1083
  %v1085 = vrot.slane %v1080, %v1084
  %v1086 = vlaneseq
  %v1087 = vshrl.u32 %v1086, 7
  %v1088 = vsub.s32 1, %v1087
  %v1089 = vrot.slane %v1080, %v1088
  %v1100 = vunpack.c.l.b16 %v1071
  %v1101 = vunpack.c.h.b16 %v1071
  %v1102 = vunpack.c.l.b16 %v1072
  %v1103 = vunpack.c.h.b16 %v1072
  %v1104 = vunpack.c.l.b16 %v1073
  %v1105 = vunpack.c.h.b16 %v1073
  %v1106 = vunpack.c.l.b16 %v1074
  %v1107 = vunpack.c.h.b16 %v1074
  %v1108 = vunpack.c.l.b16 %v1075
  %v1109 = vunpack.c.h.b16 %v1075
  %v1110 = vunpack.c.l.b16 %v1076
  %v1111 = vunpack.c.h.b16 %v1076
  %v1112 = vunpack.c.l.b16 %v1077
  %v1113 = vunpack.c.h.b16 %v1077
  %v1114 = vunpack.c.l.b16 %v1078
  %v1115 = vunpack.c.h.b16 %v1078
  %v1116 = vpack.c.b16 %v1102, %v1100
  %v1117 = vpack.c.b16 %v1103, %v1101
  %v1118 = vpack.c.b16 %v1106, %v1104
  %v1119 = vpack.c.b16 %v1107, %v1105
  %v1120 = vpack.c.b16 %v1110, %v1108
  %v1121 = vpack.c.b16 %v1111, %v1109
  %v1122 = vpack.c.b16 %v1114, %v1112
  %v1123 = vpack.c.b16 %v1115, %v1113
  %v1133 = vsel %vm306, %v1067, 0
  %v1136 = vsel %vm306, %v1068, 0
  %v1139 = vsel %vm306, %v1069, 0
  %v1142 = vsel %vm306, %v1070, 0
  %1144 = vmatprep.subr.bf16.mxu0 %v1117
  %1145 = vmatpush1.bf16.msra.mxu0 %v1116
  %1146 = vmatprep.subr.bf16.mxu0 %v1119
  %1147 = vmatpush1.bf16.msra.mxu0 %v1118
  %1148 = vmatprep.subr.bf16.mxu0 %v1121
  %1149 = vmatpush1.bf16.msra.mxu0 %v1120
  %1150 = vmatprep.subr.bf16.mxu0 %v1123
  %1151 = vmatpush1.bf16.msra.mxu0 %v1122
  %1152 = vmatprep.subr.bf16.mxu0 0
  %1153 = vmatpush1.bf16.msra.mxu0 0
  %1154 = vmatprep.subr.bf16.mxu0 0
  %1155 = vmatpush1.bf16.msra.mxu0 0
  %1156 = vmatprep.subr.bf16.mxu0 0
  %1157 = vmatpush1.bf16.msra.mxu0 0
  %1158 = vmatprep.subr.bf16.mxu0 0
  %1159 = vmatpush1.bf16.msra.mxu0 0
  %1160 = vmatprep.subr.bf16.mxu0 0
  %1161 = vmatpush1.bf16.msra.mxu0 0
  %1162 = vmatprep.subr.bf16.mxu0 0
  %1163 = vmatpush1.bf16.msra.mxu0 0
  %1164 = vmatprep.subr.bf16.mxu0 0
  %1165 = vmatpush1.bf16.msra.mxu0 0
  %1166 = vmatprep.subr.bf16.mxu0 0
  %1167 = vmatpush1.bf16.msra.mxu0 0
  %1168 = vmatprep.subr.bf16.mxu0 0
  %1169 = vmatpush1.bf16.msra.mxu0 0
  %1170 = vmatprep.subr.bf16.mxu0 0
  %1171 = vmatpush1.bf16.msra.mxu0 0
  %1172 = vmatprep.subr.bf16.mxu0 0
  %1173 = vmatpush1.bf16.msra.mxu0 0
  %1174 = vmatprep.subr.bf16.mxu0 0
  %1175 = vmatpush1.bf16.msra.mxu0 0
  %1176 = vmatprep.mubr.bf16.mxu0 0
  %1177 = vmatmul.mubr.bf16.gmra.mrb[0].mxu0 %v1133
  %v1178 = vpop.f32.mrb[0].mxu0
  %v1179 = vadd.f32 %v1085, %v1178
  %v1180 = vpop.f32.mrb[0].mxu0
  %v1181 = vadd.f32 %v1089, %v1180
  %v1182 = vpop.f32.mrb[0].mxu0
  %v1183 = vadd.f32 %v1085, %v1182
  %v1184 = vpop.f32.mrb[0].mxu0
  %v1185 = vadd.f32 %v1089, %v1184
  %1186 = vmatprep.mubr.bf16.mxu0 0
  %1187 = vmatmul.mubr.bf16.gmra.mrb[0].mxu0 %v1136
  %v1188 = vpop.f32.mrb[0].mxu0
  %v1189 = vadd.f32 %v1085, %v1188
  %v1190 = vpop.f32.mrb[0].mxu0
  %v1191 = vadd.f32 %v1089, %v1190
  %v1192 = vpop.f32.mrb[0].mxu0
  %v1193 = vadd.f32 %v1085, %v1192
  %v1194 = vpop.f32.mrb[0].mxu0
  %v1195 = vadd.f32 %v1089, %v1194
  %1196 = vmatprep.mubr.bf16.mxu0 0
  %1197 = vmatmul.mubr.bf16.gmra.mrb[0].mxu0 %v1139
  %v1198 = vpop.f32.mrb[0].mxu0
  %v1199 = vadd.f32 %v1085, %v1198
  %v1200 = vpop.f32.mrb[0].mxu0
  %v1201 = vadd.f32 %v1089, %v1200
  %v1202 = vpop.f32.mrb[0].mxu0
  %v1203 = vadd.f32 %v1085, %v1202
  %v1204 = vpop.f32.mrb[0].mxu0
  %v1205 = vadd.f32 %v1089, %v1204
  %1206 = vmatprep.mubr.bf16.mxu0 0
  %1207 = vmatmul.mubr.bf16.gmra.mrb[0].mxu0 %v1142
  %v1208 = vpop.f32.mrb[0].mxu0
  %v1209 = vadd.f32 %v1085, %v1208
  %v1210 = vpop.f32.mrb[0].mxu0
  %v1211 = vadd.f32 %v1089, %v1210
  %v1212 = vpop.f32.mrb[0].mxu0
  %v1213 = vadd.f32 %v1085, %v1212
  %v1214 = vpop.f32.mrb[0].mxu0
  %v1215 = vadd.f32 %v1089, %v1214
  %1216 = vdwg.mxu0
  %1217 = vst [vmem:[#allocation3] sm:$0xff] %v1179
  %1218 = vst [vmem:[#allocation3 + $0x8] sm:$0xff] %v1181
  %1219 = vst [vmem:[#allocation3 + $0x10] sm:$0xff] %v1183
  %1220 = vst [vmem:[#allocation3 + $0x18] sm:$0xff] %v1185
  %1221 = vst [vmem:[#allocation3 + $0x20] sm:$0xff] %v1189
  %1222 = vst [vmem:[#allocation3 + $0x28] sm:$0xff] %v1191
  %1223 = vst [vmem:[#allocation3 + $0x30] sm:$0xff] %v1193
  %1224 = vst [vmem:[#allocation3 + $0x38] sm:$0xff] %v1195
  %1225 = vst [vmem:[#allocation3 + $0x40] sm:$0xff] %v1199
  %1226 = vst [vmem:[#allocation3 + $0x48] sm:$0xff] %v1201
  %1227 = vst [vmem:[#allocation3 + $0x50] sm:$0xff] %v1203
  %1228 = vst [vmem:[#allocation3 + $0x58] sm:$0xff] %v1205
  %1229 = vst [vmem:[#allocation3 + $0x60] sm:$0xff] %v1209
  %1230 = vst [vmem:[#allocation3 + $0x68] sm:$0xff] %v1211
  %1231 = vst [vmem:[#allocation3 + $0x70] sm:$0xff] %v1213
  %1232 = vst [vmem:[#allocation3 + $0x78] sm:$0xff] %v1215
  %s1233 = scalar_lea.vmem %s3, 64
  %v1234 = vld [vmem:[%s1233] sm:$0xff]
  %v1235 = vld [vmem:[%s1233 + $0x8] sm:$0xff]
  %v1236 = vld [vmem:[%s1233 + $0x10] sm:$0xff]
  %v1237 = vld [vmem:[%s1233 + $0x18] sm:$0xff]
  %v1238 = vld [vmem:[%s1233 + $0x20] sm:$0xff]
  %v1239 = vld [vmem:[%s1233 + $0x28] sm:$0xff]
  %v1240 = vld [vmem:[%s1233 + $0x30] sm:$0xff]
  %v1241 = vld [vmem:[%s1233 + $0x38] sm:$0xff]
  %v1242 = vld [vmem:[#allocation3] sm:$0xff]
  %v1243 = vld [vmem:[#allocation3 + $0x78] sm:$0xff]
  %v1244 = vxor.u32 %v1242, 2147483648
  %v1245 = vmul.f32 %v1244, 1.442695
  %v1246 = vpow.pop %v1245
  %v1247 = vadd.f32 %v1246, 1.0
  %v1248 = vrcp.pop %v1247
  %v1249 = vmul.f32 1.0, %v1248
  %v1250 = vtanh.pop %v1242
  %v1251 = vmul.f32 %v1249, 0.0
  %1253 = vrot.lane.b32.xlu0 %v1250, 64
  %v1254 = vpop.permute.xlu0 %1253
  %v1256 = vmul.f32 %v1249, %v1254
  %1258 = vrot.lane.b32.xlu0 %v1256, 32
  %v1259 = vpop.permute.xlu0 %1258
  %v1261 = vadd.f32 %v1251, %v1259
  %v1262 = vtanh.pop %v1261
  %1264 = vrot.lane.b32.xlu0 %v1262, 64
  %v1265 = vpop.permute.xlu0 %1264
  %v1267 = vmul.f32 %v1249, %v1265
  %v1268 = vxor.u32 %v1243, 2147483648
  %v1269 = vmul.f32 %v1268, 1.442695
  %v1270 = vpow.pop %v1269
  %v1271 = vadd.f32 %v1270, 1.0
  %v1272 = vrcp.pop %v1271
  %v1273 = vmul.f32 1.0, %v1272
  %v1274 = vtanh.pop %v1243
  %v1275 = vmul.f32 %v1273, 0.0
  %1277 = vrot.lane.b32.xlu0 %v1274, 64
  %v1278 = vpop.permute.xlu0 %1277
  %v1280 = vmul.f32 %v1273, %v1278
  %1282 = vrot.lane.b32.xlu0 %v1280, 32
  %v1283 = vpop.permute.xlu0 %1282
  %v1285 = vadd.f32 %v1275, %v1283
  %v1286 = vtanh.pop %v1285
  %1288 = vrot.lane.b32.xlu0 %v1286, 64
  %v1289 = vpop.permute.xlu0 %1288
  %v1291 = vmul.f32 %v1273, %v1289
  %1293 = vrot.lane.b32.xlu0 %v1267, 32
  %v1294 = vpop.permute.xlu0 %1293
  %1296 = vst.msk [vmem:[#allocation2] sm:$0xff] %vm91, %v1294
  %1298 = vrot.lane.b32.xlu0 %v1291, 64
  %v1299 = vpop.permute.xlu0 %1298
  %1301 = vst.msk [vmem:[#allocation2 + $0x38] sm:$0xff] %vm260, %v1299
  %v1302 = vld [vmem:[#allocation3 + $0x10] sm:$0xff]
  %v1303 = vld [vmem:[#allocation3 + $0x68] sm:$0xff]
  %v1304 = vsel %vm91, %v1294, %v1299
  %v1305 = vpack.c.bf16 %v1304, %v1304
  %v1314 = vunpack.c.l.b16 %v1234
  %v1315 = vunpack.c.h.b16 %v1234
  %v1316 = vunpack.c.l.b16 %v1235
  %v1317 = vunpack.c.h.b16 %v1235
  %v1318 = vunpack.c.l.b16 %v1236
  %v1319 = vunpack.c.h.b16 %v1236
  %v1320 = vunpack.c.l.b16 %v1237
  %v1321 = vunpack.c.h.b16 %v1237
  %v1322 = vunpack.c.l.b16 %v1238
  %v1323 = vunpack.c.h.b16 %v1238
  %v1324 = vunpack.c.l.b16 %v1239
  %v1325 = vunpack.c.h.b16 %v1239
  %v1326 = vunpack.c.l.b16 %v1240
  %v1327 = vunpack.c.h.b16 %v1240
  %v1328 = vunpack.c.l.b16 %v1241
  %v1329 = vunpack.c.h.b16 %v1241
  %v1330 = vpack.c.b16 %v1316, %v1314
  %v1331 = vpack.c.b16 %v1317, %v1315
  %v1332 = vpack.c.b16 %v1320, %v1318
  %v1333 = vpack.c.b16 %v1321, %v1319
  %v1334 = vpack.c.b16 %v1324, %v1322
  %v1335 = vpack.c.b16 %v1325, %v1323
  %v1336 = vpack.c.b16 %v1328, %v1326
  %v1337 = vpack.c.b16 %v1329, %v1327
  %v1347 = vsel %vm306, %v1305, 0
  %1349 = vmatprep.subr.bf16.mxu0 %v1331
  %1350 = vmatpush1.bf16.msra.mxu0 %v1330
  %1351 = vmatprep.subr.bf16.mxu0 %v1333
  %1352 = vmatpush1.bf16.msra.mxu0 %v1332
  %1353 = vmatprep.subr.bf16.mxu0 %v1335
  %1354 = vmatpush1.bf16.msra.mxu0 %v1334
  %1355 = vmatprep.subr.bf16.mxu0 %v1337
  %1356 = vmatpush1.bf16.msra.mxu0 %v1336
  %1357 = vmatprep.subr.bf16.mxu0 0
  %1358 = vmatpush1.bf16.msra.mxu0 0
  %1359 = vmatprep.subr.bf16.mxu0 0
  %1360 = vmatpush1.bf16.msra.mxu0 0
  %1361 = vmatprep.subr.bf16.mxu0 0
  %1362 = vmatpush1.bf16.msra.mxu0 0
  %1363 = vmatprep.subr.bf16.mxu0 0
  %1364 = vmatpush1.bf16.msra.mxu0 0
  %1365 = vmatprep.subr.bf16.mxu0 0
  %1366 = vmatpush1.bf16.msra.mxu0 0
  %1367 = vmatprep.subr.bf16.mxu0 0
  %1368 = vmatpush1.bf16.msra.mxu0 0
  %1369 = vmatprep.subr.bf16.mxu0 0
  %1370 = vmatpush1.bf16.msra.mxu0 0
  %1371 = vmatprep.subr.bf16.mxu0 0
  %1372 = vmatpush1.bf16.msra.mxu0 0
  %1373 = vmatprep.subr.bf16.mxu0 0
  %1374 = vmatpush1.bf16.msra.mxu0 0
  %1375 = vmatprep.subr.bf16.mxu0 0
  %1376 = vmatpush1.bf16.msra.mxu0 0
  %1377 = vmatprep.subr.bf16.mxu0 0
  %1378 = vmatpush1.bf16.msra.mxu0 0
  %1379 = vmatprep.subr.bf16.mxu0 0
  %1380 = vmatpush1.bf16.msra.mxu0 0
  %1381 = vmatprep.mubr.bf16.mxu0 0
  %1382 = vmatmul.mubr.bf16.gmra.mrb[0].mxu0 %v1347
  %v1383 = vpop.f32.mrb[0].mxu0
  %v1384 = vadd.f32 0.0, %v1383
  %v1385 = vpop.f32.mrb[0].mxu0
  %v1386 = vadd.f32 0.0, %v1385
  %v1387 = vpop.f32.mrb[0].mxu0
  %v1388 = vpop.f32.mrb[0].mxu0
  %1389 = vdwg.mxu0
  %v1390 = vadd.f32 %v1302, %v1384
  %v1391 = vadd.f32 %v1303, %v1386
  %v1392 = vxor.u32 %v1390, 2147483648
  %v1393 = vmul.f32 %v1392, 1.442695
  %v1394 = vpow.pop %v1393
  %v1395 = vadd.f32 %v1394, 1.0
  %v1396 = vrcp.pop %v1395
  %v1397 = vmul.f32 1.0, %v1396
  %v1398 = vtanh.pop %v1390
  %v1399 = vmul.f32 %v1397, %v1261
  %1401 = vrot.lane.b32.xlu0 %v1398, 64
  %v1402 = vpop.permute.xlu0 %1401
  %v1404 = vmul.f32 %v1397, %v1402
  %1406 = vrot.lane.b32.xlu0 %v1404, 32
  %v1407 = vpop.permute.xlu0 %1406
  %v1409 = vadd.f32 %v1399, %v1407
  %v1410 = vtanh.pop %v1409
  %1412 = vrot.lane.b32.xlu0 %v1410, 64
  %v1413 = vpop.permute.xlu0 %1412
  %v1415 = vmul.f32 %v1397, %v1413
  %v1416 = vxor.u32 %v1391, 2147483648
  %v1417 = vmul.f32 %v1416, 1.442695
  %v1418 = vpow.pop %v1417
  %v1419 = vadd.f32 %v1418, 1.0
  %v1420 = vrcp.pop %v1419
  %v1421 = vmul.f32 1.0, %v1420
  %v1422 = vtanh.pop %v1391
  %v1423 = vmul.f32 %v1421, %v1285
  %1425 = vrot.lane.b32.xlu0 %v1422, 64
  %v1426 = vpop.permute.xlu0 %1425
  %v1428 = vmul.f32 %v1421, %v1426
  %1430 = vrot.lane.b32.xlu0 %v1428, 32
  %v1431 = vpop.permute.xlu0 %1430
  %v1433 = vadd.f32 %v1423, %v1431
  %v1434 = vtanh.pop %v1433
  %1436 = vrot.lane.b32.xlu0 %v1434, 64
  %v1437 = vpop.permute.xlu0 %1436
  %v1439 = vmul.f32 %v1421, %v1437
  %1441 = vrot.lane.b32.xlu0 %v1415, 32
  %v1442 = vpop.permute.xlu0 %1441
  %1444 = vst.msk [vmem:[#allocation2 + $0x8] sm:$0xff] %vm91, %v1442
  %1446 = vrot.lane.b32.xlu0 %v1439, 64
  %v1447 = vpop.permute.xlu0 %1446
  %1449 = vst.msk [vmem:[#allocation2 + $0x30] sm:$0xff] %vm260, %v1447
  %v1450 = vld [vmem:[#allocation3 + $0x20] sm:$0xff]
  %v1451 = vld [vmem:[#allocation3 + $0x58] sm:$0xff]
  %v1452 = vsel %vm91, %v1442, %v1447
  %v1453 = vpack.c.bf16 %v1452, %v1452
  %v1455 = vsel %vm306, %v1453, 0
  %1457 = vmatprep.subr.bf16.mxu0 %v1331
  %1458 = vmatpush1.bf16.msra.mxu0 %v1330
  %1459 = vmatprep.subr.bf16.mxu0 %v1333
  %1460 = vmatpush1.bf16.msra.mxu0 %v1332
  %1461 = vmatprep.subr.bf16.mxu0 %v1335
  %1462 = vmatpush1.bf16.msra.mxu0 %v1334
  %1463 = vmatprep.subr.bf16.mxu0 %v1337
  %1464 = vmatpush1.bf16.msra.mxu0 %v1336
  %1465 = vmatprep.subr.bf16.mxu0 0
  %1466 = vmatpush1.bf16.msra.mxu0 0
  %1467 = vmatprep.subr.bf16.mxu0 0
  %1468 = vmatpush1.bf16.msra.mxu0 0
  %1469 = vmatprep.subr.bf16.mxu0 0
  %1470 = vmatpush1.bf16.msra.mxu0 0
  %1471 = vmatprep.subr.bf16.mxu0 0
  %1472 = vmatpush1.bf16.msra.mxu0 0
  %1473 = vmatprep.subr.bf16.mxu0 0
  %1474 = vmatpush1.bf16.msra.mxu0 0
  %1475 = vmatprep.subr.bf16.mxu0 0
  %1476 = vmatpush1.bf16.msra.mxu0 0
  %1477 = vmatprep.subr.bf16.mxu0 0
  %1478 = vmatpush1.bf16.msra.mxu0 0
  %1479 = vmatprep.subr.bf16.mxu0 0
  %1480 = vmatpush1.bf16.msra.mxu0 0
  %1481 = vmatprep.subr.bf16.mxu0 0
  %1482 = vmatpush1.bf16.msra.mxu0 0
  %1483 = vmatprep.subr.bf16.mxu0 0
  %1484 = vmatpush1.bf16.msra.mxu0 0
  %1485 = vmatprep.subr.bf16.mxu0 0
  %1486 = vmatpush1.bf16.msra.mxu0 0
  %1487 = vmatprep.subr.bf16.mxu0 0
  %1488 = vmatpush1.bf16.msra.mxu0 0
  %1489 = vmatprep.mubr.bf16.mxu0 0
  %1490 = vmatmul.mubr.bf16.gmra.mrb[0].mxu0 %v1455
  %v1491 = vpop.f32.mrb[0].mxu0
  %v1492 = vadd.f32 0.0, %v1491
  %v1493 = vpop.f32.mrb[0].mxu0
  %v1494 = vadd.f32 0.0, %v1493
  %v1495 = vpop.f32.mrb[0].mxu0
  %v1496 = vpop.f32.mrb[0].mxu0
  %1497 = vdwg.mxu0
  %v1498 = vadd.f32 %v1450, %v1492
  %v1499 = vadd.f32 %v1451, %v1494
  %v1500 = vxor.u32 %v1498, 2147483648
  %v1501 = vmul.f32 %v1500, 1.442695
  %v1502 = vpow.pop %v1501
  %v1503 = vadd.f32 %v1502, 1.0
  %v1504 = vrcp.pop %v1503
  %v1505 = vmul.f32 1.0, %v1504
  %v1506 = vtanh.pop %v1498
  %v1507 = vmul.f32 %v1505, %v1409
  %1509 = vrot.lane.b32.xlu0 %v1506, 64
  %v1510 = vpop.permute.xlu0 %1509
  %v1512 = vmul.f32 %v1505, %v1510
  %1514 = vrot.lane.b32.xlu0 %v1512, 32
  %v1515 = vpop.permute.xlu0 %1514
  %v1517 = vadd.f32 %v1507, %v1515
  %v1518 = vtanh.pop %v1517
  %1520 = vrot.lane.b32.xlu0 %v1518, 64
  %v1521 = vpop.permute.xlu0 %1520
  %v1523 = vmul.f32 %v1505, %v1521
  %v1524 = vxor.u32 %v1499, 2147483648
  %v1525 = vmul.f32 %v1524, 1.442695
  %v1526 = vpow.pop %v1525
  %v1527 = vadd.f32 %v1526, 1.0
  %v1528 = vrcp.pop %v1527
  %v1529 = vmul.f32 1.0, %v1528
  %v1530 = vtanh.pop %v1499
  %v1531 = vmul.f32 %v1529, %v1433
  %1533 = vrot.lane.b32.xlu0 %v1530, 64
  %v1534 = vpop.permute.xlu0 %1533
  %v1536 = vmul.f32 %v1529, %v1534
  %1538 = vrot.lane.b32.xlu0 %v1536, 32
  %v1539 = vpop.permute.xlu0 %1538
  %v1541 = vadd.f32 %v1531, %v1539
  %v1542 = vtanh.pop %v1541
  %1544 = vrot.lane.b32.xlu0 %v1542, 64
  %v1545 = vpop.permute.xlu0 %1544
  %v1547 = vmul.f32 %v1529, %v1545
  %1549 = vrot.lane.b32.xlu0 %v1523, 32
  %v1550 = vpop.permute.xlu0 %1549
  %1552 = vst.msk [vmem:[#allocation2 + $0x10] sm:$0xff] %vm91, %v1550
  %1554 = vrot.lane.b32.xlu0 %v1547, 64
  %v1555 = vpop.permute.xlu0 %1554
  %1557 = vst.msk [vmem:[#allocation2 + $0x28] sm:$0xff] %vm260, %v1555
  %v1558 = vld [vmem:[#allocation3 + $0x30] sm:$0xff]
  %v1559 = vld [vmem:[#allocation3 + $0x48] sm:$0xff]
  %v1560 = vsel %vm91, %v1550, %v1555
  %v1561 = vpack.c.bf16 %v1560, %v1560
  %v1563 = vsel %vm306, %v1561, 0
  %1565 = vmatprep.subr.bf16.mxu0 %v1331
  %1566 = vmatpush1.bf16.msra.mxu0 %v1330
  %1567 = vmatprep.subr.bf16.mxu0 %v1333
  %1568 = vmatpush1.bf16.msra.mxu0 %v1332
  %1569 = vmatprep.subr.bf16.mxu0 %v1335
  %1570 = vmatpush1.bf16.msra.mxu0 %v1334
  %1571 = vmatprep.subr.bf16.mxu0 %v1337
  %1572 = vmatpush1.bf16.msra.mxu0 %v1336
  %1573 = vmatprep.subr.bf16.mxu0 0
  %1574 = vmatpush1.bf16.msra.mxu0 0
  %1575 = vmatprep.subr.bf16.mxu0 0
  %1576 = vmatpush1.bf16.msra.mxu0 0
  %1577 = vmatprep.subr.bf16.mxu0 0
  %1578 = vmatpush1.bf16.msra.mxu0 0
  %1579 = vmatprep.subr.bf16.mxu0 0
  %1580 = vmatpush1.bf16.msra.mxu0 0
  %1581 = vmatprep.subr.bf16.mxu0 0
  %1582 = vmatpush1.bf16.msra.mxu0 0
  %1583 = vmatprep.subr.bf16.mxu0 0
  %1584 = vmatpush1.bf16.msra.mxu0 0
  %1585 = vmatprep.subr.bf16.mxu0 0
  %1586 = vmatpush1.bf16.msra.mxu0 0
  %1587 = vmatprep.subr.bf16.mxu0 0
  %1588 = vmatpush1.bf16.msra.mxu0 0
  %1589 = vmatprep.subr.bf16.mxu0 0
  %1590 = vmatpush1.bf16.msra.mxu0 0
  %1591 = vmatprep.subr.bf16.mxu0 0
  %1592 = vmatpush1.bf16.msra.mxu0 0
  %1593 = vmatprep.subr.bf16.mxu0 0
  %1594 = vmatpush1.bf16.msra.mxu0 0
  %1595 = vmatprep.subr.bf16.mxu0 0
  %1596 = vmatpush1.bf16.msra.mxu0 0
  %1597 = vmatprep.mubr.bf16.mxu0 0
  %1598 = vmatmul.mubr.bf16.gmra.mrb[0].mxu0 %v1563
  %v1599 = vpop.f32.mrb[0].mxu0
  %v1600 = vadd.f32 0.0, %v1599
  %v1601 = vpop.f32.mrb[0].mxu0
  %v1602 = vadd.f32 0.0, %v1601
  %v1603 = vpop.f32.mrb[0].mxu0
  %v1604 = vpop.f32.mrb[0].mxu0
  %1605 = vdwg.mxu0
  %v1606 = vadd.f32 %v1558, %v1600
  %v1607 = vadd.f32 %v1559, %v1602
  %v1608 = vxor.u32 %v1606, 2147483648
  %v1609 = vmul.f32 %v1608, 1.442695
  %v1610 = vpow.pop %v1609
  %v1611 = vadd.f32 %v1610, 1.0
  %v1612 = vrcp.pop %v1611
  %v1613 = vmul.f32 1.0, %v1612
  %v1614 = vtanh.pop %v1606
  %v1615 = vmul.f32 %v1613, %v1517
  %1617 = vrot.lane.b32.xlu0 %v1614, 64
  %v1618 = vpop.permute.xlu0 %1617
  %v1620 = vmul.f32 %v1613, %v1618
  %1622 = vrot.lane.b32.xlu0 %v1620, 32
  %v1623 = vpop.permute.xlu0 %1622
  %v1625 = vadd.f32 %v1615, %v1623
  %v1626 = vtanh.pop %v1625
  %1628 = vrot.lane.b32.xlu0 %v1626, 64
  %v1629 = vpop.permute.xlu0 %1628
  %v1631 = vmul.f32 %v1613, %v1629
  %v1632 = vxor.u32 %v1607, 2147483648
  %v1633 = vmul.f32 %v1632, 1.442695
  %v1634 = vpow.pop %v1633
  %v1635 = vadd.f32 %v1634, 1.0
  %v1636 = vrcp.pop %v1635
  %v1637 = vmul.f32 1.0, %v1636
  %v1638 = vtanh.pop %v1607
  %v1639 = vmul.f32 %v1637, %v1541
  %1641 = vrot.lane.b32.xlu0 %v1638, 64
  %v1642 = vpop.permute.xlu0 %1641
  %v1644 = vmul.f32 %v1637, %v1642
  %1646 = vrot.lane.b32.xlu0 %v1644, 32
  %v1647 = vpop.permute.xlu0 %1646
  %v1649 = vadd.f32 %v1639, %v1647
  %v1650 = vtanh.pop %v1649
  %1652 = vrot.lane.b32.xlu0 %v1650, 64
  %v1653 = vpop.permute.xlu0 %1652
  %v1655 = vmul.f32 %v1637, %v1653
  %1657 = vrot.lane.b32.xlu0 %v1631, 32
  %v1658 = vpop.permute.xlu0 %1657
  %1660 = vst.msk [vmem:[#allocation2 + $0x18] sm:$0xff] %vm91, %v1658
  %1662 = vrot.lane.b32.xlu0 %v1655, 64
  %v1663 = vpop.permute.xlu0 %1662
  %1665 = vst.msk [vmem:[#allocation2 + $0x20] sm:$0xff] %vm260, %v1663
  %v1666 = vld [vmem:[#allocation3 + $0x40] sm:$0xff]
  %v1667 = vld [vmem:[#allocation3 + $0x38] sm:$0xff]
  %v1668 = vsel %vm91, %v1658, %v1663
  %v1669 = vpack.c.bf16 %v1668, %v1668
  %v1671 = vsel %vm306, %v1669, 0
  %1673 = vmatprep.subr.bf16.mxu0 %v1331
  %1674 = vmatpush1.bf16.msra.mxu0 %v1330
  %1675 = vmatprep.subr.bf16.mxu0 %v1333
  %1676 = vmatpush1.bf16.msra.mxu0 %v1332
  %1677 = vmatprep.subr.bf16.mxu0 %v1335
  %1678 = vmatpush1.bf16.msra.mxu0 %v1334
  %1679 = vmatprep.subr.bf16.mxu0 %v1337
  %1680 = vmatpush1.bf16.msra.mxu0 %v1336
  %1681 = vmatprep.subr.bf16.mxu0 0
  %1682 = vmatpush1.bf16.msra.mxu0 0
  %1683 = vmatprep.subr.bf16.mxu0 0
  %1684 = vmatpush1.bf16.msra.mxu0 0
  %1685 = vmatprep.subr.bf16.mxu0 0
  %1686 = vmatpush1.bf16.msra.mxu0 0
  %1687 = vmatprep.subr.bf16.mxu0 0
  %1688 = vmatpush1.bf16.msra.mxu0 0
  %1689 = vmatprep.subr.bf16.mxu0 0
  %1690 = vmatpush1.bf16.msra.mxu0 0
  %1691 = vmatprep.subr.bf16.mxu0 0
  %1692 = vmatpush1.bf16.msra.mxu0 0
  %1693 = vmatprep.subr.bf16.mxu0 0
  %1694 = vmatpush1.bf16.msra.mxu0 0
  %1695 = vmatprep.subr.bf16.mxu0 0
  %1696 = vmatpush1.bf16.msra.mxu0 0
  %1697 = vmatprep.subr.bf16.mxu0 0
  %1698 = vmatpush1.bf16.msra.mxu0 0
  %1699 = vmatprep.subr.bf16.mxu0 0
  %1700 = vmatpush1.bf16.msra.mxu0 0
  %1701 = vmatprep.subr.bf16.mxu0 0
  %1702 = vmatpush1.bf16.msra.mxu0 0
  %1703 = vmatprep.subr.bf16.mxu0 0
  %1704 = vmatpush1.bf16.msra.mxu0 0
  %1705 = vmatprep.mubr.bf16.mxu0 0
  %1706 = vmatmul.mubr.bf16.gmra.mrb[0].mxu0 %v1671
  %v1707 = vpop.f32.mrb[0].mxu0
  %v1708 = vadd.f32 0.0, %v1707
  %v1709 = vpop.f32.mrb[0].mxu0
  %v1710 = vadd.f32 0.0, %v1709
  %v1711 = vpop.f32.mrb[0].mxu0
  %v1712 = vpop.f32.mrb[0].mxu0
  %1713 = vdwg.mxu0
  %v1714 = vadd.f32 %v1666, %v1708
  %v1715 = vadd.f32 %v1667, %v1710
  %v1716 = vxor.u32 %v1714, 2147483648
  %v1717 = vmul.f32 %v1716, 1.442695
  %v1718 = vpow.pop %v1717
  %v1719 = vadd.f32 %v1718, 1.0
  %v1720 = vrcp.pop %v1719
  %v1721 = vmul.f32 1.0, %v1720
  %v1722 = vtanh.pop %v1714
  %v1723 = vmul.f32 %v1721, %v1625
  %1725 = vrot.lane.b32.xlu0 %v1722, 64
  %v1726 = vpop.permute.xlu0 %1725
  %v1728 = vmul.f32 %v1721, %v1726
  %1730 = vrot.lane.b32.xlu0 %v1728, 32
  %v1731 = vpop.permute.xlu0 %1730
  %v1733 = vadd.f32 %v1723, %v1731
  %v1734 = vtanh.pop %v1733
  %1736 = vrot.lane.b32.xlu0 %v1734, 64
  %v1737 = vpop.permute.xlu0 %1736
  %v1739 = vmul.f32 %v1721, %v1737
  %v1740 = vxor.u32 %v1715, 2147483648
  %v1741 = vmul.f32 %v1740, 1.442695
  %v1742 = vpow.pop %v1741
  %v1743 = vadd.f32 %v1742, 1.0
  %v1744 = vrcp.pop %v1743
  %v1745 = vmul.f32 1.0, %v1744
  %v1746 = vtanh.pop %v1715
  %v1747 = vmul.f32 %v1745, %v1649
  %1749 = vrot.lane.b32.xlu0 %v1746, 64
  %v1750 = vpop.permute.xlu0 %1749
  %v1752 = vmul.f32 %v1745, %v1750
  %1754 = vrot.lane.b32.xlu0 %v1752, 32
  %v1755 = vpop.permute.xlu0 %1754
  %v1757 = vadd.f32 %v1747, %v1755
  %v1758 = vtanh.pop %v1757
  %1760 = vrot.lane.b32.xlu0 %v1758, 64
  %v1761 = vpop.permute.xlu0 %1760
  %v1763 = vmul.f32 %v1745, %v1761
  %1765 = vrot.lane.b32.xlu0 %v1739, 32
  %v1766 = vpop.permute.xlu0 %1765
  %1768 = vst.msk [vmem:[#allocation2 + $0x20] sm:$0xff] %vm91, %v1766
  %1770 = vrot.lane.b32.xlu0 %v1763, 64
  %v1771 = vpop.permute.xlu0 %1770
  %1773 = vst.msk [vmem:[#allocation2 + $0x18] sm:$0xff] %vm260, %v1771
  %v1774 = vld [vmem:[#allocation3 + $0x50] sm:$0xff]
  %v1775 = vld [vmem:[#allocation3 + $0x28] sm:$0xff]
  %v1776 = vsel %vm91, %v1766, %v1771
  %v1777 = vpack.c.bf16 %v1776, %v1776
  %v1779 = vsel %vm306, %v1777, 0
  %1781 = vmatprep.subr.bf16.mxu0 %v1331
  %1782 = vmatpush1.bf16.msra.mxu0 %v1330
  %1783 = vmatprep.subr.bf16.mxu0 %v1333
  %1784 = vmatpush1.bf16.msra.mxu0 %v1332
  %1785 = vmatprep.subr.bf16.mxu0 %v1335
  %1786 = vmatpush1.bf16.msra.mxu0 %v1334
  %1787 = vmatprep.subr.bf16.mxu0 %v1337
  %1788 = vmatpush1.bf16.msra.mxu0 %v1336
  %1789 = vmatprep.subr.bf16.mxu0 0
  %1790 = vmatpush1.bf16.msra.mxu0 0
  %1791 = vmatprep.subr.bf16.mxu0 0
  %1792 = vmatpush1.bf16.msra.mxu0 0
  %1793 = vmatprep.subr.bf16.mxu0 0
  %1794 = vmatpush1.bf16.msra.mxu0 0
  %1795 = vmatprep.subr.bf16.mxu0 0
  %1796 = vmatpush1.bf16.msra.mxu0 0
  %1797 = vmatprep.subr.bf16.mxu0 0
  %1798 = vmatpush1.bf16.msra.mxu0 0
  %1799 = vmatprep.subr.bf16.mxu0 0
  %1800 = vmatpush1.bf16.msra.mxu0 0
  %1801 = vmatprep.subr.bf16.mxu0 0
  %1802 = vmatpush1.bf16.msra.mxu0 0
  %1803 = vmatprep.subr.bf16.mxu0 0
  %1804 = vmatpush1.bf16.msra.mxu0 0
  %1805 = vmatprep.subr.bf16.mxu0 0
  %1806 = vmatpush1.bf16.msra.mxu0 0
  %1807 = vmatprep.subr.bf16.mxu0 0
  %1808 = vmatpush1.bf16.msra.mxu0 0
  %1809 = vmatprep.subr.bf16.mxu0 0
  %1810 = vmatpush1.bf16.msra.mxu0 0
  %1811 = vmatprep.subr.bf16.mxu0 0
  %1812 = vmatpush1.bf16.msra.mxu0 0
  %1813 = vmatprep.mubr.bf16.mxu0 0
  %1814 = vmatmul.mubr.bf16.gmra.mrb[0].mxu0 %v1779
  %v1815 = vpop.f32.mrb[0].mxu0
  %v1816 = vadd.f32 0.0, %v1815
  %v1817 = vpop.f32.mrb[0].mxu0
  %v1818 = vadd.f32 0.0, %v1817
  %v1819 = vpop.f32.mrb[0].mxu0
  %v1820 = vpop.f32.mrb[0].mxu0
  %1821 = vdwg.mxu0
  %v1822 = vadd.f32 %v1774, %v1816
  %v1823 = vadd.f32 %v1775, %v1818
  %v1824 = vxor.u32 %v1822, 2147483648
  %v1825 = vmul.f32 %v1824, 1.442695
  %v1826 = vpow.pop %v1825
  %v1827 = vadd.f32 %v1826, 1.0
  %v1828 = vrcp.pop %v1827
  %v1829 = vmul.f32 1.0, %v1828
  %v1830 = vtanh.pop %v1822
  %v1831 = vmul.f32 %v1829, %v1733
  %1833 = vrot.lane.b32.xlu0 %v1830, 64
  %v1834 = vpop.permute.xlu0 %1833
  %v1836 = vmul.f32 %v1829, %v1834
  %1838 = vrot.lane.b32.xlu0 %v1836, 32
  %v1839 = vpop.permute.xlu0 %1838
  %v1841 = vadd.f32 %v1831, %v1839
  %v1842 = vtanh.pop %v1841
  %1844 = vrot.lane.b32.xlu0 %v1842, 64
  %v1845 = vpop.permute.xlu0 %1844
  %v1847 = vmul.f32 %v1829, %v1845
  %v1848 = vxor.u32 %v1823, 2147483648
  %v1849 = vmul.f32 %v1848, 1.442695
  %v1850 = vpow.pop %v1849
  %v1851 = vadd.f32 %v1850, 1.0
  %v1852 = vrcp.pop %v1851
  %v1853 = vmul.f32 1.0, %v1852
  %v1854 = vtanh.pop %v1823
  %v1855 = vmul.f32 %v1853, %v1757
  %1857 = vrot.lane.b32.xlu0 %v1854, 64
  %v1858 = vpop.permute.xlu0 %1857
  %v1860 = vmul.f32 %v1853, %v1858
  %1862 = vrot.lane.b32.xlu0 %v1860, 32
  %v1863 = vpop.permute.xlu0 %1862
  %v1865 = vadd.f32 %v1855, %v1863
  %v1866 = vtanh.pop %v1865
  %1868 = vrot.lane.b32.xlu0 %v1866, 64
  %v1869 = vpop.permute.xlu0 %1868
  %v1871 = vmul.f32 %v1853, %v1869
  %1873 = vrot.lane.b32.xlu0 %v1847, 32
  %v1874 = vpop.permute.xlu0 %1873
  %1876 = vst.msk [vmem:[#allocation2 + $0x28] sm:$0xff] %vm91, %v1874
  %1878 = vrot.lane.b32.xlu0 %v1871, 64
  %v1879 = vpop.permute.xlu0 %1878
  %1881 = vst.msk [vmem:[#allocation2 + $0x10] sm:$0xff] %vm260, %v1879
  %v1882 = vld [vmem:[#allocation3 + $0x60] sm:$0xff]
  %v1883 = vld [vmem:[#allocation3 + $0x18] sm:$0xff]
  %v1884 = vsel %vm91, %v1874, %v1879
  %v1885 = vpack.c.bf16 %v1884, %v1884
  %v1887 = vsel %vm306, %v1885, 0
  %1889 = vmatprep.subr.bf16.mxu0 %v1331
  %1890 = vmatpush1.bf16.msra.mxu0 %v1330
  %1891 = vmatprep.subr.bf16.mxu0 %v1333
  %1892 = vmatpush1.bf16.msra.mxu0 %v1332
  %1893 = vmatprep.subr.bf16.mxu0 %v1335
  %1894 = vmatpush1.bf16.msra.mxu0 %v1334
  %1895 = vmatprep.subr.bf16.mxu0 %v1337
  %1896 = vmatpush1.bf16.msra.mxu0 %v1336
  %1897 = vmatprep.subr.bf16.mxu0 0
  %1898 = vmatpush1.bf16.msra.mxu0 0
  %1899 = vmatprep.subr.bf16.mxu0 0
  %1900 = vmatpush1.bf16.msra.mxu0 0
  %1901 = vmatprep.subr.bf16.mxu0 0
  %1902 = vmatpush1.bf16.msra.mxu0 0
  %1903 = vmatprep.subr.bf16.mxu0 0
  %1904 = vmatpush1.bf16.msra.mxu0 0
  %1905 = vmatprep.subr.bf16.mxu0 0
  %1906 = vmatpush1.bf16.msra.mxu0 0
  %1907 = vmatprep.subr.bf16.mxu0 0
  %1908 = vmatpush1.bf16.msra.mxu0 0
  %1909 = vmatprep.subr.bf16.mxu0 0
  %1910 = vmatpush1.bf16.msra.mxu0 0
  %1911 = vmatprep.subr.bf16.mxu0 0
  %1912 = vmatpush1.bf16.msra.mxu0 0
  %1913 = vmatprep.subr.bf16.mxu0 0
  %1914 = vmatpush1.bf16.msra.mxu0 0
  %1915 = vmatprep.subr.bf16.mxu0 0
  %1916 = vmatpush1.bf16.msra.mxu0 0
  %1917 = vmatprep.subr.bf16.mxu0 0
  %1918 = vmatpush1.bf16.msra.mxu0 0
  %1919 = vmatprep.subr.bf16.mxu0 0
  %1920 = vmatpush1.bf16.msra.mxu0 0
  %1921 = vmatprep.mubr.bf16.mxu0 0
  %1922 = vmatmul.mubr.bf16.gmra.mrb[0].mxu0 %v1887
  %v1923 = vpop.f32.mrb[0].mxu0
  %v1924 = vadd.f32 0.0, %v1923
  %v1925 = vpop.f32.mrb[0].mxu0
  %v1926 = vadd.f32 0.0, %v1925
  %v1927 = vpop.f32.mrb[0].mxu0
  %v1928 = vpop.f32.mrb[0].mxu0
  %1929 = vdwg.mxu0
  %v1930 = vadd.f32 %v1882, %v1924
  %v1931 = vadd.f32 %v1883, %v1926
  %v1932 = vxor.u32 %v1930, 2147483648
  %v1933 = vmul.f32 %v1932, 1.442695
  %v1934 = vpow.pop %v1933
  %v1935 = vadd.f32 %v1934, 1.0
  %v1936 = vrcp.pop %v1935
  %v1937 = vmul.f32 1.0, %v1936
  %v1938 = vtanh.pop %v1930
  %v1939 = vmul.f32 %v1937, %v1841
  %1941 = vrot.lane.b32.xlu0 %v1938, 64
  %v1942 = vpop.permute.xlu0 %1941
  %v1944 = vmul.f32 %v1937, %v1942
  %1946 = vrot.lane.b32.xlu0 %v1944, 32
  %v1947 = vpop.permute.xlu0 %1946
  %v1949 = vadd.f32 %v1939, %v1947
  %v1950 = vtanh.pop %v1949
  %1952 = vrot.lane.b32.xlu0 %v1950, 64
  %v1953 = vpop.permute.xlu0 %1952
  %v1955 = vmul.f32 %v1937, %v1953
  %v1956 = vxor.u32 %v1931, 2147483648
  %v1957 = vmul.f32 %v1956, 1.442695
  %v1958 = vpow.pop %v1957
  %v1959 = vadd.f32 %v1958, 1.0
  %v1960 = vrcp.pop %v1959
  %v1961 = vmul.f32 1.0, %v1960
  %v1962 = vtanh.pop %v1931
  %v1963 = vmul.f32 %v1961, %v1865
  %1965 = vrot.lane.b32.xlu0 %v1962, 64
  %v1966 = vpop.permute.xlu0 %1965
  %v1968 = vmul.f32 %v1961, %v1966
  %1970 = vrot.lane.b32.xlu0 %v1968, 32
  %v1971 = vpop.permute.xlu0 %1970
  %v1973 = vadd.f32 %v1963, %v1971
  %v1974 = vtanh.pop %v1973
  %1976 = vrot.lane.b32.xlu0 %v1974, 64
  %v1977 = vpop.permute.xlu0 %1976
  %v1979 = vmul.f32 %v1961, %v1977
  %1981 = vrot.lane.b32.xlu0 %v1955, 32
  %v1982 = vpop.permute.xlu0 %1981
  %1984 = vst.msk [vmem:[#allocation2 + $0x30] sm:$0xff] %vm91, %v1982
  %1986 = vrot.lane.b32.xlu0 %v1979, 64
  %v1987 = vpop.permute.xlu0 %1986
  %1989 = vst.msk [vmem:[#allocation2 + $0x8] sm:$0xff] %vm260, %v1987
  %v1990 = vld [vmem:[#allocation3 + $0x70] sm:$0xff]
  %v1991 = vld [vmem:[#allocation3 + $0x8] sm:$0xff]
  %v1992 = vsel %vm91, %v1982, %v1987
  %v1993 = vpack.c.bf16 %v1992, %v1992
  %v1995 = vsel %vm306, %v1993, 0
  %1997 = vmatprep.subr.bf16.mxu0 %v1331
  %1998 = vmatpush1.bf16.msra.mxu0 %v1330
  %1999 = vmatprep.subr.bf16.mxu0 %v1333
  %2000 = vmatpush1.bf16.msra.mxu0 %v1332
  %2001 = vmatprep.subr.bf16.mxu0 %v1335
  %2002 = vmatpush1.bf16.msra.mxu0 %v1334
  %2003 = vmatprep.subr.bf16.mxu0 %v1337
  %2004 = vmatpush1.bf16.msra.mxu0 %v1336
  %2005 = vmatprep.subr.bf16.mxu0 0
  %2006 = vmatpush1.bf16.msra.mxu0 0
  %2007 = vmatprep.subr.bf16.mxu0 0
  %2008 = vmatpush1.bf16.msra.mxu0 0
  %2009 = vmatprep.subr.bf16.mxu0 0
  %2010 = vmatpush1.bf16.msra.mxu0 0
  %2011 = vmatprep.subr.bf16.mxu0 0
  %2012 = vmatpush1.bf16.msra.mxu0 0
  %2013 = vmatprep.subr.bf16.mxu0 0
  %2014 = vmatpush1.bf16.msra.mxu0 0
  %2015 = vmatprep.subr.bf16.mxu0 0
  %2016 = vmatpush1.bf16.msra.mxu0 0
  %2017 = vmatprep.subr.bf16.mxu0 0
  %2018 = vmatpush1.bf16.msra.mxu0 0
  %2019 = vmatprep.subr.bf16.mxu0 0
  %2020 = vmatpush1.bf16.msra.mxu0 0
  %2021 = vmatprep.subr.bf16.mxu0 0
  %2022 = vmatpush1.bf16.msra.mxu0 0
  %2023 = vmatprep.subr.bf16.mxu0 0
  %2024 = vmatpush1.bf16.msra.mxu0 0
  %2025 = vmatprep.subr.bf16.mxu0 0
  %2026 = vmatpush1.bf16.msra.mxu0 0
  %2027 = vmatprep.subr.bf16.mxu0 0
  %2028 = vmatpush1.bf16.msra.mxu0 0
  %2029 = vmatprep.mubr.bf16.mxu0 0
  %2030 = vmatmul.mubr.bf16.gmra.mrb[0].mxu0 %v1995
  %v2031 = vpop.f32.mrb[0].mxu0
  %v2032 = vadd.f32 0.0, %v2031
  %v2033 = vpop.f32.mrb[0].mxu0
  %v2034 = vadd.f32 0.0, %v2033
  %v2035 = vpop.f32.mrb[0].mxu0
  %v2036 = vpop.f32.mrb[0].mxu0
  %2037 = vdwg.mxu0
  %v2038 = vadd.f32 %v1990, %v2032
  %v2039 = vadd.f32 %v1991, %v2034
  %v2040 = vxor.u32 %v2038, 2147483648
  %v2041 = vmul.f32 %v2040, 1.442695
  %v2042 = vpow.pop %v2041
  %v2043 = vadd.f32 %v2042, 1.0
  %v2044 = vrcp.pop %v2043
  %v2045 = vmul.f32 1.0, %v2044
  %v2046 = vtanh.pop %v2038
  %v2047 = vmul.f32 %v2045, %v1949
  %2049 = vrot.lane.b32.xlu0 %v2046, 64
  %v2050 = vpop.permute.xlu0 %2049
  %v2052 = vmul.f32 %v2045, %v2050
  %2054 = vrot.lane.b32.xlu0 %v2052, 32
  %v2055 = vpop.permute.xlu0 %2054
  %v2057 = vadd.f32 %v2047, %v2055
  %v2058 = vtanh.pop %v2057
  %2060 = vrot.lane.b32.xlu0 %v2058, 64
  %v2061 = vpop.permute.xlu0 %2060
  %v2063 = vmul.f32 %v2045, %v2061
  %v2064 = vxor.u32 %v2039, 2147483648
  %v2065 = vmul.f32 %v2064, 1.442695
  %v2066 = vpow.pop %v2065
  %v2067 = vadd.f32 %v2066, 1.0
  %v2068 = vrcp.pop %v2067
  %v2069 = vmul.f32 1.0, %v2068
  %v2070 = vtanh.pop %v2039
  %v2071 = vmul.f32 %v2069, %v1973
  %2073 = vrot.lane.b32.xlu0 %v2070, 64
  %v2074 = vpop.permute.xlu0 %2073
  %v2076 = vmul.f32 %v2069, %v2074
  %2078 = vrot.lane.b32.xlu0 %v2076, 32
  %v2079 = vpop.permute.xlu0 %2078
  %v2081 = vadd.f32 %v2071, %v2079
  %v2082 = vtanh.pop %v2081
  %2084 = vrot.lane.b32.xlu0 %v2082, 64
  %v2085 = vpop.permute.xlu0 %2084
  %v2087 = vmul.f32 %v2069, %v2085
  %2089 = vrot.lane.b32.xlu0 %v2063, 32
  %v2090 = vpop.permute.xlu0 %2089
  %2092 = vst.msk [vmem:[#allocation2 + $0x38] sm:$0xff] %vm91, %v2090
  %2094 = vrot.lane.b32.xlu0 %v2087, 64
  %v2095 = vpop.permute.xlu0 %2094
  %2097 = vst.msk [vmem:[#allocation2] sm:$0xff] %vm260, %v2095
  %v2098 = vld [vmem:[#allocation2] sm:$0xff]
  %v2099 = vld [vmem:[#allocation2 + $0x8] sm:$0xff]
  %v2100 = vld [vmem:[#allocation2 + $0x10] sm:$0xff]
  %v2101 = vld [vmem:[#allocation2 + $0x18] sm:$0xff]
  %v2102 = vld [vmem:[#allocation2 + $0x20] sm:$0xff]
  %v2103 = vld [vmem:[#allocation2 + $0x28] sm:$0xff]
  %v2104 = vld [vmem:[#allocation2 + $0x30] sm:$0xff]
  %v2105 = vld [vmem:[#allocation2 + $0x38] sm:$0xff]
  %v2106 = vpack.c.bf16 %v2099, %v2098
  %v2107 = vpack.c.bf16 %v2101, %v2100
  %v2108 = vpack.c.bf16 %v2103, %v2102
  %v2109 = vpack.c.bf16 %v2105, %v2104
  %s2110 = scalar_lea.vmem %s2, 64
  %v2111 = vld [vmem:[%s2110] sm:$0xff]
  %v2112 = vld [vmem:[%s2110 + $0x8] sm:$0xff]
  %v2113 = vld [vmem:[%s2110 + $0x10] sm:$0xff]
  %v2114 = vld [vmem:[%s2110 + $0x18] sm:$0xff]
  %v2115 = vld [vmem:[%s2110 + $0x20] sm:$0xff]
  %v2116 = vld [vmem:[%s2110 + $0x28] sm:$0xff]
  %v2117 = vld [vmem:[%s2110 + $0x30] sm:$0xff]
  %v2118 = vld [vmem:[%s2110 + $0x38] sm:$0xff]
  %s2119 = scalar_lea.vmem %s4, 4
  %v2120 = vld [vmem:[%s2119] sm:$0x3]
  %v2122 = vlaneseq
  %v2123 = vshrl.u32 %v2122, 7
  %v2124 = vsub.s32 0, %v2123
  %v2125 = vrot.slane %v2120, %v2124
  %v2126 = vlaneseq
  %v2127 = vshrl.u32 %v2126, 7
  %v2128 = vsub.s32 1, %v2127
  %v2129 = vrot.slane %v2120, %v2128
  %v2140 = vunpack.c.l.b16 %v2111
  %v2141 = vunpack.c.h.b16 %v2111
  %v2142 = vunpack.c.l.b16 %v2112
  %v2143 = vunpack.c.h.b16 %v2112
  %v2144 = vunpack.c.l.b16 %v2113
  %v2145 = vunpack.c.h.b16 %v2113
  %v2146 = vunpack.c.l.b16 %v2114
  %v2147 = vunpack.c.h.b16 %v2114
  %v2148 = vunpack.c.l.b16 %v2115
  %v2149 = vunpack.c.h.b16 %v2115
  %v2150 = vunpack.c.l.b16 %v2116
  %v2151 = vunpack.c.h.b16 %v2116
  %v2152 = vunpack.c.l.b16 %v2117
  %v2153 = vunpack.c.h.b16 %v2117
  %v2154 = vunpack.c.l.b16 %v2118
  %v2155 = vunpack.c.h.b16 %v2118
  %v2156 = vpack.c.b16 %v2142, %v2140
  %v2157 = vpack.c.b16 %v2143, %v2141
  %v2158 = vpack.c.b16 %v2146, %v2144
  %v2159 = vpack.c.b16 %v2147, %v2145
  %v2160 = vpack.c.b16 %v2150, %v2148
  %v2161 = vpack.c.b16 %v2151, %v2149
  %v2162 = vpack.c.b16 %v2154, %v2152
  %v2163 = vpack.c.b16 %v2155, %v2153
  %v2173 = vsel %vm306, %v2106, 0
  %v2176 = vsel %vm306, %v2107, 0
  %v2179 = vsel %vm306, %v2108, 0
  %v2182 = vsel %vm306, %v2109, 0
  %2184 = vmatprep.subr.bf16.mxu0 %v2157
  %2185 = vmatpush1.bf16.msra.mxu0 %v2156
  %2186 = vmatprep.subr.bf16.mxu0 %v2159
  %2187 = vmatpush1.bf16.msra.mxu0 %v2158
  %2188 = vmatprep.subr.bf16.mxu0 %v2161
  %2189 = vmatpush1.bf16.msra.mxu0 %v2160
  %2190 = vmatprep.subr.bf16.mxu0 %v2163
  %2191 = vmatpush1.bf16.msra.mxu0 %v2162
  %2192 = vmatprep.subr.bf16.mxu0 0
  %2193 = vmatpush1.bf16.msra.mxu0 0
  %2194 = vmatprep.subr.bf16.mxu0 0
  %2195 = vmatpush1.bf16.msra.mxu0 0
  %2196 = vmatprep.subr.bf16.mxu0 0
  %2197 = vmatpush1.bf16.msra.mxu0 0
  %2198 = vmatprep.subr.bf16.mxu0 0
  %2199 = vmatpush1.bf16.msra.mxu0 0
  %2200 = vmatprep.subr.bf16.mxu0 0
  %2201 = vmatpush1.bf16.msra.mxu0 0
  %2202 = vmatprep.subr.bf16.mxu0 0
  %2203 = vmatpush1.bf16.msra.mxu0 0
  %2204 = vmatprep.subr.bf16.mxu0 0
  %2205 = vmatpush1.bf16.msra.mxu0 0
  %2206 = vmatprep.subr.bf16.mxu0 0
  %2207 = vmatpush1.bf16.msra.mxu0 0
  %2208 = vmatprep.subr.bf16.mxu0 0
  %2209 = vmatpush1.bf16.msra.mxu0 0
  %2210 = vmatprep.subr.bf16.mxu0 0
  %2211 = vmatpush1.bf16.msra.mxu0 0
  %2212 = vmatprep.subr.bf16.mxu0 0
  %2213 = vmatpush1.bf16.msra.mxu0 0
  %2214 = vmatprep.subr.bf16.mxu0 0
  %2215 = vmatpush1.bf16.msra.mxu0 0
  %2216 = vmatprep.mubr.bf16.mxu0 0
  %2217 = vmatmul.mubr.bf16.gmra.mrb[0].mxu0 %v2173
  %v2218 = vpop.f32.mrb[0].mxu0
  %v2219 = vadd.f32 %v2125, %v2218
  %v2220 = vpop.f32.mrb[0].mxu0
  %v2221 = vadd.f32 %v2129, %v2220
  %v2222 = vpop.f32.mrb[0].mxu0
  %v2223 = vadd.f32 %v2125, %v2222
  %v2224 = vpop.f32.mrb[0].mxu0
  %v2225 = vadd.f32 %v2129, %v2224
  %2226 = vmatprep.mubr.bf16.mxu0 0
  %2227 = vmatmul.mubr.bf16.gmra.mrb[0].mxu0 %v2176
  %v2228 = vpop.f32.mrb[0].mxu0
  %v2229 = vadd.f32 %v2125, %v2228
  %v2230 = vpop.f32.mrb[0].mxu0
  %v2231 = vadd.f32 %v2129, %v2230
  %v2232 = vpop.f32.mrb[0].mxu0
  %v2233 = vadd.f32 %v2125, %v2232
  %v2234 = vpop.f32.mrb[0].mxu0
  %v2235 = vadd.f32 %v2129, %v2234
  %2236 = vmatprep.mubr.bf16.mxu0 0
  %2237 = vmatmul.mubr.bf16.gmra.mrb[0].mxu0 %v2179
  %v2238 = vpop.f32.mrb[0].mxu0
  %v2239 = vadd.f32 %v2125, %v2238
  %v2240 = vpop.f32.mrb[0].mxu0
  %v2241 = vadd.f32 %v2129, %v2240
  %v2242 = vpop.f32.mrb[0].mxu0
  %v2243 = vadd.f32 %v2125, %v2242
  %v2244 = vpop.f32.mrb[0].mxu0
  %v2245 = vadd.f32 %v2129, %v2244
  %2246 = vmatprep.mubr.bf16.mxu0 0
  %2247 = vmatmul.mubr.bf16.gmra.mrb[0].mxu0 %v2182
  %v2248 = vpop.f32.mrb[0].mxu0
  %v2249 = vadd.f32 %v2125, %v2248
  %v2250 = vpop.f32.mrb[0].mxu0
  %v2251 = vadd.f32 %v2129, %v2250
  %v2252 = vpop.f32.mrb[0].mxu0
  %v2253 = vadd.f32 %v2125, %v2252
  %v2254 = vpop.f32.mrb[0].mxu0
  %v2255 = vadd.f32 %v2129, %v2254
  %2256 = vdwg.mxu0
  %2257 = vst [vmem:[#allocation3] sm:$0xff] %v2219
  %2258 = vst [vmem:[#allocation3 + $0x8] sm:$0xff] %v2221
  %2259 = vst [vmem:[#allocation3 + $0x10] sm:$0xff] %v2223
  %2260 = vst [vmem:[#allocation3 + $0x18] sm:$0xff] %v2225
  %2261 = vst [vmem:[#allocation3 + $0x20] sm:$0xff] %v2229
  %2262 = vst [vmem:[#allocation3 + $0x28] sm:$0xff] %v2231
  %2263 = vst [vmem:[#allocation3 + $0x30] sm:$0xff] %v2233
  %2264 = vst [vmem:[#allocation3 + $0x38] sm:$0xff] %v2235
  %2265 = vst [vmem:[#allocation3 + $0x40] sm:$0xff] %v2239
  %2266 = vst [vmem:[#allocation3 + $0x48] sm:$0xff] %v2241
  %2267 = vst [vmem:[#allocation3 + $0x50] sm:$0xff] %v2243
  %2268 = vst [vmem:[#allocation3 + $0x58] sm:$0xff] %v2245
  %2269 = vst [vmem:[#allocation3 + $0x60] sm:$0xff] %v2249
  %2270 = vst [vmem:[#allocation3 + $0x68] sm:$0xff] %v2251
  %2271 = vst [vmem:[#allocation3 + $0x70] sm:$0xff] %v2253
  %2272 = vst [vmem:[#allocation3 + $0x78] sm:$0xff] %v2255
  %s2273 = scalar_lea.vmem %s3, 128
  %v2274 = vld [vmem:[%s2273] sm:$0xff]
  %v2275 = vld [vmem:[%s2273 + $0x8] sm:$0xff]
  %v2276 = vld [vmem:[%s2273 + $0x10] sm:$0xff]
  %v2277 = vld [vmem:[%s2273 + $0x18] sm:$0xff]
  %v2278 = vld [vmem:[%s2273 + $0x20] sm:$0xff]
  %v2279 = vld [vmem:[%s2273 + $0x28] sm:$0xff]
  %v2280 = vld [vmem:[%s2273 + $0x30] sm:$0xff]
  %v2281 = vld [vmem:[%s2273 + $0x38] sm:$0xff]
  %v2282 = vld [vmem:[#allocation3] sm:$0xff]
  %v2283 = vld [vmem:[#allocation3 + $0x78] sm:$0xff]
  %v2284 = vxor.u32 %v2282, 2147483648
  %v2285 = vmul.f32 %v2284, 1.442695
  %v2286 = vpow.pop %v2285
  %v2287 = vadd.f32 %v2286, 1.0
  %v2288 = vrcp.pop %v2287
  %v2289 = vmul.f32 1.0, %v2288
  %v2290 = vtanh.pop %v2282
  %v2291 = vmul.f32 %v2289, 0.0
  %2293 = vrot.lane.b32.xlu0 %v2290, 64
  %v2294 = vpop.permute.xlu0 %2293
  %v2296 = vmul.f32 %v2289, %v2294
  %2298 = vrot.lane.b32.xlu0 %v2296, 32
  %v2299 = vpop.permute.xlu0 %2298
  %v2301 = vadd.f32 %v2291, %v2299
  %v2302 = vtanh.pop %v2301
  %2304 = vrot.lane.b32.xlu0 %v2302, 64
  %v2305 = vpop.permute.xlu0 %2304
  %v2307 = vmul.f32 %v2289, %v2305
  %v2308 = vxor.u32 %v2283, 2147483648
  %v2309 = vmul.f32 %v2308, 1.442695
  %v2310 = vpow.pop %v2309
  %v2311 = vadd.f32 %v2310, 1.0
  %v2312 = vrcp.pop %v2311
  %v2313 = vmul.f32 1.0, %v2312
  %v2314 = vtanh.pop %v2283
  %v2315 = vmul.f32 %v2313, 0.0
  %2317 = vrot.lane.b32.xlu0 %v2314, 64
  %v2318 = vpop.permute.xlu0 %2317
  %v2320 = vmul.f32 %v2313, %v2318
  %2322 = vrot.lane.b32.xlu0 %v2320, 32
  %v2323 = vpop.permute.xlu0 %2322
  %v2325 = vadd.f32 %v2315, %v2323
  %v2326 = vtanh.pop %v2325
  %2328 = vrot.lane.b32.xlu0 %v2326, 64
  %v2329 = vpop.permute.xlu0 %2328
  %v2331 = vmul.f32 %v2313, %v2329
  %2333 = vrot.lane.b32.xlu0 %v2307, 32
  %v2334 = vpop.permute.xlu0 %2333
  %2336 = vst.msk [vmem:[#allocation2] sm:$0xff] %vm91, %v2334
  %2338 = vrot.lane.b32.xlu0 %v2331, 64
  %v2339 = vpop.permute.xlu0 %2338
  %2341 = vst.msk [vmem:[#allocation2 + $0x38] sm:$0xff] %vm260, %v2339
  %v2342 = vld [vmem:[#allocation3 + $0x10] sm:$0xff]
  %v2343 = vld [vmem:[#allocation3 + $0x68] sm:$0xff]
  %v2344 = vsel %vm91, %v2334, %v2339
  %v2345 = vpack.c.bf16 %v2344, %v2344
  %v2354 = vunpack.c.l.b16 %v2274
  %v2355 = vunpack.c.h.b16 %v2274
  %v2356 = vunpack.c.l.b16 %v2275
  %v2357 = vunpack.c.h.b16 %v2275
  %v2358 = vunpack.c.l.b16 %v2276
  %v2359 = vunpack.c.h.b16 %v2276
  %v2360 = vunpack.c.l.b16 %v2277
  %v2361 = vunpack.c.h.b16 %v2277
  %v2362 = vunpack.c.l.b16 %v2278
  %v2363 = vunpack.c.h.b16 %v2278
  %v2364 = vunpack.c.l.b16 %v2279
  %v2365 = vunpack.c.h.b16 %v2279
  %v2366 = vunpack.c.l.b16 %v2280
  %v2367 = vunpack.c.h.b16 %v2280
  %v2368 = vunpack.c.l.b16 %v2281
  %v2369 = vunpack.c.h.b16 %v2281
  %v2370 = vpack.c.b16 %v2356, %v2354
  %v2371 = vpack.c.b16 %v2357, %v2355
  %v2372 = vpack.c.b16 %v2360, %v2358
  %v2373 = vpack.c.b16 %v2361, %v2359
  %v2374 = vpack.c.b16 %v2364, %v2362
  %v2375 = vpack.c.b16 %v2365, %v2363
  %v2376 = vpack.c.b16 %v2368, %v2366
  %v2377 = vpack.c.b16 %v2369, %v2367
  %v2387 = vsel %vm306, %v2345, 0
  %2389 = vmatprep.subr.bf16.mxu0 %v2371
  %2390 = vmatpush1.bf16.msra.mxu0 %v2370
  %2391 = vmatprep.subr.bf16.mxu0 %v2373
  %2392 = vmatpush1.bf16.msra.mxu0 %v2372
  %2393 = vmatprep.subr.bf16.mxu0 %v2375
  %2394 = vmatpush1.bf16.msra.mxu0 %v2374
  %2395 = vmatprep.subr.bf16.mxu0 %v2377
  %2396 = vmatpush1.bf16.msra.mxu0 %v2376
  %2397 = vmatprep.subr.bf16.mxu0 0
  %2398 = vmatpush1.bf16.msra.mxu0 0
  %2399 = vmatprep.subr.bf16.mxu0 0
  %2400 = vmatpush1.bf16.msra.mxu0 0
  %2401 = vmatprep.subr.bf16.mxu0 0
  %2402 = vmatpush1.bf16.msra.mxu0 0
  %2403 = vmatprep.subr.bf16.mxu0 0
  %2404 = vmatpush1.bf16.msra.mxu0 0
  %2405 = vmatprep.subr.bf16.mxu0 0
  %2406 = vmatpush1.bf16.msra.mxu0 0
  %2407 = vmatprep.subr.bf16.mxu0 0
  %2408 = vmatpush1.bf16.msra.mxu0 0
  %2409 = vmatprep.subr.bf16.mxu0 0
  %2410 = vmatpush1.bf16.msra.mxu0 0
  %2411 = vmatprep.subr.bf16.mxu0 0
  %2412 = vmatpush1.bf16.msra.mxu0 0
  %2413 = vmatprep.subr.bf16.mxu0 0
  %2414 = vmatpush1.bf16.msra.mxu0 0
  %2415 = vmatprep.subr.bf16.mxu0 0
  %2416 = vmatpush1.bf16.msra.mxu0 0
  %2417 = vmatprep.subr.bf16.mxu0 0
  %2418 = vmatpush1.bf16.msra.mxu0 0
  %2419 = vmatprep.subr.bf16.mxu0 0
  %2420 = vmatpush1.bf16.msra.mxu0 0
  %2421 = vmatprep.mubr.bf16.mxu0 0
  %2422 = vmatmul.mubr.bf16.gmra.mrb[0].mxu0 %v2387
  %v2423 = vpop.f32.mrb[0].mxu0
  %v2424 = vadd.f32 0.0, %v2423
  %v2425 = vpop.f32.mrb[0].mxu0
  %v2426 = vadd.f32 0.0, %v2425
  %v2427 = vpop.f32.mrb[0].mxu0
  %v2428 = vpop.f32.mrb[0].mxu0
  %2429 = vdwg.mxu0
  %v2430 = vadd.f32 %v2342, %v2424
  %v2431 = vadd.f32 %v2343, %v2426
  %v2432 = vxor.u32 %v2430, 2147483648
  %v2433 = vmul.f32 %v2432, 1.442695
  %v2434 = vpow.pop %v2433
  %v2435 = vadd.f32 %v2434, 1.0
  %v2436 = vrcp.pop %v2435
  %v2437 = vmul.f32 1.0, %v2436
  %v2438 = vtanh.pop %v2430
  %v2439 = vmul.f32 %v2437, %v2301
  %2441 = vrot.lane.b32.xlu0 %v2438, 64
  %v2442 = vpop.permute.xlu0 %2441
  %v2444 = vmul.f32 %v2437, %v2442
  %2446 = vrot.lane.b32.xlu0 %v2444, 32
  %v2447 = vpop.permute.xlu0 %2446
  %v2449 = vadd.f32 %v2439, %v2447
  %v2450 = vtanh.pop %v2449
  %2452 = vrot.lane.b32.xlu0 %v2450, 64
  %v2453 = vpop.permute.xlu0 %2452
  %v2455 = vmul.f32 %v2437, %v2453
  %v2456 = vxor.u32 %v2431, 2147483648
  %v2457 = vmul.f32 %v2456, 1.442695
  %v2458 = vpow.pop %v2457
  %v2459 = vadd.f32 %v2458, 1.0
  %v2460 = vrcp.pop %v2459
  %v2461 = vmul.f32 1.0, %v2460
  %v2462 = vtanh.pop %v2431
  %v2463 = vmul.f32 %v2461, %v2325
  %2465 = vrot.lane.b32.xlu0 %v2462, 64
  %v2466 = vpop.permute.xlu0 %2465
  %v2468 = vmul.f32 %v2461, %v2466
  %2470 = vrot.lane.b32.xlu0 %v2468, 32
  %v2471 = vpop.permute.xlu0 %2470
  %v2473 = vadd.f32 %v2463, %v2471
  %v2474 = vtanh.pop %v2473
  %2476 = vrot.lane.b32.xlu0 %v2474, 64
  %v2477 = vpop.permute.xlu0 %2476
  %v2479 = vmul.f32 %v2461, %v2477
  %2481 = vrot.lane.b32.xlu0 %v2455, 32
  %v2482 = vpop.permute.xlu0 %2481
  %2484 = vst.msk [vmem:[#allocation2 + $0x8] sm:$0xff] %vm91, %v2482
  %2486 = vrot.lane.b32.xlu0 %v2479, 64
  %v2487 = vpop.permute.xlu0 %2486
  %2489 = vst.msk [vmem:[#allocation2 + $0x30] sm:$0xff] %vm260, %v2487
  %v2490 = vld [vmem:[#allocation3 + $0x20] sm:$0xff]
  %v2491 = vld [vmem:[#allocation3 + $0x58] sm:$0xff]
  %v2492 = vsel %vm91, %v2482, %v2487
  %v2493 = vpack.c.bf16 %v2492, %v2492
  %v2495 = vsel %vm306, %v2493, 0
  %2497 = vmatprep.subr.bf16.mxu0 %v2371
  %2498 = vmatpush1.bf16.msra.mxu0 %v2370
  %2499 = vmatprep.subr.bf16.mxu0 %v2373
  %2500 = vmatpush1.bf16.msra.mxu0 %v2372
  %2501 = vmatprep.subr.bf16.mxu0 %v2375
  %2502 = vmatpush1.bf16.msra.mxu0 %v2374
  %2503 = vmatprep.subr.bf16.mxu0 %v2377
  %2504 = vmatpush1.bf16.msra.mxu0 %v2376
  %2505 = vmatprep.subr.bf16.mxu0 0
  %2506 = vmatpush1.bf16.msra.mxu0 0
  %2507 = vmatprep.subr.bf16.mxu0 0
  %2508 = vmatpush1.bf16.msra.mxu0 0
  %2509 = vmatprep.subr.bf16.mxu0 0
  %2510 = vmatpush1.bf16.msra.mxu0 0
  %2511 = vmatprep.subr.bf16.mxu0 0
  %2512 = vmatpush1.bf16.msra.mxu0 0
  %2513 = vmatprep.subr.bf16.mxu0 0
  %2514 = vmatpush1.bf16.msra.mxu0 0
  %2515 = vmatprep.subr.bf16.mxu0 0
  %2516 = vmatpush1.bf16.msra.mxu0 0
  %2517 = vmatprep.subr.bf16.mxu0 0
  %2518 = vmatpush1.bf16.msra.mxu0 0
  %2519 = vmatprep.subr.bf16.mxu0 0
  %2520 = vmatpush1.bf16.msra.mxu0 0
  %2521 = vmatprep.subr.bf16.mxu0 0
  %2522 = vmatpush1.bf16.msra.mxu0 0
  %2523 = vmatprep.subr.bf16.mxu0 0
  %2524 = vmatpush1.bf16.msra.mxu0 0
  %2525 = vmatprep.subr.bf16.mxu0 0
  %2526 = vmatpush1.bf16.msra.mxu0 0
  %2527 = vmatprep.subr.bf16.mxu0 0
  %2528 = vmatpush1.bf16.msra.mxu0 0
  %2529 = vmatprep.mubr.bf16.mxu0 0
  %2530 = vmatmul.mubr.bf16.gmra.mrb[0].mxu0 %v2495
  %v2531 = vpop.f32.mrb[0].mxu0
  %v2532 = vadd.f32 0.0, %v2531
  %v2533 = vpop.f32.mrb[0].mxu0
  %v2534 = vadd.f32 0.0, %v2533
  %v2535 = vpop.f32.mrb[0].mxu0
  %v2536 = vpop.f32.mrb[0].mxu0
  %2537 = vdwg.mxu0
  %v2538 = vadd.f32 %v2490, %v2532
  %v2539 = vadd.f32 %v2491, %v2534
  %v2540 = vxor.u32 %v2538, 2147483648
  %v2541 = vmul.f32 %v2540, 1.442695
  %v2542 = vpow.pop %v2541
  %v2543 = vadd.f32 %v2542, 1.0
  %v2544 = vrcp.pop %v2543
  %v2545 = vmul.f32 1.0, %v2544
  %v2546 = vtanh.pop %v2538
  %v2547 = vmul.f32 %v2545, %v2449
  %2549 = vrot.lane.b32.xlu0 %v2546, 64
  %v2550 = vpop.permute.xlu0 %2549
  %v2552 = vmul.f32 %v2545, %v2550
  %2554 = vrot.lane.b32.xlu0 %v2552, 32
  %v2555 = vpop.permute.xlu0 %2554
  %v2557 = vadd.f32 %v2547, %v2555
  %v2558 = vtanh.pop %v2557
  %2560 = vrot.lane.b32.xlu0 %v2558, 64
  %v2561 = vpop.permute.xlu0 %2560
  %v2563 = vmul.f32 %v2545, %v2561
  %v2564 = vxor.u32 %v2539, 2147483648
  %v2565 = vmul.f32 %v2564, 1.442695
  %v2566 = vpow.pop %v2565
  %v2567 = vadd.f32 %v2566, 1.0
  %v2568 = vrcp.pop %v2567
  %v2569 = vmul.f32 1.0, %v2568
  %v2570 = vtanh.pop %v2539
  %v2571 = vmul.f32 %v2569, %v2473
  %2573 = vrot.lane.b32.xlu0 %v2570, 64
  %v2574 = vpop.permute.xlu0 %2573
  %v2576 = vmul.f32 %v2569, %v2574
  %2578 = vrot.lane.b32.xlu0 %v2576, 32
  %v2579 = vpop.permute.xlu0 %2578
  %v2581 = vadd.f32 %v2571, %v2579
  %v2582 = vtanh.pop %v2581
  %2584 = vrot.lane.b32.xlu0 %v2582, 64
  %v2585 = vpop.permute.xlu0 %2584
  %v2587 = vmul.f32 %v2569, %v2585
  %2589 = vrot.lane.b32.xlu0 %v2563, 32
  %v2590 = vpop.permute.xlu0 %2589
  %2592 = vst.msk [vmem:[#allocation2 + $0x10] sm:$0xff] %vm91, %v2590
  %2594 = vrot.lane.b32.xlu0 %v2587, 64
  %v2595 = vpop.permute.xlu0 %2594
  %2597 = vst.msk [vmem:[#allocation2 + $0x28] sm:$0xff] %vm260, %v2595
  %v2598 = vld [vmem:[#allocation3 + $0x30] sm:$0xff]
  %v2599 = vld [vmem:[#allocation3 + $0x48] sm:$0xff]
  %v2600 = vsel %vm91, %v2590, %v2595
  %v2601 = vpack.c.bf16 %v2600, %v2600
  %v2603 = vsel %vm306, %v2601, 0
  %2605 = vmatprep.subr.bf16.mxu0 %v2371
  %2606 = vmatpush1.bf16.msra.mxu0 %v2370
  %2607 = vmatprep.subr.bf16.mxu0 %v2373
  %2608 = vmatpush1.bf16.msra.mxu0 %v2372
  %2609 = vmatprep.subr.bf16.mxu0 %v2375
  %2610 = vmatpush1.bf16.msra.mxu0 %v2374
  %2611 = vmatprep.subr.bf16.mxu0 %v2377
  %2612 = vmatpush1.bf16.msra.mxu0 %v2376
  %2613 = vmatprep.subr.bf16.mxu0 0
  %2614 = vmatpush1.bf16.msra.mxu0 0
  %2615 = vmatprep.subr.bf16.mxu0 0
  %2616 = vmatpush1.bf16.msra.mxu0 0
  %2617 = vmatprep.subr.bf16.mxu0 0
  %2618 = vmatpush1.bf16.msra.mxu0 0
  %2619 = vmatprep.subr.bf16.mxu0 0
  %2620 = vmatpush1.bf16.msra.mxu0 0
  %2621 = vmatprep.subr.bf16.mxu0 0
  %2622 = vmatpush1.bf16.msra.mxu0 0
  %2623 = vmatprep.subr.bf16.mxu0 0
  %2624 = vmatpush1.bf16.msra.mxu0 0
  %2625 = vmatprep.subr.bf16.mxu0 0
  %2626 = vmatpush1.bf16.msra.mxu0 0
  %2627 = vmatprep.subr.bf16.mxu0 0
  %2628 = vmatpush1.bf16.msra.mxu0 0
  %2629 = vmatprep.subr.bf16.mxu0 0
  %2630 = vmatpush1.bf16.msra.mxu0 0
  %2631 = vmatprep.subr.bf16.mxu0 0
  %2632 = vmatpush1.bf16.msra.mxu0 0
  %2633 = vmatprep.subr.bf16.mxu0 0
  %2634 = vmatpush1.bf16.msra.mxu0 0
  %2635 = vmatprep.subr.bf16.mxu0 0
  %2636 = vmatpush1.bf16.msra.mxu0 0
  %2637 = vmatprep.mubr.bf16.mxu0 0
  %2638 = vmatmul.mubr.bf16.gmra.mrb[0].mxu0 %v2603
  %v2639 = vpop.f32.mrb[0].mxu0
  %v2640 = vadd.f32 0.0, %v2639
  %v2641 = vpop.f32.mrb[0].mxu0
  %v2642 = vadd.f32 0.0, %v2641
  %v2643 = vpop.f32.mrb[0].mxu0
  %v2644 = vpop.f32.mrb[0].mxu0
  %2645 = vdwg.mxu0
  %v2646 = vadd.f32 %v2598, %v2640
  %v2647 = vadd.f32 %v2599, %v2642
  %v2648 = vxor.u32 %v2646, 2147483648
  %v2649 = vmul.f32 %v2648, 1.442695
  %v2650 = vpow.pop %v2649
  %v2651 = vadd.f32 %v2650, 1.0
  %v2652 = vrcp.pop %v2651
  %v2653 = vmul.f32 1.0, %v2652
  %v2654 = vtanh.pop %v2646
  %v2655 = vmul.f32 %v2653, %v2557
  %2657 = vrot.lane.b32.xlu0 %v2654, 64
  %v2658 = vpop.permute.xlu0 %2657
  %v2660 = vmul.f32 %v2653, %v2658
  %2662 = vrot.lane.b32.xlu0 %v2660, 32
  %v2663 = vpop.permute.xlu0 %2662
  %v2665 = vadd.f32 %v2655, %v2663
  %v2666 = vtanh.pop %v2665
  %2668 = vrot.lane.b32.xlu0 %v2666, 64
  %v2669 = vpop.permute.xlu0 %2668
  %v2671 = vmul.f32 %v2653, %v2669
  %v2672 = vxor.u32 %v2647, 2147483648
  %v2673 = vmul.f32 %v2672, 1.442695
  %v2674 = vpow.pop %v2673
  %v2675 = vadd.f32 %v2674, 1.0
  %v2676 = vrcp.pop %v2675
  %v2677 = vmul.f32 1.0, %v2676
  %v2678 = vtanh.pop %v2647
  %v2679 = vmul.f32 %v2677, %v2581
  %2681 = vrot.lane.b32.xlu0 %v2678, 64
  %v2682 = vpop.permute.xlu0 %2681
  %v2684 = vmul.f32 %v2677, %v2682
  %2686 = vrot.lane.b32.xlu0 %v2684, 32
  %v2687 = vpop.permute.xlu0 %2686
  %v2689 = vadd.f32 %v2679, %v2687
  %v2690 = vtanh.pop %v2689
  %2692 = vrot.lane.b32.xlu0 %v2690, 64
  %v2693 = vpop.permute.xlu0 %2692
  %v2695 = vmul.f32 %v2677, %v2693
  %2697 = vrot.lane.b32.xlu0 %v2671, 32
  %v2698 = vpop.permute.xlu0 %2697
  %2700 = vst.msk [vmem:[#allocation2 + $0x18] sm:$0xff] %vm91, %v2698
  %2702 = vrot.lane.b32.xlu0 %v2695, 64
  %v2703 = vpop.permute.xlu0 %2702
  %2705 = vst.msk [vmem:[#allocation2 + $0x20] sm:$0xff] %vm260, %v2703
  %v2706 = vld [vmem:[#allocation3 + $0x40] sm:$0xff]
  %v2707 = vld [vmem:[#allocation3 + $0x38] sm:$0xff]
  %v2708 = vsel %vm91, %v2698, %v2703
  %v2709 = vpack.c.bf16 %v2708, %v2708
  %v2711 = vsel %vm306, %v2709, 0
  %2713 = vmatprep.subr.bf16.mxu0 %v2371
  %2714 = vmatpush1.bf16.msra.mxu0 %v2370
  %2715 = vmatprep.subr.bf16.mxu0 %v2373
  %2716 = vmatpush1.bf16.msra.mxu0 %v2372
  %2717 = vmatprep.subr.bf16.mxu0 %v2375
  %2718 = vmatpush1.bf16.msra.mxu0 %v2374
  %2719 = vmatprep.subr.bf16.mxu0 %v2377
  %2720 = vmatpush1.bf16.msra.mxu0 %v2376
  %2721 = vmatprep.subr.bf16.mxu0 0
  %2722 = vmatpush1.bf16.msra.mxu0 0
  %2723 = vmatprep.subr.bf16.mxu0 0
  %2724 = vmatpush1.bf16.msra.mxu0 0
  %2725 = vmatprep.subr.bf16.mxu0 0
  %2726 = vmatpush1.bf16.msra.mxu0 0
  %2727 = vmatprep.subr.bf16.mxu0 0
  %2728 = vmatpush1.bf16.msra.mxu0 0
  %2729 = vmatprep.subr.bf16.mxu0 0
  %2730 = vmatpush1.bf16.msra.mxu0 0
  %2731 = vmatprep.subr.bf16.mxu0 0
  %2732 = vmatpush1.bf16.msra.mxu0 0
  %2733 = vmatprep.subr.bf16.mxu0 0
  %2734 = vmatpush1.bf16.msra.mxu0 0
  %2735 = vmatprep.subr.bf16.mxu0 0
  %2736 = vmatpush1.bf16.msra.mxu0 0
  %2737 = vmatprep.subr.bf16.mxu0 0
  %2738 = vmatpush1.bf16.msra.mxu0 0
  %2739 = vmatprep.subr.bf16.mxu0 0
  %2740 = vmatpush1.bf16.msra.mxu0 0
  %2741 = vmatprep.subr.bf16.mxu0 0
  %2742 = vmatpush1.bf16.msra.mxu0 0
  %2743 = vmatprep.subr.bf16.mxu0 0
  %2744 = vmatpush1.bf16.msra.mxu0 0
  %2745 = vmatprep.mubr.bf16.mxu0 0
  %2746 = vmatmul.mubr.bf16.gmra.mrb[0].mxu0 %v2711
  %v2747 = vpop.f32.mrb[0].mxu0
  %v2748 = vadd.f32 0.0, %v2747
  %v2749 = vpop.f32.mrb[0].mxu0
  %v2750 = vadd.f32 0.0, %v2749
  %v2751 = vpop.f32.mrb[0].mxu0
  %v2752 = vpop.f32.mrb[0].mxu0
  %2753 = vdwg.mxu0
  %v2754 = vadd.f32 %v2706, %v2748
  %v2755 = vadd.f32 %v2707, %v2750
  %v2756 = vxor.u32 %v2754, 2147483648
  %v2757 = vmul.f32 %v2756, 1.442695
  %v2758 = vpow.pop %v2757
  %v2759 = vadd.f32 %v2758, 1.0
  %v2760 = vrcp.pop %v2759
  %v2761 = vmul.f32 1.0, %v2760
  %v2762 = vtanh.pop %v2754
  %v2763 = vmul.f32 %v2761, %v2665
  %2765 = vrot.lane.b32.xlu0 %v2762, 64
  %v2766 = vpop.permute.xlu0 %2765
  %v2768 = vmul.f32 %v2761, %v2766
  %2770 = vrot.lane.b32.xlu0 %v2768, 32
  %v2771 = vpop.permute.xlu0 %2770
  %v2773 = vadd.f32 %v2763, %v2771
  %v2774 = vtanh.pop %v2773
  %2776 = vrot.lane.b32.xlu0 %v2774, 64
  %v2777 = vpop.permute.xlu0 %2776
  %v2779 = vmul.f32 %v2761, %v2777
  %v2780 = vxor.u32 %v2755, 2147483648
  %v2781 = vmul.f32 %v2780, 1.442695
  %v2782 = vpow.pop %v2781
  %v2783 = vadd.f32 %v2782, 1.0
  %v2784 = vrcp.pop %v2783
  %v2785 = vmul.f32 1.0, %v2784
  %v2786 = vtanh.pop %v2755
  %v2787 = vmul.f32 %v2785, %v2689
  %2789 = vrot.lane.b32.xlu0 %v2786, 64
  %v2790 = vpop.permute.xlu0 %2789
  %v2792 = vmul.f32 %v2785, %v2790
  %2794 = vrot.lane.b32.xlu0 %v2792, 32
  %v2795 = vpop.permute.xlu0 %2794
  %v2797 = vadd.f32 %v2787, %v2795
  %v2798 = vtanh.pop %v2797
  %2800 = vrot.lane.b32.xlu0 %v2798, 64
  %v2801 = vpop.permute.xlu0 %2800
  %v2803 = vmul.f32 %v2785, %v2801
  %2805 = vrot.lane.b32.xlu0 %v2779, 32
  %v2806 = vpop.permute.xlu0 %2805
  %2808 = vst.msk [vmem:[#allocation2 + $0x20] sm:$0xff] %vm91, %v2806
  %2810 = vrot.lane.b32.xlu0 %v2803, 64
  %v2811 = vpop.permute.xlu0 %2810
  %2813 = vst.msk [vmem:[#allocation2 + $0x18] sm:$0xff] %vm260, %v2811
  %v2814 = vld [vmem:[#allocation3 + $0x50] sm:$0xff]
  %v2815 = vld [vmem:[#allocation3 + $0x28] sm:$0xff]
  %v2816 = vsel %vm91, %v2806, %v2811
  %v2817 = vpack.c.bf16 %v2816, %v2816
  %v2819 = vsel %vm306, %v2817, 0
  %2821 = vmatprep.subr.bf16.mxu0 %v2371
  %2822 = vmatpush1.bf16.msra.mxu0 %v2370
  %2823 = vmatprep.subr.bf16.mxu0 %v2373
  %2824 = vmatpush1.bf16.msra.mxu0 %v2372
  %2825 = vmatprep.subr.bf16.mxu0 %v2375
  %2826 = vmatpush1.bf16.msra.mxu0 %v2374
  %2827 = vmatprep.subr.bf16.mxu0 %v2377
  %2828 = vmatpush1.bf16.msra.mxu0 %v2376
  %2829 = vmatprep.subr.bf16.mxu0 0
  %2830 = vmatpush1.bf16.msra.mxu0 0
  %2831 = vmatprep.subr.bf16.mxu0 0
  %2832 = vmatpush1.bf16.msra.mxu0 0
  %2833 = vmatprep.subr.bf16.mxu0 0
  %2834 = vmatpush1.bf16.msra.mxu0 0
  %2835 = vmatprep.subr.bf16.mxu0 0
  %2836 = vmatpush1.bf16.msra.mxu0 0
  %2837 = vmatprep.subr.bf16.mxu0 0
  %2838 = vmatpush1.bf16.msra.mxu0 0
  %2839 = vmatprep.subr.bf16.mxu0 0
  %2840 = vmatpush1.bf16.msra.mxu0 0
  %2841 = vmatprep.subr.bf16.mxu0 0
  %2842 = vmatpush1.bf16.msra.mxu0 0
  %2843 = vmatprep.subr.bf16.mxu0 0
  %2844 = vmatpush1.bf16.msra.mxu0 0
  %2845 = vmatprep.subr.bf16.mxu0 0
  %2846 = vmatpush1.bf16.msra.mxu0 0
  %2847 = vmatprep.subr.bf16.mxu0 0
  %2848 = vmatpush1.bf16.msra.mxu0 0
  %2849 = vmatprep.subr.bf16.mxu0 0
  %2850 = vmatpush1.bf16.msra.mxu0 0
  %2851 = vmatprep.subr.bf16.mxu0 0
  %2852 = vmatpush1.bf16.msra.mxu0 0
  %2853 = vmatprep.mubr.bf16.mxu0 0
  %2854 = vmatmul.mubr.bf16.gmra.mrb[0].mxu0 %v2819
  %v2855 = vpop.f32.mrb[0].mxu0
  %v2856 = vadd.f32 0.0, %v2855
  %v2857 = vpop.f32.mrb[0].mxu0
  %v2858 = vadd.f32 0.0, %v2857
  %v2859 = vpop.f32.mrb[0].mxu0
  %v2860 = vpop.f32.mrb[0].mxu0
  %2861 = vdwg.mxu0
  %v2862 = vadd.f32 %v2814, %v2856
  %v2863 = vadd.f32 %v2815, %v2858
  %v2864 = vxor.u32 %v2862, 2147483648
  %v2865 = vmul.f32 %v2864, 1.442695
  %v2866 = vpow.pop %v2865
  %v2867 = vadd.f32 %v2866, 1.0
  %v2868 = vrcp.pop %v2867
  %v2869 = vmul.f32 1.0, %v2868
  %v2870 = vtanh.pop %v2862
  %v2871 = vmul.f32 %v2869, %v2773
  %2873 = vrot.lane.b32.xlu0 %v2870, 64
  %v2874 = vpop.permute.xlu0 %2873
  %v2876 = vmul.f32 %v2869, %v2874
  %2878 = vrot.lane.b32.xlu0 %v2876, 32
  %v2879 = vpop.permute.xlu0 %2878
  %v2881 = vadd.f32 %v2871, %v2879
  %v2882 = vtanh.pop %v2881
  %2884 = vrot.lane.b32.xlu0 %v2882, 64
  %v2885 = vpop.permute.xlu0 %2884
  %v2887 = vmul.f32 %v2869, %v2885
  %v2888 = vxor.u32 %v2863, 2147483648
  %v2889 = vmul.f32 %v2888, 1.442695
  %v2890 = vpow.pop %v2889
  %v2891 = vadd.f32 %v2890, 1.0
  %v2892 = vrcp.pop %v2891
  %v2893 = vmul.f32 1.0, %v2892
  %v2894 = vtanh.pop %v2863
  %v2895 = vmul.f32 %v2893, %v2797
  %2897 = vrot.lane.b32.xlu0 %v2894, 64
  %v2898 = vpop.permute.xlu0 %2897
  %v2900 = vmul.f32 %v2893, %v2898
  %2902 = vrot.lane.b32.xlu0 %v2900, 32
  %v2903 = vpop.permute.xlu0 %2902
  %v2905 = vadd.f32 %v2895, %v2903
  %v2906 = vtanh.pop %v2905
  %2908 = vrot.lane.b32.xlu0 %v2906, 64
  %v2909 = vpop.permute.xlu0 %2908
  %v2911 = vmul.f32 %v2893, %v2909
  %2913 = vrot.lane.b32.xlu0 %v2887, 32
  %v2914 = vpop.permute.xlu0 %2913
  %2916 = vst.msk [vmem:[#allocation2 + $0x28] sm:$0xff] %vm91, %v2914
  %2918 = vrot.lane.b32.xlu0 %v2911, 64
  %v2919 = vpop.permute.xlu0 %2918
  %2921 = vst.msk [vmem:[#allocation2 + $0x10] sm:$0xff] %vm260, %v2919
  %v2922 = vld [vmem:[#allocation3 + $0x60] sm:$0xff]
  %v2923 = vld [vmem:[#allocation3 + $0x18] sm:$0xff]
  %v2924 = vsel %vm91, %v2914, %v2919
  %v2925 = vpack.c.bf16 %v2924, %v2924
  %v2927 = vsel %vm306, %v2925, 0
  %2929 = vmatprep.subr.bf16.mxu0 %v2371
  %2930 = vmatpush1.bf16.msra.mxu0 %v2370
  %2931 = vmatprep.subr.bf16.mxu0 %v2373
  %2932 = vmatpush1.bf16.msra.mxu0 %v2372
  %2933 = vmatprep.subr.bf16.mxu0 %v2375
  %2934 = vmatpush1.bf16.msra.mxu0 %v2374
  %2935 = vmatprep.subr.bf16.mxu0 %v2377
  %2936 = vmatpush1.bf16.msra.mxu0 %v2376
  %2937 = vmatprep.subr.bf16.mxu0 0
  %2938 = vmatpush1.bf16.msra.mxu0 0
  %2939 = vmatprep.subr.bf16.mxu0 0
  %2940 = vmatpush1.bf16.msra.mxu0 0
  %2941 = vmatprep.subr.bf16.mxu0 0
  %2942 = vmatpush1.bf16.msra.mxu0 0
  %2943 = vmatprep.subr.bf16.mxu0 0
  %2944 = vmatpush1.bf16.msra.mxu0 0
  %2945 = vmatprep.subr.bf16.mxu0 0
  %2946 = vmatpush1.bf16.msra.mxu0 0
  %2947 = vmatprep.subr.bf16.mxu0 0
  %2948 = vmatpush1.bf16.msra.mxu0 0
  %2949 = vmatprep.subr.bf16.mxu0 0
  %2950 = vmatpush1.bf16.msra.mxu0 0
  %2951 = vmatprep.subr.bf16.mxu0 0
  %2952 = vmatpush1.bf16.msra.mxu0 0
  %2953 = vmatprep.subr.bf16.mxu0 0
  %2954 = vmatpush1.bf16.msra.mxu0 0
  %2955 = vmatprep.subr.bf16.mxu0 0
  %2956 = vmatpush1.bf16.msra.mxu0 0
  %2957 = vmatprep.subr.bf16.mxu0 0
  %2958 = vmatpush1.bf16.msra.mxu0 0
  %2959 = vmatprep.subr.bf16.mxu0 0
  %2960 = vmatpush1.bf16.msra.mxu0 0
  %2961 = vmatprep.mubr.bf16.mxu0 0
  %2962 = vmatmul.mubr.bf16.gmra.mrb[0].mxu0 %v2927
  %v2963 = vpop.f32.mrb[0].mxu0
  %v2964 = vadd.f32 0.0, %v2963
  %v2965 = vpop.f32.mrb[0].mxu0
  %v2966 = vadd.f32 0.0, %v2965
  %v2967 = vpop.f32.mrb[0].mxu0
  %v2968 = vpop.f32.mrb[0].mxu0
  %2969 = vdwg.mxu0
  %v2970 = vadd.f32 %v2922, %v2964
  %v2971 = vadd.f32 %v2923, %v2966
  %v2972 = vxor.u32 %v2970, 2147483648
  %v2973 = vmul.f32 %v2972, 1.442695
  %v2974 = vpow.pop %v2973
  %v2975 = vadd.f32 %v2974, 1.0
  %v2976 = vrcp.pop %v2975
  %v2977 = vmul.f32 1.0, %v2976
  %v2978 = vtanh.pop %v2970
  %v2979 = vmul.f32 %v2977, %v2881
  %2981 = vrot.lane.b32.xlu0 %v2978, 64
  %v2982 = vpop.permute.xlu0 %2981
  %v2984 = vmul.f32 %v2977, %v2982
  %2986 = vrot.lane.b32.xlu0 %v2984, 32
  %v2987 = vpop.permute.xlu0 %2986
  %v2989 = vadd.f32 %v2979, %v2987
  %v2990 = vtanh.pop %v2989
  %2992 = vrot.lane.b32.xlu0 %v2990, 64
  %v2993 = vpop.permute.xlu0 %2992
  %v2995 = vmul.f32 %v2977, %v2993
  %v2996 = vxor.u32 %v2971, 2147483648
  %v2997 = vmul.f32 %v2996, 1.442695
  %v2998 = vpow.pop %v2997
  %v2999 = vadd.f32 %v2998, 1.0
  %v3000 = vrcp.pop %v2999
  %v3001 = vmul.f32 1.0, %v3000
  %v3002 = vtanh.pop %v2971
  %v3003 = vmul.f32 %v3001, %v2905
  %3005 = vrot.lane.b32.xlu0 %v3002, 64
  %v3006 = vpop.permute.xlu0 %3005
  %v3008 = vmul.f32 %v3001, %v3006
  %3010 = vrot.lane.b32.xlu0 %v3008, 32
  %v3011 = vpop.permute.xlu0 %3010
  %v3013 = vadd.f32 %v3003, %v3011
  %v3014 = vtanh.pop %v3013
  %3016 = vrot.lane.b32.xlu0 %v3014, 64
  %v3017 = vpop.permute.xlu0 %3016
  %v3019 = vmul.f32 %v3001, %v3017
  %3021 = vrot.lane.b32.xlu0 %v2995, 32
  %v3022 = vpop.permute.xlu0 %3021
  %3024 = vst.msk [vmem:[#allocation2 + $0x30] sm:$0xff] %vm91, %v3022
  %3026 = vrot.lane.b32.xlu0 %v3019, 64
  %v3027 = vpop.permute.xlu0 %3026
  %3029 = vst.msk [vmem:[#allocation2 + $0x8] sm:$0xff] %vm260, %v3027
  %v3030 = vld [vmem:[#allocation3 + $0x70] sm:$0xff]
  %v3031 = vld [vmem:[#allocation3 + $0x8] sm:$0xff]
  %v3032 = vsel %vm91, %v3022, %v3027
  %v3033 = vpack.c.bf16 %v3032, %v3032
  %v3035 = vsel %vm306, %v3033, 0
  %3037 = vmatprep.subr.bf16.mxu0 %v2371
  %3038 = vmatpush1.bf16.msra.mxu0 %v2370
  %3039 = vmatprep.subr.bf16.mxu0 %v2373
  %3040 = vmatpush1.bf16.msra.mxu0 %v2372
  %3041 = vmatprep.subr.bf16.mxu0 %v2375
  %3042 = vmatpush1.bf16.msra.mxu0 %v2374
  %3043 = vmatprep.subr.bf16.mxu0 %v2377
  %3044 = vmatpush1.bf16.msra.mxu0 %v2376
  %3045 = vmatprep.subr.bf16.mxu0 0
  %3046 = vmatpush1.bf16.msra.mxu0 0
  %3047 = vmatprep.subr.bf16.mxu0 0
  %3048 = vmatpush1.bf16.msra.mxu0 0
  %3049 = vmatprep.subr.bf16.mxu0 0
  %3050 = vmatpush1.bf16.msra.mxu0 0
  %3051 = vmatprep.subr.bf16.mxu0 0
  %3052 = vmatpush1.bf16.msra.mxu0 0
  %3053 = vmatprep.subr.bf16.mxu0 0
  %3054 = vmatpush1.bf16.msra.mxu0 0
  %3055 = vmatprep.subr.bf16.mxu0 0
  %3056 = vmatpush1.bf16.msra.mxu0 0
  %3057 = vmatprep.subr.bf16.mxu0 0
  %3058 = vmatpush1.bf16.msra.mxu0 0
  %3059 = vmatprep.subr.bf16.mxu0 0
  %3060 = vmatpush1.bf16.msra.mxu0 0
  %3061 = vmatprep.subr.bf16.mxu0 0
  %3062 = vmatpush1.bf16.msra.mxu0 0
  %3063 = vmatprep.subr.bf16.mxu0 0
  %3064 = vmatpush1.bf16.msra.mxu0 0
  %3065 = vmatprep.subr.bf16.mxu0 0
  %3066 = vmatpush1.bf16.msra.mxu0 0
  %3067 = vmatprep.subr.bf16.mxu0 0
  %3068 = vmatpush1.bf16.msra.mxu0 0
  %3069 = vmatprep.mubr.bf16.mxu0 0
  %3070 = vmatmul.mubr.bf16.gmra.mrb[0].mxu0 %v3035
  %v3071 = vpop.f32.mrb[0].mxu0
  %v3072 = vadd.f32 0.0, %v3071
  %v3073 = vpop.f32.mrb[0].mxu0
  %v3074 = vadd.f32 0.0, %v3073
  %v3075 = vpop.f32.mrb[0].mxu0
  %v3076 = vpop.f32.mrb[0].mxu0
  %3077 = vdwg.mxu0
  %v3078 = vadd.f32 %v3030, %v3072
  %v3079 = vadd.f32 %v3031, %v3074
  %v3080 = vxor.u32 %v3078, 2147483648
  %v3081 = vmul.f32 %v3080, 1.442695
  %v3082 = vpow.pop %v3081
  %v3083 = vadd.f32 %v3082, 1.0
  %v3084 = vrcp.pop %v3083
  %v3085 = vmul.f32 1.0, %v3084
  %v3086 = vtanh.pop %v3078
  %v3087 = vmul.f32 %v3085, %v2989
  %3089 = vrot.lane.b32.xlu0 %v3086, 64
  %v3090 = vpop.permute.xlu0 %3089
  %v3092 = vmul.f32 %v3085, %v3090
  %3094 = vrot.lane.b32.xlu0 %v3092, 32
  %v3095 = vpop.permute.xlu0 %3094
  %v3097 = vadd.f32 %v3087, %v3095
  %v3098 = vtanh.pop %v3097
  %3100 = vrot.lane.b32.xlu0 %v3098, 64
  %v3101 = vpop.permute.xlu0 %3100
  %v3103 = vmul.f32 %v3085, %v3101
  %v3104 = vxor.u32 %v3079, 2147483648
  %v3105 = vmul.f32 %v3104, 1.442695
  %v3106 = vpow.pop %v3105
  %v3107 = vadd.f32 %v3106, 1.0
  %v3108 = vrcp.pop %v3107
  %v3109 = vmul.f32 1.0, %v3108
  %v3110 = vtanh.pop %v3079
  %v3111 = vmul.f32 %v3109, %v3013
  %3113 = vrot.lane.b32.xlu0 %v3110, 64
  %v3114 = vpop.permute.xlu0 %3113
  %v3116 = vmul.f32 %v3109, %v3114
  %3118 = vrot.lane.b32.xlu0 %v3116, 32
  %v3119 = vpop.permute.xlu0 %3118
  %v3121 = vadd.f32 %v3111, %v3119
  %v3122 = vtanh.pop %v3121
  %3124 = vrot.lane.b32.xlu0 %v3122, 64
  %v3125 = vpop.permute.xlu0 %3124
  %v3127 = vmul.f32 %v3109, %v3125
  %3129 = vrot.lane.b32.xlu0 %v3103, 32
  %v3130 = vpop.permute.xlu0 %3129
  %3132 = vst.msk [vmem:[#allocation2 + $0x38] sm:$0xff] %vm91, %v3130
  %3134 = vrot.lane.b32.xlu0 %v3127, 64
  %v3135 = vpop.permute.xlu0 %3134
  %3137 = vst.msk [vmem:[#allocation2] sm:$0xff] %vm260, %v3135
  %v3138 = vld [vmem:[#allocation2] sm:$0xff]
  %v3139 = vld [vmem:[#allocation2 + $0x8] sm:$0xff]
  %v3140 = vld [vmem:[#allocation2 + $0x10] sm:$0xff]
  %v3141 = vld [vmem:[#allocation2 + $0x18] sm:$0xff]
  %v3142 = vld [vmem:[#allocation2 + $0x20] sm:$0xff]
  %v3143 = vld [vmem:[#allocation2 + $0x28] sm:$0xff]
  %v3144 = vld [vmem:[#allocation2 + $0x30] sm:$0xff]
  %v3145 = vld [vmem:[#allocation2 + $0x38] sm:$0xff]
  %v3146 = vpack.c.bf16 %v3139, %v3138
  %v3147 = vpack.c.bf16 %v3141, %v3140
  %v3148 = vpack.c.bf16 %v3143, %v3142
  %v3149 = vpack.c.bf16 %v3145, %v3144
  %s3150 = scalar_lea.vmem %s2, 128
  %v3151 = vld [vmem:[%s3150] sm:$0xff]
  %v3152 = vld [vmem:[%s3150 + $0x8] sm:$0xff]
  %v3153 = vld [vmem:[%s3150 + $0x10] sm:$0xff]
  %v3154 = vld [vmem:[%s3150 + $0x18] sm:$0xff]
  %v3155 = vld [vmem:[%s3150 + $0x20] sm:$0xff]
  %v3156 = vld [vmem:[%s3150 + $0x28] sm:$0xff]
  %v3157 = vld [vmem:[%s3150 + $0x30] sm:$0xff]
  %v3158 = vld [vmem:[%s3150 + $0x38] sm:$0xff]
  %s3159 = scalar_lea.vmem %s4, 6
  %v3160 = vld [vmem:[%s3159] sm:$0x3]
  %v3162 = vlaneseq
  %v3163 = vshrl.u32 %v3162, 7
  %v3164 = vsub.s32 0, %v3163
  %v3165 = vrot.slane %v3160, %v3164
  %v3166 = vlaneseq
  %v3167 = vshrl.u32 %v3166, 7
  %v3168 = vsub.s32 1, %v3167
  %v3169 = vrot.slane %v3160, %v3168
  %v3180 = vunpack.c.l.b16 %v3151
  %v3181 = vunpack.c.h.b16 %v3151
  %v3182 = vunpack.c.l.b16 %v3152
  %v3183 = vunpack.c.h.b16 %v3152
  %v3184 = vunpack.c.l.b16 %v3153
  %v3185 = vunpack.c.h.b16 %v3153
  %v3186 = vunpack.c.l.b16 %v3154
  %v3187 = vunpack.c.h.b16 %v3154
  %v3188 = vunpack.c.l.b16 %v3155
  %v3189 = vunpack.c.h.b16 %v3155
  %v3190 = vunpack.c.l.b16 %v3156
  %v3191 = vunpack.c.h.b16 %v3156
  %v3192 = vunpack.c.l.b16 %v3157
  %v3193 = vunpack.c.h.b16 %v3157
  %v3194 = vunpack.c.l.b16 %v3158
  %v3195 = vunpack.c.h.b16 %v3158
  %v3196 = vpack.c.b16 %v3182, %v3180
  %v3197 = vpack.c.b16 %v3183, %v3181
  %v3198 = vpack.c.b16 %v3186, %v3184
  %v3199 = vpack.c.b16 %v3187, %v3185
  %v3200 = vpack.c.b16 %v3190, %v3188
  %v3201 = vpack.c.b16 %v3191, %v3189
  %v3202 = vpack.c.b16 %v3194, %v3192
  %v3203 = vpack.c.b16 %v3195, %v3193
  %v3213 = vsel %vm306, %v3146, 0
  %v3216 = vsel %vm306, %v3147, 0
  %v3219 = vsel %vm306, %v3148, 0
  %v3222 = vsel %vm306, %v3149, 0
  %3224 = vmatprep.subr.bf16.mxu0 %v3197
  %3225 = vmatpush1.bf16.msra.mxu0 %v3196
  %3226 = vmatprep.subr.bf16.mxu0 %v3199
  %3227 = vmatpush1.bf16.msra.mxu0 %v3198
  %3228 = vmatprep.subr.bf16.mxu0 %v3201
  %3229 = vmatpush1.bf16.msra.mxu0 %v3200
  %3230 = vmatprep.subr.bf16.mxu0 %v3203
  %3231 = vmatpush1.bf16.msra.mxu0 %v3202
  %3232 = vmatprep.subr.bf16.mxu0 0
  %3233 = vmatpush1.bf16.msra.mxu0 0
  %3234 = vmatprep.subr.bf16.mxu0 0
  %3235 = vmatpush1.bf16.msra.mxu0 0
  %3236 = vmatprep.subr.bf16.mxu0 0
  %3237 = vmatpush1.bf16.msra.mxu0 0
  %3238 = vmatprep.subr.bf16.mxu0 0
  %3239 = vmatpush1.bf16.msra.mxu0 0
  %3240 = vmatprep.subr.bf16.mxu0 0
  %3241 = vmatpush1.bf16.msra.mxu0 0
  %3242 = vmatprep.subr.bf16.mxu0 0
  %3243 = vmatpush1.bf16.msra.mxu0 0
  %3244 = vmatprep.subr.bf16.mxu0 0
  %3245 = vmatpush1.bf16.msra.mxu0 0
  %3246 = vmatprep.subr.bf16.mxu0 0
  %3247 = vmatpush1.bf16.msra.mxu0 0
  %3248 = vmatprep.subr.bf16.mxu0 0
  %3249 = vmatpush1.bf16.msra.mxu0 0
  %3250 = vmatprep.subr.bf16.mxu0 0
  %3251 = vmatpush1.bf16.msra.mxu0 0
  %3252 = vmatprep.subr.bf16.mxu0 0
  %3253 = vmatpush1.bf16.msra.mxu0 0
  %3254 = vmatprep.subr.bf16.mxu0 0
  %3255 = vmatpush1.bf16.msra.mxu0 0
  %3256 = vmatprep.mubr.bf16.mxu0 0
  %3257 = vmatmul.mubr.bf16.gmra.mrb[0].mxu0 %v3213
  %v3258 = vpop.f32.mrb[0].mxu0
  %v3259 = vadd.f32 %v3165, %v3258
  %v3260 = vpop.f32.mrb[0].mxu0
  %v3261 = vadd.f32 %v3169, %v3260
  %v3262 = vpop.f32.mrb[0].mxu0
  %v3263 = vadd.f32 %v3165, %v3262
  %v3264 = vpop.f32.mrb[0].mxu0
  %v3265 = vadd.f32 %v3169, %v3264
  %3266 = vmatprep.mubr.bf16.mxu0 0
  %3267 = vmatmul.mubr.bf16.gmra.mrb[0].mxu0 %v3216
  %v3268 = vpop.f32.mrb[0].mxu0
  %v3269 = vadd.f32 %v3165, %v3268
  %v3270 = vpop.f32.mrb[0].mxu0
  %v3271 = vadd.f32 %v3169, %v3270
  %v3272 = vpop.f32.mrb[0].mxu0
  %v3273 = vadd.f32 %v3165, %v3272
  %v3274 = vpop.f32.mrb[0].mxu0
  %v3275 = vadd.f32 %v3169, %v3274
  %3276 = vmatprep.mubr.bf16.mxu0 0
  %3277 = vmatmul.mubr.bf16.gmra.mrb[0].mxu0 %v3219
  %v3278 = vpop.f32.mrb[0].mxu0
  %v3279 = vadd.f32 %v3165, %v3278
  %v3280 = vpop.f32.mrb[0].mxu0
  %v3281 = vadd.f32 %v3169, %v3280
  %v3282 = vpop.f32.mrb[0].mxu0
  %v3283 = vadd.f32 %v3165, %v3282
  %v3284 = vpop.f32.mrb[0].mxu0
  %v3285 = vadd.f32 %v3169, %v3284
  %3286 = vmatprep.mubr.bf16.mxu0 0
  %3287 = vmatmul.mubr.bf16.gmra.mrb[0].mxu0 %v3222
  %v3288 = vpop.f32.mrb[0].mxu0
  %v3289 = vadd.f32 %v3165, %v3288
  %v3290 = vpop.f32.mrb[0].mxu0
  %v3291 = vadd.f32 %v3169, %v3290
  %v3292 = vpop.f32.mrb[0].mxu0
  %v3293 = vadd.f32 %v3165, %v3292
  %v3294 = vpop.f32.mrb[0].mxu0
  %v3295 = vadd.f32 %v3169, %v3294
  %3296 = vdwg.mxu0
  %3297 = vst [vmem:[#allocation3] sm:$0xff] %v3259
  %3298 = vst [vmem:[#allocation3 + $0x8] sm:$0xff] %v3261
  %3299 = vst [vmem:[#allocation3 + $0x10] sm:$0xff] %v3263
  %3300 = vst [vmem:[#allocation3 + $0x18] sm:$0xff] %v3265
  %3301 = vst [vmem:[#allocation3 + $0x20] sm:$0xff] %v3269
  %3302 = vst [vmem:[#allocation3 + $0x28] sm:$0xff] %v3271
  %3303 = vst [vmem:[#allocation3 + $0x30] sm:$0xff] %v3273
  %3304 = vst [vmem:[#allocation3 + $0x38] sm:$0xff] %v3275
  %3305 = vst [vmem:[#allocation3 + $0x40] sm:$0xff] %v3279
  %3306 = vst [vmem:[#allocation3 + $0x48] sm:$0xff] %v3281
  %3307 = vst [vmem:[#allocation3 + $0x50] sm:$0xff] %v3283
  %3308 = vst [vmem:[#allocation3 + $0x58] sm:$0xff] %v3285
  %3309 = vst [vmem:[#allocation3 + $0x60] sm:$0xff] %v3289
  %3310 = vst [vmem:[#allocation3 + $0x68] sm:$0xff] %v3291
  %3311 = vst [vmem:[#allocation3 + $0x70] sm:$0xff] %v3293
  %3312 = vst [vmem:[#allocation3 + $0x78] sm:$0xff] %v3295
  %s3313 = scalar_lea.vmem %s3, 192
  %v3314 = vld [vmem:[%s3313] sm:$0xff]
  %v3315 = vld [vmem:[%s3313 + $0x8] sm:$0xff]
  %v3316 = vld [vmem:[%s3313 + $0x10] sm:$0xff]
  %v3317 = vld [vmem:[%s3313 + $0x18] sm:$0xff]
  %v3318 = vld [vmem:[%s3313 + $0x20] sm:$0xff]
  %v3319 = vld [vmem:[%s3313 + $0x28] sm:$0xff]
  %v3320 = vld [vmem:[%s3313 + $0x30] sm:$0xff]
  %v3321 = vld [vmem:[%s3313 + $0x38] sm:$0xff]
  %v3322 = vld [vmem:[#allocation3] sm:$0xff]
  %v3323 = vld [vmem:[#allocation3 + $0x78] sm:$0xff]
  %v3324 = vxor.u32 %v3322, 2147483648
  %v3325 = vmul.f32 %v3324, 1.442695
  %v3326 = vpow.pop %v3325
  %v3327 = vadd.f32 %v3326, 1.0
  %v3328 = vrcp.pop %v3327
  %v3329 = vmul.f32 1.0, %v3328
  %v3330 = vtanh.pop %v3322
  %v3331 = vmul.f32 %v3329, 0.0
  %3333 = vrot.lane.b32.xlu0 %v3330, 64
  %v3334 = vpop.permute.xlu0 %3333
  %v3336 = vmul.f32 %v3329, %v3334
  %3338 = vrot.lane.b32.xlu0 %v3336, 32
  %v3339 = vpop.permute.xlu0 %3338
  %v3341 = vadd.f32 %v3331, %v3339
  %v3342 = vtanh.pop %v3341
  %3344 = vrot.lane.b32.xlu0 %v3342, 64
  %v3345 = vpop.permute.xlu0 %3344
  %v3347 = vmul.f32 %v3329, %v3345
  %v3348 = vxor.u32 %v3323, 2147483648
  %v3349 = vmul.f32 %v3348, 1.442695
  %v3350 = vpow.pop %v3349
  %v3351 = vadd.f32 %v3350, 1.0
  %v3352 = vrcp.pop %v3351
  %v3353 = vmul.f32 1.0, %v3352
  %v3354 = vtanh.pop %v3323
  %v3355 = vmul.f32 %v3353, 0.0
  %3357 = vrot.lane.b32.xlu0 %v3354, 64
  %v3358 = vpop.permute.xlu0 %3357
  %v3360 = vmul.f32 %v3353, %v3358
  %3362 = vrot.lane.b32.xlu0 %v3360, 32
  %v3363 = vpop.permute.xlu0 %3362
  %v3365 = vadd.f32 %v3355, %v3363
  %v3366 = vtanh.pop %v3365
  %3368 = vrot.lane.b32.xlu0 %v3366, 64
  %v3369 = vpop.permute.xlu0 %3368
  %v3371 = vmul.f32 %v3353, %v3369
  %v3372 = vld [vmem:[#allocation3 + $0x10] sm:$0xff]
  %v3373 = vld [vmem:[#allocation3 + $0x68] sm:$0xff]
  %3375 = vrot.lane.b32.xlu0 %v3347, 32
  %v3376 = vpop.permute.xlu0 %3375
  %3379 = vrot.lane.b32.xlu0 %v3371, 64
  %v3380 = vpop.permute.xlu0 %3379
  %v3382 = vsel %vm91, %v3376, %v3380
  %v3383 = vpack.c.bf16 %v3382, %v3382
  %v3392 = vunpack.c.l.b16 %v3314
  %v3393 = vunpack.c.h.b16 %v3314
  %v3394 = vunpack.c.l.b16 %v3315
  %v3395 = vunpack.c.h.b16 %v3315
  %v3396 = vunpack.c.l.b16 %v3316
  %v3397 = vunpack.c.h.b16 %v3316
  %v3398 = vunpack.c.l.b16 %v3317
  %v3399 = vunpack.c.h.b16 %v3317
  %v3400 = vunpack.c.l.b16 %v3318
  %v3401 = vunpack.c.h.b16 %v3318
  %v3402 = vunpack.c.l.b16 %v3319
  %v3403 = vunpack.c.h.b16 %v3319
  %v3404 = vunpack.c.l.b16 %v3320
  %v3405 = vunpack.c.h.b16 %v3320
  %v3406 = vunpack.c.l.b16 %v3321
  %v3407 = vunpack.c.h.b16 %v3321
  %v3408 = vpack.c.b16 %v3394, %v3392
  %v3409 = vpack.c.b16 %v3395, %v3393
  %v3410 = vpack.c.b16 %v3398, %v3396
  %v3411 = vpack.c.b16 %v3399, %v3397
  %v3412 = vpack.c.b16 %v3402, %v3400
  %v3413 = vpack.c.b16 %v3403, %v3401
  %v3414 = vpack.c.b16 %v3406, %v3404
  %v3415 = vpack.c.b16 %v3407, %v3405
  %v3425 = vsel %vm306, %v3383, 0
  %3427 = vmatprep.subr.bf16.mxu0 %v3409
  %3428 = vmatpush1.bf16.msra.mxu0 %v3408
  %3429 = vmatprep.subr.bf16.mxu0 %v3411
  %3430 = vmatpush1.bf16.msra.mxu0 %v3410
  %3431 = vmatprep.subr.bf16.mxu0 %v3413
  %3432 = vmatpush1.bf16.msra.mxu0 %v3412
  %3433 = vmatprep.subr.bf16.mxu0 %v3415
  %3434 = vmatpush1.bf16.msra.mxu0 %v3414
  %3435 = vmatprep.subr.bf16.mxu0 0
  %3436 = vmatpush1.bf16.msra.mxu0 0
  %3437 = vmatprep.subr.bf16.mxu0 0
  %3438 = vmatpush1.bf16.msra.mxu0 0
  %3439 = vmatprep.subr.bf16.mxu0 0
  %3440 = vmatpush1.bf16.msra.mxu0 0
  %3441 = vmatprep.subr.bf16.mxu0 0
  %3442 = vmatpush1.bf16.msra.mxu0 0
  %3443 = vmatprep.subr.bf16.mxu0 0
  %3444 = vmatpush1.bf16.msra.mxu0 0
  %3445 = vmatprep.subr.bf16.mxu0 0
  %3446 = vmatpush1.bf16.msra.mxu0 0
  %3447 = vmatprep.subr.bf16.mxu0 0
  %3448 = vmatpush1.bf16.msra.mxu0 0
  %3449 = vmatprep.subr.bf16.mxu0 0
  %3450 = vmatpush1.bf16.msra.mxu0 0
  %3451 = vmatprep.subr.bf16.mxu0 0
  %3452 = vmatpush1.bf16.msra.mxu0 0
  %3453 = vmatprep.subr.bf16.mxu0 0
  %3454 = vmatpush1.bf16.msra.mxu0 0
  %3455 = vmatprep.subr.bf16.mxu0 0
  %3456 = vmatpush1.bf16.msra.mxu0 0
  %3457 = vmatprep.subr.bf16.mxu0 0
  %3458 = vmatpush1.bf16.msra.mxu0 0
  %3459 = vmatprep.mubr.bf16.mxu0 0
  %3460 = vmatmul.mubr.bf16.gmra.mrb[0].mxu0 %v3425
  %v3461 = vpop.f32.mrb[0].mxu0
  %v3462 = vadd.f32 0.0, %v3461
  %v3463 = vpop.f32.mrb[0].mxu0
  %v3464 = vadd.f32 0.0, %v3463
  %v3465 = vpop.f32.mrb[0].mxu0
  %v3466 = vpop.f32.mrb[0].mxu0
  %3467 = vdwg.mxu0
  %v3468 = vadd.f32 %v3372, %v3462
  %v3469 = vadd.f32 %v3373, %v3464
  %v3470 = vxor.u32 %v3468, 2147483648
  %v3471 = vmul.f32 %v3470, 1.442695
  %v3472 = vpow.pop %v3471
  %v3473 = vadd.f32 %v3472, 1.0
  %v3474 = vrcp.pop %v3473
  %v3475 = vmul.f32 1.0, %v3474
  %v3476 = vtanh.pop %v3468
  %v3477 = vmul.f32 %v3475, %v3341
  %3479 = vrot.lane.b32.xlu0 %v3476, 64
  %v3480 = vpop.permute.xlu0 %3479
  %v3482 = vmul.f32 %v3475, %v3480
  %3484 = vrot.lane.b32.xlu0 %v3482, 32
  %v3485 = vpop.permute.xlu0 %3484
  %v3487 = vadd.f32 %v3477, %v3485
  %v3488 = vtanh.pop %v3487
  %3490 = vrot.lane.b32.xlu0 %v3488, 64
  %v3491 = vpop.permute.xlu0 %3490
  %v3493 = vmul.f32 %v3475, %v3491
  %v3494 = vxor.u32 %v3469, 2147483648
  %v3495 = vmul.f32 %v3494, 1.442695
  %v3496 = vpow.pop %v3495
  %v3497 = vadd.f32 %v3496, 1.0
  %v3498 = vrcp.pop %v3497
  %v3499 = vmul.f32 1.0, %v3498
  %v3500 = vtanh.pop %v3469
  %v3501 = vmul.f32 %v3499, %v3365
  %3503 = vrot.lane.b32.xlu0 %v3500, 64
  %v3504 = vpop.permute.xlu0 %3503
  %v3506 = vmul.f32 %v3499, %v3504
  %3508 = vrot.lane.b32.xlu0 %v3506, 32
  %v3509 = vpop.permute.xlu0 %3508
  %v3511 = vadd.f32 %v3501, %v3509
  %v3512 = vtanh.pop %v3511
  %3514 = vrot.lane.b32.xlu0 %v3512, 64
  %v3515 = vpop.permute.xlu0 %3514
  %v3517 = vmul.f32 %v3499, %v3515
  %v3518 = vld [vmem:[#allocation3 + $0x20] sm:$0xff]
  %v3519 = vld [vmem:[#allocation3 + $0x58] sm:$0xff]
  %3521 = vrot.lane.b32.xlu0 %v3493, 32
  %v3522 = vpop.permute.xlu0 %3521
  %3525 = vrot.lane.b32.xlu0 %v3517, 64
  %v3526 = vpop.permute.xlu0 %3525
  %v3528 = vsel %vm91, %v3522, %v3526
  %v3529 = vpack.c.bf16 %v3528, %v3528
  %v3531 = vsel %vm306, %v3529, 0
  %3533 = vmatprep.subr.bf16.mxu0 %v3409
  %3534 = vmatpush1.bf16.msra.mxu0 %v3408
  %3535 = vmatprep.subr.bf16.mxu0 %v3411
  %3536 = vmatpush1.bf16.msra.mxu0 %v3410
  %3537 = vmatprep.subr.bf16.mxu0 %v3413
  %3538 = vmatpush1.bf16.msra.mxu0 %v3412
  %3539 = vmatprep.subr.bf16.mxu0 %v3415
  %3540 = vmatpush1.bf16.msra.mxu0 %v3414
  %3541 = vmatprep.subr.bf16.mxu0 0
  %3542 = vmatpush1.bf16.msra.mxu0 0
  %3543 = vmatprep.subr.bf16.mxu0 0
  %3544 = vmatpush1.bf16.msra.mxu0 0
  %3545 = vmatprep.subr.bf16.mxu0 0
  %3546 = vmatpush1.bf16.msra.mxu0 0
  %3547 = vmatprep.subr.bf16.mxu0 0
  %3548 = vmatpush1.bf16.msra.mxu0 0
  %3549 = vmatprep.subr.bf16.mxu0 0
  %3550 = vmatpush1.bf16.msra.mxu0 0
  %3551 = vmatprep.subr.bf16.mxu0 0
  %3552 = vmatpush1.bf16.msra.mxu0 0
  %3553 = vmatprep.subr.bf16.mxu0 0
  %3554 = vmatpush1.bf16.msra.mxu0 0
  %3555 = vmatprep.subr.bf16.mxu0 0
  %3556 = vmatpush1.bf16.msra.mxu0 0
  %3557 = vmatprep.subr.bf16.mxu0 0
  %3558 = vmatpush1.bf16.msra.mxu0 0
  %3559 = vmatprep.subr.bf16.mxu0 0
  %3560 = vmatpush1.bf16.msra.mxu0 0
  %3561 = vmatprep.subr.bf16.mxu0 0
  %3562 = vmatpush1.bf16.msra.mxu0 0
  %3563 = vmatprep.subr.bf16.mxu0 0
  %3564 = vmatpush1.bf16.msra.mxu0 0
  %3565 = vmatprep.mubr.bf16.mxu0 0
  %3566 = vmatmul.mubr.bf16.gmra.mrb[0].mxu0 %v3531
  %v3567 = vpop.f32.mrb[0].mxu0
  %v3568 = vadd.f32 0.0, %v3567
  %v3569 = vpop.f32.mrb[0].mxu0
  %v3570 = vadd.f32 0.0, %v3569
  %v3571 = vpop.f32.mrb[0].mxu0
  %v3572 = vpop.f32.mrb[0].mxu0
  %3573 = vdwg.mxu0
  %v3574 = vadd.f32 %v3518, %v3568
  %v3575 = vadd.f32 %v3519, %v3570
  %v3576 = vxor.u32 %v3574, 2147483648
  %v3577 = vmul.f32 %v3576, 1.442695
  %v3578 = vpow.pop %v3577
  %v3579 = vadd.f32 %v3578, 1.0
  %v3580 = vrcp.pop %v3579
  %v3581 = vmul.f32 1.0, %v3580
  %v3582 = vtanh.pop %v3574
  %v3583 = vmul.f32 %v3581, %v3487
  %3585 = vrot.lane.b32.xlu0 %v3582, 64
  %v3586 = vpop.permute.xlu0 %3585
  %v3588 = vmul.f32 %v3581, %v3586
  %3590 = vrot.lane.b32.xlu0 %v3588, 32
  %v3591 = vpop.permute.xlu0 %3590
  %v3593 = vadd.f32 %v3583, %v3591
  %v3594 = vtanh.pop %v3593
  %3596 = vrot.lane.b32.xlu0 %v3594, 64
  %v3597 = vpop.permute.xlu0 %3596
  %v3599 = vmul.f32 %v3581, %v3597
  %v3600 = vxor.u32 %v3575, 2147483648
  %v3601 = vmul.f32 %v3600, 1.442695
  %v3602 = vpow.pop %v3601
  %v3603 = vadd.f32 %v3602, 1.0
  %v3604 = vrcp.pop %v3603
  %v3605 = vmul.f32 1.0, %v3604
  %v3606 = vtanh.pop %v3575
  %v3607 = vmul.f32 %v3605, %v3511
  %3609 = vrot.lane.b32.xlu0 %v3606, 64
  %v3610 = vpop.permute.xlu0 %3609
  %v3612 = vmul.f32 %v3605, %v3610
  %3614 = vrot.lane.b32.xlu0 %v3612, 32
  %v3615 = vpop.permute.xlu0 %3614
  %v3617 = vadd.f32 %v3607, %v3615
  %v3618 = vtanh.pop %v3617
  %3620 = vrot.lane.b32.xlu0 %v3618, 64
  %v3621 = vpop.permute.xlu0 %3620
  %v3623 = vmul.f32 %v3605, %v3621
  %v3624 = vld [vmem:[#allocation3 + $0x30] sm:$0xff]
  %v3625 = vld [vmem:[#allocation3 + $0x48] sm:$0xff]
  %3627 = vrot.lane.b32.xlu0 %v3599, 32
  %v3628 = vpop.permute.xlu0 %3627
  %3631 = vrot.lane.b32.xlu0 %v3623, 64
  %v3632 = vpop.permute.xlu0 %3631
  %v3634 = vsel %vm91, %v3628, %v3632
  %v3635 = vpack.c.bf16 %v3634, %v3634
  %v3637 = vsel %vm306, %v3635, 0
  %3639 = vmatprep.subr.bf16.mxu0 %v3409
  %3640 = vmatpush1.bf16.msra.mxu0 %v3408
  %3641 = vmatprep.subr.bf16.mxu0 %v3411
  %3642 = vmatpush1.bf16.msra.mxu0 %v3410
  %3643 = vmatprep.subr.bf16.mxu0 %v3413
  %3644 = vmatpush1.bf16.msra.mxu0 %v3412
  %3645 = vmatprep.subr.bf16.mxu0 %v3415
  %3646 = vmatpush1.bf16.msra.mxu0 %v3414
  %3647 = vmatprep.subr.bf16.mxu0 0
  %3648 = vmatpush1.bf16.msra.mxu0 0
  %3649 = vmatprep.subr.bf16.mxu0 0
  %3650 = vmatpush1.bf16.msra.mxu0 0
  %3651 = vmatprep.subr.bf16.mxu0 0
  %3652 = vmatpush1.bf16.msra.mxu0 0
  %3653 = vmatprep.subr.bf16.mxu0 0
  %3654 = vmatpush1.bf16.msra.mxu0 0
  %3655 = vmatprep.subr.bf16.mxu0 0
  %3656 = vmatpush1.bf16.msra.mxu0 0
  %3657 = vmatprep.subr.bf16.mxu0 0
  %3658 = vmatpush1.bf16.msra.mxu0 0
  %3659 = vmatprep.subr.bf16.mxu0 0
  %3660 = vmatpush1.bf16.msra.mxu0 0
  %3661 = vmatprep.subr.bf16.mxu0 0
  %3662 = vmatpush1.bf16.msra.mxu0 0
  %3663 = vmatprep.subr.bf16.mxu0 0
  %3664 = vmatpush1.bf16.msra.mxu0 0
  %3665 = vmatprep.subr.bf16.mxu0 0
  %3666 = vmatpush1.bf16.msra.mxu0 0
  %3667 = vmatprep.subr.bf16.mxu0 0
  %3668 = vmatpush1.bf16.msra.mxu0 0
  %3669 = vmatprep.subr.bf16.mxu0 0
  %3670 = vmatpush1.bf16.msra.mxu0 0
  %3671 = vmatprep.mubr.bf16.mxu0 0
  %3672 = vmatmul.mubr.bf16.gmra.mrb[0].mxu0 %v3637
  %v3673 = vpop.f32.mrb[0].mxu0
  %v3674 = vadd.f32 0.0, %v3673
  %v3675 = vpop.f32.mrb[0].mxu0
  %v3676 = vadd.f32 0.0, %v3675
  %v3677 = vpop.f32.mrb[0].mxu0
  %v3678 = vpop.f32.mrb[0].mxu0
  %3679 = vdwg.mxu0
  %v3680 = vadd.f32 %v3624, %v3674
  %v3681 = vadd.f32 %v3625, %v3676
  %v3682 = vxor.u32 %v3680, 2147483648
  %v3683 = vmul.f32 %v3682, 1.442695
  %v3684 = vpow.pop %v3683
  %v3685 = vadd.f32 %v3684, 1.0
  %v3686 = vrcp.pop %v3685
  %v3687 = vmul.f32 1.0, %v3686
  %v3688 = vtanh.pop %v3680
  %v3689 = vmul.f32 %v3687, %v3593
  %3691 = vrot.lane.b32.xlu0 %v3688, 64
  %v3692 = vpop.permute.xlu0 %3691
  %v3694 = vmul.f32 %v3687, %v3692
  %3696 = vrot.lane.b32.xlu0 %v3694, 32
  %v3697 = vpop.permute.xlu0 %3696
  %v3699 = vadd.f32 %v3689, %v3697
  %v3700 = vtanh.pop %v3699
  %3702 = vrot.lane.b32.xlu0 %v3700, 64
  %v3703 = vpop.permute.xlu0 %3702
  %v3705 = vmul.f32 %v3687, %v3703
  %v3706 = vxor.u32 %v3681, 2147483648
  %v3707 = vmul.f32 %v3706, 1.442695
  %v3708 = vpow.pop %v3707
  %v3709 = vadd.f32 %v3708, 1.0
  %v3710 = vrcp.pop %v3709
  %v3711 = vmul.f32 1.0, %v3710
  %v3712 = vtanh.pop %v3681
  %v3713 = vmul.f32 %v3711, %v3617
  %3715 = vrot.lane.b32.xlu0 %v3712, 64
  %v3716 = vpop.permute.xlu0 %3715
  %v3718 = vmul.f32 %v3711, %v3716
  %3720 = vrot.lane.b32.xlu0 %v3718, 32
  %v3721 = vpop.permute.xlu0 %3720
  %v3723 = vadd.f32 %v3713, %v3721
  %v3724 = vtanh.pop %v3723
  %3726 = vrot.lane.b32.xlu0 %v3724, 64
  %v3727 = vpop.permute.xlu0 %3726
  %v3729 = vmul.f32 %v3711, %v3727
  %v3730 = vld [vmem:[#allocation3 + $0x40] sm:$0xff]
  %v3731 = vld [vmem:[#allocation3 + $0x38] sm:$0xff]
  %3733 = vrot.lane.b32.xlu0 %v3705, 32
  %v3734 = vpop.permute.xlu0 %3733
  %3737 = vrot.lane.b32.xlu0 %v3729, 64
  %v3738 = vpop.permute.xlu0 %3737
  %v3740 = vsel %vm91, %v3734, %v3738
  %v3741 = vpack.c.bf16 %v3740, %v3740
  %v3743 = vsel %vm306, %v3741, 0
  %3745 = vmatprep.subr.bf16.mxu0 %v3409
  %3746 = vmatpush1.bf16.msra.mxu0 %v3408
  %3747 = vmatprep.subr.bf16.mxu0 %v3411
  %3748 = vmatpush1.bf16.msra.mxu0 %v3410
  %3749 = vmatprep.subr.bf16.mxu0 %v3413
  %3750 = vmatpush1.bf16.msra.mxu0 %v3412
  %3751 = vmatprep.subr.bf16.mxu0 %v3415
  %3752 = vmatpush1.bf16.msra.mxu0 %v3414
  %3753 = vmatprep.subr.bf16.mxu0 0
  %3754 = vmatpush1.bf16.msra.mxu0 0
  %3755 = vmatprep.subr.bf16.mxu0 0
  %3756 = vmatpush1.bf16.msra.mxu0 0
  %3757 = vmatprep.subr.bf16.mxu0 0
  %3758 = vmatpush1.bf16.msra.mxu0 0
  %3759 = vmatprep.subr.bf16.mxu0 0
  %3760 = vmatpush1.bf16.msra.mxu0 0
  %3761 = vmatprep.subr.bf16.mxu0 0
  %3762 = vmatpush1.bf16.msra.mxu0 0
  %3763 = vmatprep.subr.bf16.mxu0 0
  %3764 = vmatpush1.bf16.msra.mxu0 0
  %3765 = vmatprep.subr.bf16.mxu0 0
  %3766 = vmatpush1.bf16.msra.mxu0 0
  %3767 = vmatprep.subr.bf16.mxu0 0
  %3768 = vmatpush1.bf16.msra.mxu0 0
  %3769 = vmatprep.subr.bf16.mxu0 0
  %3770 = vmatpush1.bf16.msra.mxu0 0
  %3771 = vmatprep.subr.bf16.mxu0 0
  %3772 = vmatpush1.bf16.msra.mxu0 0
  %3773 = vmatprep.subr.bf16.mxu0 0
  %3774 = vmatpush1.bf16.msra.mxu0 0
  %3775 = vmatprep.subr.bf16.mxu0 0
  %3776 = vmatpush1.bf16.msra.mxu0 0
  %3777 = vmatprep.mubr.bf16.mxu0 0
  %3778 = vmatmul.mubr.bf16.gmra.mrb[0].mxu0 %v3743
  %v3779 = vpop.f32.mrb[0].mxu0
  %v3780 = vadd.f32 0.0, %v3779
  %v3781 = vpop.f32.mrb[0].mxu0
  %v3782 = vadd.f32 0.0, %v3781
  %v3783 = vpop.f32.mrb[0].mxu0
  %v3784 = vpop.f32.mrb[0].mxu0
  %3785 = vdwg.mxu0
  %v3786 = vadd.f32 %v3730, %v3780
  %v3787 = vadd.f32 %v3731, %v3782
  %v3788 = vxor.u32 %v3786, 2147483648
  %v3789 = vmul.f32 %v3788, 1.442695
  %v3790 = vpow.pop %v3789
  %v3791 = vadd.f32 %v3790, 1.0
  %v3792 = vrcp.pop %v3791
  %v3793 = vmul.f32 1.0, %v3792
  %v3794 = vtanh.pop %v3786
  %v3795 = vmul.f32 %v3793, %v3699
  %3797 = vrot.lane.b32.xlu0 %v3794, 64
  %v3798 = vpop.permute.xlu0 %3797
  %v3800 = vmul.f32 %v3793, %v3798
  %3802 = vrot.lane.b32.xlu0 %v3800, 32
  %v3803 = vpop.permute.xlu0 %3802
  %v3805 = vadd.f32 %v3795, %v3803
  %v3806 = vtanh.pop %v3805
  %3808 = vrot.lane.b32.xlu0 %v3806, 64
  %v3809 = vpop.permute.xlu0 %3808
  %v3811 = vmul.f32 %v3793, %v3809
  %v3812 = vxor.u32 %v3787, 2147483648
  %v3813 = vmul.f32 %v3812, 1.442695
  %v3814 = vpow.pop %v3813
  %v3815 = vadd.f32 %v3814, 1.0
  %v3816 = vrcp.pop %v3815
  %v3817 = vmul.f32 1.0, %v3816
  %v3818 = vtanh.pop %v3787
  %v3819 = vmul.f32 %v3817, %v3723
  %3821 = vrot.lane.b32.xlu0 %v3818, 64
  %v3822 = vpop.permute.xlu0 %3821
  %v3824 = vmul.f32 %v3817, %v3822
  %3826 = vrot.lane.b32.xlu0 %v3824, 32
  %v3827 = vpop.permute.xlu0 %3826
  %v3829 = vadd.f32 %v3819, %v3827
  %v3830 = vtanh.pop %v3829
  %3832 = vrot.lane.b32.xlu0 %v3830, 64
  %v3833 = vpop.permute.xlu0 %3832
  %v3835 = vmul.f32 %v3817, %v3833
  %v3836 = vld [vmem:[#allocation3 + $0x50] sm:$0xff]
  %v3837 = vld [vmem:[#allocation3 + $0x28] sm:$0xff]
  %3839 = vrot.lane.b32.xlu0 %v3811, 32
  %v3840 = vpop.permute.xlu0 %3839
  %3843 = vrot.lane.b32.xlu0 %v3835, 64
  %v3844 = vpop.permute.xlu0 %3843
  %v3846 = vsel %vm91, %v3840, %v3844
  %v3847 = vpack.c.bf16 %v3846, %v3846
  %v3849 = vsel %vm306, %v3847, 0
  %3851 = vmatprep.subr.bf16.mxu0 %v3409
  %3852 = vmatpush1.bf16.msra.mxu0 %v3408
  %3853 = vmatprep.subr.bf16.mxu0 %v3411
  %3854 = vmatpush1.bf16.msra.mxu0 %v3410
  %3855 = vmatprep.subr.bf16.mxu0 %v3413
  %3856 = vmatpush1.bf16.msra.mxu0 %v3412
  %3857 = vmatprep.subr.bf16.mxu0 %v3415
  %3858 = vmatpush1.bf16.msra.mxu0 %v3414
  %3859 = vmatprep.subr.bf16.mxu0 0
  %3860 = vmatpush1.bf16.msra.mxu0 0
  %3861 = vmatprep.subr.bf16.mxu0 0
  %3862 = vmatpush1.bf16.msra.mxu0 0
  %3863 = vmatprep.subr.bf16.mxu0 0
  %3864 = vmatpush1.bf16.msra.mxu0 0
  %3865 = vmatprep.subr.bf16.mxu0 0
  %3866 = vmatpush1.bf16.msra.mxu0 0
  %3867 = vmatprep.subr.bf16.mxu0 0
  %3868 = vmatpush1.bf16.msra.mxu0 0
  %3869 = vmatprep.subr.bf16.mxu0 0
  %3870 = vmatpush1.bf16.msra.mxu0 0
  %3871 = vmatprep.subr.bf16.mxu0 0
  %3872 = vmatpush1.bf16.msra.mxu0 0
  %3873 = vmatprep.subr.bf16.mxu0 0
  %3874 = vmatpush1.bf16.msra.mxu0 0
  %3875 = vmatprep.subr.bf16.mxu0 0
  %3876 = vmatpush1.bf16.msra.mxu0 0
  %3877 = vmatprep.subr.bf16.mxu0 0
  %3878 = vmatpush1.bf16.msra.mxu0 0
  %3879 = vmatprep.subr.bf16.mxu0 0
  %3880 = vmatpush1.bf16.msra.mxu0 0
  %3881 = vmatprep.subr.bf16.mxu0 0
  %3882 = vmatpush1.bf16.msra.mxu0 0
  %3883 = vmatprep.mubr.bf16.mxu0 0
  %3884 = vmatmul.mubr.bf16.gmra.mrb[0].mxu0 %v3849
  %v3885 = vpop.f32.mrb[0].mxu0
  %v3886 = vadd.f32 0.0, %v3885
  %v3887 = vpop.f32.mrb[0].mxu0
  %v3888 = vadd.f32 0.0, %v3887
  %v3889 = vpop.f32.mrb[0].mxu0
  %v3890 = vpop.f32.mrb[0].mxu0
  %3891 = vdwg.mxu0
  %v3892 = vadd.f32 %v3836, %v3886
  %v3893 = vadd.f32 %v3837, %v3888
  %v3894 = vxor.u32 %v3892, 2147483648
  %v3895 = vmul.f32 %v3894, 1.442695
  %v3896 = vpow.pop %v3895
  %v3897 = vadd.f32 %v3896, 1.0
  %v3898 = vrcp.pop %v3897
  %v3899 = vmul.f32 1.0, %v3898
  %v3900 = vtanh.pop %v3892
  %v3901 = vmul.f32 %v3899, %v3805
  %3903 = vrot.lane.b32.xlu0 %v3900, 64
  %v3904 = vpop.permute.xlu0 %3903
  %v3906 = vmul.f32 %v3899, %v3904
  %3908 = vrot.lane.b32.xlu0 %v3906, 32
  %v3909 = vpop.permute.xlu0 %3908
  %v3911 = vadd.f32 %v3901, %v3909
  %v3912 = vtanh.pop %v3911
  %3914 = vrot.lane.b32.xlu0 %v3912, 64
  %v3915 = vpop.permute.xlu0 %3914
  %v3917 = vmul.f32 %v3899, %v3915
  %v3918 = vxor.u32 %v3893, 2147483648
  %v3919 = vmul.f32 %v3918, 1.442695
  %v3920 = vpow.pop %v3919
  %v3921 = vadd.f32 %v3920, 1.0
  %v3922 = vrcp.pop %v3921
  %v3923 = vmul.f32 1.0, %v3922
  %v3924 = vtanh.pop %v3893
  %v3925 = vmul.f32 %v3923, %v3829
  %3927 = vrot.lane.b32.xlu0 %v3924, 64
  %v3928 = vpop.permute.xlu0 %3927
  %v3930 = vmul.f32 %v3923, %v3928
  %3932 = vrot.lane.b32.xlu0 %v3930, 32
  %v3933 = vpop.permute.xlu0 %3932
  %v3935 = vadd.f32 %v3925, %v3933
  %v3936 = vtanh.pop %v3935
  %3938 = vrot.lane.b32.xlu0 %v3936, 64
  %v3939 = vpop.permute.xlu0 %3938
  %v3941 = vmul.f32 %v3923, %v3939
  %v3942 = vld [vmem:[#allocation3 + $0x60] sm:$0xff]
  %v3943 = vld [vmem:[#allocation3 + $0x18] sm:$0xff]
  %3945 = vrot.lane.b32.xlu0 %v3917, 32
  %v3946 = vpop.permute.xlu0 %3945
  %3949 = vrot.lane.b32.xlu0 %v3941, 64
  %v3950 = vpop.permute.xlu0 %3949
  %v3952 = vsel %vm91, %v3946, %v3950
  %v3953 = vpack.c.bf16 %v3952, %v3952
  %v3955 = vsel %vm306, %v3953, 0
  %3957 = vmatprep.subr.bf16.mxu0 %v3409
  %3958 = vmatpush1.bf16.msra.mxu0 %v3408
  %3959 = vmatprep.subr.bf16.mxu0 %v3411
  %3960 = vmatpush1.bf16.msra.mxu0 %v3410
  %3961 = vmatprep.subr.bf16.mxu0 %v3413
  %3962 = vmatpush1.bf16.msra.mxu0 %v3412
  %3963 = vmatprep.subr.bf16.mxu0 %v3415
  %3964 = vmatpush1.bf16.msra.mxu0 %v3414
  %3965 = vmatprep.subr.bf16.mxu0 0
  %3966 = vmatpush1.bf16.msra.mxu0 0
  %3967 = vmatprep.subr.bf16.mxu0 0
  %3968 = vmatpush1.bf16.msra.mxu0 0
  %3969 = vmatprep.subr.bf16.mxu0 0
  %3970 = vmatpush1.bf16.msra.mxu0 0
  %3971 = vmatprep.subr.bf16.mxu0 0
  %3972 = vmatpush1.bf16.msra.mxu0 0
  %3973 = vmatprep.subr.bf16.mxu0 0
  %3974 = vmatpush1.bf16.msra.mxu0 0
  %3975 = vmatprep.subr.bf16.mxu0 0
  %3976 = vmatpush1.bf16.msra.mxu0 0
  %3977 = vmatprep.subr.bf16.mxu0 0
  %3978 = vmatpush1.bf16.msra.mxu0 0
  %3979 = vmatprep.subr.bf16.mxu0 0
  %3980 = vmatpush1.bf16.msra.mxu0 0
  %3981 = vmatprep.subr.bf16.mxu0 0
  %3982 = vmatpush1.bf16.msra.mxu0 0
  %3983 = vmatprep.subr.bf16.mxu0 0
  %3984 = vmatpush1.bf16.msra.mxu0 0
  %3985 = vmatprep.subr.bf16.mxu0 0
  %3986 = vmatpush1.bf16.msra.mxu0 0
  %3987 = vmatprep.subr.bf16.mxu0 0
  %3988 = vmatpush1.bf16.msra.mxu0 0
  %3989 = vmatprep.mubr.bf16.mxu0 0
  %3990 = vmatmul.mubr.bf16.gmra.mrb[0].mxu0 %v3955
  %v3991 = vpop.f32.mrb[0].mxu0
  %v3992 = vadd.f32 0.0, %v3991
  %v3993 = vpop.f32.mrb[0].mxu0
  %v3994 = vadd.f32 0.0, %v3993
  %v3995 = vpop.f32.mrb[0].mxu0
  %v3996 = vpop.f32.mrb[0].mxu0
  %3997 = vdwg.mxu0
  %v3998 = vadd.f32 %v3942, %v3992
  %v3999 = vadd.f32 %v3943, %v3994
  %v4000 = vxor.u32 %v3998, 2147483648
  %v4001 = vmul.f32 %v4000, 1.442695
  %v4002 = vpow.pop %v4001
  %v4003 = vadd.f32 %v4002, 1.0
  %v4004 = vrcp.pop %v4003
  %v4005 = vmul.f32 1.0, %v4004
  %v4006 = vtanh.pop %v3998
  %v4007 = vmul.f32 %v4005, %v3911
  %4009 = vrot.lane.b32.xlu0 %v4006, 64
  %v4010 = vpop.permute.xlu0 %4009
  %v4012 = vmul.f32 %v4005, %v4010
  %4014 = vrot.lane.b32.xlu0 %v4012, 32
  %v4015 = vpop.permute.xlu0 %4014
  %v4017 = vadd.f32 %v4007, %v4015
  %v4018 = vtanh.pop %v4017
  %4020 = vrot.lane.b32.xlu0 %v4018, 64
  %v4021 = vpop.permute.xlu0 %4020
  %v4023 = vmul.f32 %v4005, %v4021
  %v4024 = vxor.u32 %v3999, 2147483648
  %v4025 = vmul.f32 %v4024, 1.442695
  %v4026 = vpow.pop %v4025
  %v4027 = vadd.f32 %v4026, 1.0
  %v4028 = vrcp.pop %v4027
  %v4029 = vmul.f32 1.0, %v4028
  %v4030 = vtanh.pop %v3999
  %v4031 = vmul.f32 %v4029, %v3935
  %4033 = vrot.lane.b32.xlu0 %v4030, 64
  %v4034 = vpop.permute.xlu0 %4033
  %v4036 = vmul.f32 %v4029, %v4034
  %4038 = vrot.lane.b32.xlu0 %v4036, 32
  %v4039 = vpop.permute.xlu0 %4038
  %v4041 = vadd.f32 %v4031, %v4039
  %v4042 = vtanh.pop %v4041
  %4044 = vrot.lane.b32.xlu0 %v4042, 64
  %v4045 = vpop.permute.xlu0 %4044
  %v4047 = vmul.f32 %v4029, %v4045
  %v4048 = vld [vmem:[#allocation3 + $0x70] sm:$0xff]
  %4050 = vrot.lane.b32.xlu0 %v4023, 32
  %v4051 = vpop.permute.xlu0 %4050
  %4054 = vrot.lane.b32.xlu0 %v4047, 64
  %v4055 = vpop.permute.xlu0 %4054
  %v4057 = vsel %vm91, %v4051, %v4055
  %v4058 = vpack.c.bf16 %v4057, %v4057
  %v4060 = vsel %vm306, %v4058, 0
  %4062 = vmatprep.subr.bf16.mxu0 %v3409
  %4063 = vmatpush1.bf16.msra.mxu0 %v3408
  %4064 = vmatprep.subr.bf16.mxu0 %v3411
  %4065 = vmatpush1.bf16.msra.mxu0 %v3410
  %4066 = vmatprep.subr.bf16.mxu0 %v3413
  %4067 = vmatpush1.bf16.msra.mxu0 %v3412
  %4068 = vmatprep.subr.bf16.mxu0 %v3415
  %4069 = vmatpush1.bf16.msra.mxu0 %v3414
  %4070 = vmatprep.subr.bf16.mxu0 0
  %4071 = vmatpush1.bf16.msra.mxu0 0
  %4072 = vmatprep.subr.bf16.mxu0 0
  %4073 = vmatpush1.bf16.msra.mxu0 0
  %4074 = vmatprep.subr.bf16.mxu0 0
  %4075 = vmatpush1.bf16.msra.mxu0 0
  %4076 = vmatprep.subr.bf16.mxu0 0
  %4077 = vmatpush1.bf16.msra.mxu0 0
  %4078 = vmatprep.subr.bf16.mxu0 0
  %4079 = vmatpush1.bf16.msra.mxu0 0
  %4080 = vmatprep.subr.bf16.mxu0 0
  %4081 = vmatpush1.bf16.msra.mxu0 0
  %4082 = vmatprep.subr.bf16.mxu0 0
  %4083 = vmatpush1.bf16.msra.mxu0 0
  %4084 = vmatprep.subr.bf16.mxu0 0
  %4085 = vmatpush1.bf16.msra.mxu0 0
  %4086 = vmatprep.subr.bf16.mxu0 0
  %4087 = vmatpush1.bf16.msra.mxu0 0
  %4088 = vmatprep.subr.bf16.mxu0 0
  %4089 = vmatpush1.bf16.msra.mxu0 0
  %4090 = vmatprep.subr.bf16.mxu0 0
  %4091 = vmatpush1.bf16.msra.mxu0 0
  %4092 = vmatprep.subr.bf16.mxu0 0
  %4093 = vmatpush1.bf16.msra.mxu0 0
  %4094 = vmatprep.mubr.bf16.mxu0 0
  %4095 = vmatmul.mubr.bf16.gmra.mrb[0].mxu0 %v4060
  %v4096 = vpop.f32.mrb[0].mxu0
  %v4097 = vadd.f32 0.0, %v4096
  %v4098 = vpop.f32.mrb[0].mxu0
  %v4099 = vpop.f32.mrb[0].mxu0
  %v4100 = vpop.f32.mrb[0].mxu0
  %4101 = vdwg.mxu0
  %v4102 = vadd.f32 %v4048, %v4097
  %v4103 = vxor.u32 %v4102, 2147483648
  %v4104 = vmul.f32 %v4103, 1.442695
  %v4105 = vpow.pop %v4104
  %v4106 = vadd.f32 %v4105, 1.0
  %v4107 = vrcp.pop %v4106
  %v4108 = vmul.f32 1.0, %v4107
  %v4109 = vtanh.pop %v4102
  %v4110 = vmul.f32 %v4108, %v4017
  %4112 = vrot.lane.b32.xlu0 %v4109, 64
  %v4113 = vpop.permute.xlu0 %4112
  %v4115 = vmul.f32 %v4108, %v4113
  %4117 = vrot.lane.b32.xlu0 %v4115, 32
  %v4118 = vpop.permute.xlu0 %4117
  %v4120 = vadd.f32 %v4110, %v4118
  %v4121 = vtanh.pop %v4120
  %4123 = vrot.lane.b32.xlu0 %v4121, 64
  %v4124 = vpop.permute.xlu0 %4123
  %v4126 = vmul.f32 %v4108, %v4124
  %v4127 = vld [vmem:[%s5] sm:$0xf]
  %v4128 = vld [vmem:[%s5 + $0x4] sm:$0xf]
  %v4129 = vld [vmem:[%s5 + $0x8] sm:$0xf]
  %v4130 = vld [vmem:[%s5 + $0xc] sm:$0xf]
  %v4131 = vld [vmem:[%s5 + $0x10] sm:$0xf]
  %v4132 = vld [vmem:[%s5 + $0x14] sm:$0xf]
  %v4133 = vld [vmem:[%s5 + $0x18] sm:$0xf]
  %v4134 = vld [vmem:[%s5 + $0x1c] sm:$0xf]
  %v4135 = vpack.c.bf16 %v4126, %v4126
  %v4136 = vpack.c.bf16 %v3371, %v3371
  %4138 = vrot.lane.b32.xlu0 %v4136, 32
  %v4139 = vpop.permute.xlu0 %4138
  %v4144 = vunpack.c.l.b16 %v4131
  %v4145 = vunpack.c.l.b16 %v4132
  %v4146 = vunpack.c.l.b16 %v4133
  %v4147 = vunpack.c.l.b16 %v4134
  %v4148 = vpack.c.b16 %v4145, %v4144
  %v4149 = vpack.c.b16 %v4147, %v4146
  %v4153 = vsel %vm91, %v4139, 0
  %4155 = vmatprep.subr.bf16.mxu0 0
  %4156 = vmatpush1.bf16.msra.mxu0 %v4148
  %4157 = vmatprep.subr.bf16.mxu0 0
  %4158 = vmatpush1.bf16.msra.mxu0 %v4149
  %4159 = vmatprep.subr.bf16.mxu0 0
  %4160 = vmatpush1.bf16.msra.mxu0 0
  %4161 = vmatprep.subr.bf16.mxu0 0
  %4162 = vmatpush1.bf16.msra.mxu0 0
  %4163 = vmatprep.subr.bf16.mxu0 0
  %4164 = vmatpush1.bf16.msra.mxu0 0
  %4165 = vmatprep.subr.bf16.mxu0 0
  %4166 = vmatpush1.bf16.msra.mxu0 0
  %4167 = vmatprep.subr.bf16.mxu0 0
  %4168 = vmatpush1.bf16.msra.mxu0 0
  %4169 = vmatprep.subr.bf16.mxu0 0
  %4170 = vmatpush1.bf16.msra.mxu0 0
  %4171 = vmatprep.subr.bf16.mxu0 0
  %4172 = vmatpush1.bf16.msra.mxu0 0
  %4173 = vmatprep.subr.bf16.mxu0 0
  %4174 = vmatpush1.bf16.msra.mxu0 0
  %4175 = vmatprep.subr.bf16.mxu0 0
  %4176 = vmatpush1.bf16.msra.mxu0 0
  %4177 = vmatprep.subr.bf16.mxu0 0
  %4178 = vmatpush1.bf16.msra.mxu0 0
  %4179 = vmatprep.subr.bf16.mxu0 0
  %4180 = vmatpush1.bf16.msra.mxu0 0
  %4181 = vmatprep.subr.bf16.mxu0 0
  %4182 = vmatpush1.bf16.msra.mxu0 0
  %4183 = vmatprep.subr.bf16.mxu0 0
  %4184 = vmatpush1.bf16.msra.mxu0 0
  %4185 = vmatprep.subr.bf16.mxu0 0
  %4186 = vmatpush1.bf16.msra.mxu0 0
  %4187 = vmatprep.mubr.bf16.mxu0 0
  %4188 = vmatmul.mubr.bf16.gmra.mrb[0].mxu0 %v4153
  %v4189 = vpop.f32.mrb[0].mxu0
  %v4190 = vadd.f32 0.0, %v4189
  %v4191 = vpop.f32.mrb[0].mxu0
  %v4192 = vpop.f32.mrb[0].mxu0
  %v4193 = vpop.f32.mrb[0].mxu0
  %4194 = vdwg.mxu0
  %4196 = vrot.lane.b32.xlu0 %v4135, 32
  %v4197 = vpop.permute.xlu0 %4196
  %v4202 = vunpack.c.l.b16 %v4127
  %v4203 = vunpack.c.l.b16 %v4128
  %v4204 = vunpack.c.l.b16 %v4129
  %v4205 = vunpack.c.l.b16 %v4130
  %v4206 = vpack.c.b16 %v4203, %v4202
  %v4207 = vpack.c.b16 %v4205, %v4204
  %v4211 = vsel %vm91, %v4197, 0
  %4213 = vmatprep.subr.bf16.mxu0 0
  %4214 = vmatpush1.bf16.msra.mxu0 %v4206
  %4215 = vmatprep.subr.bf16.mxu0 0
  %4216 = vmatpush1.bf16.msra.mxu0 %v4207
  %4217 = vmatprep.subr.bf16.mxu0 0
  %4218 = vmatpush1.bf16.msra.mxu0 0
  %4219 = vmatprep.subr.bf16.mxu0 0
  %4220 = vmatpush1.bf16.msra.mxu0 0
  %4221 = vmatprep.subr.bf16.mxu0 0
  %4222 = vmatpush1.bf16.msra.mxu0 0
  %4223 = vmatprep.subr.bf16.mxu0 0
  %4224 = vmatpush1.bf16.msra.mxu0 0
  %4225 = vmatprep.subr.bf16.mxu0 0
  %4226 = vmatpush1.bf16.msra.mxu0 0
  %4227 = vmatprep.subr.bf16.mxu0 0
  %4228 = vmatpush1.bf16.msra.mxu0 0
  %4229 = vmatprep.subr.bf16.mxu0 0
  %4230 = vmatpush1.bf16.msra.mxu0 0
  %4231 = vmatprep.subr.bf16.mxu0 0
  %4232 = vmatpush1.bf16.msra.mxu0 0
  %4233 = vmatprep.subr.bf16.mxu0 0
  %4234 = vmatpush1.bf16.msra.mxu0 0
  %4235 = vmatprep.subr.bf16.mxu0 0
  %4236 = vmatpush1.bf16.msra.mxu0 0
  %4237 = vmatprep.subr.bf16.mxu0 0
  %4238 = vmatpush1.bf16.msra.mxu0 0
  %4239 = vmatprep.subr.bf16.mxu0 0
  %4240 = vmatpush1.bf16.msra.mxu0 0
  %4241 = vmatprep.subr.bf16.mxu0 0
  %4242 = vmatpush1.bf16.msra.mxu0 0
  %4243 = vmatprep.subr.bf16.mxu0 0
  %4244 = vmatpush1.bf16.msra.mxu0 0
  %4245 = vmatprep.mubr.bf16.mxu0 0
  %4246 = vmatmul.mubr.bf16.gmra.mrb[0].mxu0 %v4211
  %v4247 = vpop.f32.mrb[0].mxu0
  %v4248 = vadd.f32 %v4190, %v4247
  %v4249 = vpop.f32.mrb[0].mxu0
  %v4250 = vpop.f32.mrb[0].mxu0
  %v4251 = vpop.f32.mrb[0].mxu0
  %4252 = vdwg.mxu0
  %v4253 = vld [vmem:[%s6] sm:$0x1]
  %v4255 = vlaneseq
  %v4256 = vshrl.u32 %v4255, 7
  %v4257 = vsub.s32 0, %v4256
  %v4258 = vrot.slane %v4253, %v4257
  %v4260 = vadd.f32 %v4248, %v4258
  %vm4261 = vcmask 39936
  %v4262 = vsel %vm4261, %v4260, -inf
  %4263 = vmax.xlane.f32.xlu0 %v4262
  %v4264 = vpop.xlane.xlu0 %4263
  %v4265 = vsub.f32 %v4260, %v4264
  %v4266 = vmul.f32 %v4265, 1.442695
  %v4267 = vpow.pop %v4266
  %v4268 = vsel %vm4261, %v4267, 0.0
  %4269 = vadd.xlane.f32.xlu0 %v4268
  %v4270 = vpop.xlane.xlu0 %4269
  %v4271 = vlog2.pop %v4270
  %v4272 = vmul.f32 %v4271, 0.6931472
  %v4273 = vsub.f32 %v4265, %v4272
  %4274 = vst.msk [vmem:[%s7] sm:$0xff] %vm4261, %v4273
  // Predicated region
  $region30: #{rnn_classifier_forward.1} parent=0 // pred_check
    _
  $region31: #{rnn_classifier_forward.1} parent=0 // pred_check_branch
    %4276 = sbr.rel (0) target = $region33
  $region32: #{rnn_classifier_forward.1} parent=0 // pred_region
    _
  $region33: #{rnn_classifier_forward.1} parent=0 // pred_fallthru
    _
  // Predicated region
  $region34: #{rnn_classifier_forward.1} parent=0 // pred_check
    _
  $region35: #{rnn_classifier_forward.1} parent=0 // pred_check_branch
    %4278 = sbr.rel (0) target = $region37
  $region36: #{rnn_classifier_forward.1} parent=0 // pred_region
    _
  $region37: #{rnn_classifier_forward.1} parent=0 // pred_fallthru
    _

</llo_original>
